<compile_context>
chip_gen: v7x
topology: tpu7x:2x2x1
jax: 0.10.0
libtpu: 0.0.40
codegen_flags: <defaults>
</compile_context>

<pallas_src>
import jax
import jax.numpy as jnp
from jax import lax
from jax.experimental import pallas as pl
from jax.experimental.pallas import tpu as pltpu


# -----------------------------------------------------------------------------
# Fused kernel: conv1+bn1+relu -> conv2+bn2+relu -> maxpool2 -> fc5+relu -> fc6
# -----------------------------------------------------------------------------
def _font_cnn_kernel(xq_ref, t1_ref, aff1_ref, t2_ref, aff2_ref,
                     w5_ref, b5_ref, w6_ref, b6_ref, out_ref, ph_scr):
    f32, bf16 = jnp.float32, jnp.bfloat16
    bt = out_ref.shape[0]                   # images in this grid step
    rows = bt * 8                           # k-major rows: row = k*bt + img

    scale1, shift1 = aff1_ref[0:1, :], aff1_ref[1:2, :]
    scale2, shift2 = aff2_ref[0:1, :], aff2_ref[1:2, :]

    # ---- conv1 + bn1 + relu1: one K=1408 streaming GEMM per output-row phase
    # (the 11 vertical taps are K-fused in the wrapper's xq layout).
    # Phase ph holds conv1 output rows ho = 4*k + ph; lanes = wo*4 + cout.
    t1 = t1_ref[...]                                            # (1408, 128) bf16

    def conv1_phase(ph):
        acc = jnp.dot(xq_ref[ph], t1, preferred_element_type=f32)   # (rows, 128)
        return jnp.maximum(acc * scale1 + shift1, 0.0)              # f32 epilogue

    # Stage conv2's five phase inputs lane-blocked: [p3m1 | p0 | p1 | p2 | p3].
    for ph in range(3):
        ph_scr[:, 128 * (ph + 1):128 * (ph + 2)] = conv1_phase(ph).astype(bf16)
    y3 = conv1_phase(3)
    ph_scr[:, 512:640] = y3.astype(bf16)

    # conv2 needs conv1 row (4*k - 1) = phase-3 row (k-1): in k-major row order
    # that is a sublane roll by bt, with the k == 0 rows (H top padding and the
    # wraparound rows) masked to zero.
    row = lax.broadcasted_iota(jnp.int32, (rows, 128), 0)
    p3m1 = jnp.where(row < bt, 0.0, pltpu.roll(y3, shift=bt, axis=0))
    ph_scr[:, 0:128] = p3m1.astype(bf16)

    # ---- conv2 + bn2 + relu2, K-fused over the 3 vertical taps and split by
    # output-row parity so the 2x2 max-pool over rows is purely elementwise.
    # Lanes = wo2*8 + cout (128 dense).
    t2 = t2_ref[...]                                            # (384, 128) bf16
    acc_e = jnp.dot(ph_scr[:, 0:384], t2, preferred_element_type=f32)    # ho2 = 2k
    acc_o = jnp.dot(ph_scr[:, 256:640], t2, preferred_element_type=f32)  # ho2 = 2k+1
    y_e = jnp.maximum(acc_e * scale2 + shift2, 0.0)
    y_o = jnp.maximum(acc_o * scale2 + shift2, 0.0)

    # ---- 2x2 max-pool: rows via the parity split, columns via one XLU lane
    # rotate (rot[:, q] = rp[:, (q + 8) % 128]); valid at lanes 16*wp + c, c<8.
    rp = jnp.maximum(y_e, y_o)
    cp = jnp.maximum(rp, pltpu.roll(rp, shift=120, axis=1))

    # ---- fc5 + relu5 (dropout5 = eval identity) + fc6, all VMEM resident.
    # k-major rows make each pooled row-set hp a static slice; lane-concat the
    # 8 slices into one (bt, 1024) LHS so fc5 is a single K=1024 GEMM against
    # the pre-permuted (1024, 256) weight (zeros on the pool-garbage lanes).
    # TODO(synk): training-mode dropout randomness not implemented (eval identity).
    x5 = jnp.concatenate([cp[hp * bt:(hp + 1) * bt, :] for hp in range(8)],
                         axis=1).astype(bf16)                   # (bt, 1024)
    h5 = jnp.maximum(jnp.dot(x5, w5_ref[...], preferred_element_type=f32)
                     + b5_ref[0:1, :], 0.0)
    out_ref[...] = (jnp.dot(h5.astype(bf16), w6_ref[...], preferred_element_type=f32)
                    + b6_ref[0:1, :])


# -----------------------------------------------------------------------------
# Hoisted parameter preprocessing (BN folding + GEMM-friendly bf16 weights)
# -----------------------------------------------------------------------------
def prepare_params(params, eps=1e-5):
    f32, bf16 = jnp.float32, jnp.bfloat16
    n = params["conv1_w"].shape[0]
    assert n == 4, "lane packing assumes cnn_num_channels == 4 (32*4 == 128 lanes)"

    # conv1 Toeplitz, K-fused: T1[i*128 + p, wo*4+co] = w1[co, 0, i, p - 2*wo].
    w1 = jnp.transpose(params["conv1_w"][:, 0], (1, 2, 0)).astype(f32)   # (11,11,n)
    p = jnp.arange(128)[:, None]
    q = jnp.arange(32 * n)[None, :]
    wo, co = q // n, q % n
    j = p - 2 * wo
    t1 = jnp.where((j >= 0) & (j < 11), w1[:, jnp.clip(j, 0, 10), co], 0.0)
    t1 = t1.reshape(11 * 128, 128).astype(bf16)

    s1 = params["bn1_gamma"] / jnp.sqrt(params["bn1_var"] + eps)
    sh1 = params["bn1_beta"] + s1 * (params["conv1_b"] - params["bn1_mean"])
    aff1 = jnp.stack([jnp.tile(s1, 32), jnp.tile(sh1, 32)]).astype(f32)  # (2,128)

    # conv2 Toeplitz, K-fused: T2[di*128 + wi*4+ci, wo2*8+co] = w2[co,ci,di,wi-2*wo2+1].
    w2 = jnp.transpose(params["conv2_w"], (2, 3, 1, 0)).astype(f32)      # (3,3,n,2n)
    qi = jnp.arange(32 * n)[:, None]
    qo = jnp.arange(16 * 2 * n)[None, :]
    wi, ci = qi // n, qi % n
    wo2, co2 = qo // (2 * n), qo % (2 * n)
    dj = wi - 2 * wo2 + 1
    t2 = jnp.where((dj >= 0) & (dj < 3), w2[:, jnp.clip(dj, 0, 2), ci, co2], 0.0)
    t2 = t2.reshape(3 * 128, 128).astype(bf16)

    s2 = params["bn2_gamma"] / jnp.sqrt(params["bn2_var"] + eps)
    sh2 = params["bn2_beta"] + s2 * (params["conv2_b"] - params["bn2_mean"])
    aff2 = jnp.stack([jnp.tile(s2, 16), jnp.tile(sh2, 16)]).astype(f32)  # (2,128)

    # fc5 weight permuted to the pooled layout (row hp, lane 16*wp+co) with
    # zeros on the 8 pool-garbage lanes per 16-lane group (torch NCHW flatten),
    # then flattened hp-major to (1024, 256) so fc5 is one K=1024 GEMM.
    w5 = params["fc5_w"].astype(f32)                                     # (256, 2n*64)
    q2 = jnp.arange(16 * 2 * n)
    wp, c8 = q2 // (4 * n), q2 % (4 * n)
    hp = jnp.arange(8)
    f_idx = jnp.clip(c8, 0, 2 * n - 1)[None, :] * 64 + hp[:, None] * 8 + wp[None, :]
    w5p = jnp.where((c8 < 2 * n)[None, :, None], w5.T[f_idx], 0.0)       # (8,128,256)
    w5p = w5p.reshape(8 * 128, 256).astype(bf16)

    return {
        "t1": t1, "aff1": aff1, "t2": t2, "aff2": aff2,
        "w5": w5p, "b5": params["fc5_b"].astype(f32)[None, :],
        "w6": params["fc6_w"].astype(bf16).T,                            # (256,label)
        "b6": params["fc6_b"].astype(f32)[None, :],
    }


# -----------------------------------------------------------------------------
# Forward pass wrapper
# -----------------------------------------------------------------------------
def font_cnn_forward(prep, x_nchw, *, batch_grid=1):
    # batch_grid=1 for single-TensorCore v5e/v6e (one big step, M=256);
    # batch_grid=2 on v7x so each TensorCore gets exactly one step.
    N, cin, H, W = x_nchw.shape
    assert cin == 1 and H == 64 and W == 64, "FontCNN expects 1x64x64 inputs"
    assert N % batch_grid == 0 and (N // batch_grid) % 8 == 0
    bt = N // batch_grid
    label = prep["w6"].shape[1]

    # K-fused conv1 LHS, k-major rows within each grid tile:
    #   xq[ph, g*8*bt + k*bt + j, i*128 + w] = xpad[g*bt + j, 8*k + 2*ph + i, w]
    # so conv1 phase ph is one (8*bt, 1408) @ (1408, 128) GEMM in the kernel.
    x2 = x_nchw[:, 0].astype(jnp.float32)
    xpad = jnp.pad(x2, ((0, 0), (5, 11), (5, 59)))                 # (N, 80, 128)
    phases = []
    for ph in range(4):
        taps = [xpad[:, 2 * ph + i: 2 * ph + i + 57: 8, :] for i in range(11)]
        phases.append(jnp.concatenate(taps, axis=-1))              # (N, 8, 1408)
    xq = jnp.stack(phases, axis=0)                                  # (4, N, 8, 1408)
    xq = xq.reshape(4, batch_grid, bt, 8, 11 * 128)
    xq = jnp.transpose(xq, (0, 1, 3, 2, 4)).reshape(4, 8 * N, 11 * 128)
    xq = xq.astype(jnp.bfloat16)

    return pl.pallas_call(
        _font_cnn_kernel,
        out_shape=jax.ShapeDtypeStruct((N, label), jnp.float32),
        grid_spec=pltpu.PrefetchScalarGridSpec(
            num_scalar_prefetch=0,
            grid=(batch_grid,),
            in_specs=[
                pl.BlockSpec((4, 8 * bt, 11 * 128), lambda g: (0, g, 0)),
                pl.BlockSpec((11 * 128, 128), lambda g: (0, 0)),
                pl.BlockSpec((2, 128), lambda g: (0, 0)),
                pl.BlockSpec((3 * 128, 128), lambda g: (0, 0)),
                pl.BlockSpec((2, 128), lambda g: (0, 0)),
                pl.BlockSpec((8 * 128, 256), lambda g: (0, 0)),
                pl.BlockSpec((1, 256), lambda g: (0, 0)),
                pl.BlockSpec((256, label), lambda g: (0, 0)),
                pl.BlockSpec((1, label), lambda g: (0, 0)),
            ],
            out_specs=pl.BlockSpec((bt, label), lambda g: (g, 0)),
            # Lane-blocked staging for the conv2 inputs: [p3m1 | p0 | p1 | p2 | p3].
            scratch_shapes=[pltpu.VMEM((bt * 8, 5 * 128), jnp.bfloat16)],
        ),
        compiler_params=pltpu.CompilerParams(dimension_semantics=("parallel",)),
    )(xq, prep["t1"], prep["aff1"], prep["t2"], prep["aff2"],
      prep["w5"], prep["b5"], prep["w6"], prep["b6"])


# -----------------------------------------------------------------------------
# Synthetic params (torch layout) and a plain-JAX reference for the self-check
# -----------------------------------------------------------------------------
def init_params(key, num_channels=4, label_size=16, init_gain=0.02):
    """Weights ~ N(0, 0.02), biases 0; mirrors FontCNN.init_func (which also
    normal-inits the BatchNorm gammas); BN running stats are mean=0, var=1."""
    n = num_channels
    ks = jax.random.split(key, 6)
    f32 = jnp.float32
    return {
        "conv1_w": init_gain * jax.random.normal(ks[0], (n, 1, 11, 11), f32),
        "conv1_b": jnp.zeros((n,), f32),
        "bn1_gamma": init_gain * jax.random.normal(ks[1], (n,), f32),
        "bn1_beta": jnp.zeros((n,), f32),
        "bn1_mean": jnp.zeros((n,), f32),
        "bn1_var": jnp.ones((n,), f32),
        "conv2_w": init_gain * jax.random.normal(ks[2], (2 * n, n, 3, 3), f32),
        "conv2_b": jnp.zeros((2 * n,), f32),
        "bn2_gamma": init_gain * jax.random.normal(ks[3], (2 * n,), f32),
        "bn2_beta": jnp.zeros((2 * n,), f32),
        "bn2_mean": jnp.zeros((2 * n,), f32),
        "bn2_var": jnp.ones((2 * n,), f32),
        "fc5_w": init_gain * jax.random.normal(ks[4], (256, 2 * n * 8 * 8), f32),
        "fc5_b": jnp.zeros((256,), f32),
        "fc6_w": init_gain * jax.random.normal(ks[5], (label_size, 256), f32),
        "fc6_b": jnp.zeros((label_size,), f32),
    }


def font_cnn_reference(params, x, eps=1e-5):
    def bn(y, g, b, m, v):
        s = g / jnp.sqrt(v + eps)
        return s[None, :, None, None] * (y - m[None, :, None, None]) + b[None, :, None, None]

    y = lax.conv_general_dilated(x, params["conv1_w"], (2, 2), ((5, 5), (5, 5)),
                                 dimension_numbers=("NCHW", "OIHW", "NCHW"))
    y = y + params["conv1_b"][None, :, None, None]
    y = jnp.maximum(bn(y, params["bn1_gamma"], params["bn1_beta"],
                       params["bn1_mean"], params["bn1_var"]), 0.0)
    y = lax.conv_general_dilated(y, params["conv2_w"], (2, 2), ((1, 1), (1, 1)),
                                 dimension_numbers=("NCHW", "OIHW", "NCHW"))
    y = y + params["conv2_b"][None, :, None, None]
    y = jnp.maximum(bn(y, params["bn2_gamma"], params["bn2_beta"],
                       params["bn2_mean"], params["bn2_var"]), 0.0)
    n_, c_, h_, w_ = y.shape
    y = y.reshape(n_, c_, h_ // 2, 2, w_ // 2, 2).max(axis=(3, 5))
    flat = y.reshape(n_, -1)
    h = jnp.maximum(flat @ params["fc5_w"].T + params["fc5_b"], 0.0)
    return h @ params["fc6_w"].T + params["fc6_b"]


if __name__ == "__main__":
    key = jax.random.PRNGKey(0)
    pkey, xkey = jax.random.split(key)
    params = init_params(pkey, num_channels=4, label_size=16)
    prep = prepare_params(params)        # hoisted out of the per-call hot path
    # Batch 32 and 64x64 input are implied by x.view(32, -1) and fc5's 2n*8*8.
    x = jax.random.normal(xkey, (32, 1, 64, 64), jnp.float32)

    fwd = jax.jit(font_cnn_forward)
    out = jax.block_until_ready(fwd(prep, x))

    ref = font_cnn_reference(params, x)
    rel_err = float(jnp.linalg.norm(out - ref) / (jnp.linalg.norm(ref) + 1e-30))
    assert out.shape == (32, 16)
    assert bool(jnp.all(jnp.isfinite(out)))
    assert rel_err < 2e-2, f"mismatch vs reference: rel_err={rel_err}"
    print("KERNEL_OK")
</pallas_src>

<mosaic_0001>
module attributes {stable_mosaic.version = 11 : i64} {
  func.func @_font_cnn_kernel(%arg0: i32, %arg1: memref<4x256x1408xbf16, #tpu.memory_space<vmem>>, %arg2: memref<1408x128xbf16, #tpu.memory_space<vmem>>, %arg3: memref<2x128xf32, #tpu.memory_space<vmem>>, %arg4: memref<384x128xbf16, #tpu.memory_space<vmem>>, %arg5: memref<2x128xf32, #tpu.memory_space<vmem>>, %arg6: memref<1024x256xbf16, #tpu.memory_space<vmem>>, %arg7: memref<1x256xf32, #tpu.memory_space<vmem>>, %arg8: memref<256x16xbf16, #tpu.memory_space<vmem>>, %arg9: memref<1x16xf32, #tpu.memory_space<vmem>>, %arg10: memref<32x16xf32, #tpu.memory_space<vmem>>, %arg11: memref<256x640xbf16, #tpu.memory_space<vmem>>) attributes {dimension_semantics = [#tpu.dimension_semantics<parallel>], iteration_bounds = array<i64: 1>, scalar_prefetch = 0 : i64, scratch_operands = 1 : i64, tpu.core_type = #tpu.core_type<tc>, window_params = [{transform_indices = @transform_0, window_bounds = array<i64: 4, 256, 1408>}, {pipeline_mode = #tpu.pipeline_mode<synchronous>, transform_indices = @transform_1, window_bounds = array<i64: 1408, 128>}, {pipeline_mode = #tpu.pipeline_mode<synchronous>, transform_indices = @transform_2, window_bounds = array<i64: 2, 128>}, {pipeline_mode = #tpu.pipeline_mode<synchronous>, transform_indices = @transform_3, window_bounds = array<i64: 384, 128>}, {pipeline_mode = #tpu.pipeline_mode<synchronous>, transform_indices = @transform_4, window_bounds = array<i64: 2, 128>}, {pipeline_mode = #tpu.pipeline_mode<synchronous>, transform_indices = @transform_5, window_bounds = array<i64: 1024, 256>}, {pipeline_mode = #tpu.pipeline_mode<synchronous>, transform_indices = @transform_6, window_bounds = array<i64: 1, 256>}, {pipeline_mode = #tpu.pipeline_mode<synchronous>, transform_indices = @transform_7, window_bounds = array<i64: 256, 16>}, {pipeline_mode = #tpu.pipeline_mode<synchronous>, transform_indices = @transform_8, window_bounds = array<i64: 1, 16>}, {transform_indices = @transform_9, window_bounds = array<i64: 32, 16>}]} {
    %c0 = arith.constant 0 : index
    %c0_0 = arith.constant 0 : index
    %0 = vector.load %arg3[%c0, %c0_0] : memref<2x128xf32, #tpu.memory_space<vmem>>, vector<1x128xf32>
    %c1 = arith.constant 1 : index
    %c0_1 = arith.constant 0 : index
    %1 = vector.load %arg3[%c1, %c0_1] : memref<2x128xf32, #tpu.memory_space<vmem>>, vector<1x128xf32>
    %c0_2 = arith.constant 0 : index
    %c0_3 = arith.constant 0 : index
    %2 = vector.load %arg5[%c0_2, %c0_3] : memref<2x128xf32, #tpu.memory_space<vmem>>, vector<1x128xf32>
    %c1_4 = arith.constant 1 : index
    %c0_5 = arith.constant 0 : index
    %3 = vector.load %arg5[%c1_4, %c0_5] : memref<2x128xf32, #tpu.memory_space<vmem>>, vector<1x128xf32>
    %c0_6 = arith.constant 0 : index
    %c0_7 = arith.constant 0 : index
    %4 = vector.load %arg2[%c0_6, %c0_7] : memref<1408x128xbf16, #tpu.memory_space<vmem>>, vector<1408x128xbf16>
    %c0_8 = arith.constant 0 : index
    %c0_9 = arith.constant 0 : index
    %c0_10 = arith.constant 0 : index
    %5 = vector.load %arg1[%c0_8, %c0_9, %c0_10] : memref<4x256x1408xbf16, #tpu.memory_space<vmem>>, vector<1x256x1408xbf16>
    %6 = vector.shape_cast %5 : vector<1x256x1408xbf16> to vector<256x1408xbf16>
    %cst = arith.constant dense<0.000000e+00> : vector<256x128xf32>
    %7 = tpu.matmul %6, %4, %cst {dimension_numbers = #tpu.dot_dimension_numbers<[1], [0], [0], [1], [0, 0, 1, 1], [], []>} : vector<256x1408xbf16>, vector<1408x128xbf16>, vector<256x128xf32> -> vector<256x128xf32>
    %8 = vector.broadcast %0 : vector<1x128xf32> to vector<256x128xf32>
    %9 = arith.mulf %7, %8 : vector<256x128xf32>
    %10 = vector.broadcast %1 : vector<1x128xf32> to vector<256x128xf32>
    %11 = arith.addf %9, %10 : vector<256x128xf32>
    %cst_11 = arith.constant 0.000000e+00 : f32
    %12 = vector.broadcast %cst_11 : f32 to vector<256x128xf32>
    %13 = arith.maximumf %11, %12 : vector<256x128xf32>
    %14 = arith.truncf %13 : vector<256x128xf32> to vector<256x128xbf16>
    %c0_12 = arith.constant 0 : index
    %c128 = arith.constant 128 : index
    %15 = vector.load %arg11[%c0_12, %c128] : memref<256x640xbf16, #tpu.memory_space<vmem>>, vector<256x128xbf16>
    tpu.vector_store %arg11[%c0_12, %c128], %14 {strides = array<i32>} : memref<256x640xbf16, #tpu.memory_space<vmem>>, vector<256x128xbf16>,
    %c1_13 = arith.constant 1 : index
    %c0_14 = arith.constant 0 : index
    %c0_15 = arith.constant 0 : index
    %16 = vector.load %arg1[%c1_13, %c0_14, %c0_15] : memref<4x256x1408xbf16, #tpu.memory_space<vmem>>, vector<1x256x1408xbf16>
    %17 = vector.shape_cast %16 : vector<1x256x1408xbf16> to vector<256x1408xbf16>
    %cst_16 = arith.constant dense<0.000000e+00> : vector<256x128xf32>
    %18 = tpu.matmul %17, %4, %cst_16 {dimension_numbers = #tpu.dot_dimension_numbers<[1], [0], [0], [1], [0, 0, 1, 1], [], []>} : vector<256x1408xbf16>, vector<1408x128xbf16>, vector<256x128xf32> -> vector<256x128xf32>
    %19 = vector.broadcast %0 : vector<1x128xf32> to vector<256x128xf32>
    %20 = arith.mulf %18, %19 : vector<256x128xf32>
    %21 = vector.broadcast %1 : vector<1x128xf32> to vector<256x128xf32>
    %22 = arith.addf %20, %21 : vector<256x128xf32>
    %cst_17 = arith.constant 0.000000e+00 : f32
    %23 = vector.broadcast %cst_17 : f32 to vector<256x128xf32>
    %24 = arith.maximumf %22, %23 : vector<256x128xf32>
    %25 = arith.truncf %24 : vector<256x128xf32> to vector<256x128xbf16>
    %c0_18 = arith.constant 0 : index
    %c256 = arith.constant 256 : index
    %26 = vector.load %arg11[%c0_18, %c256] : memref<256x640xbf16, #tpu.memory_space<vmem>>, vector<256x128xbf16>
    tpu.vector_store %arg11[%c0_18, %c256], %25 {strides = array<i32>} : memref<256x640xbf16, #tpu.memory_space<vmem>>, vector<256x128xbf16>,
    %c2 = arith.constant 2 : index
    %c0_19 = arith.constant 0 : index
    %c0_20 = arith.constant 0 : index
    %27 = vector.load %arg1[%c2, %c0_19, %c0_20] : memref<4x256x1408xbf16, #tpu.memory_space<vmem>>, vector<1x256x1408xbf16>
    %28 = vector.shape_cast %27 : vector<1x256x1408xbf16> to vector<256x1408xbf16>
    %cst_21 = arith.constant dense<0.000000e+00> : vector<256x128xf32>
    %29 = tpu.matmul %28, %4, %cst_21 {dimension_numbers = #tpu.dot_dimension_numbers<[1], [0], [0], [1], [0, 0, 1, 1], [], []>} : vector<256x1408xbf16>, vector<1408x128xbf16>, vector<256x128xf32> -> vector<256x128xf32>
    %30 = vector.broadcast %0 : vector<1x128xf32> to vector<256x128xf32>
    %31 = arith.mulf %29, %30 : vector<256x128xf32>
    %32 = vector.broadcast %1 : vector<1x128xf32> to vector<256x128xf32>
    %33 = arith.addf %31, %32 : vector<256x128xf32>
    %cst_22 = arith.constant 0.000000e+00 : f32
    %34 = vector.broadcast %cst_22 : f32 to vector<256x128xf32>
    %35 = arith.maximumf %33, %34 : vector<256x128xf32>
    %36 = arith.truncf %35 : vector<256x128xf32> to vector<256x128xbf16>
    %c0_23 = arith.constant 0 : index
    %c384 = arith.constant 384 : index
    %37 = vector.load %arg11[%c0_23, %c384] : memref<256x640xbf16, #tpu.memory_space<vmem>>, vector<256x128xbf16>
    tpu.vector_store %arg11[%c0_23, %c384], %36 {strides = array<i32>} : memref<256x640xbf16, #tpu.memory_space<vmem>>, vector<256x128xbf16>,
    %c3 = arith.constant 3 : index
    %c0_24 = arith.constant 0 : index
    %c0_25 = arith.constant 0 : index
    %38 = vector.load %arg1[%c3, %c0_24, %c0_25] : memref<4x256x1408xbf16, #tpu.memory_space<vmem>>, vector<1x256x1408xbf16>
    %39 = vector.shape_cast %38 : vector<1x256x1408xbf16> to vector<256x1408xbf16>
    %cst_26 = arith.constant dense<0.000000e+00> : vector<256x128xf32>
    %40 = tpu.matmul %39, %4, %cst_26 {dimension_numbers = #tpu.dot_dimension_numbers<[1], [0], [0], [1], [0, 0, 1, 1], [], []>} : vector<256x1408xbf16>, vector<1408x128xbf16>, vector<256x128xf32> -> vector<256x128xf32>
    %41 = vector.broadcast %0 : vector<1x128xf32> to vector<256x128xf32>
    %42 = arith.mulf %40, %41 : vector<256x128xf32>
    %43 = vector.broadcast %1 : vector<1x128xf32> to vector<256x128xf32>
    %44 = arith.addf %42, %43 : vector<256x128xf32>
    %cst_27 = arith.constant 0.000000e+00 : f32
    %45 = vector.broadcast %cst_27 : f32 to vector<256x128xf32>
    %46 = arith.maximumf %44, %45 : vector<256x128xf32>
    %47 = arith.truncf %46 : vector<256x128xf32> to vector<256x128xbf16>
    %c0_28 = arith.constant 0 : index
    %c512 = arith.constant 512 : index
    %48 = vector.load %arg11[%c0_28, %c512] : memref<256x640xbf16, #tpu.memory_space<vmem>>, vector<256x128xbf16>
    tpu.vector_store %arg11[%c0_28, %c512], %47 {strides = array<i32>} : memref<256x640xbf16, #tpu.memory_space<vmem>>, vector<256x128xbf16>,
    %49 = tpu.iota {dimensions = array<i32: 0>} : vector<256x128xi32>
    %c32_i32 = arith.constant 32 : i32
    %50 = vector.broadcast %c32_i32 : i32 to vector<256x128xi32>
    %51 = arith.cmpi slt, %49, %50 : vector<256x128xi32>
    %c32_i32_29 = arith.constant 32 : i32
    %52 = tpu.dynamic_rotate %46 by %c32_i32_29 dim 0 : vector<256x128xf32>, i32 -> vector<256x128xf32>
    %cst_30 = arith.constant 0.000000e+00 : f32
    %53 = vector.broadcast %cst_30 : f32 to vector<256x128xf32>
    %54 = arith.select %51, %53, %52 : vector<256x128xi1>, vector<256x128xf32>
    %55 = arith.truncf %54 : vector<256x128xf32> to vector<256x128xbf16>
    %c0_31 = arith.constant 0 : index
    %c0_32 = arith.constant 0 : index
    %56 = vector.load %arg11[%c0_31, %c0_32] : memref<256x640xbf16, #tpu.memory_space<vmem>>, vector<256x128xbf16>
    tpu.vector_store %arg11[%c0_31, %c0_32], %55 {strides = array<i32>} : memref<256x640xbf16, #tpu.memory_space<vmem>>, vector<256x128xbf16>,
    %c0_33 = arith.constant 0 : index
    %c0_34 = arith.constant 0 : index
    %57 = vector.load %arg4[%c0_33, %c0_34] : memref<384x128xbf16, #tpu.memory_space<vmem>>, vector<384x128xbf16>
    %c0_35 = arith.constant 0 : index
    %c0_36 = arith.constant 0 : index
    %58 = vector.load %arg11[%c0_35, %c0_36] : memref<256x640xbf16, #tpu.memory_space<vmem>>, vector<256x384xbf16>
    %cst_37 = arith.constant dense<0.000000e+00> : vector<256x128xf32>
    %59 = tpu.matmul %58, %57, %cst_37 {dimension_numbers = #tpu.dot_dimension_numbers<[1], [0], [0], [1], [0, 0, 1, 1], [], []>} : vector<256x384xbf16>, vector<384x128xbf16>, vector<256x128xf32> -> vector<256x128xf32>
    %c0_38 = arith.constant 0 : index
    %c256_39 = arith.constant 256 : index
    %60 = vector.load %arg11[%c0_38, %c256_39] : memref<256x640xbf16, #tpu.memory_space<vmem>>, vector<256x384xbf16>
    %cst_40 = arith.constant dense<0.000000e+00> : vector<256x128xf32>
    %61 = tpu.matmul %60, %57, %cst_40 {dimension_numbers = #tpu.dot_dimension_numbers<[1], [0], [0], [1], [0, 0, 1, 1], [], []>} : vector<256x384xbf16>, vector<384x128xbf16>, vector<256x128xf32> -> vector<256x128xf32>
    %62 = vector.broadcast %2 : vector<1x128xf32> to vector<256x128xf32>
    %63 = arith.mulf %59, %62 : vector<256x128xf32>
    %64 = vector.broadcast %3 : vector<1x128xf32> to vector<256x128xf32>
    %65 = arith.addf %63, %64 : vector<256x128xf32>
    %cst_41 = arith.constant 0.000000e+00 : f32
    %66 = vector.broadcast %cst_41 : f32 to vector<256x128xf32>
    %67 = arith.maximumf %65, %66 : vector<256x128xf32>
    %68 = vector.broadcast %2 : vector<1x128xf32> to vector<256x128xf32>
    %69 = arith.mulf %61, %68 : vector<256x128xf32>
    %70 = vector.broadcast %3 : vector<1x128xf32> to vector<256x128xf32>
    %71 = arith.addf %69, %70 : vector<256x128xf32>
    %cst_42 = arith.constant 0.000000e+00 : f32
    %72 = vector.broadcast %cst_42 : f32 to vector<256x128xf32>
    %73 = arith.maximumf %71, %72 : vector<256x128xf32>
    %74 = arith.maximumf %67, %73 : vector<256x128xf32>
    %c120_i32 = arith.constant 120 : i32
    %75 = tpu.dynamic_rotate %74 by %c120_i32 dim 1 : vector<256x128xf32>, i32 -> vector<256x128xf32>
    %76 = arith.maximumf %74, %75 : vector<256x128xf32>
    %77 = vector.extract_strided_slice %76 {offsets = [0, 0], sizes = [32, 128], strides = [1, 1]} : vector<256x128xf32> to vector<32x128xf32>
    %78 = vector.extract_strided_slice %76 {offsets = [32, 0], sizes = [32, 128], strides = [1, 1]} : vector<256x128xf32> to vector<32x128xf32>
    %79 = vector.extract_strided_slice %76 {offsets = [64, 0], sizes = [32, 128], strides = [1, 1]} : vector<256x128xf32> to vector<32x128xf32>
    %80 = vector.extract_strided_slice %76 {offsets = [96, 0], sizes = [32, 128], strides = [1, 1]} : vector<256x128xf32> to vector<32x128xf32>
    %81 = vector.extract_strided_slice %76 {offsets = [128, 0], sizes = [32, 128], strides = [1, 1]} : vector<256x128xf32> to vector<32x128xf32>
    %82 = vector.extract_strided_slice %76 {offsets = [160, 0], sizes = [32, 128], strides = [1, 1]} : vector<256x128xf32> to vector<32x128xf32>
    %83 = vector.extract_strided_slice %76 {offsets = [192, 0], sizes = [32, 128], strides = [1, 1]} : vector<256x128xf32> to vector<32x128xf32>
    %84 = vector.extract_strided_slice %76 {offsets = [224, 0], sizes = [32, 128], strides = [1, 1]} : vector<256x128xf32> to vector<32x128xf32>
    %85 = tpu.concatenate %77, %78, %79, %80, %81, %82, %83, %84 in 1 : vector<32x128xf32>, vector<32x128xf32>, vector<32x128xf32>, vector<32x128xf32>, vector<32x128xf32>, vector<32x128xf32>, vector<32x128xf32>, vector<32x128xf32> -> vector<32x1024xf32>
    %86 = arith.truncf %85 : vector<32x1024xf32> to vector<32x1024xbf16>
    %c0_43 = arith.constant 0 : index
    %c0_44 = arith.constant 0 : index
    %87 = vector.load %arg6[%c0_43, %c0_44] : memref<1024x256xbf16, #tpu.memory_space<vmem>>, vector<1024x256xbf16>
    %cst_45 = arith.constant dense<0.000000e+00> : vector<32x256xf32>
    %88 = tpu.matmul %86, %87, %cst_45 {dimension_numbers = #tpu.dot_dimension_numbers<[1], [0], [0], [1], [0, 0, 1, 1], [], []>} : vector<32x1024xbf16>, vector<1024x256xbf16>, vector<32x256xf32> -> vector<32x256xf32>
    %c0_46 = arith.constant 0 : index
    %c0_47 = arith.constant 0 : index
    %89 = vector.load %arg7[%c0_46, %c0_47] : memref<1x256xf32, #tpu.memory_space<vmem>>, vector<1x256xf32>
    %90 = vector.broadcast %89 : vector<1x256xf32> to vector<32x256xf32>
    %91 = arith.addf %88, %90 : vector<32x256xf32>
    %cst_48 = arith.constant 0.000000e+00 : f32
    %92 = vector.broadcast %cst_48 : f32 to vector<32x256xf32>
    %93 = arith.maximumf %91, %92 : vector<32x256xf32>
    %94 = arith.truncf %93 : vector<32x256xf32> to vector<32x256xbf16>
    %c0_49 = arith.constant 0 : index
    %c0_50 = arith.constant 0 : index
    %95 = vector.load %arg8[%c0_49, %c0_50] : memref<256x16xbf16, #tpu.memory_space<vmem>>, vector<256x16xbf16>
    %cst_51 = arith.constant dense<0.000000e+00> : vector<32x16xf32>
    %96 = tpu.matmul %94, %95, %cst_51 {dimension_numbers = #tpu.dot_dimension_numbers<[1], [0], [0], [1], [0, 0, 1, 1], [], []>} : vector<32x256xbf16>, vector<256x16xbf16>, vector<32x16xf32> -> vector<32x16xf32>
    %c0_52 = arith.constant 0 : index
    %c0_53 = arith.constant 0 : index
    %97 = vector.load %arg9[%c0_52, %c0_53] : memref<1x16xf32, #tpu.memory_space<vmem>>, vector<1x16xf32>
    %98 = vector.broadcast %97 : vector<1x16xf32> to vector<32x16xf32>
    %99 = arith.addf %96, %98 : vector<32x16xf32>
    %c0_54 = arith.constant 0 : index
    %c0_55 = arith.constant 0 : index
    %100 = vector.load %arg10[%c0_54, %c0_55] : memref<32x16xf32, #tpu.memory_space<vmem>>, vector<32x16xf32>
    tpu.vector_store %arg10[%c0_54, %c0_55], %99 {strides = array<i32>} : memref<32x16xf32, #tpu.memory_space<vmem>>, vector<32x16xf32>,
    return
  }
  func.func @transform_0(%arg0: i32) -> (i32, i32, i32) {
    %c0_i32 = arith.constant 0 : i32
    %c0_i32_0 = arith.constant 0 : i32
    %c0_i32_1 = arith.constant 0 : i32
    return %c0_i32, %arg0, %c0_i32_0 : i32, i32, i32
  }
  func.func @transform_1(%arg0: i32) -> (i32, i32) {
    %c0_i32 = arith.constant 0 : i32
    %c0_i32_0 = arith.constant 0 : i32
    %c0_i32_1 = arith.constant 0 : i32
    return %c0_i32, %c0_i32_0 : i32, i32
  }
  func.func @transform_2(%arg0: i32) -> (i32, i32) {
    %c0_i32 = arith.constant 0 : i32
    %c0_i32_0 = arith.constant 0 : i32
    %c0_i32_1 = arith.constant 0 : i32
    return %c0_i32, %c0_i32_0 : i32, i32
  }
  func.func @transform_3(%arg0: i32) -> (i32, i32) {
    %c0_i32 = arith.constant 0 : i32
    %c0_i32_0 = arith.constant 0 : i32
    %c0_i32_1 = arith.constant 0 : i32
    return %c0_i32, %c0_i32_0 : i32, i32
  }
  func.func @transform_4(%arg0: i32) -> (i32, i32) {
    %c0_i32 = arith.constant 0 : i32
    %c0_i32_0 = arith.constant 0 : i32
    %c0_i32_1 = arith.constant 0 : i32
    return %c0_i32, %c0_i32_0 : i32, i32
  }
  func.func @transform_5(%arg0: i32) -> (i32, i32) {
    %c0_i32 = arith.constant 0 : i32
    %c0_i32_0 = arith.constant 0 : i32
    %c0_i32_1 = arith.constant 0 : i32
    return %c0_i32, %c0_i32_0 : i32, i32
  }
  func.func @transform_6(%arg0: i32) -> (i32, i32) {
    %c0_i32 = arith.constant 0 : i32
    %c0_i32_0 = arith.constant 0 : i32
    %c0_i32_1 = arith.constant 0 : i32
    return %c0_i32, %c0_i32_0 : i32, i32
  }
  func.func @transform_7(%arg0: i32) -> (i32, i32) {
    %c0_i32 = arith.constant 0 : i32
    %c0_i32_0 = arith.constant 0 : i32
    %c0_i32_1 = arith.constant 0 : i32
    return %c0_i32, %c0_i32_0 : i32, i32
  }
  func.func @transform_8(%arg0: i32) -> (i32, i32) {
    %c0_i32 = arith.constant 0 : i32
    %c0_i32_0 = arith.constant 0 : i32
    %c0_i32_1 = arith.constant 0 : i32
    return %c0_i32, %c0_i32_0 : i32, i32
  }
  func.func @transform_9(%arg0: i32) -> (i32, i32) {
    %c0_i32 = arith.constant 0 : i32
    %c0_i32_0 = arith.constant 0 : i32
    return %arg0, %c0_i32 : i32, i32
  }
}

</mosaic_0001>

<llo_original>
// kernel: font_cnn_forward.1
$region0: #{font_cnn_forward.1}
  #allocation0 [shape = 'u32[]', space=smem, size = 0x4, offset = 0x4, fixed_abs, tag = 'smem constant byte address 0x4 - core index']
  #allocation1 [shape = 'u32[144,128]{1,0:T(1,128)}', space=vmem, size = 0x12000, scoped, tag = 'internal scratch']
  #allocation2 [shape = 'bf16[256,640]{1,0:T(16,128)(2,1)}', space=vmem, size = 0x50000, scoped, tag = 'scratch operand']
  %s0 = inlined_call_operand.vmem [shape: bf16[4,256,1408], index: 0, kind: input, shape index: {}]
  %s1 = inlined_call_operand.vmem [shape: bf16[1408,128], index: 1, kind: input, shape index: {}]
  %s2 = inlined_call_operand.vmem [shape: f32[2,128], index: 2, kind: input, shape index: {}]
  %s3 = inlined_call_operand.vmem [shape: bf16[384,128], index: 3, kind: input, shape index: {}]
  %s4 = inlined_call_operand.vmem [shape: f32[2,128], index: 4, kind: input, shape index: {}]
  %s5 = inlined_call_operand.vmem [shape: bf16[1024,256], index: 5, kind: input, shape index: {}]
  %s6 = inlined_call_operand.vmem [shape: f32[1,256], index: 6, kind: input, shape index: {}]
  %s7 = inlined_call_operand.vmem [shape: bf16[256,16], index: 7, kind: input, shape index: {}]
  %s8 = inlined_call_operand.vmem [shape: f32[1,16], index: 8, kind: input, shape index: {}]
  %s9 = inlined_call_operand.vmem [shape: f32[32,16], index: 9, kind: output, shape index: {}]
  %s10 = sld [smem:[#allocation0]]
  $region46: #{font_cnn_forward.1} parent=0
    _
  %s12 = ssub.s32 1, %s10
  %s13 = scalar_select 0, %s12, %s10
  // Predicated region
  $region2: #{font_cnn_forward.1} parent=0 // pred_check
    _
  $region3: #{font_cnn_forward.1} parent=0 // pred_check_branch
    %15 = sbr.rel (0) target = $region5
  $region4: #{font_cnn_forward.1} parent=0 // pred_region
    _
  $region5: #{font_cnn_forward.1} parent=0 // pred_fallthru
    _
  // Predicated region
  $region6: #{font_cnn_forward.1} parent=0 // pred_check
    _
  $region7: #{font_cnn_forward.1} parent=0 // pred_check_branch
    %17 = sbr.rel (0) target = $region9
  $region8: #{font_cnn_forward.1} parent=0 // pred_region
    _
  $region9: #{font_cnn_forward.1} parent=0 // pred_fallthru
    _
  // Predicated region
  $region10: #{font_cnn_forward.1} parent=0 // pred_check
    _
  $region11: #{font_cnn_forward.1} parent=0 // pred_check_branch
    %19 = sbr.rel (0) target = $region13
  $region12: #{font_cnn_forward.1} parent=0 // pred_region
    _
  $region13: #{font_cnn_forward.1} parent=0 // pred_fallthru
    _
  // Predicated region
  $region14: #{font_cnn_forward.1} parent=0 // pred_check
    _
  $region15: #{font_cnn_forward.1} parent=0 // pred_check_branch
    %21 = sbr.rel (0) target = $region17
  $region16: #{font_cnn_forward.1} parent=0 // pred_region
    _
  $region17: #{font_cnn_forward.1} parent=0 // pred_fallthru
    _
  // Predicated region
  $region18: #{font_cnn_forward.1} parent=0 // pred_check
    _
  $region19: #{font_cnn_forward.1} parent=0 // pred_check_branch
    %23 = sbr.rel (0) target = $region21
  $region20: #{font_cnn_forward.1} parent=0 // pred_region
    _
  $region21: #{font_cnn_forward.1} parent=0 // pred_fallthru
    _
  // Predicated region
  $region22: #{font_cnn_forward.1} parent=0 // pred_check
    _
  $region23: #{font_cnn_forward.1} parent=0 // pred_check_branch
    %25 = sbr.rel (0) target = $region25
  $region24: #{font_cnn_forward.1} parent=0 // pred_region
    _
  $region25: #{font_cnn_forward.1} parent=0 // pred_fallthru
    _
  // Predicated region
  $region26: #{font_cnn_forward.1} parent=0 // pred_check
    _
  $region27: #{font_cnn_forward.1} parent=0 // pred_check_branch
    %27 = sbr.rel (0) target = $region29
  $region28: #{font_cnn_forward.1} parent=0 // pred_region
    _
  $region29: #{font_cnn_forward.1} parent=0 // pred_fallthru
    _
  // Predicated region
  $region30: #{font_cnn_forward.1} parent=0 // pred_check
    _
  $region31: #{font_cnn_forward.1} parent=0 // pred_check_branch
    %29 = sbr.rel (0) target = $region33
  $region32: #{font_cnn_forward.1} parent=0 // pred_region
    _
  $region33: #{font_cnn_forward.1} parent=0 // pred_fallthru
    _
  // Predicated region
  $region34: #{font_cnn_forward.1} parent=0 // pred_check
    _
  $region35: #{font_cnn_forward.1} parent=0 // pred_check_branch
    %31 = sbr.rel (0) target = $region37
  $region36: #{font_cnn_forward.1} parent=0 // pred_region
    _
  $region37: #{font_cnn_forward.1} parent=0 // pred_fallthru
    _
  %v33 = vld [vmem:[%s2] sm:$0x1]
  %v34 = vld [vmem:[%s2 + $0x1] sm:$0x1]
  %v35 = vld [vmem:[%s4] sm:$0x1]
  %v36 = vld [vmem:[%s4 + $0x1] sm:$0x1]
  %v37 = vld [vmem:[%s1] sm:$0xf]
  %v38 = vld [vmem:[%s1 + $0x4] sm:$0xf]
  %v39 = vld [vmem:[%s1 + $0x8] sm:$0xf]
  %v40 = vld [vmem:[%s1 + $0xc] sm:$0xf]
  %v41 = vld [vmem:[%s1 + $0x10] sm:$0xf]
  %v42 = vld [vmem:[%s1 + $0x14] sm:$0xf]
  %v43 = vld [vmem:[%s1 + $0x18] sm:$0xf]
  %v44 = vld [vmem:[%s1 + $0x1c] sm:$0xf]
  %v45 = vld [vmem:[%s1 + $0x20] sm:$0xf]
  %v46 = vld [vmem:[%s1 + $0x24] sm:$0xf]
  %v47 = vld [vmem:[%s1 + $0x28] sm:$0xf]
  %v48 = vld [vmem:[%s1 + $0x2c] sm:$0xf]
  %v49 = vld [vmem:[%s1 + $0x30] sm:$0xf]
  %v50 = vld [vmem:[%s1 + $0x34] sm:$0xf]
  %v51 = vld [vmem:[%s1 + $0x38] sm:$0xf]
  %v52 = vld [vmem:[%s1 + $0x3c] sm:$0xf]
  %v53 = vld [vmem:[%s1 + $0x40] sm:$0xf]
  %v54 = vld [vmem:[%s1 + $0x44] sm:$0xf]
  %v55 = vld [vmem:[%s1 + $0x48] sm:$0xf]
  %v56 = vld [vmem:[%s1 + $0x4c] sm:$0xf]
  %v57 = vld [vmem:[%s1 + $0x50] sm:$0xf]
  %v58 = vld [vmem:[%s1 + $0x54] sm:$0xf]
  %v59 = vld [vmem:[%s1 + $0x58] sm:$0xf]
  %v60 = vld [vmem:[%s1 + $0x5c] sm:$0xf]
  %v61 = vld [vmem:[%s1 + $0x60] sm:$0xf]
  %v62 = vld [vmem:[%s1 + $0x64] sm:$0xf]
  %v63 = vld [vmem:[%s1 + $0x68] sm:$0xf]
  %v64 = vld [vmem:[%s1 + $0x6c] sm:$0xf]
  %v65 = vld [vmem:[%s1 + $0x70] sm:$0xf]
  %v66 = vld [vmem:[%s1 + $0x74] sm:$0xf]
  %v67 = vld [vmem:[%s1 + $0x78] sm:$0xf]
  %v68 = vld [vmem:[%s1 + $0x7c] sm:$0xf]
  %v69 = vld [vmem:[%s1 + $0x80] sm:$0xf]
  %v70 = vld [vmem:[%s1 + $0x84] sm:$0xf]
  %v71 = vld [vmem:[%s1 + $0x88] sm:$0xf]
  %v72 = vld [vmem:[%s1 + $0x8c] sm:$0xf]
  %v73 = vld [vmem:[%s1 + $0x90] sm:$0xf]
  %v74 = vld [vmem:[%s1 + $0x94] sm:$0xf]
  %v75 = vld [vmem:[%s1 + $0x98] sm:$0xf]
  %v76 = vld [vmem:[%s1 + $0x9c] sm:$0xf]
  %v77 = vld [vmem:[%s1 + $0xa0] sm:$0xf]
  %v78 = vld [vmem:[%s1 + $0xa4] sm:$0xf]
  %v79 = vld [vmem:[%s1 + $0xa8] sm:$0xf]
  %v80 = vld [vmem:[%s1 + $0xac] sm:$0xf]
  %v81 = vld [vmem:[%s1 + $0xb0] sm:$0xf]
  %v82 = vld [vmem:[%s1 + $0xb4] sm:$0xf]
  %v83 = vld [vmem:[%s1 + $0xb8] sm:$0xf]
  %v84 = vld [vmem:[%s1 + $0xbc] sm:$0xf]
  %v85 = vld [vmem:[%s1 + $0xc0] sm:$0xf]
  %v86 = vld [vmem:[%s1 + $0xc4] sm:$0xf]
  %v87 = vld [vmem:[%s1 + $0xc8] sm:$0xf]
  %v88 = vld [vmem:[%s1 + $0xcc] sm:$0xf]
  %v89 = vld [vmem:[%s1 + $0xd0] sm:$0xf]
  %v90 = vld [vmem:[%s1 + $0xd4] sm:$0xf]
  %v91 = vld [vmem:[%s1 + $0xd8] sm:$0xf]
  %v92 = vld [vmem:[%s1 + $0xdc] sm:$0xf]
  %v93 = vld [vmem:[%s1 + $0xe0] sm:$0xf]
  %v94 = vld [vmem:[%s1 + $0xe4] sm:$0xf]
  %v95 = vld [vmem:[%s1 + $0xe8] sm:$0xf]
  %v96 = vld [vmem:[%s1 + $0xec] sm:$0xf]
  %v97 = vld [vmem:[%s1 + $0xf0] sm:$0xf]
  %v98 = vld [vmem:[%s1 + $0xf4] sm:$0xf]
  %v99 = vld [vmem:[%s1 + $0xf8] sm:$0xf]
  %v100 = vld [vmem:[%s1 + $0xfc] sm:$0xf]
  %v101 = vld [vmem:[%s1 + $0x100] sm:$0xf]
  %v102 = vld [vmem:[%s1 + $0x104] sm:$0xf]
  %v103 = vld [vmem:[%s1 + $0x108] sm:$0xf]
  %v104 = vld [vmem:[%s1 + $0x10c] sm:$0xf]
  %v105 = vld [vmem:[%s1 + $0x110] sm:$0xf]
  %v106 = vld [vmem:[%s1 + $0x114] sm:$0xf]
  %v107 = vld [vmem:[%s1 + $0x118] sm:$0xf]
  %v108 = vld [vmem:[%s1 + $0x11c] sm:$0xf]
  %v109 = vld [vmem:[%s1 + $0x120] sm:$0xf]
  %v110 = vld [vmem:[%s1 + $0x124] sm:$0xf]
  %v111 = vld [vmem:[%s1 + $0x128] sm:$0xf]
  %v112 = vld [vmem:[%s1 + $0x12c] sm:$0xf]
  %v113 = vld [vmem:[%s1 + $0x130] sm:$0xf]
  %v114 = vld [vmem:[%s1 + $0x134] sm:$0xf]
  %v115 = vld [vmem:[%s1 + $0x138] sm:$0xf]
  %v116 = vld [vmem:[%s1 + $0x13c] sm:$0xf]
  %v117 = vld [vmem:[%s1 + $0x140] sm:$0xf]
  %v118 = vld [vmem:[%s1 + $0x144] sm:$0xf]
  %v119 = vld [vmem:[%s1 + $0x148] sm:$0xf]
  %v120 = vld [vmem:[%s1 + $0x14c] sm:$0xf]
  %v121 = vld [vmem:[%s1 + $0x150] sm:$0xf]
  %v122 = vld [vmem:[%s1 + $0x154] sm:$0xf]
  %v123 = vld [vmem:[%s1 + $0x158] sm:$0xf]
  %v124 = vld [vmem:[%s1 + $0x15c] sm:$0xf]
  %v125 = vld [vmem:[%s1 + $0x160] sm:$0xf]
  %v126 = vld [vmem:[%s1 + $0x164] sm:$0xf]
  %v127 = vld [vmem:[%s1 + $0x168] sm:$0xf]
  %v128 = vld [vmem:[%s1 + $0x16c] sm:$0xf]
  %v129 = vld [vmem:[%s1 + $0x170] sm:$0xf]
  %v130 = vld [vmem:[%s1 + $0x174] sm:$0xf]
  %v131 = vld [vmem:[%s1 + $0x178] sm:$0xf]
  %v132 = vld [vmem:[%s1 + $0x17c] sm:$0xf]
  %v133 = vld [vmem:[%s1 + $0x180] sm:$0xf]
  %v134 = vld [vmem:[%s1 + $0x184] sm:$0xf]
  %v135 = vld [vmem:[%s1 + $0x188] sm:$0xf]
  %v136 = vld [vmem:[%s1 + $0x18c] sm:$0xf]
  %v137 = vld [vmem:[%s1 + $0x190] sm:$0xf]
  %v138 = vld [vmem:[%s1 + $0x194] sm:$0xf]
  %v139 = vld [vmem:[%s1 + $0x198] sm:$0xf]
  %v140 = vld [vmem:[%s1 + $0x19c] sm:$0xf]
  %v141 = vld [vmem:[%s1 + $0x1a0] sm:$0xf]
  %v142 = vld [vmem:[%s1 + $0x1a4] sm:$0xf]
  %v143 = vld [vmem:[%s1 + $0x1a8] sm:$0xf]
  %v144 = vld [vmem:[%s1 + $0x1ac] sm:$0xf]
  %v145 = vld [vmem:[%s1 + $0x1b0] sm:$0xf]
  %v146 = vld [vmem:[%s1 + $0x1b4] sm:$0xf]
  %v147 = vld [vmem:[%s1 + $0x1b8] sm:$0xf]
  %v148 = vld [vmem:[%s1 + $0x1bc] sm:$0xf]
  %v149 = vld [vmem:[%s1 + $0x1c0] sm:$0xf]
  %v150 = vld [vmem:[%s1 + $0x1c4] sm:$0xf]
  %v151 = vld [vmem:[%s1 + $0x1c8] sm:$0xf]
  %v152 = vld [vmem:[%s1 + $0x1cc] sm:$0xf]
  %v153 = vld [vmem:[%s1 + $0x1d0] sm:$0xf]
  %v154 = vld [vmem:[%s1 + $0x1d4] sm:$0xf]
  %v155 = vld [vmem:[%s1 + $0x1d8] sm:$0xf]
  %v156 = vld [vmem:[%s1 + $0x1dc] sm:$0xf]
  %v157 = vld [vmem:[%s1 + $0x1e0] sm:$0xf]
  %v158 = vld [vmem:[%s1 + $0x1e4] sm:$0xf]
  %v159 = vld [vmem:[%s1 + $0x1e8] sm:$0xf]
  %v160 = vld [vmem:[%s1 + $0x1ec] sm:$0xf]
  %v161 = vld [vmem:[%s1 + $0x1f0] sm:$0xf]
  %v162 = vld [vmem:[%s1 + $0x1f4] sm:$0xf]
  %v163 = vld [vmem:[%s1 + $0x1f8] sm:$0xf]
  %v164 = vld [vmem:[%s1 + $0x1fc] sm:$0xf]
  %v165 = vld [vmem:[%s1 + $0x200] sm:$0xf]
  %v166 = vld [vmem:[%s1 + $0x204] sm:$0xf]
  %v167 = vld [vmem:[%s1 + $0x208] sm:$0xf]
  %v168 = vld [vmem:[%s1 + $0x20c] sm:$0xf]
  %v169 = vld [vmem:[%s1 + $0x210] sm:$0xf]
  %v170 = vld [vmem:[%s1 + $0x214] sm:$0xf]
  %v171 = vld [vmem:[%s1 + $0x218] sm:$0xf]
  %v172 = vld [vmem:[%s1 + $0x21c] sm:$0xf]
  %v173 = vld [vmem:[%s1 + $0x220] sm:$0xf]
  %v174 = vld [vmem:[%s1 + $0x224] sm:$0xf]
  %v175 = vld [vmem:[%s1 + $0x228] sm:$0xf]
  %v176 = vld [vmem:[%s1 + $0x22c] sm:$0xf]
  %v177 = vld [vmem:[%s1 + $0x230] sm:$0xf]
  %v178 = vld [vmem:[%s1 + $0x234] sm:$0xf]
  %v179 = vld [vmem:[%s1 + $0x238] sm:$0xf]
  %v180 = vld [vmem:[%s1 + $0x23c] sm:$0xf]
  %v181 = vld [vmem:[%s1 + $0x240] sm:$0xf]
  %v182 = vld [vmem:[%s1 + $0x244] sm:$0xf]
  %v183 = vld [vmem:[%s1 + $0x248] sm:$0xf]
  %v184 = vld [vmem:[%s1 + $0x24c] sm:$0xf]
  %v185 = vld [vmem:[%s1 + $0x250] sm:$0xf]
  %v186 = vld [vmem:[%s1 + $0x254] sm:$0xf]
  %v187 = vld [vmem:[%s1 + $0x258] sm:$0xf]
  %v188 = vld [vmem:[%s1 + $0x25c] sm:$0xf]
  %v189 = vld [vmem:[%s1 + $0x260] sm:$0xf]
  %v190 = vld [vmem:[%s1 + $0x264] sm:$0xf]
  %v191 = vld [vmem:[%s1 + $0x268] sm:$0xf]
  %v192 = vld [vmem:[%s1 + $0x26c] sm:$0xf]
  %v193 = vld [vmem:[%s1 + $0x270] sm:$0xf]
  %v194 = vld [vmem:[%s1 + $0x274] sm:$0xf]
  %v195 = vld [vmem:[%s1 + $0x278] sm:$0xf]
  %v196 = vld [vmem:[%s1 + $0x27c] sm:$0xf]
  %v197 = vld [vmem:[%s1 + $0x280] sm:$0xf]
  %v198 = vld [vmem:[%s1 + $0x284] sm:$0xf]
  %v199 = vld [vmem:[%s1 + $0x288] sm:$0xf]
  %v200 = vld [vmem:[%s1 + $0x28c] sm:$0xf]
  %v201 = vld [vmem:[%s1 + $0x290] sm:$0xf]
  %v202 = vld [vmem:[%s1 + $0x294] sm:$0xf]
  %v203 = vld [vmem:[%s1 + $0x298] sm:$0xf]
  %v204 = vld [vmem:[%s1 + $0x29c] sm:$0xf]
  %v205 = vld [vmem:[%s1 + $0x2a0] sm:$0xf]
  %v206 = vld [vmem:[%s1 + $0x2a4] sm:$0xf]
  %v207 = vld [vmem:[%s1 + $0x2a8] sm:$0xf]
  %v208 = vld [vmem:[%s1 + $0x2ac] sm:$0xf]
  %v209 = vld [vmem:[%s1 + $0x2b0] sm:$0xf]
  %v210 = vld [vmem:[%s1 + $0x2b4] sm:$0xf]
  %v211 = vld [vmem:[%s1 + $0x2b8] sm:$0xf]
  %v212 = vld [vmem:[%s1 + $0x2bc] sm:$0xf]
  %v213 = vld [vmem:[%s0] sm:$0xff]
  %v214 = vld [vmem:[%s0 + $0x8] sm:$0xff]
  %v215 = vld [vmem:[%s0 + $0x10] sm:$0xff]
  %v216 = vld [vmem:[%s0 + $0x18] sm:$0xff]
  %v217 = vld [vmem:[%s0 + $0x20] sm:$0xff]
  %v218 = vld [vmem:[%s0 + $0x28] sm:$0xf]
  %v219 = vld [vmem:[%s0 + $0x2c] sm:$0xff]
  %v220 = vld [vmem:[%s0 + $0x34] sm:$0xff]
  %v221 = vld [vmem:[%s0 + $0x3c] sm:$0xff]
  %v222 = vld [vmem:[%s0 + $0x44] sm:$0xff]
  %v223 = vld [vmem:[%s0 + $0x4c] sm:$0xff]
  %v224 = vld [vmem:[%s0 + $0x54] sm:$0xf]
  %v225 = vld [vmem:[%s0 + $0x58] sm:$0xff]
  %v226 = vld [vmem:[%s0 + $0x60] sm:$0xff]
  %v227 = vld [vmem:[%s0 + $0x68] sm:$0xff]
  %v228 = vld [vmem:[%s0 + $0x70] sm:$0xff]
  %v229 = vld [vmem:[%s0 + $0x78] sm:$0xff]
  %v230 = vld [vmem:[%s0 + $0x80] sm:$0xf]
  %v231 = vld [vmem:[%s0 + $0x84] sm:$0xff]
  %v232 = vld [vmem:[%s0 + $0x8c] sm:$0xff]
  %v233 = vld [vmem:[%s0 + $0x94] sm:$0xff]
  %v234 = vld [vmem:[%s0 + $0x9c] sm:$0xff]
  %v235 = vld [vmem:[%s0 + $0xa4] sm:$0xff]
  %v236 = vld [vmem:[%s0 + $0xac] sm:$0xf]
  %v237 = vld [vmem:[%s0 + $0xb0] sm:$0xff]
  %v238 = vld [vmem:[%s0 + $0xb8] sm:$0xff]
  %v239 = vld [vmem:[%s0 + $0xc0] sm:$0xff]
  %v240 = vld [vmem:[%s0 + $0xc8] sm:$0xff]
  %v241 = vld [vmem:[%s0 + $0xd0] sm:$0xff]
  %v242 = vld [vmem:[%s0 + $0xd8] sm:$0xf]
  %v243 = vld [vmem:[%s0 + $0xdc] sm:$0xff]
  %v244 = vld [vmem:[%s0 + $0xe4] sm:$0xff]
  %v245 = vld [vmem:[%s0 + $0xec] sm:$0xff]
  %v246 = vld [vmem:[%s0 + $0xf4] sm:$0xff]
  %v247 = vld [vmem:[%s0 + $0xfc] sm:$0xff]
  %v248 = vld [vmem:[%s0 + $0x104] sm:$0xf]
  %v249 = vld [vmem:[%s0 + $0x108] sm:$0xff]
  %v250 = vld [vmem:[%s0 + $0x110] sm:$0xff]
  %v251 = vld [vmem:[%s0 + $0x118] sm:$0xff]
  %v252 = vld [vmem:[%s0 + $0x120] sm:$0xff]
  %v253 = vld [vmem:[%s0 + $0x128] sm:$0xff]
  %v254 = vld [vmem:[%s0 + $0x130] sm:$0xf]
  %v255 = vld [vmem:[%s0 + $0x134] sm:$0xff]
  %v256 = vld [vmem:[%s0 + $0x13c] sm:$0xff]
  %v257 = vld [vmem:[%s0 + $0x144] sm:$0xff]
  %v258 = vld [vmem:[%s0 + $0x14c] sm:$0xff]
  %v259 = vld [vmem:[%s0 + $0x154] sm:$0xff]
  %v260 = vld [vmem:[%s0 + $0x15c] sm:$0xf]
  %v261 = vld [vmem:[%s0 + $0x160] sm:$0xff]
  %v262 = vld [vmem:[%s0 + $0x168] sm:$0xff]
  %v263 = vld [vmem:[%s0 + $0x170] sm:$0xff]
  %v264 = vld [vmem:[%s0 + $0x178] sm:$0xff]
  %v265 = vld [vmem:[%s0 + $0x180] sm:$0xff]
  %v266 = vld [vmem:[%s0 + $0x188] sm:$0xf]
  %v267 = vld [vmem:[%s0 + $0x18c] sm:$0xff]
  %v268 = vld [vmem:[%s0 + $0x194] sm:$0xff]
  %v269 = vld [vmem:[%s0 + $0x19c] sm:$0xff]
  %v270 = vld [vmem:[%s0 + $0x1a4] sm:$0xff]
  %v271 = vld [vmem:[%s0 + $0x1ac] sm:$0xff]
  %v272 = vld [vmem:[%s0 + $0x1b4] sm:$0xf]
  %v273 = vld [vmem:[%s0 + $0x1b8] sm:$0xff]
  %v274 = vld [vmem:[%s0 + $0x1c0] sm:$0xff]
  %v275 = vld [vmem:[%s0 + $0x1c8] sm:$0xff]
  %v276 = vld [vmem:[%s0 + $0x1d0] sm:$0xff]
  %v277 = vld [vmem:[%s0 + $0x1d8] sm:$0xff]
  %v278 = vld [vmem:[%s0 + $0x1e0] sm:$0xf]
  %v279 = vld [vmem:[%s0 + $0x1e4] sm:$0xff]
  %v280 = vld [vmem:[%s0 + $0x1ec] sm:$0xff]
  %v281 = vld [vmem:[%s0 + $0x1f4] sm:$0xff]
  %v282 = vld [vmem:[%s0 + $0x1fc] sm:$0xff]
  %v283 = vld [vmem:[%s0 + $0x204] sm:$0xff]
  %v284 = vld [vmem:[%s0 + $0x20c] sm:$0xf]
  %v285 = vld [vmem:[%s0 + $0x210] sm:$0xff]
  %v286 = vld [vmem:[%s0 + $0x218] sm:$0xff]
  %v287 = vld [vmem:[%s0 + $0x220] sm:$0xff]
  %v288 = vld [vmem:[%s0 + $0x228] sm:$0xff]
  %v289 = vld [vmem:[%s0 + $0x230] sm:$0xff]
  %v290 = vld [vmem:[%s0 + $0x238] sm:$0xf]
  %v291 = vld [vmem:[%s0 + $0x23c] sm:$0xff]
  %v292 = vld [vmem:[%s0 + $0x244] sm:$0xff]
  %v293 = vld [vmem:[%s0 + $0x24c] sm:$0xff]
  %v294 = vld [vmem:[%s0 + $0x254] sm:$0xff]
  %v295 = vld [vmem:[%s0 + $0x25c] sm:$0xff]
  %v296 = vld [vmem:[%s0 + $0x264] sm:$0xf]
  %v297 = vld [vmem:[%s0 + $0x268] sm:$0xff]
  %v298 = vld [vmem:[%s0 + $0x270] sm:$0xff]
  %v299 = vld [vmem:[%s0 + $0x278] sm:$0xff]
  %v300 = vld [vmem:[%s0 + $0x280] sm:$0xff]
  %v301 = vld [vmem:[%s0 + $0x288] sm:$0xff]
  %v302 = vld [vmem:[%s0 + $0x290] sm:$0xf]
  %v303 = vld [vmem:[%s0 + $0x294] sm:$0xff]
  %v304 = vld [vmem:[%s0 + $0x29c] sm:$0xff]
  %v305 = vld [vmem:[%s0 + $0x2a4] sm:$0xff]
  %v306 = vld [vmem:[%s0 + $0x2ac] sm:$0xff]
  %v307 = vld [vmem:[%s0 + $0x2b4] sm:$0xff]
  %v308 = vld [vmem:[%s0 + $0x2bc] sm:$0xf]
  %v309 = vld [vmem:[%s0 + $0x2c0] sm:$0xff]
  %v310 = vld [vmem:[%s0 + $0x2c8] sm:$0xff]
  %v311 = vld [vmem:[%s0 + $0x2d0] sm:$0xff]
  %v312 = vld [vmem:[%s0 + $0x2d8] sm:$0xff]
  %v313 = vld [vmem:[%s0 + $0x2e0] sm:$0xff]
  %v314 = vld [vmem:[%s0 + $0x2e8] sm:$0xf]
  %v315 = vld [vmem:[%s0 + $0x2ec] sm:$0xff]
  %v316 = vld [vmem:[%s0 + $0x2f4] sm:$0xff]
  %v317 = vld [vmem:[%s0 + $0x2fc] sm:$0xff]
  %v318 = vld [vmem:[%s0 + $0x304] sm:$0xff]
  %v319 = vld [vmem:[%s0 + $0x30c] sm:$0xff]
  %v320 = vld [vmem:[%s0 + $0x314] sm:$0xf]
  %v321 = vld [vmem:[%s0 + $0x318] sm:$0xff]
  %v322 = vld [vmem:[%s0 + $0x320] sm:$0xff]
  %v323 = vld [vmem:[%s0 + $0x328] sm:$0xff]
  %v324 = vld [vmem:[%s0 + $0x330] sm:$0xff]
  %v325 = vld [vmem:[%s0 + $0x338] sm:$0xff]
  %v326 = vld [vmem:[%s0 + $0x340] sm:$0xf]
  %v327 = vld [vmem:[%s0 + $0x344] sm:$0xff]
  %v328 = vld [vmem:[%s0 + $0x34c] sm:$0xff]
  %v329 = vld [vmem:[%s0 + $0x354] sm:$0xff]
  %v330 = vld [vmem:[%s0 + $0x35c] sm:$0xff]
  %v331 = vld [vmem:[%s0 + $0x364] sm:$0xff]
  %v332 = vld [vmem:[%s0 + $0x36c] sm:$0xf]
  %v333 = vld [vmem:[%s0 + $0x370] sm:$0xff]
  %v334 = vld [vmem:[%s0 + $0x378] sm:$0xff]
  %v335 = vld [vmem:[%s0 + $0x380] sm:$0xff]
  %v336 = vld [vmem:[%s0 + $0x388] sm:$0xff]
  %v337 = vld [vmem:[%s0 + $0x390] sm:$0xff]
  %v338 = vld [vmem:[%s0 + $0x398] sm:$0xf]
  %v339 = vld [vmem:[%s0 + $0x39c] sm:$0xff]
  %v340 = vld [vmem:[%s0 + $0x3a4] sm:$0xff]
  %v341 = vld [vmem:[%s0 + $0x3ac] sm:$0xff]
  %v342 = vld [vmem:[%s0 + $0x3b4] sm:$0xff]
  %v343 = vld [vmem:[%s0 + $0x3bc] sm:$0xff]
  %v344 = vld [vmem:[%s0 + $0x3c4] sm:$0xf]
  %v345 = vld [vmem:[%s0 + $0x3c8] sm:$0xff]
  %v346 = vld [vmem:[%s0 + $0x3d0] sm:$0xff]
  %v347 = vld [vmem:[%s0 + $0x3d8] sm:$0xff]
  %v348 = vld [vmem:[%s0 + $0x3e0] sm:$0xff]
  %v349 = vld [vmem:[%s0 + $0x3e8] sm:$0xff]
  %v350 = vld [vmem:[%s0 + $0x3f0] sm:$0xf]
  %v351 = vld [vmem:[%s0 + $0x3f4] sm:$0xff]
  %v352 = vld [vmem:[%s0 + $0x3fc] sm:$0xff]
  %v353 = vld [vmem:[%s0 + $0x404] sm:$0xff]
  %v354 = vld [vmem:[%s0 + $0x40c] sm:$0xff]
  %v355 = vld [vmem:[%s0 + $0x414] sm:$0xff]
  %v356 = vld [vmem:[%s0 + $0x41c] sm:$0xf]
  %v357 = vld [vmem:[%s0 + $0x420] sm:$0xff]
  %v358 = vld [vmem:[%s0 + $0x428] sm:$0xff]
  %v359 = vld [vmem:[%s0 + $0x430] sm:$0xff]
  %v360 = vld [vmem:[%s0 + $0x438] sm:$0xff]
  %v361 = vld [vmem:[%s0 + $0x440] sm:$0xff]
  %v362 = vld [vmem:[%s0 + $0x448] sm:$0xf]
  %v363 = vld [vmem:[%s0 + $0x44c] sm:$0xff]
  %v364 = vld [vmem:[%s0 + $0x454] sm:$0xff]
  %v365 = vld [vmem:[%s0 + $0x45c] sm:$0xff]
  %v366 = vld [vmem:[%s0 + $0x464] sm:$0xff]
  %v367 = vld [vmem:[%s0 + $0x46c] sm:$0xff]
  %v368 = vld [vmem:[%s0 + $0x474] sm:$0xf]
  %v369 = vld [vmem:[%s0 + $0x478] sm:$0xff]
  %v370 = vld [vmem:[%s0 + $0x480] sm:$0xff]
  %v371 = vld [vmem:[%s0 + $0x488] sm:$0xff]
  %v372 = vld [vmem:[%s0 + $0x490] sm:$0xff]
  %v373 = vld [vmem:[%s0 + $0x498] sm:$0xff]
  %v374 = vld [vmem:[%s0 + $0x4a0] sm:$0xf]
  %v375 = vld [vmem:[%s0 + $0x4a4] sm:$0xff]
  %v376 = vld [vmem:[%s0 + $0x4ac] sm:$0xff]
  %v377 = vld [vmem:[%s0 + $0x4b4] sm:$0xff]
  %v378 = vld [vmem:[%s0 + $0x4bc] sm:$0xff]
  %v379 = vld [vmem:[%s0 + $0x4c4] sm:$0xff]
  %v380 = vld [vmem:[%s0 + $0x4cc] sm:$0xf]
  %v381 = vld [vmem:[%s0 + $0x4d0] sm:$0xff]
  %v382 = vld [vmem:[%s0 + $0x4d8] sm:$0xff]
  %v383 = vld [vmem:[%s0 + $0x4e0] sm:$0xff]
  %v384 = vld [vmem:[%s0 + $0x4e8] sm:$0xff]
  %v385 = vld [vmem:[%s0 + $0x4f0] sm:$0xff]
  %v386 = vld [vmem:[%s0 + $0x4f8] sm:$0xf]
  %v387 = vld [vmem:[%s0 + $0x4fc] sm:$0xff]
  %v388 = vld [vmem:[%s0 + $0x504] sm:$0xff]
  %v389 = vld [vmem:[%s0 + $0x50c] sm:$0xff]
  %v390 = vld [vmem:[%s0 + $0x514] sm:$0xff]
  %v391 = vld [vmem:[%s0 + $0x51c] sm:$0xff]
  %v392 = vld [vmem:[%s0 + $0x524] sm:$0xf]
  %v393 = vld [vmem:[%s0 + $0x528] sm:$0xff]
  %v394 = vld [vmem:[%s0 + $0x530] sm:$0xff]
  %v395 = vld [vmem:[%s0 + $0x538] sm:$0xff]
  %v396 = vld [vmem:[%s0 + $0x540] sm:$0xff]
  %v397 = vld [vmem:[%s0 + $0x548] sm:$0xff]
  %v398 = vld [vmem:[%s0 + $0x550] sm:$0xf]
  %v399 = vld [vmem:[%s0 + $0x554] sm:$0xff]
  %v400 = vld [vmem:[%s0 + $0x55c] sm:$0xff]
  %v401 = vld [vmem:[%s0 + $0x564] sm:$0xff]
  %v402 = vld [vmem:[%s0 + $0x56c] sm:$0xff]
  %v403 = vld [vmem:[%s0 + $0x574] sm:$0xff]
  %v404 = vld [vmem:[%s0 + $0x57c] sm:$0xf]
  %v597 = vunpack.c.l.b16 %v213
  %v598 = vunpack.c.h.b16 %v213
  %v599 = vunpack.c.l.b16 %v214
  %v600 = vunpack.c.h.b16 %v214
  %v601 = vunpack.c.l.b16 %v215
  %v602 = vunpack.c.h.b16 %v215
  %v603 = vunpack.c.l.b16 %v216
  %v604 = vunpack.c.h.b16 %v216
  %v605 = vunpack.c.l.b16 %v217
  %v606 = vunpack.c.h.b16 %v217
  %v607 = vunpack.c.l.b16 %v218
  %v608 = vunpack.c.l.b16 %v219
  %v609 = vunpack.c.h.b16 %v219
  %v610 = vunpack.c.l.b16 %v220
  %v611 = vunpack.c.h.b16 %v220
  %v612 = vunpack.c.l.b16 %v221
  %v613 = vunpack.c.h.b16 %v221
  %v614 = vunpack.c.l.b16 %v222
  %v615 = vunpack.c.h.b16 %v222
  %v616 = vunpack.c.l.b16 %v223
  %v617 = vunpack.c.h.b16 %v223
  %v618 = vunpack.c.l.b16 %v224
  %v619 = vunpack.c.l.b16 %v225
  %v620 = vunpack.c.h.b16 %v225
  %v621 = vunpack.c.l.b16 %v226
  %v622 = vunpack.c.h.b16 %v226
  %v623 = vunpack.c.l.b16 %v227
  %v624 = vunpack.c.h.b16 %v227
  %v625 = vunpack.c.l.b16 %v228
  %v626 = vunpack.c.h.b16 %v228
  %v627 = vunpack.c.l.b16 %v229
  %v628 = vunpack.c.h.b16 %v229
  %v629 = vunpack.c.l.b16 %v230
  %v630 = vunpack.c.l.b16 %v231
  %v631 = vunpack.c.h.b16 %v231
  %v632 = vunpack.c.l.b16 %v232
  %v633 = vunpack.c.h.b16 %v232
  %v634 = vunpack.c.l.b16 %v233
  %v635 = vunpack.c.h.b16 %v233
  %v636 = vunpack.c.l.b16 %v234
  %v637 = vunpack.c.h.b16 %v234
  %v638 = vunpack.c.l.b16 %v235
  %v639 = vunpack.c.h.b16 %v235
  %v640 = vunpack.c.l.b16 %v236
  %v641 = vunpack.c.l.b16 %v237
  %v642 = vunpack.c.h.b16 %v237
  %v643 = vunpack.c.l.b16 %v238
  %v644 = vunpack.c.h.b16 %v238
  %v645 = vunpack.c.l.b16 %v239
  %v646 = vunpack.c.h.b16 %v239
  %v647 = vunpack.c.l.b16 %v240
  %v648 = vunpack.c.h.b16 %v240
  %v649 = vunpack.c.l.b16 %v241
  %v650 = vunpack.c.h.b16 %v241
  %v651 = vunpack.c.l.b16 %v242
  %v652 = vunpack.c.l.b16 %v243
  %v653 = vunpack.c.h.b16 %v243
  %v654 = vunpack.c.l.b16 %v244
  %v655 = vunpack.c.h.b16 %v244
  %v656 = vunpack.c.l.b16 %v245
  %v657 = vunpack.c.h.b16 %v245
  %v658 = vunpack.c.l.b16 %v246
  %v659 = vunpack.c.h.b16 %v246
  %v660 = vunpack.c.l.b16 %v247
  %v661 = vunpack.c.h.b16 %v247
  %v662 = vunpack.c.l.b16 %v248
  %v663 = vunpack.c.l.b16 %v249
  %v664 = vunpack.c.h.b16 %v249
  %v665 = vunpack.c.l.b16 %v250
  %v666 = vunpack.c.h.b16 %v250
  %v667 = vunpack.c.l.b16 %v251
  %v668 = vunpack.c.h.b16 %v251
  %v669 = vunpack.c.l.b16 %v252
  %v670 = vunpack.c.h.b16 %v252
  %v671 = vunpack.c.l.b16 %v253
  %v672 = vunpack.c.h.b16 %v253
  %v673 = vunpack.c.l.b16 %v254
  %v674 = vunpack.c.l.b16 %v255
  %v675 = vunpack.c.h.b16 %v255
  %v676 = vunpack.c.l.b16 %v256
  %v677 = vunpack.c.h.b16 %v256
  %v678 = vunpack.c.l.b16 %v257
  %v679 = vunpack.c.h.b16 %v257
  %v680 = vunpack.c.l.b16 %v258
  %v681 = vunpack.c.h.b16 %v258
  %v682 = vunpack.c.l.b16 %v259
  %v683 = vunpack.c.h.b16 %v259
  %v684 = vunpack.c.l.b16 %v260
  %v685 = vunpack.c.l.b16 %v261
  %v686 = vunpack.c.h.b16 %v261
  %v687 = vunpack.c.l.b16 %v262
  %v688 = vunpack.c.h.b16 %v262
  %v689 = vunpack.c.l.b16 %v263
  %v690 = vunpack.c.h.b16 %v263
  %v691 = vunpack.c.l.b16 %v264
  %v692 = vunpack.c.h.b16 %v264
  %v693 = vunpack.c.l.b16 %v265
  %v694 = vunpack.c.h.b16 %v265
  %v695 = vunpack.c.l.b16 %v266
  %v696 = vunpack.c.l.b16 %v267
  %v697 = vunpack.c.h.b16 %v267
  %v698 = vunpack.c.l.b16 %v268
  %v699 = vunpack.c.h.b16 %v268
  %v700 = vunpack.c.l.b16 %v269
  %v701 = vunpack.c.h.b16 %v269
  %v702 = vunpack.c.l.b16 %v270
  %v703 = vunpack.c.h.b16 %v270
  %v704 = vunpack.c.l.b16 %v271
  %v705 = vunpack.c.h.b16 %v271
  %v706 = vunpack.c.l.b16 %v272
  %v707 = vunpack.c.l.b16 %v273
  %v708 = vunpack.c.h.b16 %v273
  %v709 = vunpack.c.l.b16 %v274
  %v710 = vunpack.c.h.b16 %v274
  %v711 = vunpack.c.l.b16 %v275
  %v712 = vunpack.c.h.b16 %v275
  %v713 = vunpack.c.l.b16 %v276
  %v714 = vunpack.c.h.b16 %v276
  %v715 = vunpack.c.l.b16 %v277
  %v716 = vunpack.c.h.b16 %v277
  %v717 = vunpack.c.l.b16 %v278
  %v718 = vunpack.c.l.b16 %v279
  %v719 = vunpack.c.h.b16 %v279
  %v720 = vunpack.c.l.b16 %v280
  %v721 = vunpack.c.h.b16 %v280
  %v722 = vunpack.c.l.b16 %v281
  %v723 = vunpack.c.h.b16 %v281
  %v724 = vunpack.c.l.b16 %v282
  %v725 = vunpack.c.h.b16 %v282
  %v726 = vunpack.c.l.b16 %v283
  %v727 = vunpack.c.h.b16 %v283
  %v728 = vunpack.c.l.b16 %v284
  %v729 = vunpack.c.l.b16 %v285
  %v730 = vunpack.c.h.b16 %v285
  %v731 = vunpack.c.l.b16 %v286
  %v732 = vunpack.c.h.b16 %v286
  %v733 = vunpack.c.l.b16 %v287
  %v734 = vunpack.c.h.b16 %v287
  %v735 = vunpack.c.l.b16 %v288
  %v736 = vunpack.c.h.b16 %v288
  %v737 = vunpack.c.l.b16 %v289
  %v738 = vunpack.c.h.b16 %v289
  %v739 = vunpack.c.l.b16 %v290
  %v740 = vunpack.c.l.b16 %v291
  %v741 = vunpack.c.h.b16 %v291
  %v742 = vunpack.c.l.b16 %v292
  %v743 = vunpack.c.h.b16 %v292
  %v744 = vunpack.c.l.b16 %v293
  %v745 = vunpack.c.h.b16 %v293
  %v746 = vunpack.c.l.b16 %v294
  %v747 = vunpack.c.h.b16 %v294
  %v748 = vunpack.c.l.b16 %v295
  %v749 = vunpack.c.h.b16 %v295
  %v750 = vunpack.c.l.b16 %v296
  %v751 = vunpack.c.l.b16 %v297
  %v752 = vunpack.c.h.b16 %v297
  %v753 = vunpack.c.l.b16 %v298
  %v754 = vunpack.c.h.b16 %v298
  %v755 = vunpack.c.l.b16 %v299
  %v756 = vunpack.c.h.b16 %v299
  %v757 = vunpack.c.l.b16 %v300
  %v758 = vunpack.c.h.b16 %v300
  %v759 = vunpack.c.l.b16 %v301
  %v760 = vunpack.c.h.b16 %v301
  %v761 = vunpack.c.l.b16 %v302
  %v762 = vunpack.c.l.b16 %v303
  %v763 = vunpack.c.h.b16 %v303
  %v764 = vunpack.c.l.b16 %v304
  %v765 = vunpack.c.h.b16 %v304
  %v766 = vunpack.c.l.b16 %v305
  %v767 = vunpack.c.h.b16 %v305
  %v768 = vunpack.c.l.b16 %v306
  %v769 = vunpack.c.h.b16 %v306
  %v770 = vunpack.c.l.b16 %v307
  %v771 = vunpack.c.h.b16 %v307
  %v772 = vunpack.c.l.b16 %v308
  %v773 = vunpack.c.l.b16 %v309
  %v774 = vunpack.c.h.b16 %v309
  %v775 = vunpack.c.l.b16 %v310
  %v776 = vunpack.c.h.b16 %v310
  %v777 = vunpack.c.l.b16 %v311
  %v778 = vunpack.c.h.b16 %v311
  %v779 = vunpack.c.l.b16 %v312
  %v780 = vunpack.c.h.b16 %v312
  %v781 = vunpack.c.l.b16 %v313
  %v782 = vunpack.c.h.b16 %v313
  %v783 = vunpack.c.l.b16 %v314
  %v784 = vunpack.c.l.b16 %v315
  %v785 = vunpack.c.h.b16 %v315
  %v786 = vunpack.c.l.b16 %v316
  %v787 = vunpack.c.h.b16 %v316
  %v788 = vunpack.c.l.b16 %v317
  %v789 = vunpack.c.h.b16 %v317
  %v790 = vunpack.c.l.b16 %v318
  %v791 = vunpack.c.h.b16 %v318
  %v792 = vunpack.c.l.b16 %v319
  %v793 = vunpack.c.h.b16 %v319
  %v794 = vunpack.c.l.b16 %v320
  %v795 = vunpack.c.l.b16 %v321
  %v796 = vunpack.c.h.b16 %v321
  %v797 = vunpack.c.l.b16 %v322
  %v798 = vunpack.c.h.b16 %v322
  %v799 = vunpack.c.l.b16 %v323
  %v800 = vunpack.c.h.b16 %v323
  %v801 = vunpack.c.l.b16 %v324
  %v802 = vunpack.c.h.b16 %v324
  %v803 = vunpack.c.l.b16 %v325
  %v804 = vunpack.c.h.b16 %v325
  %v805 = vunpack.c.l.b16 %v326
  %v806 = vunpack.c.l.b16 %v327
  %v807 = vunpack.c.h.b16 %v327
  %v808 = vunpack.c.l.b16 %v328
  %v809 = vunpack.c.h.b16 %v328
  %v810 = vunpack.c.l.b16 %v329
  %v811 = vunpack.c.h.b16 %v329
  %v812 = vunpack.c.l.b16 %v330
  %v813 = vunpack.c.h.b16 %v330
  %v814 = vunpack.c.l.b16 %v331
  %v815 = vunpack.c.h.b16 %v331
  %v816 = vunpack.c.l.b16 %v332
  %v817 = vunpack.c.l.b16 %v333
  %v818 = vunpack.c.h.b16 %v333
  %v819 = vunpack.c.l.b16 %v334
  %v820 = vunpack.c.h.b16 %v334
  %v821 = vunpack.c.l.b16 %v335
  %v822 = vunpack.c.h.b16 %v335
  %v823 = vunpack.c.l.b16 %v336
  %v824 = vunpack.c.h.b16 %v336
  %v825 = vunpack.c.l.b16 %v337
  %v826 = vunpack.c.h.b16 %v337
  %v827 = vunpack.c.l.b16 %v338
  %v828 = vunpack.c.l.b16 %v339
  %v829 = vunpack.c.h.b16 %v339
  %v830 = vunpack.c.l.b16 %v340
  %v831 = vunpack.c.h.b16 %v340
  %v832 = vunpack.c.l.b16 %v341
  %v833 = vunpack.c.h.b16 %v341
  %v834 = vunpack.c.l.b16 %v342
  %v835 = vunpack.c.h.b16 %v342
  %v836 = vunpack.c.l.b16 %v343
  %v837 = vunpack.c.h.b16 %v343
  %v838 = vunpack.c.l.b16 %v344
  %v839 = vunpack.c.l.b16 %v345
  %v840 = vunpack.c.h.b16 %v345
  %v841 = vunpack.c.l.b16 %v346
  %v842 = vunpack.c.h.b16 %v346
  %v843 = vunpack.c.l.b16 %v347
  %v844 = vunpack.c.h.b16 %v347
  %v845 = vunpack.c.l.b16 %v348
  %v846 = vunpack.c.h.b16 %v348
  %v847 = vunpack.c.l.b16 %v349
  %v848 = vunpack.c.h.b16 %v349
  %v849 = vunpack.c.l.b16 %v350
  %v850 = vunpack.c.l.b16 %v351
  %v851 = vunpack.c.h.b16 %v351
  %v852 = vunpack.c.l.b16 %v352
  %v853 = vunpack.c.h.b16 %v352
  %v854 = vunpack.c.l.b16 %v353
  %v855 = vunpack.c.h.b16 %v353
  %v856 = vunpack.c.l.b16 %v354
  %v857 = vunpack.c.h.b16 %v354
  %v858 = vunpack.c.l.b16 %v355
  %v859 = vunpack.c.h.b16 %v355
  %v860 = vunpack.c.l.b16 %v356
  %v861 = vunpack.c.l.b16 %v357
  %v862 = vunpack.c.h.b16 %v357
  %v863 = vunpack.c.l.b16 %v358
  %v864 = vunpack.c.h.b16 %v358
  %v865 = vunpack.c.l.b16 %v359
  %v866 = vunpack.c.h.b16 %v359
  %v867 = vunpack.c.l.b16 %v360
  %v868 = vunpack.c.h.b16 %v360
  %v869 = vunpack.c.l.b16 %v361
  %v870 = vunpack.c.h.b16 %v361
  %v871 = vunpack.c.l.b16 %v362
  %v872 = vunpack.c.l.b16 %v363
  %v873 = vunpack.c.h.b16 %v363
  %v874 = vunpack.c.l.b16 %v364
  %v875 = vunpack.c.h.b16 %v364
  %v876 = vunpack.c.l.b16 %v365
  %v877 = vunpack.c.h.b16 %v365
  %v878 = vunpack.c.l.b16 %v366
  %v879 = vunpack.c.h.b16 %v366
  %v880 = vunpack.c.l.b16 %v367
  %v881 = vunpack.c.h.b16 %v367
  %v882 = vunpack.c.l.b16 %v368
  %v883 = vunpack.c.l.b16 %v369
  %v884 = vunpack.c.h.b16 %v369
  %v885 = vunpack.c.l.b16 %v370
  %v886 = vunpack.c.h.b16 %v370
  %v887 = vunpack.c.l.b16 %v371
  %v888 = vunpack.c.h.b16 %v371
  %v889 = vunpack.c.l.b16 %v372
  %v890 = vunpack.c.h.b16 %v372
  %v891 = vunpack.c.l.b16 %v373
  %v892 = vunpack.c.h.b16 %v373
  %v893 = vunpack.c.l.b16 %v374
  %v894 = vunpack.c.l.b16 %v375
  %v895 = vunpack.c.h.b16 %v375
  %v896 = vunpack.c.l.b16 %v376
  %v897 = vunpack.c.h.b16 %v376
  %v898 = vunpack.c.l.b16 %v377
  %v899 = vunpack.c.h.b16 %v377
  %v900 = vunpack.c.l.b16 %v378
  %v901 = vunpack.c.h.b16 %v378
  %v902 = vunpack.c.l.b16 %v379
  %v903 = vunpack.c.h.b16 %v379
  %v904 = vunpack.c.l.b16 %v380
  %v905 = vunpack.c.l.b16 %v381
  %v906 = vunpack.c.h.b16 %v381
  %v907 = vunpack.c.l.b16 %v382
  %v908 = vunpack.c.h.b16 %v382
  %v909 = vunpack.c.l.b16 %v383
  %v910 = vunpack.c.h.b16 %v383
  %v911 = vunpack.c.l.b16 %v384
  %v912 = vunpack.c.h.b16 %v384
  %v913 = vunpack.c.l.b16 %v385
  %v914 = vunpack.c.h.b16 %v385
  %v915 = vunpack.c.l.b16 %v386
  %v916 = vunpack.c.l.b16 %v387
  %v917 = vunpack.c.h.b16 %v387
  %v918 = vunpack.c.l.b16 %v388
  %v919 = vunpack.c.h.b16 %v388
  %v920 = vunpack.c.l.b16 %v389
  %v921 = vunpack.c.h.b16 %v389
  %v922 = vunpack.c.l.b16 %v390
  %v923 = vunpack.c.h.b16 %v390
  %v924 = vunpack.c.l.b16 %v391
  %v925 = vunpack.c.h.b16 %v391
  %v926 = vunpack.c.l.b16 %v392
  %v927 = vunpack.c.l.b16 %v393
  %v928 = vunpack.c.h.b16 %v393
  %v929 = vunpack.c.l.b16 %v394
  %v930 = vunpack.c.h.b16 %v394
  %v931 = vunpack.c.l.b16 %v395
  %v932 = vunpack.c.h.b16 %v395
  %v933 = vunpack.c.l.b16 %v396
  %v934 = vunpack.c.h.b16 %v396
  %v935 = vunpack.c.l.b16 %v397
  %v936 = vunpack.c.h.b16 %v397
  %v937 = vunpack.c.l.b16 %v398
  %v938 = vunpack.c.l.b16 %v399
  %v939 = vunpack.c.h.b16 %v399
  %v940 = vunpack.c.l.b16 %v400
  %v941 = vunpack.c.h.b16 %v400
  %v942 = vunpack.c.l.b16 %v401
  %v943 = vunpack.c.h.b16 %v401
  %v944 = vunpack.c.l.b16 %v402
  %v945 = vunpack.c.h.b16 %v402
  %v946 = vunpack.c.l.b16 %v403
  %v947 = vunpack.c.h.b16 %v403
  %v948 = vunpack.c.l.b16 %v404
  %v949 = vpack.c.b16 %v608, %v597
  %v950 = vpack.c.b16 %v609, %v598
  %v951 = vpack.c.b16 %v610, %v599
  %v952 = vpack.c.b16 %v611, %v600
  %v953 = vpack.c.b16 %v612, %v601
  %v954 = vpack.c.b16 %v613, %v602
  %v955 = vpack.c.b16 %v614, %v603
  %v956 = vpack.c.b16 %v615, %v604
  %v957 = vpack.c.b16 %v616, %v605
  %v958 = vpack.c.b16 %v617, %v606
  %v959 = vpack.c.b16 %v618, %v607
  %v960 = vpack.c.b16 %v630, %v619
  %v961 = vpack.c.b16 %v631, %v620
  %v962 = vpack.c.b16 %v632, %v621
  %v963 = vpack.c.b16 %v633, %v622
  %v964 = vpack.c.b16 %v634, %v623
  %v965 = vpack.c.b16 %v635, %v624
  %v966 = vpack.c.b16 %v636, %v625
  %v967 = vpack.c.b16 %v637, %v626
  %v968 = vpack.c.b16 %v638, %v627
  %v969 = vpack.c.b16 %v639, %v628
  %v970 = vpack.c.b16 %v640, %v629
  %v971 = vpack.c.b16 %v652, %v641
  %v972 = vpack.c.b16 %v653, %v642
  %v973 = vpack.c.b16 %v654, %v643
  %v974 = vpack.c.b16 %v655, %v644
  %v975 = vpack.c.b16 %v656, %v645
  %v976 = vpack.c.b16 %v657, %v646
  %v977 = vpack.c.b16 %v658, %v647
  %v978 = vpack.c.b16 %v659, %v648
  %v979 = vpack.c.b16 %v660, %v649
  %v980 = vpack.c.b16 %v661, %v650
  %v981 = vpack.c.b16 %v662, %v651
  %v982 = vpack.c.b16 %v674, %v663
  %v983 = vpack.c.b16 %v675, %v664
  %v984 = vpack.c.b16 %v676, %v665
  %v985 = vpack.c.b16 %v677, %v666
  %v986 = vpack.c.b16 %v678, %v667
  %v987 = vpack.c.b16 %v679, %v668
  %v988 = vpack.c.b16 %v680, %v669
  %v989 = vpack.c.b16 %v681, %v670
  %v990 = vpack.c.b16 %v682, %v671
  %v991 = vpack.c.b16 %v683, %v672
  %v992 = vpack.c.b16 %v684, %v673
  %v993 = vpack.c.b16 %v696, %v685
  %v994 = vpack.c.b16 %v697, %v686
  %v995 = vpack.c.b16 %v698, %v687
  %v996 = vpack.c.b16 %v699, %v688
  %v997 = vpack.c.b16 %v700, %v689
  %v998 = vpack.c.b16 %v701, %v690
  %v999 = vpack.c.b16 %v702, %v691
  %v1000 = vpack.c.b16 %v703, %v692
  %v1001 = vpack.c.b16 %v704, %v693
  %v1002 = vpack.c.b16 %v705, %v694
  %v1003 = vpack.c.b16 %v706, %v695
  %v1004 = vpack.c.b16 %v718, %v707
  %v1005 = vpack.c.b16 %v719, %v708
  %v1006 = vpack.c.b16 %v720, %v709
  %v1007 = vpack.c.b16 %v721, %v710
  %v1008 = vpack.c.b16 %v722, %v711
  %v1009 = vpack.c.b16 %v723, %v712
  %v1010 = vpack.c.b16 %v724, %v713
  %v1011 = vpack.c.b16 %v725, %v714
  %v1012 = vpack.c.b16 %v726, %v715
  %v1013 = vpack.c.b16 %v727, %v716
  %v1014 = vpack.c.b16 %v728, %v717
  %v1015 = vpack.c.b16 %v740, %v729
  %v1016 = vpack.c.b16 %v741, %v730
  %v1017 = vpack.c.b16 %v742, %v731
  %v1018 = vpack.c.b16 %v743, %v732
  %v1019 = vpack.c.b16 %v744, %v733
  %v1020 = vpack.c.b16 %v745, %v734
  %v1021 = vpack.c.b16 %v746, %v735
  %v1022 = vpack.c.b16 %v747, %v736
  %v1023 = vpack.c.b16 %v748, %v737
  %v1024 = vpack.c.b16 %v749, %v738
  %v1025 = vpack.c.b16 %v750, %v739
  %v1026 = vpack.c.b16 %v762, %v751
  %v1027 = vpack.c.b16 %v763, %v752
  %v1028 = vpack.c.b16 %v764, %v753
  %v1029 = vpack.c.b16 %v765, %v754
  %v1030 = vpack.c.b16 %v766, %v755
  %v1031 = vpack.c.b16 %v767, %v756
  %v1032 = vpack.c.b16 %v768, %v757
  %v1033 = vpack.c.b16 %v769, %v758
  %v1034 = vpack.c.b16 %v770, %v759
  %v1035 = vpack.c.b16 %v771, %v760
  %v1036 = vpack.c.b16 %v772, %v761
  %v1037 = vpack.c.b16 %v784, %v773
  %v1038 = vpack.c.b16 %v785, %v774
  %v1039 = vpack.c.b16 %v786, %v775
  %v1040 = vpack.c.b16 %v787, %v776
  %v1041 = vpack.c.b16 %v788, %v777
  %v1042 = vpack.c.b16 %v789, %v778
  %v1043 = vpack.c.b16 %v790, %v779
  %v1044 = vpack.c.b16 %v791, %v780
  %v1045 = vpack.c.b16 %v792, %v781
  %v1046 = vpack.c.b16 %v793, %v782
  %v1047 = vpack.c.b16 %v794, %v783
  %v1048 = vpack.c.b16 %v806, %v795
  %v1049 = vpack.c.b16 %v807, %v796
  %v1050 = vpack.c.b16 %v808, %v797
  %v1051 = vpack.c.b16 %v809, %v798
  %v1052 = vpack.c.b16 %v810, %v799
  %v1053 = vpack.c.b16 %v811, %v800
  %v1054 = vpack.c.b16 %v812, %v801
  %v1055 = vpack.c.b16 %v813, %v802
  %v1056 = vpack.c.b16 %v814, %v803
  %v1057 = vpack.c.b16 %v815, %v804
  %v1058 = vpack.c.b16 %v816, %v805
  %v1059 = vpack.c.b16 %v828, %v817
  %v1060 = vpack.c.b16 %v829, %v818
  %v1061 = vpack.c.b16 %v830, %v819
  %v1062 = vpack.c.b16 %v831, %v820
  %v1063 = vpack.c.b16 %v832, %v821
  %v1064 = vpack.c.b16 %v833, %v822
  %v1065 = vpack.c.b16 %v834, %v823
  %v1066 = vpack.c.b16 %v835, %v824
  %v1067 = vpack.c.b16 %v836, %v825
  %v1068 = vpack.c.b16 %v837, %v826
  %v1069 = vpack.c.b16 %v838, %v827
  %v1070 = vpack.c.b16 %v850, %v839
  %v1071 = vpack.c.b16 %v851, %v840
  %v1072 = vpack.c.b16 %v852, %v841
  %v1073 = vpack.c.b16 %v853, %v842
  %v1074 = vpack.c.b16 %v854, %v843
  %v1075 = vpack.c.b16 %v855, %v844
  %v1076 = vpack.c.b16 %v856, %v845
  %v1077 = vpack.c.b16 %v857, %v846
  %v1078 = vpack.c.b16 %v858, %v847
  %v1079 = vpack.c.b16 %v859, %v848
  %v1080 = vpack.c.b16 %v860, %v849
  %v1081 = vpack.c.b16 %v872, %v861
  %v1082 = vpack.c.b16 %v873, %v862
  %v1083 = vpack.c.b16 %v874, %v863
  %v1084 = vpack.c.b16 %v875, %v864
  %v1085 = vpack.c.b16 %v876, %v865
  %v1086 = vpack.c.b16 %v877, %v866
  %v1087 = vpack.c.b16 %v878, %v867
  %v1088 = vpack.c.b16 %v879, %v868
  %v1089 = vpack.c.b16 %v880, %v869
  %v1090 = vpack.c.b16 %v881, %v870
  %v1091 = vpack.c.b16 %v882, %v871
  %v1092 = vpack.c.b16 %v894, %v883
  %v1093 = vpack.c.b16 %v895, %v884
  %v1094 = vpack.c.b16 %v896, %v885
  %v1095 = vpack.c.b16 %v897, %v886
  %v1096 = vpack.c.b16 %v898, %v887
  %v1097 = vpack.c.b16 %v899, %v888
  %v1098 = vpack.c.b16 %v900, %v889
  %v1099 = vpack.c.b16 %v901, %v890
  %v1100 = vpack.c.b16 %v902, %v891
  %v1101 = vpack.c.b16 %v903, %v892
  %v1102 = vpack.c.b16 %v904, %v893
  %v1103 = vpack.c.b16 %v916, %v905
  %v1104 = vpack.c.b16 %v917, %v906
  %v1105 = vpack.c.b16 %v918, %v907
  %v1106 = vpack.c.b16 %v919, %v908
  %v1107 = vpack.c.b16 %v920, %v909
  %v1108 = vpack.c.b16 %v921, %v910
  %v1109 = vpack.c.b16 %v922, %v911
  %v1110 = vpack.c.b16 %v923, %v912
  %v1111 = vpack.c.b16 %v924, %v913
  %v1112 = vpack.c.b16 %v925, %v914
  %v1113 = vpack.c.b16 %v926, %v915
  %v1114 = vpack.c.b16 %v938, %v927
  %v1115 = vpack.c.b16 %v939, %v928
  %v1116 = vpack.c.b16 %v940, %v929
  %v1117 = vpack.c.b16 %v941, %v930
  %v1118 = vpack.c.b16 %v942, %v931
  %v1119 = vpack.c.b16 %v943, %v932
  %v1120 = vpack.c.b16 %v944, %v933
  %v1121 = vpack.c.b16 %v945, %v934
  %v1122 = vpack.c.b16 %v946, %v935
  %v1123 = vpack.c.b16 %v947, %v936
  %v1124 = vpack.c.b16 %v948, %v937
  %v1477 = vunpack.c.l.b16 %v37
  %v1478 = vunpack.c.l.b16 %v38
  %v1479 = vunpack.c.l.b16 %v39
  %v1480 = vunpack.c.l.b16 %v40
  %v1481 = vunpack.c.l.b16 %v41
  %v1482 = vunpack.c.l.b16 %v42
  %v1483 = vunpack.c.l.b16 %v43
  %v1484 = vunpack.c.l.b16 %v44
  %v1485 = vunpack.c.l.b16 %v45
  %v1486 = vunpack.c.l.b16 %v46
  %v1487 = vunpack.c.l.b16 %v47
  %v1488 = vunpack.c.l.b16 %v48
  %v1489 = vunpack.c.l.b16 %v49
  %v1490 = vunpack.c.l.b16 %v50
  %v1491 = vunpack.c.l.b16 %v51
  %v1492 = vunpack.c.l.b16 %v52
  %v1493 = vunpack.c.l.b16 %v53
  %v1494 = vunpack.c.l.b16 %v54
  %v1495 = vunpack.c.l.b16 %v55
  %v1496 = vunpack.c.l.b16 %v56
  %v1497 = vunpack.c.l.b16 %v57
  %v1498 = vunpack.c.l.b16 %v58
  %v1499 = vunpack.c.l.b16 %v59
  %v1500 = vunpack.c.l.b16 %v60
  %v1501 = vunpack.c.l.b16 %v61
  %v1502 = vunpack.c.l.b16 %v62
  %v1503 = vunpack.c.l.b16 %v63
  %v1504 = vunpack.c.l.b16 %v64
  %v1505 = vunpack.c.l.b16 %v65
  %v1506 = vunpack.c.l.b16 %v66
  %v1507 = vunpack.c.l.b16 %v67
  %v1508 = vunpack.c.l.b16 %v68
  %v1509 = vunpack.c.l.b16 %v69
  %v1510 = vunpack.c.l.b16 %v70
  %v1511 = vunpack.c.l.b16 %v71
  %v1512 = vunpack.c.l.b16 %v72
  %v1513 = vunpack.c.l.b16 %v73
  %v1514 = vunpack.c.l.b16 %v74
  %v1515 = vunpack.c.l.b16 %v75
  %v1516 = vunpack.c.l.b16 %v76
  %v1517 = vunpack.c.l.b16 %v77
  %v1518 = vunpack.c.l.b16 %v78
  %v1519 = vunpack.c.l.b16 %v79
  %v1520 = vunpack.c.l.b16 %v80
  %v1521 = vunpack.c.l.b16 %v81
  %v1522 = vunpack.c.l.b16 %v82
  %v1523 = vunpack.c.l.b16 %v83
  %v1524 = vunpack.c.l.b16 %v84
  %v1525 = vunpack.c.l.b16 %v85
  %v1526 = vunpack.c.l.b16 %v86
  %v1527 = vunpack.c.l.b16 %v87
  %v1528 = vunpack.c.l.b16 %v88
  %v1529 = vunpack.c.l.b16 %v89
  %v1530 = vunpack.c.l.b16 %v90
  %v1531 = vunpack.c.l.b16 %v91
  %v1532 = vunpack.c.l.b16 %v92
  %v1533 = vunpack.c.l.b16 %v93
  %v1534 = vunpack.c.l.b16 %v94
  %v1535 = vunpack.c.l.b16 %v95
  %v1536 = vunpack.c.l.b16 %v96
  %v1537 = vunpack.c.l.b16 %v97
  %v1538 = vunpack.c.l.b16 %v98
  %v1539 = vunpack.c.l.b16 %v99
  %v1540 = vunpack.c.l.b16 %v100
  %v1541 = vunpack.c.l.b16 %v101
  %v1542 = vunpack.c.l.b16 %v102
  %v1543 = vunpack.c.l.b16 %v103
  %v1544 = vunpack.c.l.b16 %v104
  %v1545 = vunpack.c.l.b16 %v105
  %v1546 = vunpack.c.l.b16 %v106
  %v1547 = vunpack.c.l.b16 %v107
  %v1548 = vunpack.c.l.b16 %v108
  %v1549 = vunpack.c.l.b16 %v109
  %v1550 = vunpack.c.l.b16 %v110
  %v1551 = vunpack.c.l.b16 %v111
  %v1552 = vunpack.c.l.b16 %v112
  %v1553 = vunpack.c.l.b16 %v113
  %v1554 = vunpack.c.l.b16 %v114
  %v1555 = vunpack.c.l.b16 %v115
  %v1556 = vunpack.c.l.b16 %v116
  %v1557 = vunpack.c.l.b16 %v117
  %v1558 = vunpack.c.l.b16 %v118
  %v1559 = vunpack.c.l.b16 %v119
  %v1560 = vunpack.c.l.b16 %v120
  %v1561 = vunpack.c.l.b16 %v121
  %v1562 = vunpack.c.l.b16 %v122
  %v1563 = vunpack.c.l.b16 %v123
  %v1564 = vunpack.c.l.b16 %v124
  %v1565 = vunpack.c.l.b16 %v125
  %v1566 = vunpack.c.l.b16 %v126
  %v1567 = vunpack.c.l.b16 %v127
  %v1568 = vunpack.c.l.b16 %v128
  %v1569 = vunpack.c.l.b16 %v129
  %v1570 = vunpack.c.l.b16 %v130
  %v1571 = vunpack.c.l.b16 %v131
  %v1572 = vunpack.c.l.b16 %v132
  %v1573 = vunpack.c.l.b16 %v133
  %v1574 = vunpack.c.l.b16 %v134
  %v1575 = vunpack.c.l.b16 %v135
  %v1576 = vunpack.c.l.b16 %v136
  %v1577 = vunpack.c.l.b16 %v137
  %v1578 = vunpack.c.l.b16 %v138
  %v1579 = vunpack.c.l.b16 %v139
  %v1580 = vunpack.c.l.b16 %v140
  %v1581 = vunpack.c.l.b16 %v141
  %v1582 = vunpack.c.l.b16 %v142
  %v1583 = vunpack.c.l.b16 %v143
  %v1584 = vunpack.c.l.b16 %v144
  %v1585 = vunpack.c.l.b16 %v145
  %v1586 = vunpack.c.l.b16 %v146
  %v1587 = vunpack.c.l.b16 %v147
  %v1588 = vunpack.c.l.b16 %v148
  %v1589 = vunpack.c.l.b16 %v149
  %v1590 = vunpack.c.l.b16 %v150
  %v1591 = vunpack.c.l.b16 %v151
  %v1592 = vunpack.c.l.b16 %v152
  %v1593 = vunpack.c.l.b16 %v153
  %v1594 = vunpack.c.l.b16 %v154
  %v1595 = vunpack.c.l.b16 %v155
  %v1596 = vunpack.c.l.b16 %v156
  %v1597 = vunpack.c.l.b16 %v157
  %v1598 = vunpack.c.l.b16 %v158
  %v1599 = vunpack.c.l.b16 %v159
  %v1600 = vunpack.c.l.b16 %v160
  %v1601 = vunpack.c.l.b16 %v161
  %v1602 = vunpack.c.l.b16 %v162
  %v1603 = vunpack.c.l.b16 %v163
  %v1604 = vunpack.c.l.b16 %v164
  %v1605 = vunpack.c.l.b16 %v165
  %v1606 = vunpack.c.l.b16 %v166
  %v1607 = vunpack.c.l.b16 %v167
  %v1608 = vunpack.c.l.b16 %v168
  %v1609 = vunpack.c.l.b16 %v169
  %v1610 = vunpack.c.l.b16 %v170
  %v1611 = vunpack.c.l.b16 %v171
  %v1612 = vunpack.c.l.b16 %v172
  %v1613 = vunpack.c.l.b16 %v173
  %v1614 = vunpack.c.l.b16 %v174
  %v1615 = vunpack.c.l.b16 %v175
  %v1616 = vunpack.c.l.b16 %v176
  %v1617 = vunpack.c.l.b16 %v177
  %v1618 = vunpack.c.l.b16 %v178
  %v1619 = vunpack.c.l.b16 %v179
  %v1620 = vunpack.c.l.b16 %v180
  %v1621 = vunpack.c.l.b16 %v181
  %v1622 = vunpack.c.l.b16 %v182
  %v1623 = vunpack.c.l.b16 %v183
  %v1624 = vunpack.c.l.b16 %v184
  %v1625 = vunpack.c.l.b16 %v185
  %v1626 = vunpack.c.l.b16 %v186
  %v1627 = vunpack.c.l.b16 %v187
  %v1628 = vunpack.c.l.b16 %v188
  %v1629 = vunpack.c.l.b16 %v189
  %v1630 = vunpack.c.l.b16 %v190
  %v1631 = vunpack.c.l.b16 %v191
  %v1632 = vunpack.c.l.b16 %v192
  %v1633 = vunpack.c.l.b16 %v193
  %v1634 = vunpack.c.l.b16 %v194
  %v1635 = vunpack.c.l.b16 %v195
  %v1636 = vunpack.c.l.b16 %v196
  %v1637 = vunpack.c.l.b16 %v197
  %v1638 = vunpack.c.l.b16 %v198
  %v1639 = vunpack.c.l.b16 %v199
  %v1640 = vunpack.c.l.b16 %v200
  %v1641 = vunpack.c.l.b16 %v201
  %v1642 = vunpack.c.l.b16 %v202
  %v1643 = vunpack.c.l.b16 %v203
  %v1644 = vunpack.c.l.b16 %v204
  %v1645 = vunpack.c.l.b16 %v205
  %v1646 = vunpack.c.l.b16 %v206
  %v1647 = vunpack.c.l.b16 %v207
  %v1648 = vunpack.c.l.b16 %v208
  %v1649 = vunpack.c.l.b16 %v209
  %v1650 = vunpack.c.l.b16 %v210
  %v1651 = vunpack.c.l.b16 %v211
  %v1652 = vunpack.c.l.b16 %v212
  %v1653 = vpack.c.b16 %v1478, %v1477
  %v1654 = vpack.c.b16 %v1480, %v1479
  %v1655 = vpack.c.b16 %v1482, %v1481
  %v1656 = vpack.c.b16 %v1484, %v1483
  %v1657 = vpack.c.b16 %v1486, %v1485
  %v1658 = vpack.c.b16 %v1488, %v1487
  %v1659 = vpack.c.b16 %v1490, %v1489
  %v1660 = vpack.c.b16 %v1492, %v1491
  %v1661 = vpack.c.b16 %v1494, %v1493
  %v1662 = vpack.c.b16 %v1496, %v1495
  %v1663 = vpack.c.b16 %v1498, %v1497
  %v1664 = vpack.c.b16 %v1500, %v1499
  %v1665 = vpack.c.b16 %v1502, %v1501
  %v1666 = vpack.c.b16 %v1504, %v1503
  %v1667 = vpack.c.b16 %v1506, %v1505
  %v1668 = vpack.c.b16 %v1508, %v1507
  %v1669 = vpack.c.b16 %v1510, %v1509
  %v1670 = vpack.c.b16 %v1512, %v1511
  %v1671 = vpack.c.b16 %v1514, %v1513
  %v1672 = vpack.c.b16 %v1516, %v1515
  %v1673 = vpack.c.b16 %v1518, %v1517
  %v1674 = vpack.c.b16 %v1520, %v1519
  %v1675 = vpack.c.b16 %v1522, %v1521
  %v1676 = vpack.c.b16 %v1524, %v1523
  %v1677 = vpack.c.b16 %v1526, %v1525
  %v1678 = vpack.c.b16 %v1528, %v1527
  %v1679 = vpack.c.b16 %v1530, %v1529
  %v1680 = vpack.c.b16 %v1532, %v1531
  %v1681 = vpack.c.b16 %v1534, %v1533
  %v1682 = vpack.c.b16 %v1536, %v1535
  %v1683 = vpack.c.b16 %v1538, %v1537
  %v1684 = vpack.c.b16 %v1540, %v1539
  %v1685 = vpack.c.b16 %v1542, %v1541
  %v1686 = vpack.c.b16 %v1544, %v1543
  %v1687 = vpack.c.b16 %v1546, %v1545
  %v1688 = vpack.c.b16 %v1548, %v1547
  %v1689 = vpack.c.b16 %v1550, %v1549
  %v1690 = vpack.c.b16 %v1552, %v1551
  %v1691 = vpack.c.b16 %v1554, %v1553
  %v1692 = vpack.c.b16 %v1556, %v1555
  %v1693 = vpack.c.b16 %v1558, %v1557
  %v1694 = vpack.c.b16 %v1560, %v1559
  %v1695 = vpack.c.b16 %v1562, %v1561
  %v1696 = vpack.c.b16 %v1564, %v1563
  %v1697 = vpack.c.b16 %v1566, %v1565
  %v1698 = vpack.c.b16 %v1568, %v1567
  %v1699 = vpack.c.b16 %v1570, %v1569
  %v1700 = vpack.c.b16 %v1572, %v1571
  %v1701 = vpack.c.b16 %v1574, %v1573
  %v1702 = vpack.c.b16 %v1576, %v1575
  %v1703 = vpack.c.b16 %v1578, %v1577
  %v1704 = vpack.c.b16 %v1580, %v1579
  %v1705 = vpack.c.b16 %v1582, %v1581
  %v1706 = vpack.c.b16 %v1584, %v1583
  %v1707 = vpack.c.b16 %v1586, %v1585
  %v1708 = vpack.c.b16 %v1588, %v1587
  %v1709 = vpack.c.b16 %v1590, %v1589
  %v1710 = vpack.c.b16 %v1592, %v1591
  %v1711 = vpack.c.b16 %v1594, %v1593
  %v1712 = vpack.c.b16 %v1596, %v1595
  %v1713 = vpack.c.b16 %v1598, %v1597
  %v1714 = vpack.c.b16 %v1600, %v1599
  %v1715 = vpack.c.b16 %v1602, %v1601
  %v1716 = vpack.c.b16 %v1604, %v1603
  %v1717 = vpack.c.b16 %v1606, %v1605
  %v1718 = vpack.c.b16 %v1608, %v1607
  %v1719 = vpack.c.b16 %v1610, %v1609
  %v1720 = vpack.c.b16 %v1612, %v1611
  %v1721 = vpack.c.b16 %v1614, %v1613
  %v1722 = vpack.c.b16 %v1616, %v1615
  %v1723 = vpack.c.b16 %v1618, %v1617
  %v1724 = vpack.c.b16 %v1620, %v1619
  %v1725 = vpack.c.b16 %v1622, %v1621
  %v1726 = vpack.c.b16 %v1624, %v1623
  %v1727 = vpack.c.b16 %v1626, %v1625
  %v1728 = vpack.c.b16 %v1628, %v1627
  %v1729 = vpack.c.b16 %v1630, %v1629
  %v1730 = vpack.c.b16 %v1632, %v1631
  %v1731 = vpack.c.b16 %v1634, %v1633
  %v1732 = vpack.c.b16 %v1636, %v1635
  %v1733 = vpack.c.b16 %v1638, %v1637
  %v1734 = vpack.c.b16 %v1640, %v1639
  %v1735 = vpack.c.b16 %v1642, %v1641
  %v1736 = vpack.c.b16 %v1644, %v1643
  %v1737 = vpack.c.b16 %v1646, %v1645
  %v1738 = vpack.c.b16 %v1648, %v1647
  %v1739 = vpack.c.b16 %v1650, %v1649
  %v1740 = vpack.c.b16 %v1652, %v1651
  %1829 = vmatprep.subr.bf16.mxu0 0
  %1830 = vmatpush1.bf16.msra.mxu0 %v1653
  %1831 = vmatprep.subr.bf16.mxu0 0
  %1832 = vmatpush1.bf16.msra.mxu0 %v1654
  %1833 = vmatprep.subr.bf16.mxu0 0
  %1834 = vmatpush1.bf16.msra.mxu0 %v1655
  %1835 = vmatprep.subr.bf16.mxu0 0
  %1836 = vmatpush1.bf16.msra.mxu0 %v1656
  %1837 = vmatprep.subr.bf16.mxu0 0
  %1838 = vmatpush1.bf16.msra.mxu0 %v1657
  %1839 = vmatprep.subr.bf16.mxu0 0
  %1840 = vmatpush1.bf16.msra.mxu0 %v1658
  %1841 = vmatprep.subr.bf16.mxu0 0
  %1842 = vmatpush1.bf16.msra.mxu0 %v1659
  %1843 = vmatprep.subr.bf16.mxu0 0
  %1844 = vmatpush1.bf16.msra.mxu0 %v1660
  %1845 = vmatprep.subr.bf16.mxu0 0
  %1846 = vmatpush1.bf16.msra.mxu0 %v1661
  %1847 = vmatprep.subr.bf16.mxu0 0
  %1848 = vmatpush1.bf16.msra.mxu0 %v1662
  %1849 = vmatprep.subr.bf16.mxu0 0
  %1850 = vmatpush1.bf16.msra.mxu0 %v1663
  %1851 = vmatprep.subr.bf16.mxu0 0
  %1852 = vmatpush1.bf16.msra.mxu0 %v1664
  %1853 = vmatprep.subr.bf16.mxu0 0
  %1854 = vmatpush1.bf16.msra.mxu0 %v1665
  %1855 = vmatprep.subr.bf16.mxu0 0
  %1856 = vmatpush1.bf16.msra.mxu0 %v1666
  %1857 = vmatprep.subr.bf16.mxu0 0
  %1858 = vmatpush1.bf16.msra.mxu0 %v1667
  %1859 = vmatprep.subr.bf16.mxu0 0
  %1860 = vmatpush1.bf16.msra.mxu0 %v1668
  %1861 = vmatprep.mubr.bf16.mxu0 %v950
  %1862 = vmatmul.mubr.bf16.gmra.mrb[0].mxu0 %v949
  %v1863 = vpop.f32.mrb[0].mxu0
  %v1864 = vadd.f32 0.0, %v1863
  %v1865 = vpop.f32.mrb[0].mxu0
  %v1866 = vpop.f32.mrb[0].mxu0
  %v1867 = vadd.f32 0.0, %v1866
  %v1868 = vpop.f32.mrb[0].mxu0
  %1869 = vmatprep.mubr.bf16.mxu0 %v961
  %1870 = vmatmul.mubr.bf16.gmra.mrb[0].mxu0 %v960
  %v1871 = vpop.f32.mrb[0].mxu0
  %v1872 = vadd.f32 0.0, %v1871
  %v1873 = vpop.f32.mrb[0].mxu0
  %v1874 = vpop.f32.mrb[0].mxu0
  %v1875 = vadd.f32 0.0, %v1874
  %v1876 = vpop.f32.mrb[0].mxu0
  %1877 = vmatprep.mubr.bf16.mxu0 %v972
  %1878 = vmatmul.mubr.bf16.gmra.mrb[0].mxu0 %v971
  %v1879 = vpop.f32.mrb[0].mxu0
  %v1880 = vadd.f32 0.0, %v1879
  %v1881 = vpop.f32.mrb[0].mxu0
  %v1882 = vpop.f32.mrb[0].mxu0
  %v1883 = vadd.f32 0.0, %v1882
  %v1884 = vpop.f32.mrb[0].mxu0
  %1885 = vmatprep.mubr.bf16.mxu0 %v983
  %1886 = vmatmul.mubr.bf16.gmra.mrb[0].mxu0 %v982
  %v1887 = vpop.f32.mrb[0].mxu0
  %v1888 = vadd.f32 0.0, %v1887
  %v1889 = vpop.f32.mrb[0].mxu0
  %v1890 = vpop.f32.mrb[0].mxu0
  %v1891 = vadd.f32 0.0, %v1890
  %v1892 = vpop.f32.mrb[0].mxu0
  %1893 = vmatprep.mubr.bf16.mxu0 %v994
  %1894 = vmatmul.mubr.bf16.gmra.mrb[0].mxu0 %v993
  %v1895 = vpop.f32.mrb[0].mxu0
  %v1896 = vadd.f32 0.0, %v1895
  %v1897 = vpop.f32.mrb[0].mxu0
  %v1898 = vpop.f32.mrb[0].mxu0
  %v1899 = vadd.f32 0.0, %v1898
  %v1900 = vpop.f32.mrb[0].mxu0
  %1901 = vmatprep.mubr.bf16.mxu0 %v1005
  %1902 = vmatmul.mubr.bf16.gmra.mrb[0].mxu0 %v1004
  %v1903 = vpop.f32.mrb[0].mxu0
  %v1904 = vadd.f32 0.0, %v1903
  %v1905 = vpop.f32.mrb[0].mxu0
  %v1906 = vpop.f32.mrb[0].mxu0
  %v1907 = vadd.f32 0.0, %v1906
  %v1908 = vpop.f32.mrb[0].mxu0
  %1909 = vmatprep.mubr.bf16.mxu0 %v1016
  %1910 = vmatmul.mubr.bf16.gmra.mrb[0].mxu0 %v1015
  %v1911 = vpop.f32.mrb[0].mxu0
  %v1912 = vadd.f32 0.0, %v1911
  %v1913 = vpop.f32.mrb[0].mxu0
  %v1914 = vpop.f32.mrb[0].mxu0
  %v1915 = vadd.f32 0.0, %v1914
  %v1916 = vpop.f32.mrb[0].mxu0
  %1917 = vmatprep.mubr.bf16.mxu0 %v1027
  %1918 = vmatmul.mubr.bf16.gmra.mrb[0].mxu0 %v1026
  %v1919 = vpop.f32.mrb[0].mxu0
  %v1920 = vadd.f32 0.0, %v1919
  %v1921 = vpop.f32.mrb[0].mxu0
  %v1922 = vpop.f32.mrb[0].mxu0
  %v1923 = vadd.f32 0.0, %v1922
  %v1924 = vpop.f32.mrb[0].mxu0
  %1925 = vmatprep.mubr.bf16.mxu0 %v1038
  %1926 = vmatmul.mubr.bf16.gmra.mrb[0].mxu0 %v1037
  %v1927 = vpop.f32.mrb[0].mxu0
  %v1928 = vadd.f32 0.0, %v1927
  %v1929 = vpop.f32.mrb[0].mxu0
  %v1930 = vpop.f32.mrb[0].mxu0
  %v1931 = vadd.f32 0.0, %v1930
  %v1932 = vpop.f32.mrb[0].mxu0
  %1933 = vmatprep.mubr.bf16.mxu0 %v1049
  %1934 = vmatmul.mubr.bf16.gmra.mrb[0].mxu0 %v1048
  %v1935 = vpop.f32.mrb[0].mxu0
  %v1936 = vadd.f32 0.0, %v1935
  %v1937 = vpop.f32.mrb[0].mxu0
  %v1938 = vpop.f32.mrb[0].mxu0
  %v1939 = vadd.f32 0.0, %v1938
  %v1940 = vpop.f32.mrb[0].mxu0
  %1941 = vmatprep.mubr.bf16.mxu0 %v1060
  %1942 = vmatmul.mubr.bf16.gmra.mrb[0].mxu0 %v1059
  %v1943 = vpop.f32.mrb[0].mxu0
  %v1944 = vadd.f32 0.0, %v1943
  %v1945 = vpop.f32.mrb[0].mxu0
  %v1946 = vpop.f32.mrb[0].mxu0
  %v1947 = vadd.f32 0.0, %v1946
  %v1948 = vpop.f32.mrb[0].mxu0
  %1949 = vmatprep.mubr.bf16.mxu0 %v1071
  %1950 = vmatmul.mubr.bf16.gmra.mrb[0].mxu0 %v1070
  %v1951 = vpop.f32.mrb[0].mxu0
  %v1952 = vadd.f32 0.0, %v1951
  %v1953 = vpop.f32.mrb[0].mxu0
  %v1954 = vpop.f32.mrb[0].mxu0
  %v1955 = vadd.f32 0.0, %v1954
  %v1956 = vpop.f32.mrb[0].mxu0
  %1957 = vmatprep.mubr.bf16.mxu0 %v1082
  %1958 = vmatmul.mubr.bf16.gmra.mrb[0].mxu0 %v1081
  %v1959 = vpop.f32.mrb[0].mxu0
  %v1960 = vadd.f32 0.0, %v1959
  %v1961 = vpop.f32.mrb[0].mxu0
  %v1962 = vpop.f32.mrb[0].mxu0
  %v1963 = vadd.f32 0.0, %v1962
  %v1964 = vpop.f32.mrb[0].mxu0
  %1965 = vmatprep.mubr.bf16.mxu0 %v1093
  %1966 = vmatmul.mubr.bf16.gmra.mrb[0].mxu0 %v1092
  %v1967 = vpop.f32.mrb[0].mxu0
  %v1968 = vadd.f32 0.0, %v1967
  %v1969 = vpop.f32.mrb[0].mxu0
  %v1970 = vpop.f32.mrb[0].mxu0
  %v1971 = vadd.f32 0.0, %v1970
  %v1972 = vpop.f32.mrb[0].mxu0
  %1973 = vmatprep.mubr.bf16.mxu0 %v1104
  %1974 = vmatmul.mubr.bf16.gmra.mrb[0].mxu0 %v1103
  %v1975 = vpop.f32.mrb[0].mxu0
  %v1976 = vadd.f32 0.0, %v1975
  %v1977 = vpop.f32.mrb[0].mxu0
  %v1978 = vpop.f32.mrb[0].mxu0
  %v1979 = vadd.f32 0.0, %v1978
  %v1980 = vpop.f32.mrb[0].mxu0
  %1981 = vmatprep.mubr.bf16.mxu0 %v1115
  %1982 = vmatmul.mubr.bf16.gmra.mrb[0].mxu0 %v1114
  %v1983 = vpop.f32.mrb[0].mxu0
  %v1984 = vadd.f32 0.0, %v1983
  %v1985 = vpop.f32.mrb[0].mxu0
  %v1986 = vpop.f32.mrb[0].mxu0
  %v1987 = vadd.f32 0.0, %v1986
  %v1988 = vpop.f32.mrb[0].mxu0
  %1989 = vdwg.mxu0
  %1990 = vmatprep.subr.bf16.mxu0 0
  %1991 = vmatpush1.bf16.msra.mxu0 %v1669
  %1992 = vmatprep.subr.bf16.mxu0 0
  %1993 = vmatpush1.bf16.msra.mxu0 %v1670
  %1994 = vmatprep.subr.bf16.mxu0 0
  %1995 = vmatpush1.bf16.msra.mxu0 %v1671
  %1996 = vmatprep.subr.bf16.mxu0 0
  %1997 = vmatpush1.bf16.msra.mxu0 %v1672
  %1998 = vmatprep.subr.bf16.mxu0 0
  %1999 = vmatpush1.bf16.msra.mxu0 %v1673
  %2000 = vmatprep.subr.bf16.mxu0 0
  %2001 = vmatpush1.bf16.msra.mxu0 %v1674
  %2002 = vmatprep.subr.bf16.mxu0 0
  %2003 = vmatpush1.bf16.msra.mxu0 %v1675
  %2004 = vmatprep.subr.bf16.mxu0 0
  %2005 = vmatpush1.bf16.msra.mxu0 %v1676
  %2006 = vmatprep.subr.bf16.mxu0 0
  %2007 = vmatpush1.bf16.msra.mxu0 %v1677
  %2008 = vmatprep.subr.bf16.mxu0 0
  %2009 = vmatpush1.bf16.msra.mxu0 %v1678
  %2010 = vmatprep.subr.bf16.mxu0 0
  %2011 = vmatpush1.bf16.msra.mxu0 %v1679
  %2012 = vmatprep.subr.bf16.mxu0 0
  %2013 = vmatpush1.bf16.msra.mxu0 %v1680
  %2014 = vmatprep.subr.bf16.mxu0 0
  %2015 = vmatpush1.bf16.msra.mxu0 %v1681
  %2016 = vmatprep.subr.bf16.mxu0 0
  %2017 = vmatpush1.bf16.msra.mxu0 %v1682
  %2018 = vmatprep.subr.bf16.mxu0 0
  %2019 = vmatpush1.bf16.msra.mxu0 %v1683
  %2020 = vmatprep.subr.bf16.mxu0 0
  %2021 = vmatpush1.bf16.msra.mxu0 %v1684
  %2022 = vmatprep.mubr.bf16.mxu0 %v952
  %2023 = vmatmul.mubr.bf16.gmra.mrb[0].mxu0 %v951
  %v2024 = vpop.f32.mrb[0].mxu0
  %v2025 = vadd.f32 %v1864, %v2024
  %v2026 = vpop.f32.mrb[0].mxu0
  %v2027 = vpop.f32.mrb[0].mxu0
  %v2028 = vadd.f32 %v1867, %v2027
  %v2029 = vpop.f32.mrb[0].mxu0
  %2030 = vmatprep.mubr.bf16.mxu0 %v963
  %2031 = vmatmul.mubr.bf16.gmra.mrb[0].mxu0 %v962
  %v2032 = vpop.f32.mrb[0].mxu0
  %v2033 = vadd.f32 %v1872, %v2032
  %v2034 = vpop.f32.mrb[0].mxu0
  %v2035 = vpop.f32.mrb[0].mxu0
  %v2036 = vadd.f32 %v1875, %v2035
  %v2037 = vpop.f32.mrb[0].mxu0
  %2038 = vmatprep.mubr.bf16.mxu0 %v974
  %2039 = vmatmul.mubr.bf16.gmra.mrb[0].mxu0 %v973
  %v2040 = vpop.f32.mrb[0].mxu0
  %v2041 = vadd.f32 %v1880, %v2040
  %v2042 = vpop.f32.mrb[0].mxu0
  %v2043 = vpop.f32.mrb[0].mxu0
  %v2044 = vadd.f32 %v1883, %v2043
  %v2045 = vpop.f32.mrb[0].mxu0
  %2046 = vmatprep.mubr.bf16.mxu0 %v985
  %2047 = vmatmul.mubr.bf16.gmra.mrb[0].mxu0 %v984
  %v2048 = vpop.f32.mrb[0].mxu0
  %v2049 = vadd.f32 %v1888, %v2048
  %v2050 = vpop.f32.mrb[0].mxu0
  %v2051 = vpop.f32.mrb[0].mxu0
  %v2052 = vadd.f32 %v1891, %v2051
  %v2053 = vpop.f32.mrb[0].mxu0
  %2054 = vmatprep.mubr.bf16.mxu0 %v996
  %2055 = vmatmul.mubr.bf16.gmra.mrb[0].mxu0 %v995
  %v2056 = vpop.f32.mrb[0].mxu0
  %v2057 = vadd.f32 %v1896, %v2056
  %v2058 = vpop.f32.mrb[0].mxu0
  %v2059 = vpop.f32.mrb[0].mxu0
  %v2060 = vadd.f32 %v1899, %v2059
  %v2061 = vpop.f32.mrb[0].mxu0
  %2062 = vmatprep.mubr.bf16.mxu0 %v1007
  %2063 = vmatmul.mubr.bf16.gmra.mrb[0].mxu0 %v1006
  %v2064 = vpop.f32.mrb[0].mxu0
  %v2065 = vadd.f32 %v1904, %v2064
  %v2066 = vpop.f32.mrb[0].mxu0
  %v2067 = vpop.f32.mrb[0].mxu0
  %v2068 = vadd.f32 %v1907, %v2067
  %v2069 = vpop.f32.mrb[0].mxu0
  %2070 = vmatprep.mubr.bf16.mxu0 %v1018
  %2071 = vmatmul.mubr.bf16.gmra.mrb[0].mxu0 %v1017
  %v2072 = vpop.f32.mrb[0].mxu0
  %v2073 = vadd.f32 %v1912, %v2072
  %v2074 = vpop.f32.mrb[0].mxu0
  %v2075 = vpop.f32.mrb[0].mxu0
  %v2076 = vadd.f32 %v1915, %v2075
  %v2077 = vpop.f32.mrb[0].mxu0
  %2078 = vmatprep.mubr.bf16.mxu0 %v1029
  %2079 = vmatmul.mubr.bf16.gmra.mrb[0].mxu0 %v1028
  %v2080 = vpop.f32.mrb[0].mxu0
  %v2081 = vadd.f32 %v1920, %v2080
  %v2082 = vpop.f32.mrb[0].mxu0
  %v2083 = vpop.f32.mrb[0].mxu0
  %v2084 = vadd.f32 %v1923, %v2083
  %v2085 = vpop.f32.mrb[0].mxu0
  %2086 = vmatprep.mubr.bf16.mxu0 %v1040
  %2087 = vmatmul.mubr.bf16.gmra.mrb[0].mxu0 %v1039
  %v2088 = vpop.f32.mrb[0].mxu0
  %v2089 = vadd.f32 %v1928, %v2088
  %v2090 = vpop.f32.mrb[0].mxu0
  %v2091 = vpop.f32.mrb[0].mxu0
  %v2092 = vadd.f32 %v1931, %v2091
  %v2093 = vpop.f32.mrb[0].mxu0
  %2094 = vmatprep.mubr.bf16.mxu0 %v1051
  %2095 = vmatmul.mubr.bf16.gmra.mrb[0].mxu0 %v1050
  %v2096 = vpop.f32.mrb[0].mxu0
  %v2097 = vadd.f32 %v1936, %v2096
  %v2098 = vpop.f32.mrb[0].mxu0
  %v2099 = vpop.f32.mrb[0].mxu0
  %v2100 = vadd.f32 %v1939, %v2099
  %v2101 = vpop.f32.mrb[0].mxu0
  %2102 = vmatprep.mubr.bf16.mxu0 %v1062
  %2103 = vmatmul.mubr.bf16.gmra.mrb[0].mxu0 %v1061
  %v2104 = vpop.f32.mrb[0].mxu0
  %v2105 = vadd.f32 %v1944, %v2104
  %v2106 = vpop.f32.mrb[0].mxu0
  %v2107 = vpop.f32.mrb[0].mxu0
  %v2108 = vadd.f32 %v1947, %v2107
  %v2109 = vpop.f32.mrb[0].mxu0
  %2110 = vmatprep.mubr.bf16.mxu0 %v1073
  %2111 = vmatmul.mubr.bf16.gmra.mrb[0].mxu0 %v1072
  %v2112 = vpop.f32.mrb[0].mxu0
  %v2113 = vadd.f32 %v1952, %v2112
  %v2114 = vpop.f32.mrb[0].mxu0
  %v2115 = vpop.f32.mrb[0].mxu0
  %v2116 = vadd.f32 %v1955, %v2115
  %v2117 = vpop.f32.mrb[0].mxu0
  %2118 = vmatprep.mubr.bf16.mxu0 %v1084
  %2119 = vmatmul.mubr.bf16.gmra.mrb[0].mxu0 %v1083
  %v2120 = vpop.f32.mrb[0].mxu0
  %v2121 = vadd.f32 %v1960, %v2120
  %v2122 = vpop.f32.mrb[0].mxu0
  %v2123 = vpop.f32.mrb[0].mxu0
  %v2124 = vadd.f32 %v1963, %v2123
  %v2125 = vpop.f32.mrb[0].mxu0
  %2126 = vmatprep.mubr.bf16.mxu0 %v1095
  %2127 = vmatmul.mubr.bf16.gmra.mrb[0].mxu0 %v1094
  %v2128 = vpop.f32.mrb[0].mxu0
  %v2129 = vadd.f32 %v1968, %v2128
  %v2130 = vpop.f32.mrb[0].mxu0
  %v2131 = vpop.f32.mrb[0].mxu0
  %v2132 = vadd.f32 %v1971, %v2131
  %v2133 = vpop.f32.mrb[0].mxu0
  %2134 = vmatprep.mubr.bf16.mxu0 %v1106
  %2135 = vmatmul.mubr.bf16.gmra.mrb[0].mxu0 %v1105
  %v2136 = vpop.f32.mrb[0].mxu0
  %v2137 = vadd.f32 %v1976, %v2136
  %v2138 = vpop.f32.mrb[0].mxu0
  %v2139 = vpop.f32.mrb[0].mxu0
  %v2140 = vadd.f32 %v1979, %v2139
  %v2141 = vpop.f32.mrb[0].mxu0
  %2142 = vmatprep.mubr.bf16.mxu0 %v1117
  %2143 = vmatmul.mubr.bf16.gmra.mrb[0].mxu0 %v1116
  %v2144 = vpop.f32.mrb[0].mxu0
  %v2145 = vadd.f32 %v1984, %v2144
  %v2146 = vpop.f32.mrb[0].mxu0
  %v2147 = vpop.f32.mrb[0].mxu0
  %v2148 = vadd.f32 %v1987, %v2147
  %v2149 = vpop.f32.mrb[0].mxu0
  %2150 = vdwg.mxu0
  %2151 = vmatprep.subr.bf16.mxu0 0
  %2152 = vmatpush1.bf16.msra.mxu0 %v1685
  %2153 = vmatprep.subr.bf16.mxu0 0
  %2154 = vmatpush1.bf16.msra.mxu0 %v1686
  %2155 = vmatprep.subr.bf16.mxu0 0
  %2156 = vmatpush1.bf16.msra.mxu0 %v1687
  %2157 = vmatprep.subr.bf16.mxu0 0
  %2158 = vmatpush1.bf16.msra.mxu0 %v1688
  %2159 = vmatprep.subr.bf16.mxu0 0
  %2160 = vmatpush1.bf16.msra.mxu0 %v1689
  %2161 = vmatprep.subr.bf16.mxu0 0
  %2162 = vmatpush1.bf16.msra.mxu0 %v1690
  %2163 = vmatprep.subr.bf16.mxu0 0
  %2164 = vmatpush1.bf16.msra.mxu0 %v1691
  %2165 = vmatprep.subr.bf16.mxu0 0
  %2166 = vmatpush1.bf16.msra.mxu0 %v1692
  %2167 = vmatprep.subr.bf16.mxu0 0
  %2168 = vmatpush1.bf16.msra.mxu0 %v1693
  %2169 = vmatprep.subr.bf16.mxu0 0
  %2170 = vmatpush1.bf16.msra.mxu0 %v1694
  %2171 = vmatprep.subr.bf16.mxu0 0
  %2172 = vmatpush1.bf16.msra.mxu0 %v1695
  %2173 = vmatprep.subr.bf16.mxu0 0
  %2174 = vmatpush1.bf16.msra.mxu0 %v1696
  %2175 = vmatprep.subr.bf16.mxu0 0
  %2176 = vmatpush1.bf16.msra.mxu0 %v1697
  %2177 = vmatprep.subr.bf16.mxu0 0
  %2178 = vmatpush1.bf16.msra.mxu0 %v1698
  %2179 = vmatprep.subr.bf16.mxu0 0
  %2180 = vmatpush1.bf16.msra.mxu0 %v1699
  %2181 = vmatprep.subr.bf16.mxu0 0
  %2182 = vmatpush1.bf16.msra.mxu0 %v1700
  %2183 = vmatprep.mubr.bf16.mxu0 %v954
  %2184 = vmatmul.mubr.bf16.gmra.mrb[0].mxu0 %v953
  %v2185 = vpop.f32.mrb[0].mxu0
  %v2186 = vadd.f32 %v2025, %v2185
  %v2187 = vpop.f32.mrb[0].mxu0
  %v2188 = vpop.f32.mrb[0].mxu0
  %v2189 = vadd.f32 %v2028, %v2188
  %v2190 = vpop.f32.mrb[0].mxu0
  %2191 = vmatprep.mubr.bf16.mxu0 %v965
  %2192 = vmatmul.mubr.bf16.gmra.mrb[0].mxu0 %v964
  %v2193 = vpop.f32.mrb[0].mxu0
  %v2194 = vadd.f32 %v2033, %v2193
  %v2195 = vpop.f32.mrb[0].mxu0
  %v2196 = vpop.f32.mrb[0].mxu0
  %v2197 = vadd.f32 %v2036, %v2196
  %v2198 = vpop.f32.mrb[0].mxu0
  %2199 = vmatprep.mubr.bf16.mxu0 %v976
  %2200 = vmatmul.mubr.bf16.gmra.mrb[0].mxu0 %v975
  %v2201 = vpop.f32.mrb[0].mxu0
  %v2202 = vadd.f32 %v2041, %v2201
  %v2203 = vpop.f32.mrb[0].mxu0
  %v2204 = vpop.f32.mrb[0].mxu0
  %v2205 = vadd.f32 %v2044, %v2204
  %v2206 = vpop.f32.mrb[0].mxu0
  %2207 = vmatprep.mubr.bf16.mxu0 %v987
  %2208 = vmatmul.mubr.bf16.gmra.mrb[0].mxu0 %v986
  %v2209 = vpop.f32.mrb[0].mxu0
  %v2210 = vadd.f32 %v2049, %v2209
  %v2211 = vpop.f32.mrb[0].mxu0
  %v2212 = vpop.f32.mrb[0].mxu0
  %v2213 = vadd.f32 %v2052, %v2212
  %v2214 = vpop.f32.mrb[0].mxu0
  %2215 = vmatprep.mubr.bf16.mxu0 %v998
  %2216 = vmatmul.mubr.bf16.gmra.mrb[0].mxu0 %v997
  %v2217 = vpop.f32.mrb[0].mxu0
  %v2218 = vadd.f32 %v2057, %v2217
  %v2219 = vpop.f32.mrb[0].mxu0
  %v2220 = vpop.f32.mrb[0].mxu0
  %v2221 = vadd.f32 %v2060, %v2220
  %v2222 = vpop.f32.mrb[0].mxu0
  %2223 = vmatprep.mubr.bf16.mxu0 %v1009
  %2224 = vmatmul.mubr.bf16.gmra.mrb[0].mxu0 %v1008
  %v2225 = vpop.f32.mrb[0].mxu0
  %v2226 = vadd.f32 %v2065, %v2225
  %v2227 = vpop.f32.mrb[0].mxu0
  %v2228 = vpop.f32.mrb[0].mxu0
  %v2229 = vadd.f32 %v2068, %v2228
  %v2230 = vpop.f32.mrb[0].mxu0
  %2231 = vmatprep.mubr.bf16.mxu0 %v1020
  %2232 = vmatmul.mubr.bf16.gmra.mrb[0].mxu0 %v1019
  %v2233 = vpop.f32.mrb[0].mxu0
  %v2234 = vadd.f32 %v2073, %v2233
  %v2235 = vpop.f32.mrb[0].mxu0
  %v2236 = vpop.f32.mrb[0].mxu0
  %v2237 = vadd.f32 %v2076, %v2236
  %v2238 = vpop.f32.mrb[0].mxu0
  %2239 = vmatprep.mubr.bf16.mxu0 %v1031
  %2240 = vmatmul.mubr.bf16.gmra.mrb[0].mxu0 %v1030
  %v2241 = vpop.f32.mrb[0].mxu0
  %v2242 = vadd.f32 %v2081, %v2241
  %v2243 = vpop.f32.mrb[0].mxu0
  %v2244 = vpop.f32.mrb[0].mxu0
  %v2245 = vadd.f32 %v2084, %v2244
  %v2246 = vpop.f32.mrb[0].mxu0
  %2247 = vmatprep.mubr.bf16.mxu0 %v1042
  %2248 = vmatmul.mubr.bf16.gmra.mrb[0].mxu0 %v1041
  %v2249 = vpop.f32.mrb[0].mxu0
  %v2250 = vadd.f32 %v2089, %v2249
  %v2251 = vpop.f32.mrb[0].mxu0
  %v2252 = vpop.f32.mrb[0].mxu0
  %v2253 = vadd.f32 %v2092, %v2252
  %v2254 = vpop.f32.mrb[0].mxu0
  %2255 = vmatprep.mubr.bf16.mxu0 %v1053
  %2256 = vmatmul.mubr.bf16.gmra.mrb[0].mxu0 %v1052
  %v2257 = vpop.f32.mrb[0].mxu0
  %v2258 = vadd.f32 %v2097, %v2257
  %v2259 = vpop.f32.mrb[0].mxu0
  %v2260 = vpop.f32.mrb[0].mxu0
  %v2261 = vadd.f32 %v2100, %v2260
  %v2262 = vpop.f32.mrb[0].mxu0
  %2263 = vmatprep.mubr.bf16.mxu0 %v1064
  %2264 = vmatmul.mubr.bf16.gmra.mrb[0].mxu0 %v1063
  %v2265 = vpop.f32.mrb[0].mxu0
  %v2266 = vadd.f32 %v2105, %v2265
  %v2267 = vpop.f32.mrb[0].mxu0
  %v2268 = vpop.f32.mrb[0].mxu0
  %v2269 = vadd.f32 %v2108, %v2268
  %v2270 = vpop.f32.mrb[0].mxu0
  %2271 = vmatprep.mubr.bf16.mxu0 %v1075
  %2272 = vmatmul.mubr.bf16.gmra.mrb[0].mxu0 %v1074
  %v2273 = vpop.f32.mrb[0].mxu0
  %v2274 = vadd.f32 %v2113, %v2273
  %v2275 = vpop.f32.mrb[0].mxu0
  %v2276 = vpop.f32.mrb[0].mxu0
  %v2277 = vadd.f32 %v2116, %v2276
  %v2278 = vpop.f32.mrb[0].mxu0
  %2279 = vmatprep.mubr.bf16.mxu0 %v1086
  %2280 = vmatmul.mubr.bf16.gmra.mrb[0].mxu0 %v1085
  %v2281 = vpop.f32.mrb[0].mxu0
  %v2282 = vadd.f32 %v2121, %v2281
  %v2283 = vpop.f32.mrb[0].mxu0
  %v2284 = vpop.f32.mrb[0].mxu0
  %v2285 = vadd.f32 %v2124, %v2284
  %v2286 = vpop.f32.mrb[0].mxu0
  %2287 = vmatprep.mubr.bf16.mxu0 %v1097
  %2288 = vmatmul.mubr.bf16.gmra.mrb[0].mxu0 %v1096
  %v2289 = vpop.f32.mrb[0].mxu0
  %v2290 = vadd.f32 %v2129, %v2289
  %v2291 = vpop.f32.mrb[0].mxu0
  %v2292 = vpop.f32.mrb[0].mxu0
  %v2293 = vadd.f32 %v2132, %v2292
  %v2294 = vpop.f32.mrb[0].mxu0
  %2295 = vmatprep.mubr.bf16.mxu0 %v1108
  %2296 = vmatmul.mubr.bf16.gmra.mrb[0].mxu0 %v1107
  %v2297 = vpop.f32.mrb[0].mxu0
  %v2298 = vadd.f32 %v2137, %v2297
  %v2299 = vpop.f32.mrb[0].mxu0
  %v2300 = vpop.f32.mrb[0].mxu0
  %v2301 = vadd.f32 %v2140, %v2300
  %v2302 = vpop.f32.mrb[0].mxu0
  %2303 = vmatprep.mubr.bf16.mxu0 %v1119
  %2304 = vmatmul.mubr.bf16.gmra.mrb[0].mxu0 %v1118
  %v2305 = vpop.f32.mrb[0].mxu0
  %v2306 = vadd.f32 %v2145, %v2305
  %v2307 = vpop.f32.mrb[0].mxu0
  %v2308 = vpop.f32.mrb[0].mxu0
  %v2309 = vadd.f32 %v2148, %v2308
  %v2310 = vpop.f32.mrb[0].mxu0
  %2311 = vdwg.mxu0
  %2312 = vmatprep.subr.bf16.mxu0 0
  %2313 = vmatpush1.bf16.msra.mxu0 %v1701
  %2314 = vmatprep.subr.bf16.mxu0 0
  %2315 = vmatpush1.bf16.msra.mxu0 %v1702
  %2316 = vmatprep.subr.bf16.mxu0 0
  %2317 = vmatpush1.bf16.msra.mxu0 %v1703
  %2318 = vmatprep.subr.bf16.mxu0 0
  %2319 = vmatpush1.bf16.msra.mxu0 %v1704
  %2320 = vmatprep.subr.bf16.mxu0 0
  %2321 = vmatpush1.bf16.msra.mxu0 %v1705
  %2322 = vmatprep.subr.bf16.mxu0 0
  %2323 = vmatpush1.bf16.msra.mxu0 %v1706
  %2324 = vmatprep.subr.bf16.mxu0 0
  %2325 = vmatpush1.bf16.msra.mxu0 %v1707
  %2326 = vmatprep.subr.bf16.mxu0 0
  %2327 = vmatpush1.bf16.msra.mxu0 %v1708
  %2328 = vmatprep.subr.bf16.mxu0 0
  %2329 = vmatpush1.bf16.msra.mxu0 %v1709
  %2330 = vmatprep.subr.bf16.mxu0 0
  %2331 = vmatpush1.bf16.msra.mxu0 %v1710
  %2332 = vmatprep.subr.bf16.mxu0 0
  %2333 = vmatpush1.bf16.msra.mxu0 %v1711
  %2334 = vmatprep.subr.bf16.mxu0 0
  %2335 = vmatpush1.bf16.msra.mxu0 %v1712
  %2336 = vmatprep.subr.bf16.mxu0 0
  %2337 = vmatpush1.bf16.msra.mxu0 %v1713
  %2338 = vmatprep.subr.bf16.mxu0 0
  %2339 = vmatpush1.bf16.msra.mxu0 %v1714
  %2340 = vmatprep.subr.bf16.mxu0 0
  %2341 = vmatpush1.bf16.msra.mxu0 %v1715
  %2342 = vmatprep.subr.bf16.mxu0 0
  %2343 = vmatpush1.bf16.msra.mxu0 %v1716
  %2344 = vmatprep.mubr.bf16.mxu0 %v956
  %2345 = vmatmul.mubr.bf16.gmra.mrb[0].mxu0 %v955
  %v2346 = vpop.f32.mrb[0].mxu0
  %v2347 = vadd.f32 %v2186, %v2346
  %v2348 = vpop.f32.mrb[0].mxu0
  %v2349 = vpop.f32.mrb[0].mxu0
  %v2350 = vadd.f32 %v2189, %v2349
  %v2351 = vpop.f32.mrb[0].mxu0
  %2352 = vmatprep.mubr.bf16.mxu0 %v967
  %2353 = vmatmul.mubr.bf16.gmra.mrb[0].mxu0 %v966
  %v2354 = vpop.f32.mrb[0].mxu0
  %v2355 = vadd.f32 %v2194, %v2354
  %v2356 = vpop.f32.mrb[0].mxu0
  %v2357 = vpop.f32.mrb[0].mxu0
  %v2358 = vadd.f32 %v2197, %v2357
  %v2359 = vpop.f32.mrb[0].mxu0
  %2360 = vmatprep.mubr.bf16.mxu0 %v978
  %2361 = vmatmul.mubr.bf16.gmra.mrb[0].mxu0 %v977
  %v2362 = vpop.f32.mrb[0].mxu0
  %v2363 = vadd.f32 %v2202, %v2362
  %v2364 = vpop.f32.mrb[0].mxu0
  %v2365 = vpop.f32.mrb[0].mxu0
  %v2366 = vadd.f32 %v2205, %v2365
  %v2367 = vpop.f32.mrb[0].mxu0
  %2368 = vmatprep.mubr.bf16.mxu0 %v989
  %2369 = vmatmul.mubr.bf16.gmra.mrb[0].mxu0 %v988
  %v2370 = vpop.f32.mrb[0].mxu0
  %v2371 = vadd.f32 %v2210, %v2370
  %v2372 = vpop.f32.mrb[0].mxu0
  %v2373 = vpop.f32.mrb[0].mxu0
  %v2374 = vadd.f32 %v2213, %v2373
  %v2375 = vpop.f32.mrb[0].mxu0
  %2376 = vmatprep.mubr.bf16.mxu0 %v1000
  %2377 = vmatmul.mubr.bf16.gmra.mrb[0].mxu0 %v999
  %v2378 = vpop.f32.mrb[0].mxu0
  %v2379 = vadd.f32 %v2218, %v2378
  %v2380 = vpop.f32.mrb[0].mxu0
  %v2381 = vpop.f32.mrb[0].mxu0
  %v2382 = vadd.f32 %v2221, %v2381
  %v2383 = vpop.f32.mrb[0].mxu0
  %2384 = vmatprep.mubr.bf16.mxu0 %v1011
  %2385 = vmatmul.mubr.bf16.gmra.mrb[0].mxu0 %v1010
  %v2386 = vpop.f32.mrb[0].mxu0
  %v2387 = vadd.f32 %v2226, %v2386
  %v2388 = vpop.f32.mrb[0].mxu0
  %v2389 = vpop.f32.mrb[0].mxu0
  %v2390 = vadd.f32 %v2229, %v2389
  %v2391 = vpop.f32.mrb[0].mxu0
  %2392 = vmatprep.mubr.bf16.mxu0 %v1022
  %2393 = vmatmul.mubr.bf16.gmra.mrb[0].mxu0 %v1021
  %v2394 = vpop.f32.mrb[0].mxu0
  %v2395 = vadd.f32 %v2234, %v2394
  %v2396 = vpop.f32.mrb[0].mxu0
  %v2397 = vpop.f32.mrb[0].mxu0
  %v2398 = vadd.f32 %v2237, %v2397
  %v2399 = vpop.f32.mrb[0].mxu0
  %2400 = vmatprep.mubr.bf16.mxu0 %v1033
  %2401 = vmatmul.mubr.bf16.gmra.mrb[0].mxu0 %v1032
  %v2402 = vpop.f32.mrb[0].mxu0
  %v2403 = vadd.f32 %v2242, %v2402
  %v2404 = vpop.f32.mrb[0].mxu0
  %v2405 = vpop.f32.mrb[0].mxu0
  %v2406 = vadd.f32 %v2245, %v2405
  %v2407 = vpop.f32.mrb[0].mxu0
  %2408 = vmatprep.mubr.bf16.mxu0 %v1044
  %2409 = vmatmul.mubr.bf16.gmra.mrb[0].mxu0 %v1043
  %v2410 = vpop.f32.mrb[0].mxu0
  %v2411 = vadd.f32 %v2250, %v2410
  %v2412 = vpop.f32.mrb[0].mxu0
  %v2413 = vpop.f32.mrb[0].mxu0
  %v2414 = vadd.f32 %v2253, %v2413
  %v2415 = vpop.f32.mrb[0].mxu0
  %2416 = vmatprep.mubr.bf16.mxu0 %v1055
  %2417 = vmatmul.mubr.bf16.gmra.mrb[0].mxu0 %v1054
  %v2418 = vpop.f32.mrb[0].mxu0
  %v2419 = vadd.f32 %v2258, %v2418
  %v2420 = vpop.f32.mrb[0].mxu0
  %v2421 = vpop.f32.mrb[0].mxu0
  %v2422 = vadd.f32 %v2261, %v2421
  %v2423 = vpop.f32.mrb[0].mxu0
  %2424 = vmatprep.mubr.bf16.mxu0 %v1066
  %2425 = vmatmul.mubr.bf16.gmra.mrb[0].mxu0 %v1065
  %v2426 = vpop.f32.mrb[0].mxu0
  %v2427 = vadd.f32 %v2266, %v2426
  %v2428 = vpop.f32.mrb[0].mxu0
  %v2429 = vpop.f32.mrb[0].mxu0
  %v2430 = vadd.f32 %v2269, %v2429
  %v2431 = vpop.f32.mrb[0].mxu0
  %2432 = vmatprep.mubr.bf16.mxu0 %v1077
  %2433 = vmatmul.mubr.bf16.gmra.mrb[0].mxu0 %v1076
  %v2434 = vpop.f32.mrb[0].mxu0
  %v2435 = vadd.f32 %v2274, %v2434
  %v2436 = vpop.f32.mrb[0].mxu0
  %v2437 = vpop.f32.mrb[0].mxu0
  %v2438 = vadd.f32 %v2277, %v2437
  %v2439 = vpop.f32.mrb[0].mxu0
  %2440 = vmatprep.mubr.bf16.mxu0 %v1088
  %2441 = vmatmul.mubr.bf16.gmra.mrb[0].mxu0 %v1087
  %v2442 = vpop.f32.mrb[0].mxu0
  %v2443 = vadd.f32 %v2282, %v2442
  %v2444 = vpop.f32.mrb[0].mxu0
  %v2445 = vpop.f32.mrb[0].mxu0
  %v2446 = vadd.f32 %v2285, %v2445
  %v2447 = vpop.f32.mrb[0].mxu0
  %2448 = vmatprep.mubr.bf16.mxu0 %v1099
  %2449 = vmatmul.mubr.bf16.gmra.mrb[0].mxu0 %v1098
  %v2450 = vpop.f32.mrb[0].mxu0
  %v2451 = vadd.f32 %v2290, %v2450
  %v2452 = vpop.f32.mrb[0].mxu0
  %v2453 = vpop.f32.mrb[0].mxu0
  %v2454 = vadd.f32 %v2293, %v2453
  %v2455 = vpop.f32.mrb[0].mxu0
  %2456 = vmatprep.mubr.bf16.mxu0 %v1110
  %2457 = vmatmul.mubr.bf16.gmra.mrb[0].mxu0 %v1109
  %v2458 = vpop.f32.mrb[0].mxu0
  %v2459 = vadd.f32 %v2298, %v2458
  %v2460 = vpop.f32.mrb[0].mxu0
  %v2461 = vpop.f32.mrb[0].mxu0
  %v2462 = vadd.f32 %v2301, %v2461
  %v2463 = vpop.f32.mrb[0].mxu0
  %2464 = vmatprep.mubr.bf16.mxu0 %v1121
  %2465 = vmatmul.mubr.bf16.gmra.mrb[0].mxu0 %v1120
  %v2466 = vpop.f32.mrb[0].mxu0
  %v2467 = vadd.f32 %v2306, %v2466
  %v2468 = vpop.f32.mrb[0].mxu0
  %v2469 = vpop.f32.mrb[0].mxu0
  %v2470 = vadd.f32 %v2309, %v2469
  %v2471 = vpop.f32.mrb[0].mxu0
  %2472 = vdwg.mxu0
  %2473 = vmatprep.subr.bf16.mxu0 0
  %2474 = vmatpush1.bf16.msra.mxu0 %v1717
  %2475 = vmatprep.subr.bf16.mxu0 0
  %2476 = vmatpush1.bf16.msra.mxu0 %v1718
  %2477 = vmatprep.subr.bf16.mxu0 0
  %2478 = vmatpush1.bf16.msra.mxu0 %v1719
  %2479 = vmatprep.subr.bf16.mxu0 0
  %2480 = vmatpush1.bf16.msra.mxu0 %v1720
  %2481 = vmatprep.subr.bf16.mxu0 0
  %2482 = vmatpush1.bf16.msra.mxu0 %v1721
  %2483 = vmatprep.subr.bf16.mxu0 0
  %2484 = vmatpush1.bf16.msra.mxu0 %v1722
  %2485 = vmatprep.subr.bf16.mxu0 0
  %2486 = vmatpush1.bf16.msra.mxu0 %v1723
  %2487 = vmatprep.subr.bf16.mxu0 0
  %2488 = vmatpush1.bf16.msra.mxu0 %v1724
  %2489 = vmatprep.subr.bf16.mxu0 0
  %2490 = vmatpush1.bf16.msra.mxu0 %v1725
  %2491 = vmatprep.subr.bf16.mxu0 0
  %2492 = vmatpush1.bf16.msra.mxu0 %v1726
  %2493 = vmatprep.subr.bf16.mxu0 0
  %2494 = vmatpush1.bf16.msra.mxu0 %v1727
  %2495 = vmatprep.subr.bf16.mxu0 0
  %2496 = vmatpush1.bf16.msra.mxu0 %v1728
  %2497 = vmatprep.subr.bf16.mxu0 0
  %2498 = vmatpush1.bf16.msra.mxu0 %v1729
  %2499 = vmatprep.subr.bf16.mxu0 0
  %2500 = vmatpush1.bf16.msra.mxu0 %v1730
  %2501 = vmatprep.subr.bf16.mxu0 0
  %2502 = vmatpush1.bf16.msra.mxu0 %v1731
  %2503 = vmatprep.subr.bf16.mxu0 0
  %2504 = vmatpush1.bf16.msra.mxu0 %v1732
  %2505 = vmatprep.mubr.bf16.mxu0 %v958
  %2506 = vmatmul.mubr.bf16.gmra.mrb[0].mxu0 %v957
  %v2507 = vpop.f32.mrb[0].mxu0
  %v2508 = vadd.f32 %v2347, %v2507
  %v2509 = vpop.f32.mrb[0].mxu0
  %v2510 = vpop.f32.mrb[0].mxu0
  %v2511 = vadd.f32 %v2350, %v2510
  %v2512 = vpop.f32.mrb[0].mxu0
  %2513 = vmatprep.mubr.bf16.mxu0 %v969
  %2514 = vmatmul.mubr.bf16.gmra.mrb[0].mxu0 %v968
  %v2515 = vpop.f32.mrb[0].mxu0
  %v2516 = vadd.f32 %v2355, %v2515
  %v2517 = vpop.f32.mrb[0].mxu0
  %v2518 = vpop.f32.mrb[0].mxu0
  %v2519 = vadd.f32 %v2358, %v2518
  %v2520 = vpop.f32.mrb[0].mxu0
  %2521 = vmatprep.mubr.bf16.mxu0 %v980
  %2522 = vmatmul.mubr.bf16.gmra.mrb[0].mxu0 %v979
  %v2523 = vpop.f32.mrb[0].mxu0
  %v2524 = vadd.f32 %v2363, %v2523
  %v2525 = vpop.f32.mrb[0].mxu0
  %v2526 = vpop.f32.mrb[0].mxu0
  %v2527 = vadd.f32 %v2366, %v2526
  %v2528 = vpop.f32.mrb[0].mxu0
  %2529 = vmatprep.mubr.bf16.mxu0 %v991
  %2530 = vmatmul.mubr.bf16.gmra.mrb[0].mxu0 %v990
  %v2531 = vpop.f32.mrb[0].mxu0
  %v2532 = vadd.f32 %v2371, %v2531
  %v2533 = vpop.f32.mrb[0].mxu0
  %v2534 = vpop.f32.mrb[0].mxu0
  %v2535 = vadd.f32 %v2374, %v2534
  %v2536 = vpop.f32.mrb[0].mxu0
  %2537 = vmatprep.mubr.bf16.mxu0 %v1002
  %2538 = vmatmul.mubr.bf16.gmra.mrb[0].mxu0 %v1001
  %v2539 = vpop.f32.mrb[0].mxu0
  %v2540 = vadd.f32 %v2379, %v2539
  %v2541 = vpop.f32.mrb[0].mxu0
  %v2542 = vpop.f32.mrb[0].mxu0
  %v2543 = vadd.f32 %v2382, %v2542
  %v2544 = vpop.f32.mrb[0].mxu0
  %2545 = vmatprep.mubr.bf16.mxu0 %v1013
  %2546 = vmatmul.mubr.bf16.gmra.mrb[0].mxu0 %v1012
  %v2547 = vpop.f32.mrb[0].mxu0
  %v2548 = vadd.f32 %v2387, %v2547
  %v2549 = vpop.f32.mrb[0].mxu0
  %v2550 = vpop.f32.mrb[0].mxu0
  %v2551 = vadd.f32 %v2390, %v2550
  %v2552 = vpop.f32.mrb[0].mxu0
  %2553 = vmatprep.mubr.bf16.mxu0 %v1024
  %2554 = vmatmul.mubr.bf16.gmra.mrb[0].mxu0 %v1023
  %v2555 = vpop.f32.mrb[0].mxu0
  %v2556 = vadd.f32 %v2395, %v2555
  %v2557 = vpop.f32.mrb[0].mxu0
  %v2558 = vpop.f32.mrb[0].mxu0
  %v2559 = vadd.f32 %v2398, %v2558
  %v2560 = vpop.f32.mrb[0].mxu0
  %2561 = vmatprep.mubr.bf16.mxu0 %v1035
  %2562 = vmatmul.mubr.bf16.gmra.mrb[0].mxu0 %v1034
  %v2563 = vpop.f32.mrb[0].mxu0
  %v2564 = vadd.f32 %v2403, %v2563
  %v2565 = vpop.f32.mrb[0].mxu0
  %v2566 = vpop.f32.mrb[0].mxu0
  %v2567 = vadd.f32 %v2406, %v2566
  %v2568 = vpop.f32.mrb[0].mxu0
  %2569 = vmatprep.mubr.bf16.mxu0 %v1046
  %2570 = vmatmul.mubr.bf16.gmra.mrb[0].mxu0 %v1045
  %v2571 = vpop.f32.mrb[0].mxu0
  %v2572 = vadd.f32 %v2411, %v2571
  %v2573 = vpop.f32.mrb[0].mxu0
  %v2574 = vpop.f32.mrb[0].mxu0
  %v2575 = vadd.f32 %v2414, %v2574
  %v2576 = vpop.f32.mrb[0].mxu0
  %2577 = vmatprep.mubr.bf16.mxu0 %v1057
  %2578 = vmatmul.mubr.bf16.gmra.mrb[0].mxu0 %v1056
  %v2579 = vpop.f32.mrb[0].mxu0
  %v2580 = vadd.f32 %v2419, %v2579
  %v2581 = vpop.f32.mrb[0].mxu0
  %v2582 = vpop.f32.mrb[0].mxu0
  %v2583 = vadd.f32 %v2422, %v2582
  %v2584 = vpop.f32.mrb[0].mxu0
  %2585 = vmatprep.mubr.bf16.mxu0 %v1068
  %2586 = vmatmul.mubr.bf16.gmra.mrb[0].mxu0 %v1067
  %v2587 = vpop.f32.mrb[0].mxu0
  %v2588 = vadd.f32 %v2427, %v2587
  %v2589 = vpop.f32.mrb[0].mxu0
  %v2590 = vpop.f32.mrb[0].mxu0
  %v2591 = vadd.f32 %v2430, %v2590
  %v2592 = vpop.f32.mrb[0].mxu0
  %2593 = vmatprep.mubr.bf16.mxu0 %v1079
  %2594 = vmatmul.mubr.bf16.gmra.mrb[0].mxu0 %v1078
  %v2595 = vpop.f32.mrb[0].mxu0
  %v2596 = vadd.f32 %v2435, %v2595
  %v2597 = vpop.f32.mrb[0].mxu0
  %v2598 = vpop.f32.mrb[0].mxu0
  %v2599 = vadd.f32 %v2438, %v2598
  %v2600 = vpop.f32.mrb[0].mxu0
  %2601 = vmatprep.mubr.bf16.mxu0 %v1090
  %2602 = vmatmul.mubr.bf16.gmra.mrb[0].mxu0 %v1089
  %v2603 = vpop.f32.mrb[0].mxu0
  %v2604 = vadd.f32 %v2443, %v2603
  %v2605 = vpop.f32.mrb[0].mxu0
  %v2606 = vpop.f32.mrb[0].mxu0
  %v2607 = vadd.f32 %v2446, %v2606
  %v2608 = vpop.f32.mrb[0].mxu0
  %2609 = vmatprep.mubr.bf16.mxu0 %v1101
  %2610 = vmatmul.mubr.bf16.gmra.mrb[0].mxu0 %v1100
  %v2611 = vpop.f32.mrb[0].mxu0
  %v2612 = vadd.f32 %v2451, %v2611
  %v2613 = vpop.f32.mrb[0].mxu0
  %v2614 = vpop.f32.mrb[0].mxu0
  %v2615 = vadd.f32 %v2454, %v2614
  %v2616 = vpop.f32.mrb[0].mxu0
  %2617 = vmatprep.mubr.bf16.mxu0 %v1112
  %2618 = vmatmul.mubr.bf16.gmra.mrb[0].mxu0 %v1111
  %v2619 = vpop.f32.mrb[0].mxu0
  %v2620 = vadd.f32 %v2459, %v2619
  %v2621 = vpop.f32.mrb[0].mxu0
  %v2622 = vpop.f32.mrb[0].mxu0
  %v2623 = vadd.f32 %v2462, %v2622
  %v2624 = vpop.f32.mrb[0].mxu0
  %2625 = vmatprep.mubr.bf16.mxu0 %v1123
  %2626 = vmatmul.mubr.bf16.gmra.mrb[0].mxu0 %v1122
  %v2627 = vpop.f32.mrb[0].mxu0
  %v2628 = vadd.f32 %v2467, %v2627
  %v2629 = vpop.f32.mrb[0].mxu0
  %v2630 = vpop.f32.mrb[0].mxu0
  %v2631 = vadd.f32 %v2470, %v2630
  %v2632 = vpop.f32.mrb[0].mxu0
  %2633 = vdwg.mxu0
  %2634 = vmatprep.subr.bf16.mxu0 0
  %2635 = vmatpush1.bf16.msra.mxu0 %v1733
  %2636 = vmatprep.subr.bf16.mxu0 0
  %2637 = vmatpush1.bf16.msra.mxu0 %v1734
  %2638 = vmatprep.subr.bf16.mxu0 0
  %2639 = vmatpush1.bf16.msra.mxu0 %v1735
  %2640 = vmatprep.subr.bf16.mxu0 0
  %2641 = vmatpush1.bf16.msra.mxu0 %v1736
  %2642 = vmatprep.subr.bf16.mxu0 0
  %2643 = vmatpush1.bf16.msra.mxu0 %v1737
  %2644 = vmatprep.subr.bf16.mxu0 0
  %2645 = vmatpush1.bf16.msra.mxu0 %v1738
  %2646 = vmatprep.subr.bf16.mxu0 0
  %2647 = vmatpush1.bf16.msra.mxu0 %v1739
  %2648 = vmatprep.subr.bf16.mxu0 0
  %2649 = vmatpush1.bf16.msra.mxu0 %v1740
  %2650 = vmatprep.subr.bf16.mxu0 0
  %2651 = vmatpush1.bf16.msra.mxu0 0
  %2652 = vmatprep.subr.bf16.mxu0 0
  %2653 = vmatpush1.bf16.msra.mxu0 0
  %2654 = vmatprep.subr.bf16.mxu0 0
  %2655 = vmatpush1.bf16.msra.mxu0 0
  %2656 = vmatprep.subr.bf16.mxu0 0
  %2657 = vmatpush1.bf16.msra.mxu0 0
  %2658 = vmatprep.subr.bf16.mxu0 0
  %2659 = vmatpush1.bf16.msra.mxu0 0
  %2660 = vmatprep.subr.bf16.mxu0 0
  %2661 = vmatpush1.bf16.msra.mxu0 0
  %2662 = vmatprep.subr.bf16.mxu0 0
  %2663 = vmatpush1.bf16.msra.mxu0 0
  %2664 = vmatprep.subr.bf16.mxu0 0
  %2665 = vmatpush1.bf16.msra.mxu0 0
  %2666 = vmatprep.mubr.bf16.mxu0 0
  %2667 = vmatmul.mubr.bf16.gmra.mrb[0].mxu0 %v959
  %v2668 = vpop.f32.mrb[0].mxu0
  %v2669 = vadd.f32 %v2508, %v2668
  %v2670 = vpop.f32.mrb[0].mxu0
  %v2671 = vpop.f32.mrb[0].mxu0
  %v2672 = vadd.f32 %v2511, %v2671
  %v2673 = vpop.f32.mrb[0].mxu0
  %2674 = vmatprep.mubr.bf16.mxu0 0
  %2675 = vmatmul.mubr.bf16.gmra.mrb[0].mxu0 %v970
  %v2676 = vpop.f32.mrb[0].mxu0
  %v2677 = vadd.f32 %v2516, %v2676
  %v2678 = vpop.f32.mrb[0].mxu0
  %v2679 = vpop.f32.mrb[0].mxu0
  %v2680 = vadd.f32 %v2519, %v2679
  %v2681 = vpop.f32.mrb[0].mxu0
  %2682 = vmatprep.mubr.bf16.mxu0 0
  %2683 = vmatmul.mubr.bf16.gmra.mrb[0].mxu0 %v981
  %v2684 = vpop.f32.mrb[0].mxu0
  %v2685 = vadd.f32 %v2524, %v2684
  %v2686 = vpop.f32.mrb[0].mxu0
  %v2687 = vpop.f32.mrb[0].mxu0
  %v2688 = vadd.f32 %v2527, %v2687
  %v2689 = vpop.f32.mrb[0].mxu0
  %2690 = vmatprep.mubr.bf16.mxu0 0
  %2691 = vmatmul.mubr.bf16.gmra.mrb[0].mxu0 %v992
  %v2692 = vpop.f32.mrb[0].mxu0
  %v2693 = vadd.f32 %v2532, %v2692
  %v2694 = vpop.f32.mrb[0].mxu0
  %v2695 = vpop.f32.mrb[0].mxu0
  %v2696 = vadd.f32 %v2535, %v2695
  %v2697 = vpop.f32.mrb[0].mxu0
  %2698 = vmatprep.mubr.bf16.mxu0 0
  %2699 = vmatmul.mubr.bf16.gmra.mrb[0].mxu0 %v1003
  %v2700 = vpop.f32.mrb[0].mxu0
  %v2701 = vadd.f32 %v2540, %v2700
  %v2702 = vpop.f32.mrb[0].mxu0
  %v2703 = vpop.f32.mrb[0].mxu0
  %v2704 = vadd.f32 %v2543, %v2703
  %v2705 = vpop.f32.mrb[0].mxu0
  %2706 = vmatprep.mubr.bf16.mxu0 0
  %2707 = vmatmul.mubr.bf16.gmra.mrb[0].mxu0 %v1014
  %v2708 = vpop.f32.mrb[0].mxu0
  %v2709 = vadd.f32 %v2548, %v2708
  %v2710 = vpop.f32.mrb[0].mxu0
  %v2711 = vpop.f32.mrb[0].mxu0
  %v2712 = vadd.f32 %v2551, %v2711
  %v2713 = vpop.f32.mrb[0].mxu0
  %2714 = vmatprep.mubr.bf16.mxu0 0
  %2715 = vmatmul.mubr.bf16.gmra.mrb[0].mxu0 %v1025
  %v2716 = vpop.f32.mrb[0].mxu0
  %v2717 = vadd.f32 %v2556, %v2716
  %v2718 = vpop.f32.mrb[0].mxu0
  %v2719 = vpop.f32.mrb[0].mxu0
  %v2720 = vadd.f32 %v2559, %v2719
  %v2721 = vpop.f32.mrb[0].mxu0
  %2722 = vmatprep.mubr.bf16.mxu0 0
  %2723 = vmatmul.mubr.bf16.gmra.mrb[0].mxu0 %v1036
  %v2724 = vpop.f32.mrb[0].mxu0
  %v2725 = vadd.f32 %v2564, %v2724
  %v2726 = vpop.f32.mrb[0].mxu0
  %v2727 = vpop.f32.mrb[0].mxu0
  %v2728 = vadd.f32 %v2567, %v2727
  %v2729 = vpop.f32.mrb[0].mxu0
  %2730 = vmatprep.mubr.bf16.mxu0 0
  %2731 = vmatmul.mubr.bf16.gmra.mrb[0].mxu0 %v1047
  %v2732 = vpop.f32.mrb[0].mxu0
  %v2733 = vadd.f32 %v2572, %v2732
  %v2734 = vpop.f32.mrb[0].mxu0
  %v2735 = vpop.f32.mrb[0].mxu0
  %v2736 = vadd.f32 %v2575, %v2735
  %v2737 = vpop.f32.mrb[0].mxu0
  %2738 = vmatprep.mubr.bf16.mxu0 0
  %2739 = vmatmul.mubr.bf16.gmra.mrb[0].mxu0 %v1058
  %v2740 = vpop.f32.mrb[0].mxu0
  %v2741 = vadd.f32 %v2580, %v2740
  %v2742 = vpop.f32.mrb[0].mxu0
  %v2743 = vpop.f32.mrb[0].mxu0
  %v2744 = vadd.f32 %v2583, %v2743
  %v2745 = vpop.f32.mrb[0].mxu0
  %2746 = vmatprep.mubr.bf16.mxu0 0
  %2747 = vmatmul.mubr.bf16.gmra.mrb[0].mxu0 %v1069
  %v2748 = vpop.f32.mrb[0].mxu0
  %v2749 = vadd.f32 %v2588, %v2748
  %v2750 = vpop.f32.mrb[0].mxu0
  %v2751 = vpop.f32.mrb[0].mxu0
  %v2752 = vadd.f32 %v2591, %v2751
  %v2753 = vpop.f32.mrb[0].mxu0
  %2754 = vmatprep.mubr.bf16.mxu0 0
  %2755 = vmatmul.mubr.bf16.gmra.mrb[0].mxu0 %v1080
  %v2756 = vpop.f32.mrb[0].mxu0
  %v2757 = vadd.f32 %v2596, %v2756
  %v2758 = vpop.f32.mrb[0].mxu0
  %v2759 = vpop.f32.mrb[0].mxu0
  %v2760 = vadd.f32 %v2599, %v2759
  %v2761 = vpop.f32.mrb[0].mxu0
  %2762 = vmatprep.mubr.bf16.mxu0 0
  %2763 = vmatmul.mubr.bf16.gmra.mrb[0].mxu0 %v1091
  %v2764 = vpop.f32.mrb[0].mxu0
  %v2765 = vadd.f32 %v2604, %v2764
  %v2766 = vpop.f32.mrb[0].mxu0
  %v2767 = vpop.f32.mrb[0].mxu0
  %v2768 = vadd.f32 %v2607, %v2767
  %v2769 = vpop.f32.mrb[0].mxu0
  %2770 = vmatprep.mubr.bf16.mxu0 0
  %2771 = vmatmul.mubr.bf16.gmra.mrb[0].mxu0 %v1102
  %v2772 = vpop.f32.mrb[0].mxu0
  %v2773 = vadd.f32 %v2612, %v2772
  %v2774 = vpop.f32.mrb[0].mxu0
  %v2775 = vpop.f32.mrb[0].mxu0
  %v2776 = vadd.f32 %v2615, %v2775
  %v2777 = vpop.f32.mrb[0].mxu0
  %2778 = vmatprep.mubr.bf16.mxu0 0
  %2779 = vmatmul.mubr.bf16.gmra.mrb[0].mxu0 %v1113
  %v2780 = vpop.f32.mrb[0].mxu0
  %v2781 = vadd.f32 %v2620, %v2780
  %v2782 = vpop.f32.mrb[0].mxu0
  %v2783 = vpop.f32.mrb[0].mxu0
  %v2784 = vadd.f32 %v2623, %v2783
  %v2785 = vpop.f32.mrb[0].mxu0
  %2786 = vmatprep.mubr.bf16.mxu0 0
  %2787 = vmatmul.mubr.bf16.gmra.mrb[0].mxu0 %v1124
  %v2788 = vpop.f32.mrb[0].mxu0
  %v2789 = vadd.f32 %v2628, %v2788
  %v2790 = vpop.f32.mrb[0].mxu0
  %v2791 = vpop.f32.mrb[0].mxu0
  %v2792 = vadd.f32 %v2631, %v2791
  %v2793 = vpop.f32.mrb[0].mxu0
  %2794 = vdwg.mxu0
  %v2795 = vlaneseq
  %v2796 = vshrl.u32 %v2795, 7
  %v2797 = vsub.s32 0, %v2796
  %v2798 = vrot.slane %v33, %v2797
  %v2799 = vmul.f32 %v2669, %v2798
  %v2800 = vmul.f32 %v2672, %v2798
  %v2801 = vmul.f32 %v2677, %v2798
  %v2802 = vmul.f32 %v2680, %v2798
  %v2803 = vmul.f32 %v2685, %v2798
  %v2804 = vmul.f32 %v2688, %v2798
  %v2805 = vmul.f32 %v2693, %v2798
  %v2806 = vmul.f32 %v2696, %v2798
  %v2807 = vmul.f32 %v2701, %v2798
  %v2808 = vmul.f32 %v2704, %v2798
  %v2809 = vmul.f32 %v2709, %v2798
  %v2810 = vmul.f32 %v2712, %v2798
  %v2811 = vmul.f32 %v2717, %v2798
  %v2812 = vmul.f32 %v2720, %v2798
  %v2813 = vmul.f32 %v2725, %v2798
  %v2814 = vmul.f32 %v2728, %v2798
  %v2815 = vmul.f32 %v2733, %v2798
  %v2816 = vmul.f32 %v2736, %v2798
  %v2817 = vmul.f32 %v2741, %v2798
  %v2818 = vmul.f32 %v2744, %v2798
  %v2819 = vmul.f32 %v2749, %v2798
  %v2820 = vmul.f32 %v2752, %v2798
  %v2821 = vmul.f32 %v2757, %v2798
  %v2822 = vmul.f32 %v2760, %v2798
  %v2823 = vmul.f32 %v2765, %v2798
  %v2824 = vmul.f32 %v2768, %v2798
  %v2825 = vmul.f32 %v2773, %v2798
  %v2826 = vmul.f32 %v2776, %v2798
  %v2827 = vmul.f32 %v2781, %v2798
  %v2828 = vmul.f32 %v2784, %v2798
  %v2829 = vmul.f32 %v2789, %v2798
  %v2830 = vmul.f32 %v2792, %v2798
  %v2831 = vlaneseq
  %v2832 = vshrl.u32 %v2831, 7
  %v2833 = vsub.s32 0, %v2832
  %v2834 = vrot.slane %v34, %v2833
  %v2835 = vadd.f32 %v2799, %v2834
  %v2836 = vadd.f32 %v2800, %v2834
  %v2837 = vadd.f32 %v2801, %v2834
  %v2838 = vadd.f32 %v2802, %v2834
  %v2839 = vadd.f32 %v2803, %v2834
  %v2840 = vadd.f32 %v2804, %v2834
  %v2841 = vadd.f32 %v2805, %v2834
  %v2842 = vadd.f32 %v2806, %v2834
  %v2843 = vadd.f32 %v2807, %v2834
  %v2844 = vadd.f32 %v2808, %v2834
  %v2845 = vadd.f32 %v2809, %v2834
  %v2846 = vadd.f32 %v2810, %v2834
  %v2847 = vadd.f32 %v2811, %v2834
  %v2848 = vadd.f32 %v2812, %v2834
  %v2849 = vadd.f32 %v2813, %v2834
  %v2850 = vadd.f32 %v2814, %v2834
  %v2851 = vadd.f32 %v2815, %v2834
  %v2852 = vadd.f32 %v2816, %v2834
  %v2853 = vadd.f32 %v2817, %v2834
  %v2854 = vadd.f32 %v2818, %v2834
  %v2855 = vadd.f32 %v2819, %v2834
  %v2856 = vadd.f32 %v2820, %v2834
  %v2857 = vadd.f32 %v2821, %v2834
  %v2858 = vadd.f32 %v2822, %v2834
  %v2859 = vadd.f32 %v2823, %v2834
  %v2860 = vadd.f32 %v2824, %v2834
  %v2861 = vadd.f32 %v2825, %v2834
  %v2862 = vadd.f32 %v2826, %v2834
  %v2863 = vadd.f32 %v2827, %v2834
  %v2864 = vadd.f32 %v2828, %v2834
  %v2865 = vadd.f32 %v2829, %v2834
  %v2866 = vadd.f32 %v2830, %v2834
  %v2867 = vmax.f32 %v2835, 0.0
  %v2868 = vmax.f32 %v2836, 0.0
  %v2869 = vmax.f32 %v2837, 0.0
  %v2870 = vmax.f32 %v2838, 0.0
  %v2871 = vmax.f32 %v2839, 0.0
  %v2872 = vmax.f32 %v2840, 0.0
  %v2873 = vmax.f32 %v2841, 0.0
  %v2874 = vmax.f32 %v2842, 0.0
  %v2875 = vmax.f32 %v2843, 0.0
  %v2876 = vmax.f32 %v2844, 0.0
  %v2877 = vmax.f32 %v2845, 0.0
  %v2878 = vmax.f32 %v2846, 0.0
  %v2879 = vmax.f32 %v2847, 0.0
  %v2880 = vmax.f32 %v2848, 0.0
  %v2881 = vmax.f32 %v2849, 0.0
  %v2882 = vmax.f32 %v2850, 0.0
  %v2883 = vmax.f32 %v2851, 0.0
  %v2884 = vmax.f32 %v2852, 0.0
  %v2885 = vmax.f32 %v2853, 0.0
  %v2886 = vmax.f32 %v2854, 0.0
  %v2887 = vmax.f32 %v2855, 0.0
  %v2888 = vmax.f32 %v2856, 0.0
  %v2889 = vmax.f32 %v2857, 0.0
  %v2890 = vmax.f32 %v2858, 0.0
  %v2891 = vmax.f32 %v2859, 0.0
  %v2892 = vmax.f32 %v2860, 0.0
  %v2893 = vmax.f32 %v2861, 0.0
  %v2894 = vmax.f32 %v2862, 0.0
  %v2895 = vmax.f32 %v2863, 0.0
  %v2896 = vmax.f32 %v2864, 0.0
  %v2897 = vmax.f32 %v2865, 0.0
  %v2898 = vmax.f32 %v2866, 0.0
  %v2899 = vpack.c.bf16 %v2868, %v2867
  %v2900 = vpack.c.bf16 %v2870, %v2869
  %v2901 = vpack.c.bf16 %v2872, %v2871
  %v2902 = vpack.c.bf16 %v2874, %v2873
  %v2903 = vpack.c.bf16 %v2876, %v2875
  %v2904 = vpack.c.bf16 %v2878, %v2877
  %v2905 = vpack.c.bf16 %v2880, %v2879
  %v2906 = vpack.c.bf16 %v2882, %v2881
  %v2907 = vpack.c.bf16 %v2884, %v2883
  %v2908 = vpack.c.bf16 %v2886, %v2885
  %v2909 = vpack.c.bf16 %v2888, %v2887
  %v2910 = vpack.c.bf16 %v2890, %v2889
  %v2911 = vpack.c.bf16 %v2892, %v2891
  %v2912 = vpack.c.bf16 %v2894, %v2893
  %v2913 = vpack.c.bf16 %v2896, %v2895
  %v2914 = vpack.c.bf16 %v2898, %v2897
  %2915 = vst [vmem:[#allocation2 + $0x8] sm:$0xff] %v2899
  %2916 = vst [vmem:[#allocation2 + $0x30] sm:$0xff] %v2900
  %2917 = vst [vmem:[#allocation2 + $0x58] sm:$0xff] %v2901
  %2918 = vst [vmem:[#allocation2 + $0x80] sm:$0xff] %v2902
  %2919 = vst [vmem:[#allocation2 + $0xa8] sm:$0xff] %v2903
  %2920 = vst [vmem:[#allocation2 + $0xd0] sm:$0xff] %v2904
  %2921 = vst [vmem:[#allocation2 + $0xf8] sm:$0xff] %v2905
  %2922 = vst [vmem:[#allocation2 + $0x120] sm:$0xff] %v2906
  %2923 = vst [vmem:[#allocation2 + $0x148] sm:$0xff] %v2907
  %2924 = vst [vmem:[#allocation2 + $0x170] sm:$0xff] %v2908
  %2925 = vst [vmem:[#allocation2 + $0x198] sm:$0xff] %v2909
  %2926 = vst [vmem:[#allocation2 + $0x1c0] sm:$0xff] %v2910
  %2927 = vst [vmem:[#allocation2 + $0x1e8] sm:$0xff] %v2911
  %2928 = vst [vmem:[#allocation2 + $0x210] sm:$0xff] %v2912
  %2929 = vst [vmem:[#allocation2 + $0x238] sm:$0xff] %v2913
  %2930 = vst [vmem:[#allocation2 + $0x260] sm:$0xff] %v2914
  %s2931 = scalar_lea.vmem %s0, 1408
  %v2932 = vld [vmem:[%s2931] sm:$0xff]
  %v2933 = vld [vmem:[%s2931 + $0x8] sm:$0xff]
  %v2934 = vld [vmem:[%s2931 + $0x10] sm:$0xff]
  %v2935 = vld [vmem:[%s2931 + $0x18] sm:$0xff]
  %v2936 = vld [vmem:[%s2931 + $0x20] sm:$0xff]
  %v2937 = vld [vmem:[%s2931 + $0x28] sm:$0xf]
  %v2938 = vld [vmem:[%s2931 + $0x2c] sm:$0xff]
  %v2939 = vld [vmem:[%s2931 + $0x34] sm:$0xff]
  %v2940 = vld [vmem:[%s2931 + $0x3c] sm:$0xff]
  %v2941 = vld [vmem:[%s2931 + $0x44] sm:$0xff]
  %v2942 = vld [vmem:[%s2931 + $0x4c] sm:$0xff]
  %v2943 = vld [vmem:[%s2931 + $0x54] sm:$0xf]
  %v2944 = vld [vmem:[%s2931 + $0x58] sm:$0xff]
  %v2945 = vld [vmem:[%s2931 + $0x60] sm:$0xff]
  %v2946 = vld [vmem:[%s2931 + $0x68] sm:$0xff]
  %v2947 = vld [vmem:[%s2931 + $0x70] sm:$0xff]
  %v2948 = vld [vmem:[%s2931 + $0x78] sm:$0xff]
  %v2949 = vld [vmem:[%s2931 + $0x80] sm:$0xf]
  %v2950 = vld [vmem:[%s2931 + $0x84] sm:$0xff]
  %v2951 = vld [vmem:[%s2931 + $0x8c] sm:$0xff]
  %v2952 = vld [vmem:[%s2931 + $0x94] sm:$0xff]
  %v2953 = vld [vmem:[%s2931 + $0x9c] sm:$0xff]
  %v2954 = vld [vmem:[%s2931 + $0xa4] sm:$0xff]
  %v2955 = vld [vmem:[%s2931 + $0xac] sm:$0xf]
  %v2956 = vld [vmem:[%s2931 + $0xb0] sm:$0xff]
  %v2957 = vld [vmem:[%s2931 + $0xb8] sm:$0xff]
  %v2958 = vld [vmem:[%s2931 + $0xc0] sm:$0xff]
  %v2959 = vld [vmem:[%s2931 + $0xc8] sm:$0xff]
  %v2960 = vld [vmem:[%s2931 + $0xd0] sm:$0xff]
  %v2961 = vld [vmem:[%s2931 + $0xd8] sm:$0xf]
  %v2962 = vld [vmem:[%s2931 + $0xdc] sm:$0xff]
  %v2963 = vld [vmem:[%s2931 + $0xe4] sm:$0xff]
  %v2964 = vld [vmem:[%s2931 + $0xec] sm:$0xff]
  %v2965 = vld [vmem:[%s2931 + $0xf4] sm:$0xff]
  %v2966 = vld [vmem:[%s2931 + $0xfc] sm:$0xff]
  %v2967 = vld [vmem:[%s2931 + $0x104] sm:$0xf]
  %v2968 = vld [vmem:[%s2931 + $0x108] sm:$0xff]
  %v2969 = vld [vmem:[%s2931 + $0x110] sm:$0xff]
  %v2970 = vld [vmem:[%s2931 + $0x118] sm:$0xff]
  %v2971 = vld [vmem:[%s2931 + $0x120] sm:$0xff]
  %v2972 = vld [vmem:[%s2931 + $0x128] sm:$0xff]
  %v2973 = vld [vmem:[%s2931 + $0x130] sm:$0xf]
  %v2974 = vld [vmem:[%s2931 + $0x134] sm:$0xff]
  %v2975 = vld [vmem:[%s2931 + $0x13c] sm:$0xff]
  %v2976 = vld [vmem:[%s2931 + $0x144] sm:$0xff]
  %v2977 = vld [vmem:[%s2931 + $0x14c] sm:$0xff]
  %v2978 = vld [vmem:[%s2931 + $0x154] sm:$0xff]
  %v2979 = vld [vmem:[%s2931 + $0x15c] sm:$0xf]
  %v2980 = vld [vmem:[%s2931 + $0x160] sm:$0xff]
  %v2981 = vld [vmem:[%s2931 + $0x168] sm:$0xff]
  %v2982 = vld [vmem:[%s2931 + $0x170] sm:$0xff]
  %v2983 = vld [vmem:[%s2931 + $0x178] sm:$0xff]
  %v2984 = vld [vmem:[%s2931 + $0x180] sm:$0xff]
  %v2985 = vld [vmem:[%s2931 + $0x188] sm:$0xf]
  %v2986 = vld [vmem:[%s2931 + $0x18c] sm:$0xff]
  %v2987 = vld [vmem:[%s2931 + $0x194] sm:$0xff]
  %v2988 = vld [vmem:[%s2931 + $0x19c] sm:$0xff]
  %v2989 = vld [vmem:[%s2931 + $0x1a4] sm:$0xff]
  %v2990 = vld [vmem:[%s2931 + $0x1ac] sm:$0xff]
  %v2991 = vld [vmem:[%s2931 + $0x1b4] sm:$0xf]
  %v2992 = vld [vmem:[%s2931 + $0x1b8] sm:$0xff]
  %v2993 = vld [vmem:[%s2931 + $0x1c0] sm:$0xff]
  %v2994 = vld [vmem:[%s2931 + $0x1c8] sm:$0xff]
  %v2995 = vld [vmem:[%s2931 + $0x1d0] sm:$0xff]
  %v2996 = vld [vmem:[%s2931 + $0x1d8] sm:$0xff]
  %v2997 = vld [vmem:[%s2931 + $0x1e0] sm:$0xf]
  %v2998 = vld [vmem:[%s2931 + $0x1e4] sm:$0xff]
  %v2999 = vld [vmem:[%s2931 + $0x1ec] sm:$0xff]
  %v3000 = vld [vmem:[%s2931 + $0x1f4] sm:$0xff]
  %v3001 = vld [vmem:[%s2931 + $0x1fc] sm:$0xff]
  %v3002 = vld [vmem:[%s2931 + $0x204] sm:$0xff]
  %v3003 = vld [vmem:[%s2931 + $0x20c] sm:$0xf]
  %v3004 = vld [vmem:[%s2931 + $0x210] sm:$0xff]
  %v3005 = vld [vmem:[%s2931 + $0x218] sm:$0xff]
  %v3006 = vld [vmem:[%s2931 + $0x220] sm:$0xff]
  %v3007 = vld [vmem:[%s2931 + $0x228] sm:$0xff]
  %v3008 = vld [vmem:[%s2931 + $0x230] sm:$0xff]
  %v3009 = vld [vmem:[%s2931 + $0x238] sm:$0xf]
  %v3010 = vld [vmem:[%s2931 + $0x23c] sm:$0xff]
  %v3011 = vld [vmem:[%s2931 + $0x244] sm:$0xff]
  %v3012 = vld [vmem:[%s2931 + $0x24c] sm:$0xff]
  %v3013 = vld [vmem:[%s2931 + $0x254] sm:$0xff]
  %v3014 = vld [vmem:[%s2931 + $0x25c] sm:$0xff]
  %v3015 = vld [vmem:[%s2931 + $0x264] sm:$0xf]
  %v3016 = vld [vmem:[%s2931 + $0x268] sm:$0xff]
  %v3017 = vld [vmem:[%s2931 + $0x270] sm:$0xff]
  %v3018 = vld [vmem:[%s2931 + $0x278] sm:$0xff]
  %v3019 = vld [vmem:[%s2931 + $0x280] sm:$0xff]
  %v3020 = vld [vmem:[%s2931 + $0x288] sm:$0xff]
  %v3021 = vld [vmem:[%s2931 + $0x290] sm:$0xf]
  %v3022 = vld [vmem:[%s2931 + $0x294] sm:$0xff]
  %v3023 = vld [vmem:[%s2931 + $0x29c] sm:$0xff]
  %v3024 = vld [vmem:[%s2931 + $0x2a4] sm:$0xff]
  %v3025 = vld [vmem:[%s2931 + $0x2ac] sm:$0xff]
  %v3026 = vld [vmem:[%s2931 + $0x2b4] sm:$0xff]
  %v3027 = vld [vmem:[%s2931 + $0x2bc] sm:$0xf]
  %v3028 = vld [vmem:[%s2931 + $0x2c0] sm:$0xff]
  %v3029 = vld [vmem:[%s2931 + $0x2c8] sm:$0xff]
  %v3030 = vld [vmem:[%s2931 + $0x2d0] sm:$0xff]
  %v3031 = vld [vmem:[%s2931 + $0x2d8] sm:$0xff]
  %v3032 = vld [vmem:[%s2931 + $0x2e0] sm:$0xff]
  %v3033 = vld [vmem:[%s2931 + $0x2e8] sm:$0xf]
  %v3034 = vld [vmem:[%s2931 + $0x2ec] sm:$0xff]
  %v3035 = vld [vmem:[%s2931 + $0x2f4] sm:$0xff]
  %v3036 = vld [vmem:[%s2931 + $0x2fc] sm:$0xff]
  %v3037 = vld [vmem:[%s2931 + $0x304] sm:$0xff]
  %v3038 = vld [vmem:[%s2931 + $0x30c] sm:$0xff]
  %v3039 = vld [vmem:[%s2931 + $0x314] sm:$0xf]
  %v3040 = vld [vmem:[%s2931 + $0x318] sm:$0xff]
  %v3041 = vld [vmem:[%s2931 + $0x320] sm:$0xff]
  %v3042 = vld [vmem:[%s2931 + $0x328] sm:$0xff]
  %v3043 = vld [vmem:[%s2931 + $0x330] sm:$0xff]
  %v3044 = vld [vmem:[%s2931 + $0x338] sm:$0xff]
  %v3045 = vld [vmem:[%s2931 + $0x340] sm:$0xf]
  %v3046 = vld [vmem:[%s2931 + $0x344] sm:$0xff]
  %v3047 = vld [vmem:[%s2931 + $0x34c] sm:$0xff]
  %v3048 = vld [vmem:[%s2931 + $0x354] sm:$0xff]
  %v3049 = vld [vmem:[%s2931 + $0x35c] sm:$0xff]
  %v3050 = vld [vmem:[%s2931 + $0x364] sm:$0xff]
  %v3051 = vld [vmem:[%s2931 + $0x36c] sm:$0xf]
  %v3052 = vld [vmem:[%s2931 + $0x370] sm:$0xff]
  %v3053 = vld [vmem:[%s2931 + $0x378] sm:$0xff]
  %v3054 = vld [vmem:[%s2931 + $0x380] sm:$0xff]
  %v3055 = vld [vmem:[%s2931 + $0x388] sm:$0xff]
  %v3056 = vld [vmem:[%s2931 + $0x390] sm:$0xff]
  %v3057 = vld [vmem:[%s2931 + $0x398] sm:$0xf]
  %v3058 = vld [vmem:[%s2931 + $0x39c] sm:$0xff]
  %v3059 = vld [vmem:[%s2931 + $0x3a4] sm:$0xff]
  %v3060 = vld [vmem:[%s2931 + $0x3ac] sm:$0xff]
  %v3061 = vld [vmem:[%s2931 + $0x3b4] sm:$0xff]
  %v3062 = vld [vmem:[%s2931 + $0x3bc] sm:$0xff]
  %v3063 = vld [vmem:[%s2931 + $0x3c4] sm:$0xf]
  %v3064 = vld [vmem:[%s2931 + $0x3c8] sm:$0xff]
  %v3065 = vld [vmem:[%s2931 + $0x3d0] sm:$0xff]
  %v3066 = vld [vmem:[%s2931 + $0x3d8] sm:$0xff]
  %v3067 = vld [vmem:[%s2931 + $0x3e0] sm:$0xff]
  %v3068 = vld [vmem:[%s2931 + $0x3e8] sm:$0xff]
  %v3069 = vld [vmem:[%s2931 + $0x3f0] sm:$0xf]
  %v3070 = vld [vmem:[%s2931 + $0x3f4] sm:$0xff]
  %v3071 = vld [vmem:[%s2931 + $0x3fc] sm:$0xff]
  %v3072 = vld [vmem:[%s2931 + $0x404] sm:$0xff]
  %v3073 = vld [vmem:[%s2931 + $0x40c] sm:$0xff]
  %v3074 = vld [vmem:[%s2931 + $0x414] sm:$0xff]
  %v3075 = vld [vmem:[%s2931 + $0x41c] sm:$0xf]
  %v3076 = vld [vmem:[%s2931 + $0x420] sm:$0xff]
  %v3077 = vld [vmem:[%s2931 + $0x428] sm:$0xff]
  %v3078 = vld [vmem:[%s2931 + $0x430] sm:$0xff]
  %v3079 = vld [vmem:[%s2931 + $0x438] sm:$0xff]
  %v3080 = vld [vmem:[%s2931 + $0x440] sm:$0xff]
  %v3081 = vld [vmem:[%s2931 + $0x448] sm:$0xf]
  %v3082 = vld [vmem:[%s2931 + $0x44c] sm:$0xff]
  %v3083 = vld [vmem:[%s2931 + $0x454] sm:$0xff]
  %v3084 = vld [vmem:[%s2931 + $0x45c] sm:$0xff]
  %v3085 = vld [vmem:[%s2931 + $0x464] sm:$0xff]
  %v3086 = vld [vmem:[%s2931 + $0x46c] sm:$0xff]
  %v3087 = vld [vmem:[%s2931 + $0x474] sm:$0xf]
  %v3088 = vld [vmem:[%s2931 + $0x478] sm:$0xff]
  %v3089 = vld [vmem:[%s2931 + $0x480] sm:$0xff]
  %v3090 = vld [vmem:[%s2931 + $0x488] sm:$0xff]
  %v3091 = vld [vmem:[%s2931 + $0x490] sm:$0xff]
  %v3092 = vld [vmem:[%s2931 + $0x498] sm:$0xff]
  %v3093 = vld [vmem:[%s2931 + $0x4a0] sm:$0xf]
  %v3094 = vld [vmem:[%s2931 + $0x4a4] sm:$0xff]
  %v3095 = vld [vmem:[%s2931 + $0x4ac] sm:$0xff]
  %v3096 = vld [vmem:[%s2931 + $0x4b4] sm:$0xff]
  %v3097 = vld [vmem:[%s2931 + $0x4bc] sm:$0xff]
  %v3098 = vld [vmem:[%s2931 + $0x4c4] sm:$0xff]
  %v3099 = vld [vmem:[%s2931 + $0x4cc] sm:$0xf]
  %v3100 = vld [vmem:[%s2931 + $0x4d0] sm:$0xff]
  %v3101 = vld [vmem:[%s2931 + $0x4d8] sm:$0xff]
  %v3102 = vld [vmem:[%s2931 + $0x4e0] sm:$0xff]
  %v3103 = vld [vmem:[%s2931 + $0x4e8] sm:$0xff]
  %v3104 = vld [vmem:[%s2931 + $0x4f0] sm:$0xff]
  %v3105 = vld [vmem:[%s2931 + $0x4f8] sm:$0xf]
  %v3106 = vld [vmem:[%s2931 + $0x4fc] sm:$0xff]
  %v3107 = vld [vmem:[%s2931 + $0x504] sm:$0xff]
  %v3108 = vld [vmem:[%s2931 + $0x50c] sm:$0xff]
  %v3109 = vld [vmem:[%s2931 + $0x514] sm:$0xff]
  %v3110 = vld [vmem:[%s2931 + $0x51c] sm:$0xff]
  %v3111 = vld [vmem:[%s2931 + $0x524] sm:$0xf]
  %v3112 = vld [vmem:[%s2931 + $0x528] sm:$0xff]
  %v3113 = vld [vmem:[%s2931 + $0x530] sm:$0xff]
  %v3114 = vld [vmem:[%s2931 + $0x538] sm:$0xff]
  %v3115 = vld [vmem:[%s2931 + $0x540] sm:$0xff]
  %v3116 = vld [vmem:[%s2931 + $0x548] sm:$0xff]
  %v3117 = vld [vmem:[%s2931 + $0x550] sm:$0xf]
  %v3118 = vld [vmem:[%s2931 + $0x554] sm:$0xff]
  %v3119 = vld [vmem:[%s2931 + $0x55c] sm:$0xff]
  %v3120 = vld [vmem:[%s2931 + $0x564] sm:$0xff]
  %v3121 = vld [vmem:[%s2931 + $0x56c] sm:$0xff]
  %v3122 = vld [vmem:[%s2931 + $0x574] sm:$0xff]
  %v3123 = vld [vmem:[%s2931 + $0x57c] sm:$0xf]
  %v3316 = vunpack.c.l.b16 %v2932
  %v3317 = vunpack.c.h.b16 %v2932
  %v3318 = vunpack.c.l.b16 %v2933
  %v3319 = vunpack.c.h.b16 %v2933
  %v3320 = vunpack.c.l.b16 %v2934
  %v3321 = vunpack.c.h.b16 %v2934
  %v3322 = vunpack.c.l.b16 %v2935
  %v3323 = vunpack.c.h.b16 %v2935
  %v3324 = vunpack.c.l.b16 %v2936
  %v3325 = vunpack.c.h.b16 %v2936
  %v3326 = vunpack.c.l.b16 %v2937
  %v3327 = vunpack.c.l.b16 %v2938
  %v3328 = vunpack.c.h.b16 %v2938
  %v3329 = vunpack.c.l.b16 %v2939
  %v3330 = vunpack.c.h.b16 %v2939
  %v3331 = vunpack.c.l.b16 %v2940
  %v3332 = vunpack.c.h.b16 %v2940
  %v3333 = vunpack.c.l.b16 %v2941
  %v3334 = vunpack.c.h.b16 %v2941
  %v3335 = vunpack.c.l.b16 %v2942
  %v3336 = vunpack.c.h.b16 %v2942
  %v3337 = vunpack.c.l.b16 %v2943
  %v3338 = vunpack.c.l.b16 %v2944
  %v3339 = vunpack.c.h.b16 %v2944
  %v3340 = vunpack.c.l.b16 %v2945
  %v3341 = vunpack.c.h.b16 %v2945
  %v3342 = vunpack.c.l.b16 %v2946
  %v3343 = vunpack.c.h.b16 %v2946
  %v3344 = vunpack.c.l.b16 %v2947
  %v3345 = vunpack.c.h.b16 %v2947
  %v3346 = vunpack.c.l.b16 %v2948
  %v3347 = vunpack.c.h.b16 %v2948
  %v3348 = vunpack.c.l.b16 %v2949
  %v3349 = vunpack.c.l.b16 %v2950
  %v3350 = vunpack.c.h.b16 %v2950
  %v3351 = vunpack.c.l.b16 %v2951
  %v3352 = vunpack.c.h.b16 %v2951
  %v3353 = vunpack.c.l.b16 %v2952
  %v3354 = vunpack.c.h.b16 %v2952
  %v3355 = vunpack.c.l.b16 %v2953
  %v3356 = vunpack.c.h.b16 %v2953
  %v3357 = vunpack.c.l.b16 %v2954
  %v3358 = vunpack.c.h.b16 %v2954
  %v3359 = vunpack.c.l.b16 %v2955
  %v3360 = vunpack.c.l.b16 %v2956
  %v3361 = vunpack.c.h.b16 %v2956
  %v3362 = vunpack.c.l.b16 %v2957
  %v3363 = vunpack.c.h.b16 %v2957
  %v3364 = vunpack.c.l.b16 %v2958
  %v3365 = vunpack.c.h.b16 %v2958
  %v3366 = vunpack.c.l.b16 %v2959
  %v3367 = vunpack.c.h.b16 %v2959
  %v3368 = vunpack.c.l.b16 %v2960
  %v3369 = vunpack.c.h.b16 %v2960
  %v3370 = vunpack.c.l.b16 %v2961
  %v3371 = vunpack.c.l.b16 %v2962
  %v3372 = vunpack.c.h.b16 %v2962
  %v3373 = vunpack.c.l.b16 %v2963
  %v3374 = vunpack.c.h.b16 %v2963
  %v3375 = vunpack.c.l.b16 %v2964
  %v3376 = vunpack.c.h.b16 %v2964
  %v3377 = vunpack.c.l.b16 %v2965
  %v3378 = vunpack.c.h.b16 %v2965
  %v3379 = vunpack.c.l.b16 %v2966
  %v3380 = vunpack.c.h.b16 %v2966
  %v3381 = vunpack.c.l.b16 %v2967
  %v3382 = vunpack.c.l.b16 %v2968
  %v3383 = vunpack.c.h.b16 %v2968
  %v3384 = vunpack.c.l.b16 %v2969
  %v3385 = vunpack.c.h.b16 %v2969
  %v3386 = vunpack.c.l.b16 %v2970
  %v3387 = vunpack.c.h.b16 %v2970
  %v3388 = vunpack.c.l.b16 %v2971
  %v3389 = vunpack.c.h.b16 %v2971
  %v3390 = vunpack.c.l.b16 %v2972
  %v3391 = vunpack.c.h.b16 %v2972
  %v3392 = vunpack.c.l.b16 %v2973
  %v3393 = vunpack.c.l.b16 %v2974
  %v3394 = vunpack.c.h.b16 %v2974
  %v3395 = vunpack.c.l.b16 %v2975
  %v3396 = vunpack.c.h.b16 %v2975
  %v3397 = vunpack.c.l.b16 %v2976
  %v3398 = vunpack.c.h.b16 %v2976
  %v3399 = vunpack.c.l.b16 %v2977
  %v3400 = vunpack.c.h.b16 %v2977
  %v3401 = vunpack.c.l.b16 %v2978
  %v3402 = vunpack.c.h.b16 %v2978
  %v3403 = vunpack.c.l.b16 %v2979
  %v3404 = vunpack.c.l.b16 %v2980
  %v3405 = vunpack.c.h.b16 %v2980
  %v3406 = vunpack.c.l.b16 %v2981
  %v3407 = vunpack.c.h.b16 %v2981
  %v3408 = vunpack.c.l.b16 %v2982
  %v3409 = vunpack.c.h.b16 %v2982
  %v3410 = vunpack.c.l.b16 %v2983
  %v3411 = vunpack.c.h.b16 %v2983
  %v3412 = vunpack.c.l.b16 %v2984
  %v3413 = vunpack.c.h.b16 %v2984
  %v3414 = vunpack.c.l.b16 %v2985
  %v3415 = vunpack.c.l.b16 %v2986
  %v3416 = vunpack.c.h.b16 %v2986
  %v3417 = vunpack.c.l.b16 %v2987
  %v3418 = vunpack.c.h.b16 %v2987
  %v3419 = vunpack.c.l.b16 %v2988
  %v3420 = vunpack.c.h.b16 %v2988
  %v3421 = vunpack.c.l.b16 %v2989
  %v3422 = vunpack.c.h.b16 %v2989
  %v3423 = vunpack.c.l.b16 %v2990
  %v3424 = vunpack.c.h.b16 %v2990
  %v3425 = vunpack.c.l.b16 %v2991
  %v3426 = vunpack.c.l.b16 %v2992
  %v3427 = vunpack.c.h.b16 %v2992
  %v3428 = vunpack.c.l.b16 %v2993
  %v3429 = vunpack.c.h.b16 %v2993
  %v3430 = vunpack.c.l.b16 %v2994
  %v3431 = vunpack.c.h.b16 %v2994
  %v3432 = vunpack.c.l.b16 %v2995
  %v3433 = vunpack.c.h.b16 %v2995
  %v3434 = vunpack.c.l.b16 %v2996
  %v3435 = vunpack.c.h.b16 %v2996
  %v3436 = vunpack.c.l.b16 %v2997
  %v3437 = vunpack.c.l.b16 %v2998
  %v3438 = vunpack.c.h.b16 %v2998
  %v3439 = vunpack.c.l.b16 %v2999
  %v3440 = vunpack.c.h.b16 %v2999
  %v3441 = vunpack.c.l.b16 %v3000
  %v3442 = vunpack.c.h.b16 %v3000
  %v3443 = vunpack.c.l.b16 %v3001
  %v3444 = vunpack.c.h.b16 %v3001
  %v3445 = vunpack.c.l.b16 %v3002
  %v3446 = vunpack.c.h.b16 %v3002
  %v3447 = vunpack.c.l.b16 %v3003
  %v3448 = vunpack.c.l.b16 %v3004
  %v3449 = vunpack.c.h.b16 %v3004
  %v3450 = vunpack.c.l.b16 %v3005
  %v3451 = vunpack.c.h.b16 %v3005
  %v3452 = vunpack.c.l.b16 %v3006
  %v3453 = vunpack.c.h.b16 %v3006
  %v3454 = vunpack.c.l.b16 %v3007
  %v3455 = vunpack.c.h.b16 %v3007
  %v3456 = vunpack.c.l.b16 %v3008
  %v3457 = vunpack.c.h.b16 %v3008
  %v3458 = vunpack.c.l.b16 %v3009
  %v3459 = vunpack.c.l.b16 %v3010
  %v3460 = vunpack.c.h.b16 %v3010
  %v3461 = vunpack.c.l.b16 %v3011
  %v3462 = vunpack.c.h.b16 %v3011
  %v3463 = vunpack.c.l.b16 %v3012
  %v3464 = vunpack.c.h.b16 %v3012
  %v3465 = vunpack.c.l.b16 %v3013
  %v3466 = vunpack.c.h.b16 %v3013
  %v3467 = vunpack.c.l.b16 %v3014
  %v3468 = vunpack.c.h.b16 %v3014
  %v3469 = vunpack.c.l.b16 %v3015
  %v3470 = vunpack.c.l.b16 %v3016
  %v3471 = vunpack.c.h.b16 %v3016
  %v3472 = vunpack.c.l.b16 %v3017
  %v3473 = vunpack.c.h.b16 %v3017
  %v3474 = vunpack.c.l.b16 %v3018
  %v3475 = vunpack.c.h.b16 %v3018
  %v3476 = vunpack.c.l.b16 %v3019
  %v3477 = vunpack.c.h.b16 %v3019
  %v3478 = vunpack.c.l.b16 %v3020
  %v3479 = vunpack.c.h.b16 %v3020
  %v3480 = vunpack.c.l.b16 %v3021
  %v3481 = vunpack.c.l.b16 %v3022
  %v3482 = vunpack.c.h.b16 %v3022
  %v3483 = vunpack.c.l.b16 %v3023
  %v3484 = vunpack.c.h.b16 %v3023
  %v3485 = vunpack.c.l.b16 %v3024
  %v3486 = vunpack.c.h.b16 %v3024
  %v3487 = vunpack.c.l.b16 %v3025
  %v3488 = vunpack.c.h.b16 %v3025
  %v3489 = vunpack.c.l.b16 %v3026
  %v3490 = vunpack.c.h.b16 %v3026
  %v3491 = vunpack.c.l.b16 %v3027
  %v3492 = vunpack.c.l.b16 %v3028
  %v3493 = vunpack.c.h.b16 %v3028
  %v3494 = vunpack.c.l.b16 %v3029
  %v3495 = vunpack.c.h.b16 %v3029
  %v3496 = vunpack.c.l.b16 %v3030
  %v3497 = vunpack.c.h.b16 %v3030
  %v3498 = vunpack.c.l.b16 %v3031
  %v3499 = vunpack.c.h.b16 %v3031
  %v3500 = vunpack.c.l.b16 %v3032
  %v3501 = vunpack.c.h.b16 %v3032
  %v3502 = vunpack.c.l.b16 %v3033
  %v3503 = vunpack.c.l.b16 %v3034
  %v3504 = vunpack.c.h.b16 %v3034
  %v3505 = vunpack.c.l.b16 %v3035
  %v3506 = vunpack.c.h.b16 %v3035
  %v3507 = vunpack.c.l.b16 %v3036
  %v3508 = vunpack.c.h.b16 %v3036
  %v3509 = vunpack.c.l.b16 %v3037
  %v3510 = vunpack.c.h.b16 %v3037
  %v3511 = vunpack.c.l.b16 %v3038
  %v3512 = vunpack.c.h.b16 %v3038
  %v3513 = vunpack.c.l.b16 %v3039
  %v3514 = vunpack.c.l.b16 %v3040
  %v3515 = vunpack.c.h.b16 %v3040
  %v3516 = vunpack.c.l.b16 %v3041
  %v3517 = vunpack.c.h.b16 %v3041
  %v3518 = vunpack.c.l.b16 %v3042
  %v3519 = vunpack.c.h.b16 %v3042
  %v3520 = vunpack.c.l.b16 %v3043
  %v3521 = vunpack.c.h.b16 %v3043
  %v3522 = vunpack.c.l.b16 %v3044
  %v3523 = vunpack.c.h.b16 %v3044
  %v3524 = vunpack.c.l.b16 %v3045
  %v3525 = vunpack.c.l.b16 %v3046
  %v3526 = vunpack.c.h.b16 %v3046
  %v3527 = vunpack.c.l.b16 %v3047
  %v3528 = vunpack.c.h.b16 %v3047
  %v3529 = vunpack.c.l.b16 %v3048
  %v3530 = vunpack.c.h.b16 %v3048
  %v3531 = vunpack.c.l.b16 %v3049
  %v3532 = vunpack.c.h.b16 %v3049
  %v3533 = vunpack.c.l.b16 %v3050
  %v3534 = vunpack.c.h.b16 %v3050
  %v3535 = vunpack.c.l.b16 %v3051
  %v3536 = vunpack.c.l.b16 %v3052
  %v3537 = vunpack.c.h.b16 %v3052
  %v3538 = vunpack.c.l.b16 %v3053
  %v3539 = vunpack.c.h.b16 %v3053
  %v3540 = vunpack.c.l.b16 %v3054
  %v3541 = vunpack.c.h.b16 %v3054
  %v3542 = vunpack.c.l.b16 %v3055
  %v3543 = vunpack.c.h.b16 %v3055
  %v3544 = vunpack.c.l.b16 %v3056
  %v3545 = vunpack.c.h.b16 %v3056
  %v3546 = vunpack.c.l.b16 %v3057
  %v3547 = vunpack.c.l.b16 %v3058
  %v3548 = vunpack.c.h.b16 %v3058
  %v3549 = vunpack.c.l.b16 %v3059
  %v3550 = vunpack.c.h.b16 %v3059
  %v3551 = vunpack.c.l.b16 %v3060
  %v3552 = vunpack.c.h.b16 %v3060
  %v3553 = vunpack.c.l.b16 %v3061
  %v3554 = vunpack.c.h.b16 %v3061
  %v3555 = vunpack.c.l.b16 %v3062
  %v3556 = vunpack.c.h.b16 %v3062
  %v3557 = vunpack.c.l.b16 %v3063
  %v3558 = vunpack.c.l.b16 %v3064
  %v3559 = vunpack.c.h.b16 %v3064
  %v3560 = vunpack.c.l.b16 %v3065
  %v3561 = vunpack.c.h.b16 %v3065
  %v3562 = vunpack.c.l.b16 %v3066
  %v3563 = vunpack.c.h.b16 %v3066
  %v3564 = vunpack.c.l.b16 %v3067
  %v3565 = vunpack.c.h.b16 %v3067
  %v3566 = vunpack.c.l.b16 %v3068
  %v3567 = vunpack.c.h.b16 %v3068
  %v3568 = vunpack.c.l.b16 %v3069
  %v3569 = vunpack.c.l.b16 %v3070
  %v3570 = vunpack.c.h.b16 %v3070
  %v3571 = vunpack.c.l.b16 %v3071
  %v3572 = vunpack.c.h.b16 %v3071
  %v3573 = vunpack.c.l.b16 %v3072
  %v3574 = vunpack.c.h.b16 %v3072
  %v3575 = vunpack.c.l.b16 %v3073
  %v3576 = vunpack.c.h.b16 %v3073
  %v3577 = vunpack.c.l.b16 %v3074
  %v3578 = vunpack.c.h.b16 %v3074
  %v3579 = vunpack.c.l.b16 %v3075
  %v3580 = vunpack.c.l.b16 %v3076
  %v3581 = vunpack.c.h.b16 %v3076
  %v3582 = vunpack.c.l.b16 %v3077
  %v3583 = vunpack.c.h.b16 %v3077
  %v3584 = vunpack.c.l.b16 %v3078
  %v3585 = vunpack.c.h.b16 %v3078
  %v3586 = vunpack.c.l.b16 %v3079
  %v3587 = vunpack.c.h.b16 %v3079
  %v3588 = vunpack.c.l.b16 %v3080
  %v3589 = vunpack.c.h.b16 %v3080
  %v3590 = vunpack.c.l.b16 %v3081
  %v3591 = vunpack.c.l.b16 %v3082
  %v3592 = vunpack.c.h.b16 %v3082
  %v3593 = vunpack.c.l.b16 %v3083
  %v3594 = vunpack.c.h.b16 %v3083
  %v3595 = vunpack.c.l.b16 %v3084
  %v3596 = vunpack.c.h.b16 %v3084
  %v3597 = vunpack.c.l.b16 %v3085
  %v3598 = vunpack.c.h.b16 %v3085
  %v3599 = vunpack.c.l.b16 %v3086
  %v3600 = vunpack.c.h.b16 %v3086
  %v3601 = vunpack.c.l.b16 %v3087
  %v3602 = vunpack.c.l.b16 %v3088
  %v3603 = vunpack.c.h.b16 %v3088
  %v3604 = vunpack.c.l.b16 %v3089
  %v3605 = vunpack.c.h.b16 %v3089
  %v3606 = vunpack.c.l.b16 %v3090
  %v3607 = vunpack.c.h.b16 %v3090
  %v3608 = vunpack.c.l.b16 %v3091
  %v3609 = vunpack.c.h.b16 %v3091
  %v3610 = vunpack.c.l.b16 %v3092
  %v3611 = vunpack.c.h.b16 %v3092
  %v3612 = vunpack.c.l.b16 %v3093
  %v3613 = vunpack.c.l.b16 %v3094
  %v3614 = vunpack.c.h.b16 %v3094
  %v3615 = vunpack.c.l.b16 %v3095
  %v3616 = vunpack.c.h.b16 %v3095
  %v3617 = vunpack.c.l.b16 %v3096
  %v3618 = vunpack.c.h.b16 %v3096
  %v3619 = vunpack.c.l.b16 %v3097
  %v3620 = vunpack.c.h.b16 %v3097
  %v3621 = vunpack.c.l.b16 %v3098
  %v3622 = vunpack.c.h.b16 %v3098
  %v3623 = vunpack.c.l.b16 %v3099
  %v3624 = vunpack.c.l.b16 %v3100
  %v3625 = vunpack.c.h.b16 %v3100
  %v3626 = vunpack.c.l.b16 %v3101
  %v3627 = vunpack.c.h.b16 %v3101
  %v3628 = vunpack.c.l.b16 %v3102
  %v3629 = vunpack.c.h.b16 %v3102
  %v3630 = vunpack.c.l.b16 %v3103
  %v3631 = vunpack.c.h.b16 %v3103
  %v3632 = vunpack.c.l.b16 %v3104
  %v3633 = vunpack.c.h.b16 %v3104
  %v3634 = vunpack.c.l.b16 %v3105
  %v3635 = vunpack.c.l.b16 %v3106
  %v3636 = vunpack.c.h.b16 %v3106
  %v3637 = vunpack.c.l.b16 %v3107
  %v3638 = vunpack.c.h.b16 %v3107
  %v3639 = vunpack.c.l.b16 %v3108
  %v3640 = vunpack.c.h.b16 %v3108
  %v3641 = vunpack.c.l.b16 %v3109
  %v3642 = vunpack.c.h.b16 %v3109
  %v3643 = vunpack.c.l.b16 %v3110
  %v3644 = vunpack.c.h.b16 %v3110
  %v3645 = vunpack.c.l.b16 %v3111
  %v3646 = vunpack.c.l.b16 %v3112
  %v3647 = vunpack.c.h.b16 %v3112
  %v3648 = vunpack.c.l.b16 %v3113
  %v3649 = vunpack.c.h.b16 %v3113
  %v3650 = vunpack.c.l.b16 %v3114
  %v3651 = vunpack.c.h.b16 %v3114
  %v3652 = vunpack.c.l.b16 %v3115
  %v3653 = vunpack.c.h.b16 %v3115
  %v3654 = vunpack.c.l.b16 %v3116
  %v3655 = vunpack.c.h.b16 %v3116
  %v3656 = vunpack.c.l.b16 %v3117
  %v3657 = vunpack.c.l.b16 %v3118
  %v3658 = vunpack.c.h.b16 %v3118
  %v3659 = vunpack.c.l.b16 %v3119
  %v3660 = vunpack.c.h.b16 %v3119
  %v3661 = vunpack.c.l.b16 %v3120
  %v3662 = vunpack.c.h.b16 %v3120
  %v3663 = vunpack.c.l.b16 %v3121
  %v3664 = vunpack.c.h.b16 %v3121
  %v3665 = vunpack.c.l.b16 %v3122
  %v3666 = vunpack.c.h.b16 %v3122
  %v3667 = vunpack.c.l.b16 %v3123
  %v3668 = vpack.c.b16 %v3327, %v3316
  %v3669 = vpack.c.b16 %v3328, %v3317
  %v3670 = vpack.c.b16 %v3329, %v3318
  %v3671 = vpack.c.b16 %v3330, %v3319
  %v3672 = vpack.c.b16 %v3331, %v3320
  %v3673 = vpack.c.b16 %v3332, %v3321
  %v3674 = vpack.c.b16 %v3333, %v3322
  %v3675 = vpack.c.b16 %v3334, %v3323
  %v3676 = vpack.c.b16 %v3335, %v3324
  %v3677 = vpack.c.b16 %v3336, %v3325
  %v3678 = vpack.c.b16 %v3337, %v3326
  %v3679 = vpack.c.b16 %v3349, %v3338
  %v3680 = vpack.c.b16 %v3350, %v3339
  %v3681 = vpack.c.b16 %v3351, %v3340
  %v3682 = vpack.c.b16 %v3352, %v3341
  %v3683 = vpack.c.b16 %v3353, %v3342
  %v3684 = vpack.c.b16 %v3354, %v3343
  %v3685 = vpack.c.b16 %v3355, %v3344
  %v3686 = vpack.c.b16 %v3356, %v3345
  %v3687 = vpack.c.b16 %v3357, %v3346
  %v3688 = vpack.c.b16 %v3358, %v3347
  %v3689 = vpack.c.b16 %v3359, %v3348
  %v3690 = vpack.c.b16 %v3371, %v3360
  %v3691 = vpack.c.b16 %v3372, %v3361
  %v3692 = vpack.c.b16 %v3373, %v3362
  %v3693 = vpack.c.b16 %v3374, %v3363
  %v3694 = vpack.c.b16 %v3375, %v3364
  %v3695 = vpack.c.b16 %v3376, %v3365
  %v3696 = vpack.c.b16 %v3377, %v3366
  %v3697 = vpack.c.b16 %v3378, %v3367
  %v3698 = vpack.c.b16 %v3379, %v3368
  %v3699 = vpack.c.b16 %v3380, %v3369
  %v3700 = vpack.c.b16 %v3381, %v3370
  %v3701 = vpack.c.b16 %v3393, %v3382
  %v3702 = vpack.c.b16 %v3394, %v3383
  %v3703 = vpack.c.b16 %v3395, %v3384
  %v3704 = vpack.c.b16 %v3396, %v3385
  %v3705 = vpack.c.b16 %v3397, %v3386
  %v3706 = vpack.c.b16 %v3398, %v3387
  %v3707 = vpack.c.b16 %v3399, %v3388
  %v3708 = vpack.c.b16 %v3400, %v3389
  %v3709 = vpack.c.b16 %v3401, %v3390
  %v3710 = vpack.c.b16 %v3402, %v3391
  %v3711 = vpack.c.b16 %v3403, %v3392
  %v3712 = vpack.c.b16 %v3415, %v3404
  %v3713 = vpack.c.b16 %v3416, %v3405
  %v3714 = vpack.c.b16 %v3417, %v3406
  %v3715 = vpack.c.b16 %v3418, %v3407
  %v3716 = vpack.c.b16 %v3419, %v3408
  %v3717 = vpack.c.b16 %v3420, %v3409
  %v3718 = vpack.c.b16 %v3421, %v3410
  %v3719 = vpack.c.b16 %v3422, %v3411
  %v3720 = vpack.c.b16 %v3423, %v3412
  %v3721 = vpack.c.b16 %v3424, %v3413
  %v3722 = vpack.c.b16 %v3425, %v3414
  %v3723 = vpack.c.b16 %v3437, %v3426
  %v3724 = vpack.c.b16 %v3438, %v3427
  %v3725 = vpack.c.b16 %v3439, %v3428
  %v3726 = vpack.c.b16 %v3440, %v3429
  %v3727 = vpack.c.b16 %v3441, %v3430
  %v3728 = vpack.c.b16 %v3442, %v3431
  %v3729 = vpack.c.b16 %v3443, %v3432
  %v3730 = vpack.c.b16 %v3444, %v3433
  %v3731 = vpack.c.b16 %v3445, %v3434
  %v3732 = vpack.c.b16 %v3446, %v3435
  %v3733 = vpack.c.b16 %v3447, %v3436
  %v3734 = vpack.c.b16 %v3459, %v3448
  %v3735 = vpack.c.b16 %v3460, %v3449
  %v3736 = vpack.c.b16 %v3461, %v3450
  %v3737 = vpack.c.b16 %v3462, %v3451
  %v3738 = vpack.c.b16 %v3463, %v3452
  %v3739 = vpack.c.b16 %v3464, %v3453
  %v3740 = vpack.c.b16 %v3465, %v3454
  %v3741 = vpack.c.b16 %v3466, %v3455
  %v3742 = vpack.c.b16 %v3467, %v3456
  %v3743 = vpack.c.b16 %v3468, %v3457
  %v3744 = vpack.c.b16 %v3469, %v3458
  %v3745 = vpack.c.b16 %v3481, %v3470
  %v3746 = vpack.c.b16 %v3482, %v3471
  %v3747 = vpack.c.b16 %v3483, %v3472
  %v3748 = vpack.c.b16 %v3484, %v3473
  %v3749 = vpack.c.b16 %v3485, %v3474
  %v3750 = vpack.c.b16 %v3486, %v3475
  %v3751 = vpack.c.b16 %v3487, %v3476
  %v3752 = vpack.c.b16 %v3488, %v3477
  %v3753 = vpack.c.b16 %v3489, %v3478
  %v3754 = vpack.c.b16 %v3490, %v3479
  %v3755 = vpack.c.b16 %v3491, %v3480
  %v3756 = vpack.c.b16 %v3503, %v3492
  %v3757 = vpack.c.b16 %v3504, %v3493
  %v3758 = vpack.c.b16 %v3505, %v3494
  %v3759 = vpack.c.b16 %v3506, %v3495
  %v3760 = vpack.c.b16 %v3507, %v3496
  %v3761 = vpack.c.b16 %v3508, %v3497
  %v3762 = vpack.c.b16 %v3509, %v3498
  %v3763 = vpack.c.b16 %v3510, %v3499
  %v3764 = vpack.c.b16 %v3511, %v3500
  %v3765 = vpack.c.b16 %v3512, %v3501
  %v3766 = vpack.c.b16 %v3513, %v3502
  %v3767 = vpack.c.b16 %v3525, %v3514
  %v3768 = vpack.c.b16 %v3526, %v3515
  %v3769 = vpack.c.b16 %v3527, %v3516
  %v3770 = vpack.c.b16 %v3528, %v3517
  %v3771 = vpack.c.b16 %v3529, %v3518
  %v3772 = vpack.c.b16 %v3530, %v3519
  %v3773 = vpack.c.b16 %v3531, %v3520
  %v3774 = vpack.c.b16 %v3532, %v3521
  %v3775 = vpack.c.b16 %v3533, %v3522
  %v3776 = vpack.c.b16 %v3534, %v3523
  %v3777 = vpack.c.b16 %v3535, %v3524
  %v3778 = vpack.c.b16 %v3547, %v3536
  %v3779 = vpack.c.b16 %v3548, %v3537
  %v3780 = vpack.c.b16 %v3549, %v3538
  %v3781 = vpack.c.b16 %v3550, %v3539
  %v3782 = vpack.c.b16 %v3551, %v3540
  %v3783 = vpack.c.b16 %v3552, %v3541
  %v3784 = vpack.c.b16 %v3553, %v3542
  %v3785 = vpack.c.b16 %v3554, %v3543
  %v3786 = vpack.c.b16 %v3555, %v3544
  %v3787 = vpack.c.b16 %v3556, %v3545
  %v3788 = vpack.c.b16 %v3557, %v3546
  %v3789 = vpack.c.b16 %v3569, %v3558
  %v3790 = vpack.c.b16 %v3570, %v3559
  %v3791 = vpack.c.b16 %v3571, %v3560
  %v3792 = vpack.c.b16 %v3572, %v3561
  %v3793 = vpack.c.b16 %v3573, %v3562
  %v3794 = vpack.c.b16 %v3574, %v3563
  %v3795 = vpack.c.b16 %v3575, %v3564
  %v3796 = vpack.c.b16 %v3576, %v3565
  %v3797 = vpack.c.b16 %v3577, %v3566
  %v3798 = vpack.c.b16 %v3578, %v3567
  %v3799 = vpack.c.b16 %v3579, %v3568
  %v3800 = vpack.c.b16 %v3591, %v3580
  %v3801 = vpack.c.b16 %v3592, %v3581
  %v3802 = vpack.c.b16 %v3593, %v3582
  %v3803 = vpack.c.b16 %v3594, %v3583
  %v3804 = vpack.c.b16 %v3595, %v3584
  %v3805 = vpack.c.b16 %v3596, %v3585
  %v3806 = vpack.c.b16 %v3597, %v3586
  %v3807 = vpack.c.b16 %v3598, %v3587
  %v3808 = vpack.c.b16 %v3599, %v3588
  %v3809 = vpack.c.b16 %v3600, %v3589
  %v3810 = vpack.c.b16 %v3601, %v3590
  %v3811 = vpack.c.b16 %v3613, %v3602
  %v3812 = vpack.c.b16 %v3614, %v3603
  %v3813 = vpack.c.b16 %v3615, %v3604
  %v3814 = vpack.c.b16 %v3616, %v3605
  %v3815 = vpack.c.b16 %v3617, %v3606
  %v3816 = vpack.c.b16 %v3618, %v3607
  %v3817 = vpack.c.b16 %v3619, %v3608
  %v3818 = vpack.c.b16 %v3620, %v3609
  %v3819 = vpack.c.b16 %v3621, %v3610
  %v3820 = vpack.c.b16 %v3622, %v3611
  %v3821 = vpack.c.b16 %v3623, %v3612
  %v3822 = vpack.c.b16 %v3635, %v3624
  %v3823 = vpack.c.b16 %v3636, %v3625
  %v3824 = vpack.c.b16 %v3637, %v3626
  %v3825 = vpack.c.b16 %v3638, %v3627
  %v3826 = vpack.c.b16 %v3639, %v3628
  %v3827 = vpack.c.b16 %v3640, %v3629
  %v3828 = vpack.c.b16 %v3641, %v3630
  %v3829 = vpack.c.b16 %v3642, %v3631
  %v3830 = vpack.c.b16 %v3643, %v3632
  %v3831 = vpack.c.b16 %v3644, %v3633
  %v3832 = vpack.c.b16 %v3645, %v3634
  %v3833 = vpack.c.b16 %v3657, %v3646
  %v3834 = vpack.c.b16 %v3658, %v3647
  %v3835 = vpack.c.b16 %v3659, %v3648
  %v3836 = vpack.c.b16 %v3660, %v3649
  %v3837 = vpack.c.b16 %v3661, %v3650
  %v3838 = vpack.c.b16 %v3662, %v3651
  %v3839 = vpack.c.b16 %v3663, %v3652
  %v3840 = vpack.c.b16 %v3664, %v3653
  %v3841 = vpack.c.b16 %v3665, %v3654
  %v3842 = vpack.c.b16 %v3666, %v3655
  %v3843 = vpack.c.b16 %v3667, %v3656
  %4020 = vmatprep.subr.bf16.mxu0 0
  %4021 = vmatpush1.bf16.msra.mxu0 %v1653
  %4022 = vmatprep.subr.bf16.mxu0 0
  %4023 = vmatpush1.bf16.msra.mxu0 %v1654
  %4024 = vmatprep.subr.bf16.mxu0 0
  %4025 = vmatpush1.bf16.msra.mxu0 %v1655
  %4026 = vmatprep.subr.bf16.mxu0 0
  %4027 = vmatpush1.bf16.msra.mxu0 %v1656
  %4028 = vmatprep.subr.bf16.mxu0 0
  %4029 = vmatpush1.bf16.msra.mxu0 %v1657
  %4030 = vmatprep.subr.bf16.mxu0 0
  %4031 = vmatpush1.bf16.msra.mxu0 %v1658
  %4032 = vmatprep.subr.bf16.mxu0 0
  %4033 = vmatpush1.bf16.msra.mxu0 %v1659
  %4034 = vmatprep.subr.bf16.mxu0 0
  %4035 = vmatpush1.bf16.msra.mxu0 %v1660
  %4036 = vmatprep.subr.bf16.mxu0 0
  %4037 = vmatpush1.bf16.msra.mxu0 %v1661
  %4038 = vmatprep.subr.bf16.mxu0 0
  %4039 = vmatpush1.bf16.msra.mxu0 %v1662
  %4040 = vmatprep.subr.bf16.mxu0 0
  %4041 = vmatpush1.bf16.msra.mxu0 %v1663
  %4042 = vmatprep.subr.bf16.mxu0 0
  %4043 = vmatpush1.bf16.msra.mxu0 %v1664
  %4044 = vmatprep.subr.bf16.mxu0 0
  %4045 = vmatpush1.bf16.msra.mxu0 %v1665
  %4046 = vmatprep.subr.bf16.mxu0 0
  %4047 = vmatpush1.bf16.msra.mxu0 %v1666
  %4048 = vmatprep.subr.bf16.mxu0 0
  %4049 = vmatpush1.bf16.msra.mxu0 %v1667
  %4050 = vmatprep.subr.bf16.mxu0 0
  %4051 = vmatpush1.bf16.msra.mxu0 %v1668
  %4052 = vmatprep.mubr.bf16.mxu0 %v3669
  %4053 = vmatmul.mubr.bf16.gmra.mrb[0].mxu0 %v3668
  %v4054 = vpop.f32.mrb[0].mxu0
  %v4055 = vadd.f32 0.0, %v4054
  %v4056 = vpop.f32.mrb[0].mxu0
  %v4057 = vpop.f32.mrb[0].mxu0
  %v4058 = vadd.f32 0.0, %v4057
  %v4059 = vpop.f32.mrb[0].mxu0
  %4060 = vmatprep.mubr.bf16.mxu0 %v3680
  %4061 = vmatmul.mubr.bf16.gmra.mrb[0].mxu0 %v3679
  %v4062 = vpop.f32.mrb[0].mxu0
  %v4063 = vadd.f32 0.0, %v4062
  %v4064 = vpop.f32.mrb[0].mxu0
  %v4065 = vpop.f32.mrb[0].mxu0
  %v4066 = vadd.f32 0.0, %v4065
  %v4067 = vpop.f32.mrb[0].mxu0
  %4068 = vmatprep.mubr.bf16.mxu0 %v3691
  %4069 = vmatmul.mubr.bf16.gmra.mrb[0].mxu0 %v3690
  %v4070 = vpop.f32.mrb[0].mxu0
  %v4071 = vadd.f32 0.0, %v4070
  %v4072 = vpop.f32.mrb[0].mxu0
  %v4073 = vpop.f32.mrb[0].mxu0
  %v4074 = vadd.f32 0.0, %v4073
  %v4075 = vpop.f32.mrb[0].mxu0
  %4076 = vmatprep.mubr.bf16.mxu0 %v3702
  %4077 = vmatmul.mubr.bf16.gmra.mrb[0].mxu0 %v3701
  %v4078 = vpop.f32.mrb[0].mxu0
  %v4079 = vadd.f32 0.0, %v4078
  %v4080 = vpop.f32.mrb[0].mxu0
  %v4081 = vpop.f32.mrb[0].mxu0
  %v4082 = vadd.f32 0.0, %v4081
  %v4083 = vpop.f32.mrb[0].mxu0
  %4084 = vmatprep.mubr.bf16.mxu0 %v3713
  %4085 = vmatmul.mubr.bf16.gmra.mrb[0].mxu0 %v3712
  %v4086 = vpop.f32.mrb[0].mxu0
  %v4087 = vadd.f32 0.0, %v4086
  %v4088 = vpop.f32.mrb[0].mxu0
  %v4089 = vpop.f32.mrb[0].mxu0
  %v4090 = vadd.f32 0.0, %v4089
  %v4091 = vpop.f32.mrb[0].mxu0
  %4092 = vmatprep.mubr.bf16.mxu0 %v3724
  %4093 = vmatmul.mubr.bf16.gmra.mrb[0].mxu0 %v3723
  %v4094 = vpop.f32.mrb[0].mxu0
  %v4095 = vadd.f32 0.0, %v4094
  %v4096 = vpop.f32.mrb[0].mxu0
  %v4097 = vpop.f32.mrb[0].mxu0
  %v4098 = vadd.f32 0.0, %v4097
  %v4099 = vpop.f32.mrb[0].mxu0
  %4100 = vmatprep.mubr.bf16.mxu0 %v3735
  %4101 = vmatmul.mubr.bf16.gmra.mrb[0].mxu0 %v3734
  %v4102 = vpop.f32.mrb[0].mxu0
  %v4103 = vadd.f32 0.0, %v4102
  %v4104 = vpop.f32.mrb[0].mxu0
  %v4105 = vpop.f32.mrb[0].mxu0
  %v4106 = vadd.f32 0.0, %v4105
  %v4107 = vpop.f32.mrb[0].mxu0
  %4108 = vmatprep.mubr.bf16.mxu0 %v3746
  %4109 = vmatmul.mubr.bf16.gmra.mrb[0].mxu0 %v3745
  %v4110 = vpop.f32.mrb[0].mxu0
  %v4111 = vadd.f32 0.0, %v4110
  %v4112 = vpop.f32.mrb[0].mxu0
  %v4113 = vpop.f32.mrb[0].mxu0
  %v4114 = vadd.f32 0.0, %v4113
  %v4115 = vpop.f32.mrb[0].mxu0
  %4116 = vmatprep.mubr.bf16.mxu0 %v3757
  %4117 = vmatmul.mubr.bf16.gmra.mrb[0].mxu0 %v3756
  %v4118 = vpop.f32.mrb[0].mxu0
  %v4119 = vadd.f32 0.0, %v4118
  %v4120 = vpop.f32.mrb[0].mxu0
  %v4121 = vpop.f32.mrb[0].mxu0
  %v4122 = vadd.f32 0.0, %v4121
  %v4123 = vpop.f32.mrb[0].mxu0
  %4124 = vmatprep.mubr.bf16.mxu0 %v3768
  %4125 = vmatmul.mubr.bf16.gmra.mrb[0].mxu0 %v3767
  %v4126 = vpop.f32.mrb[0].mxu0
  %v4127 = vadd.f32 0.0, %v4126
  %v4128 = vpop.f32.mrb[0].mxu0
  %v4129 = vpop.f32.mrb[0].mxu0
  %v4130 = vadd.f32 0.0, %v4129
  %v4131 = vpop.f32.mrb[0].mxu0
  %4132 = vmatprep.mubr.bf16.mxu0 %v3779
  %4133 = vmatmul.mubr.bf16.gmra.mrb[0].mxu0 %v3778
  %v4134 = vpop.f32.mrb[0].mxu0
  %v4135 = vadd.f32 0.0, %v4134
  %v4136 = vpop.f32.mrb[0].mxu0
  %v4137 = vpop.f32.mrb[0].mxu0
  %v4138 = vadd.f32 0.0, %v4137
  %v4139 = vpop.f32.mrb[0].mxu0
  %4140 = vmatprep.mubr.bf16.mxu0 %v3790
  %4141 = vmatmul.mubr.bf16.gmra.mrb[0].mxu0 %v3789
  %v4142 = vpop.f32.mrb[0].mxu0
  %v4143 = vadd.f32 0.0, %v4142
  %v4144 = vpop.f32.mrb[0].mxu0
  %v4145 = vpop.f32.mrb[0].mxu0
  %v4146 = vadd.f32 0.0, %v4145
  %v4147 = vpop.f32.mrb[0].mxu0
  %4148 = vmatprep.mubr.bf16.mxu0 %v3801
  %4149 = vmatmul.mubr.bf16.gmra.mrb[0].mxu0 %v3800
  %v4150 = vpop.f32.mrb[0].mxu0
  %v4151 = vadd.f32 0.0, %v4150
  %v4152 = vpop.f32.mrb[0].mxu0
  %v4153 = vpop.f32.mrb[0].mxu0
  %v4154 = vadd.f32 0.0, %v4153
  %v4155 = vpop.f32.mrb[0].mxu0
  %4156 = vmatprep.mubr.bf16.mxu0 %v3812
  %4157 = vmatmul.mubr.bf16.gmra.mrb[0].mxu0 %v3811
  %v4158 = vpop.f32.mrb[0].mxu0
  %v4159 = vadd.f32 0.0, %v4158
  %v4160 = vpop.f32.mrb[0].mxu0
  %v4161 = vpop.f32.mrb[0].mxu0
  %v4162 = vadd.f32 0.0, %v4161
  %v4163 = vpop.f32.mrb[0].mxu0
  %4164 = vmatprep.mubr.bf16.mxu0 %v3823
  %4165 = vmatmul.mubr.bf16.gmra.mrb[0].mxu0 %v3822
  %v4166 = vpop.f32.mrb[0].mxu0
  %v4167 = vadd.f32 0.0, %v4166
  %v4168 = vpop.f32.mrb[0].mxu0
  %v4169 = vpop.f32.mrb[0].mxu0
  %v4170 = vadd.f32 0.0, %v4169
  %v4171 = vpop.f32.mrb[0].mxu0
  %4172 = vmatprep.mubr.bf16.mxu0 %v3834
  %4173 = vmatmul.mubr.bf16.gmra.mrb[0].mxu0 %v3833
  %v4174 = vpop.f32.mrb[0].mxu0
  %v4175 = vadd.f32 0.0, %v4174
  %v4176 = vpop.f32.mrb[0].mxu0
  %v4177 = vpop.f32.mrb[0].mxu0
  %v4178 = vadd.f32 0.0, %v4177
  %v4179 = vpop.f32.mrb[0].mxu0
  %4180 = vdwg.mxu0
  %4181 = vmatprep.subr.bf16.mxu0 0
  %4182 = vmatpush1.bf16.msra.mxu0 %v1669
  %4183 = vmatprep.subr.bf16.mxu0 0
  %4184 = vmatpush1.bf16.msra.mxu0 %v1670
  %4185 = vmatprep.subr.bf16.mxu0 0
  %4186 = vmatpush1.bf16.msra.mxu0 %v1671
  %4187 = vmatprep.subr.bf16.mxu0 0
  %4188 = vmatpush1.bf16.msra.mxu0 %v1672
  %4189 = vmatprep.subr.bf16.mxu0 0
  %4190 = vmatpush1.bf16.msra.mxu0 %v1673
  %4191 = vmatprep.subr.bf16.mxu0 0
  %4192 = vmatpush1.bf16.msra.mxu0 %v1674
  %4193 = vmatprep.subr.bf16.mxu0 0
  %4194 = vmatpush1.bf16.msra.mxu0 %v1675
  %4195 = vmatprep.subr.bf16.mxu0 0
  %4196 = vmatpush1.bf16.msra.mxu0 %v1676
  %4197 = vmatprep.subr.bf16.mxu0 0
  %4198 = vmatpush1.bf16.msra.mxu0 %v1677
  %4199 = vmatprep.subr.bf16.mxu0 0
  %4200 = vmatpush1.bf16.msra.mxu0 %v1678
  %4201 = vmatprep.subr.bf16.mxu0 0
  %4202 = vmatpush1.bf16.msra.mxu0 %v1679
  %4203 = vmatprep.subr.bf16.mxu0 0
  %4204 = vmatpush1.bf16.msra.mxu0 %v1680
  %4205 = vmatprep.subr.bf16.mxu0 0
  %4206 = vmatpush1.bf16.msra.mxu0 %v1681
  %4207 = vmatprep.subr.bf16.mxu0 0
  %4208 = vmatpush1.bf16.msra.mxu0 %v1682
  %4209 = vmatprep.subr.bf16.mxu0 0
  %4210 = vmatpush1.bf16.msra.mxu0 %v1683
  %4211 = vmatprep.subr.bf16.mxu0 0
  %4212 = vmatpush1.bf16.msra.mxu0 %v1684
  %4213 = vmatprep.mubr.bf16.mxu0 %v3671
  %4214 = vmatmul.mubr.bf16.gmra.mrb[0].mxu0 %v3670
  %v4215 = vpop.f32.mrb[0].mxu0
  %v4216 = vadd.f32 %v4055, %v4215
  %v4217 = vpop.f32.mrb[0].mxu0
  %v4218 = vpop.f32.mrb[0].mxu0
  %v4219 = vadd.f32 %v4058, %v4218
  %v4220 = vpop.f32.mrb[0].mxu0
  %4221 = vmatprep.mubr.bf16.mxu0 %v3682
  %4222 = vmatmul.mubr.bf16.gmra.mrb[0].mxu0 %v3681
  %v4223 = vpop.f32.mrb[0].mxu0
  %v4224 = vadd.f32 %v4063, %v4223
  %v4225 = vpop.f32.mrb[0].mxu0
  %v4226 = vpop.f32.mrb[0].mxu0
  %v4227 = vadd.f32 %v4066, %v4226
  %v4228 = vpop.f32.mrb[0].mxu0
  %4229 = vmatprep.mubr.bf16.mxu0 %v3693
  %4230 = vmatmul.mubr.bf16.gmra.mrb[0].mxu0 %v3692
  %v4231 = vpop.f32.mrb[0].mxu0
  %v4232 = vadd.f32 %v4071, %v4231
  %v4233 = vpop.f32.mrb[0].mxu0
  %v4234 = vpop.f32.mrb[0].mxu0
  %v4235 = vadd.f32 %v4074, %v4234
  %v4236 = vpop.f32.mrb[0].mxu0
  %4237 = vmatprep.mubr.bf16.mxu0 %v3704
  %4238 = vmatmul.mubr.bf16.gmra.mrb[0].mxu0 %v3703
  %v4239 = vpop.f32.mrb[0].mxu0
  %v4240 = vadd.f32 %v4079, %v4239
  %v4241 = vpop.f32.mrb[0].mxu0
  %v4242 = vpop.f32.mrb[0].mxu0
  %v4243 = vadd.f32 %v4082, %v4242
  %v4244 = vpop.f32.mrb[0].mxu0
  %4245 = vmatprep.mubr.bf16.mxu0 %v3715
  %4246 = vmatmul.mubr.bf16.gmra.mrb[0].mxu0 %v3714
  %v4247 = vpop.f32.mrb[0].mxu0
  %v4248 = vadd.f32 %v4087, %v4247
  %v4249 = vpop.f32.mrb[0].mxu0
  %v4250 = vpop.f32.mrb[0].mxu0
  %v4251 = vadd.f32 %v4090, %v4250
  %v4252 = vpop.f32.mrb[0].mxu0
  %4253 = vmatprep.mubr.bf16.mxu0 %v3726
  %4254 = vmatmul.mubr.bf16.gmra.mrb[0].mxu0 %v3725
  %v4255 = vpop.f32.mrb[0].mxu0
  %v4256 = vadd.f32 %v4095, %v4255
  %v4257 = vpop.f32.mrb[0].mxu0
  %v4258 = vpop.f32.mrb[0].mxu0
  %v4259 = vadd.f32 %v4098, %v4258
  %v4260 = vpop.f32.mrb[0].mxu0
  %4261 = vmatprep.mubr.bf16.mxu0 %v3737
  %4262 = vmatmul.mubr.bf16.gmra.mrb[0].mxu0 %v3736
  %v4263 = vpop.f32.mrb[0].mxu0
  %v4264 = vadd.f32 %v4103, %v4263
  %v4265 = vpop.f32.mrb[0].mxu0
  %v4266 = vpop.f32.mrb[0].mxu0
  %v4267 = vadd.f32 %v4106, %v4266
  %v4268 = vpop.f32.mrb[0].mxu0
  %4269 = vmatprep.mubr.bf16.mxu0 %v3748
  %4270 = vmatmul.mubr.bf16.gmra.mrb[0].mxu0 %v3747
  %v4271 = vpop.f32.mrb[0].mxu0
  %v4272 = vadd.f32 %v4111, %v4271
  %v4273 = vpop.f32.mrb[0].mxu0
  %v4274 = vpop.f32.mrb[0].mxu0
  %v4275 = vadd.f32 %v4114, %v4274
  %v4276 = vpop.f32.mrb[0].mxu0
  %4277 = vmatprep.mubr.bf16.mxu0 %v3759
  %4278 = vmatmul.mubr.bf16.gmra.mrb[0].mxu0 %v3758
  %v4279 = vpop.f32.mrb[0].mxu0
  %v4280 = vadd.f32 %v4119, %v4279
  %v4281 = vpop.f32.mrb[0].mxu0
  %v4282 = vpop.f32.mrb[0].mxu0
  %v4283 = vadd.f32 %v4122, %v4282
  %v4284 = vpop.f32.mrb[0].mxu0
  %4285 = vmatprep.mubr.bf16.mxu0 %v3770
  %4286 = vmatmul.mubr.bf16.gmra.mrb[0].mxu0 %v3769
  %v4287 = vpop.f32.mrb[0].mxu0
  %v4288 = vadd.f32 %v4127, %v4287
  %v4289 = vpop.f32.mrb[0].mxu0
  %v4290 = vpop.f32.mrb[0].mxu0
  %v4291 = vadd.f32 %v4130, %v4290
  %v4292 = vpop.f32.mrb[0].mxu0
  %4293 = vmatprep.mubr.bf16.mxu0 %v3781
  %4294 = vmatmul.mubr.bf16.gmra.mrb[0].mxu0 %v3780
  %v4295 = vpop.f32.mrb[0].mxu0
  %v4296 = vadd.f32 %v4135, %v4295
  %v4297 = vpop.f32.mrb[0].mxu0
  %v4298 = vpop.f32.mrb[0].mxu0
  %v4299 = vadd.f32 %v4138, %v4298
  %v4300 = vpop.f32.mrb[0].mxu0
  %4301 = vmatprep.mubr.bf16.mxu0 %v3792
  %4302 = vmatmul.mubr.bf16.gmra.mrb[0].mxu0 %v3791
  %v4303 = vpop.f32.mrb[0].mxu0
  %v4304 = vadd.f32 %v4143, %v4303
  %v4305 = vpop.f32.mrb[0].mxu0
  %v4306 = vpop.f32.mrb[0].mxu0
  %v4307 = vadd.f32 %v4146, %v4306
  %v4308 = vpop.f32.mrb[0].mxu0
  %4309 = vmatprep.mubr.bf16.mxu0 %v3803
  %4310 = vmatmul.mubr.bf16.gmra.mrb[0].mxu0 %v3802
  %v4311 = vpop.f32.mrb[0].mxu0
  %v4312 = vadd.f32 %v4151, %v4311
  %v4313 = vpop.f32.mrb[0].mxu0
  %v4314 = vpop.f32.mrb[0].mxu0
  %v4315 = vadd.f32 %v4154, %v4314
  %v4316 = vpop.f32.mrb[0].mxu0
  %4317 = vmatprep.mubr.bf16.mxu0 %v3814
  %4318 = vmatmul.mubr.bf16.gmra.mrb[0].mxu0 %v3813
  %v4319 = vpop.f32.mrb[0].mxu0
  %v4320 = vadd.f32 %v4159, %v4319
  %v4321 = vpop.f32.mrb[0].mxu0
  %v4322 = vpop.f32.mrb[0].mxu0
  %v4323 = vadd.f32 %v4162, %v4322
  %v4324 = vpop.f32.mrb[0].mxu0
  %4325 = vmatprep.mubr.bf16.mxu0 %v3825
  %4326 = vmatmul.mubr.bf16.gmra.mrb[0].mxu0 %v3824
  %v4327 = vpop.f32.mrb[0].mxu0
  %v4328 = vadd.f32 %v4167, %v4327
  %v4329 = vpop.f32.mrb[0].mxu0
  %v4330 = vpop.f32.mrb[0].mxu0
  %v4331 = vadd.f32 %v4170, %v4330
  %v4332 = vpop.f32.mrb[0].mxu0
  %4333 = vmatprep.mubr.bf16.mxu0 %v3836
  %4334 = vmatmul.mubr.bf16.gmra.mrb[0].mxu0 %v3835
  %v4335 = vpop.f32.mrb[0].mxu0
  %v4336 = vadd.f32 %v4175, %v4335
  %v4337 = vpop.f32.mrb[0].mxu0
  %v4338 = vpop.f32.mrb[0].mxu0
  %v4339 = vadd.f32 %v4178, %v4338
  %v4340 = vpop.f32.mrb[0].mxu0
  %4341 = vdwg.mxu0
  %4342 = vmatprep.subr.bf16.mxu0 0
  %4343 = vmatpush1.bf16.msra.mxu0 %v1685
  %4344 = vmatprep.subr.bf16.mxu0 0
  %4345 = vmatpush1.bf16.msra.mxu0 %v1686
  %4346 = vmatprep.subr.bf16.mxu0 0
  %4347 = vmatpush1.bf16.msra.mxu0 %v1687
  %4348 = vmatprep.subr.bf16.mxu0 0
  %4349 = vmatpush1.bf16.msra.mxu0 %v1688
  %4350 = vmatprep.subr.bf16.mxu0 0
  %4351 = vmatpush1.bf16.msra.mxu0 %v1689
  %4352 = vmatprep.subr.bf16.mxu0 0
  %4353 = vmatpush1.bf16.msra.mxu0 %v1690
  %4354 = vmatprep.subr.bf16.mxu0 0
  %4355 = vmatpush1.bf16.msra.mxu0 %v1691
  %4356 = vmatprep.subr.bf16.mxu0 0
  %4357 = vmatpush1.bf16.msra.mxu0 %v1692
  %4358 = vmatprep.subr.bf16.mxu0 0
  %4359 = vmatpush1.bf16.msra.mxu0 %v1693
  %4360 = vmatprep.subr.bf16.mxu0 0
  %4361 = vmatpush1.bf16.msra.mxu0 %v1694
  %4362 = vmatprep.subr.bf16.mxu0 0
  %4363 = vmatpush1.bf16.msra.mxu0 %v1695
  %4364 = vmatprep.subr.bf16.mxu0 0
  %4365 = vmatpush1.bf16.msra.mxu0 %v1696
  %4366 = vmatprep.subr.bf16.mxu0 0
  %4367 = vmatpush1.bf16.msra.mxu0 %v1697
  %4368 = vmatprep.subr.bf16.mxu0 0
  %4369 = vmatpush1.bf16.msra.mxu0 %v1698
  %4370 = vmatprep.subr.bf16.mxu0 0
  %4371 = vmatpush1.bf16.msra.mxu0 %v1699
  %4372 = vmatprep.subr.bf16.mxu0 0
  %4373 = vmatpush1.bf16.msra.mxu0 %v1700
  %4374 = vmatprep.mubr.bf16.mxu0 %v3673
  %4375 = vmatmul.mubr.bf16.gmra.mrb[0].mxu0 %v3672
  %v4376 = vpop.f32.mrb[0].mxu0
  %v4377 = vadd.f32 %v4216, %v4376
  %v4378 = vpop.f32.mrb[0].mxu0
  %v4379 = vpop.f32.mrb[0].mxu0
  %v4380 = vadd.f32 %v4219, %v4379
  %v4381 = vpop.f32.mrb[0].mxu0
  %4382 = vmatprep.mubr.bf16.mxu0 %v3684
  %4383 = vmatmul.mubr.bf16.gmra.mrb[0].mxu0 %v3683
  %v4384 = vpop.f32.mrb[0].mxu0
  %v4385 = vadd.f32 %v4224, %v4384
  %v4386 = vpop.f32.mrb[0].mxu0
  %v4387 = vpop.f32.mrb[0].mxu0
  %v4388 = vadd.f32 %v4227, %v4387
  %v4389 = vpop.f32.mrb[0].mxu0
  %4390 = vmatprep.mubr.bf16.mxu0 %v3695
  %4391 = vmatmul.mubr.bf16.gmra.mrb[0].mxu0 %v3694
  %v4392 = vpop.f32.mrb[0].mxu0
  %v4393 = vadd.f32 %v4232, %v4392
  %v4394 = vpop.f32.mrb[0].mxu0
  %v4395 = vpop.f32.mrb[0].mxu0
  %v4396 = vadd.f32 %v4235, %v4395
  %v4397 = vpop.f32.mrb[0].mxu0
  %4398 = vmatprep.mubr.bf16.mxu0 %v3706
  %4399 = vmatmul.mubr.bf16.gmra.mrb[0].mxu0 %v3705
  %v4400 = vpop.f32.mrb[0].mxu0
  %v4401 = vadd.f32 %v4240, %v4400
  %v4402 = vpop.f32.mrb[0].mxu0
  %v4403 = vpop.f32.mrb[0].mxu0
  %v4404 = vadd.f32 %v4243, %v4403
  %v4405 = vpop.f32.mrb[0].mxu0
  %4406 = vmatprep.mubr.bf16.mxu0 %v3717
  %4407 = vmatmul.mubr.bf16.gmra.mrb[0].mxu0 %v3716
  %v4408 = vpop.f32.mrb[0].mxu0
  %v4409 = vadd.f32 %v4248, %v4408
  %v4410 = vpop.f32.mrb[0].mxu0
  %v4411 = vpop.f32.mrb[0].mxu0
  %v4412 = vadd.f32 %v4251, %v4411
  %v4413 = vpop.f32.mrb[0].mxu0
  %4414 = vmatprep.mubr.bf16.mxu0 %v3728
  %4415 = vmatmul.mubr.bf16.gmra.mrb[0].mxu0 %v3727
  %v4416 = vpop.f32.mrb[0].mxu0
  %v4417 = vadd.f32 %v4256, %v4416
  %v4418 = vpop.f32.mrb[0].mxu0
  %v4419 = vpop.f32.mrb[0].mxu0
  %v4420 = vadd.f32 %v4259, %v4419
  %v4421 = vpop.f32.mrb[0].mxu0
  %4422 = vmatprep.mubr.bf16.mxu0 %v3739
  %4423 = vmatmul.mubr.bf16.gmra.mrb[0].mxu0 %v3738
  %v4424 = vpop.f32.mrb[0].mxu0
  %v4425 = vadd.f32 %v4264, %v4424
  %v4426 = vpop.f32.mrb[0].mxu0
  %v4427 = vpop.f32.mrb[0].mxu0
  %v4428 = vadd.f32 %v4267, %v4427
  %v4429 = vpop.f32.mrb[0].mxu0
  %4430 = vmatprep.mubr.bf16.mxu0 %v3750
  %4431 = vmatmul.mubr.bf16.gmra.mrb[0].mxu0 %v3749
  %v4432 = vpop.f32.mrb[0].mxu0
  %v4433 = vadd.f32 %v4272, %v4432
  %v4434 = vpop.f32.mrb[0].mxu0
  %v4435 = vpop.f32.mrb[0].mxu0
  %v4436 = vadd.f32 %v4275, %v4435
  %v4437 = vpop.f32.mrb[0].mxu0
  %4438 = vmatprep.mubr.bf16.mxu0 %v3761
  %4439 = vmatmul.mubr.bf16.gmra.mrb[0].mxu0 %v3760
  %v4440 = vpop.f32.mrb[0].mxu0
  %v4441 = vadd.f32 %v4280, %v4440
  %v4442 = vpop.f32.mrb[0].mxu0
  %v4443 = vpop.f32.mrb[0].mxu0
  %v4444 = vadd.f32 %v4283, %v4443
  %v4445 = vpop.f32.mrb[0].mxu0
  %4446 = vmatprep.mubr.bf16.mxu0 %v3772
  %4447 = vmatmul.mubr.bf16.gmra.mrb[0].mxu0 %v3771
  %v4448 = vpop.f32.mrb[0].mxu0
  %v4449 = vadd.f32 %v4288, %v4448
  %v4450 = vpop.f32.mrb[0].mxu0
  %v4451 = vpop.f32.mrb[0].mxu0
  %v4452 = vadd.f32 %v4291, %v4451
  %v4453 = vpop.f32.mrb[0].mxu0
  %4454 = vmatprep.mubr.bf16.mxu0 %v3783
  %4455 = vmatmul.mubr.bf16.gmra.mrb[0].mxu0 %v3782
  %v4456 = vpop.f32.mrb[0].mxu0
  %v4457 = vadd.f32 %v4296, %v4456
  %v4458 = vpop.f32.mrb[0].mxu0
  %v4459 = vpop.f32.mrb[0].mxu0
  %v4460 = vadd.f32 %v4299, %v4459
  %v4461 = vpop.f32.mrb[0].mxu0
  %4462 = vmatprep.mubr.bf16.mxu0 %v3794
  %4463 = vmatmul.mubr.bf16.gmra.mrb[0].mxu0 %v3793
  %v4464 = vpop.f32.mrb[0].mxu0
  %v4465 = vadd.f32 %v4304, %v4464
  %v4466 = vpop.f32.mrb[0].mxu0
  %v4467 = vpop.f32.mrb[0].mxu0
  %v4468 = vadd.f32 %v4307, %v4467
  %v4469 = vpop.f32.mrb[0].mxu0
  %4470 = vmatprep.mubr.bf16.mxu0 %v3805
  %4471 = vmatmul.mubr.bf16.gmra.mrb[0].mxu0 %v3804
  %v4472 = vpop.f32.mrb[0].mxu0
  %v4473 = vadd.f32 %v4312, %v4472
  %v4474 = vpop.f32.mrb[0].mxu0
  %v4475 = vpop.f32.mrb[0].mxu0
  %v4476 = vadd.f32 %v4315, %v4475
  %v4477 = vpop.f32.mrb[0].mxu0
  %4478 = vmatprep.mubr.bf16.mxu0 %v3816
  %4479 = vmatmul.mubr.bf16.gmra.mrb[0].mxu0 %v3815
  %v4480 = vpop.f32.mrb[0].mxu0
  %v4481 = vadd.f32 %v4320, %v4480
  %v4482 = vpop.f32.mrb[0].mxu0
  %v4483 = vpop.f32.mrb[0].mxu0
  %v4484 = vadd.f32 %v4323, %v4483
  %v4485 = vpop.f32.mrb[0].mxu0
  %4486 = vmatprep.mubr.bf16.mxu0 %v3827
  %4487 = vmatmul.mubr.bf16.gmra.mrb[0].mxu0 %v3826
  %v4488 = vpop.f32.mrb[0].mxu0
  %v4489 = vadd.f32 %v4328, %v4488
  %v4490 = vpop.f32.mrb[0].mxu0
  %v4491 = vpop.f32.mrb[0].mxu0
  %v4492 = vadd.f32 %v4331, %v4491
  %v4493 = vpop.f32.mrb[0].mxu0
  %4494 = vmatprep.mubr.bf16.mxu0 %v3838
  %4495 = vmatmul.mubr.bf16.gmra.mrb[0].mxu0 %v3837
  %v4496 = vpop.f32.mrb[0].mxu0
  %v4497 = vadd.f32 %v4336, %v4496
  %v4498 = vpop.f32.mrb[0].mxu0
  %v4499 = vpop.f32.mrb[0].mxu0
  %v4500 = vadd.f32 %v4339, %v4499
  %v4501 = vpop.f32.mrb[0].mxu0
  %4502 = vdwg.mxu0
  %4503 = vmatprep.subr.bf16.mxu0 0
  %4504 = vmatpush1.bf16.msra.mxu0 %v1701
  %4505 = vmatprep.subr.bf16.mxu0 0
  %4506 = vmatpush1.bf16.msra.mxu0 %v1702
  %4507 = vmatprep.subr.bf16.mxu0 0
  %4508 = vmatpush1.bf16.msra.mxu0 %v1703
  %4509 = vmatprep.subr.bf16.mxu0 0
  %4510 = vmatpush1.bf16.msra.mxu0 %v1704
  %4511 = vmatprep.subr.bf16.mxu0 0
  %4512 = vmatpush1.bf16.msra.mxu0 %v1705
  %4513 = vmatprep.subr.bf16.mxu0 0
  %4514 = vmatpush1.bf16.msra.mxu0 %v1706
  %4515 = vmatprep.subr.bf16.mxu0 0
  %4516 = vmatpush1.bf16.msra.mxu0 %v1707
  %4517 = vmatprep.subr.bf16.mxu0 0
  %4518 = vmatpush1.bf16.msra.mxu0 %v1708
  %4519 = vmatprep.subr.bf16.mxu0 0
  %4520 = vmatpush1.bf16.msra.mxu0 %v1709
  %4521 = vmatprep.subr.bf16.mxu0 0
  %4522 = vmatpush1.bf16.msra.mxu0 %v1710
  %4523 = vmatprep.subr.bf16.mxu0 0
  %4524 = vmatpush1.bf16.msra.mxu0 %v1711
  %4525 = vmatprep.subr.bf16.mxu0 0
  %4526 = vmatpush1.bf16.msra.mxu0 %v1712
  %4527 = vmatprep.subr.bf16.mxu0 0
  %4528 = vmatpush1.bf16.msra.mxu0 %v1713
  %4529 = vmatprep.subr.bf16.mxu0 0
  %4530 = vmatpush1.bf16.msra.mxu0 %v1714
  %4531 = vmatprep.subr.bf16.mxu0 0
  %4532 = vmatpush1.bf16.msra.mxu0 %v1715
  %4533 = vmatprep.subr.bf16.mxu0 0
  %4534 = vmatpush1.bf16.msra.mxu0 %v1716
  %4535 = vmatprep.mubr.bf16.mxu0 %v3675
  %4536 = vmatmul.mubr.bf16.gmra.mrb[0].mxu0 %v3674
  %v4537 = vpop.f32.mrb[0].mxu0
  %v4538 = vadd.f32 %v4377, %v4537
  %v4539 = vpop.f32.mrb[0].mxu0
  %v4540 = vpop.f32.mrb[0].mxu0
  %v4541 = vadd.f32 %v4380, %v4540
  %v4542 = vpop.f32.mrb[0].mxu0
  %4543 = vmatprep.mubr.bf16.mxu0 %v3686
  %4544 = vmatmul.mubr.bf16.gmra.mrb[0].mxu0 %v3685
  %v4545 = vpop.f32.mrb[0].mxu0
  %v4546 = vadd.f32 %v4385, %v4545
  %v4547 = vpop.f32.mrb[0].mxu0
  %v4548 = vpop.f32.mrb[0].mxu0
  %v4549 = vadd.f32 %v4388, %v4548
  %v4550 = vpop.f32.mrb[0].mxu0
  %4551 = vmatprep.mubr.bf16.mxu0 %v3697
  %4552 = vmatmul.mubr.bf16.gmra.mrb[0].mxu0 %v3696
  %v4553 = vpop.f32.mrb[0].mxu0
  %v4554 = vadd.f32 %v4393, %v4553
  %v4555 = vpop.f32.mrb[0].mxu0
  %v4556 = vpop.f32.mrb[0].mxu0
  %v4557 = vadd.f32 %v4396, %v4556
  %v4558 = vpop.f32.mrb[0].mxu0
  %4559 = vmatprep.mubr.bf16.mxu0 %v3708
  %4560 = vmatmul.mubr.bf16.gmra.mrb[0].mxu0 %v3707
  %v4561 = vpop.f32.mrb[0].mxu0
  %v4562 = vadd.f32 %v4401, %v4561
  %v4563 = vpop.f32.mrb[0].mxu0
  %v4564 = vpop.f32.mrb[0].mxu0
  %v4565 = vadd.f32 %v4404, %v4564
  %v4566 = vpop.f32.mrb[0].mxu0
  %4567 = vmatprep.mubr.bf16.mxu0 %v3719
  %4568 = vmatmul.mubr.bf16.gmra.mrb[0].mxu0 %v3718
  %v4569 = vpop.f32.mrb[0].mxu0
  %v4570 = vadd.f32 %v4409, %v4569
  %v4571 = vpop.f32.mrb[0].mxu0
  %v4572 = vpop.f32.mrb[0].mxu0
  %v4573 = vadd.f32 %v4412, %v4572
  %v4574 = vpop.f32.mrb[0].mxu0
  %4575 = vmatprep.mubr.bf16.mxu0 %v3730
  %4576 = vmatmul.mubr.bf16.gmra.mrb[0].mxu0 %v3729
  %v4577 = vpop.f32.mrb[0].mxu0
  %v4578 = vadd.f32 %v4417, %v4577
  %v4579 = vpop.f32.mrb[0].mxu0
  %v4580 = vpop.f32.mrb[0].mxu0
  %v4581 = vadd.f32 %v4420, %v4580
  %v4582 = vpop.f32.mrb[0].mxu0
  %4583 = vmatprep.mubr.bf16.mxu0 %v3741
  %4584 = vmatmul.mubr.bf16.gmra.mrb[0].mxu0 %v3740
  %v4585 = vpop.f32.mrb[0].mxu0
  %v4586 = vadd.f32 %v4425, %v4585
  %v4587 = vpop.f32.mrb[0].mxu0
  %v4588 = vpop.f32.mrb[0].mxu0
  %v4589 = vadd.f32 %v4428, %v4588
  %v4590 = vpop.f32.mrb[0].mxu0
  %4591 = vmatprep.mubr.bf16.mxu0 %v3752
  %4592 = vmatmul.mubr.bf16.gmra.mrb[0].mxu0 %v3751
  %v4593 = vpop.f32.mrb[0].mxu0
  %v4594 = vadd.f32 %v4433, %v4593
  %v4595 = vpop.f32.mrb[0].mxu0
  %v4596 = vpop.f32.mrb[0].mxu0
  %v4597 = vadd.f32 %v4436, %v4596
  %v4598 = vpop.f32.mrb[0].mxu0
  %4599 = vmatprep.mubr.bf16.mxu0 %v3763
  %4600 = vmatmul.mubr.bf16.gmra.mrb[0].mxu0 %v3762
  %v4601 = vpop.f32.mrb[0].mxu0
  %v4602 = vadd.f32 %v4441, %v4601
  %v4603 = vpop.f32.mrb[0].mxu0
  %v4604 = vpop.f32.mrb[0].mxu0
  %v4605 = vadd.f32 %v4444, %v4604
  %v4606 = vpop.f32.mrb[0].mxu0
  %4607 = vmatprep.mubr.bf16.mxu0 %v3774
  %4608 = vmatmul.mubr.bf16.gmra.mrb[0].mxu0 %v3773
  %v4609 = vpop.f32.mrb[0].mxu0
  %v4610 = vadd.f32 %v4449, %v4609
  %v4611 = vpop.f32.mrb[0].mxu0
  %v4612 = vpop.f32.mrb[0].mxu0
  %v4613 = vadd.f32 %v4452, %v4612
  %v4614 = vpop.f32.mrb[0].mxu0
  %4615 = vmatprep.mubr.bf16.mxu0 %v3785
  %4616 = vmatmul.mubr.bf16.gmra.mrb[0].mxu0 %v3784
  %v4617 = vpop.f32.mrb[0].mxu0
  %v4618 = vadd.f32 %v4457, %v4617
  %v4619 = vpop.f32.mrb[0].mxu0
  %v4620 = vpop.f32.mrb[0].mxu0
  %v4621 = vadd.f32 %v4460, %v4620
  %v4622 = vpop.f32.mrb[0].mxu0
  %4623 = vmatprep.mubr.bf16.mxu0 %v3796
  %4624 = vmatmul.mubr.bf16.gmra.mrb[0].mxu0 %v3795
  %v4625 = vpop.f32.mrb[0].mxu0
  %v4626 = vadd.f32 %v4465, %v4625
  %v4627 = vpop.f32.mrb[0].mxu0
  %v4628 = vpop.f32.mrb[0].mxu0
  %v4629 = vadd.f32 %v4468, %v4628
  %v4630 = vpop.f32.mrb[0].mxu0
  %4631 = vmatprep.mubr.bf16.mxu0 %v3807
  %4632 = vmatmul.mubr.bf16.gmra.mrb[0].mxu0 %v3806
  %v4633 = vpop.f32.mrb[0].mxu0
  %v4634 = vadd.f32 %v4473, %v4633
  %v4635 = vpop.f32.mrb[0].mxu0
  %v4636 = vpop.f32.mrb[0].mxu0
  %v4637 = vadd.f32 %v4476, %v4636
  %v4638 = vpop.f32.mrb[0].mxu0
  %4639 = vmatprep.mubr.bf16.mxu0 %v3818
  %4640 = vmatmul.mubr.bf16.gmra.mrb[0].mxu0 %v3817
  %v4641 = vpop.f32.mrb[0].mxu0
  %v4642 = vadd.f32 %v4481, %v4641
  %v4643 = vpop.f32.mrb[0].mxu0
  %v4644 = vpop.f32.mrb[0].mxu0
  %v4645 = vadd.f32 %v4484, %v4644
  %v4646 = vpop.f32.mrb[0].mxu0
  %4647 = vmatprep.mubr.bf16.mxu0 %v3829
  %4648 = vmatmul.mubr.bf16.gmra.mrb[0].mxu0 %v3828
  %v4649 = vpop.f32.mrb[0].mxu0
  %v4650 = vadd.f32 %v4489, %v4649
  %v4651 = vpop.f32.mrb[0].mxu0
  %v4652 = vpop.f32.mrb[0].mxu0
  %v4653 = vadd.f32 %v4492, %v4652
  %v4654 = vpop.f32.mrb[0].mxu0
  %4655 = vmatprep.mubr.bf16.mxu0 %v3840
  %4656 = vmatmul.mubr.bf16.gmra.mrb[0].mxu0 %v3839
  %v4657 = vpop.f32.mrb[0].mxu0
  %v4658 = vadd.f32 %v4497, %v4657
  %v4659 = vpop.f32.mrb[0].mxu0
  %v4660 = vpop.f32.mrb[0].mxu0
  %v4661 = vadd.f32 %v4500, %v4660
  %v4662 = vpop.f32.mrb[0].mxu0
  %4663 = vdwg.mxu0
  %4664 = vmatprep.subr.bf16.mxu0 0
  %4665 = vmatpush1.bf16.msra.mxu0 %v1717
  %4666 = vmatprep.subr.bf16.mxu0 0
  %4667 = vmatpush1.bf16.msra.mxu0 %v1718
  %4668 = vmatprep.subr.bf16.mxu0 0
  %4669 = vmatpush1.bf16.msra.mxu0 %v1719
  %4670 = vmatprep.subr.bf16.mxu0 0
  %4671 = vmatpush1.bf16.msra.mxu0 %v1720
  %4672 = vmatprep.subr.bf16.mxu0 0
  %4673 = vmatpush1.bf16.msra.mxu0 %v1721
  %4674 = vmatprep.subr.bf16.mxu0 0
  %4675 = vmatpush1.bf16.msra.mxu0 %v1722
  %4676 = vmatprep.subr.bf16.mxu0 0
  %4677 = vmatpush1.bf16.msra.mxu0 %v1723
  %4678 = vmatprep.subr.bf16.mxu0 0
  %4679 = vmatpush1.bf16.msra.mxu0 %v1724
  %4680 = vmatprep.subr.bf16.mxu0 0
  %4681 = vmatpush1.bf16.msra.mxu0 %v1725
  %4682 = vmatprep.subr.bf16.mxu0 0
  %4683 = vmatpush1.bf16.msra.mxu0 %v1726
  %4684 = vmatprep.subr.bf16.mxu0 0
  %4685 = vmatpush1.bf16.msra.mxu0 %v1727
  %4686 = vmatprep.subr.bf16.mxu0 0
  %4687 = vmatpush1.bf16.msra.mxu0 %v1728
  %4688 = vmatprep.subr.bf16.mxu0 0
  %4689 = vmatpush1.bf16.msra.mxu0 %v1729
  %4690 = vmatprep.subr.bf16.mxu0 0
  %4691 = vmatpush1.bf16.msra.mxu0 %v1730
  %4692 = vmatprep.subr.bf16.mxu0 0
  %4693 = vmatpush1.bf16.msra.mxu0 %v1731
  %4694 = vmatprep.subr.bf16.mxu0 0
  %4695 = vmatpush1.bf16.msra.mxu0 %v1732
  %4696 = vmatprep.mubr.bf16.mxu0 %v3677
  %4697 = vmatmul.mubr.bf16.gmra.mrb[0].mxu0 %v3676
  %v4698 = vpop.f32.mrb[0].mxu0
  %v4699 = vadd.f32 %v4538, %v4698
  %v4700 = vpop.f32.mrb[0].mxu0
  %v4701 = vpop.f32.mrb[0].mxu0
  %v4702 = vadd.f32 %v4541, %v4701
  %v4703 = vpop.f32.mrb[0].mxu0
  %4704 = vmatprep.mubr.bf16.mxu0 %v3688
  %4705 = vmatmul.mubr.bf16.gmra.mrb[0].mxu0 %v3687
  %v4706 = vpop.f32.mrb[0].mxu0
  %v4707 = vadd.f32 %v4546, %v4706
  %v4708 = vpop.f32.mrb[0].mxu0
  %v4709 = vpop.f32.mrb[0].mxu0
  %v4710 = vadd.f32 %v4549, %v4709
  %v4711 = vpop.f32.mrb[0].mxu0
  %4712 = vmatprep.mubr.bf16.mxu0 %v3699
  %4713 = vmatmul.mubr.bf16.gmra.mrb[0].mxu0 %v3698
  %v4714 = vpop.f32.mrb[0].mxu0
  %v4715 = vadd.f32 %v4554, %v4714
  %v4716 = vpop.f32.mrb[0].mxu0
  %v4717 = vpop.f32.mrb[0].mxu0
  %v4718 = vadd.f32 %v4557, %v4717
  %v4719 = vpop.f32.mrb[0].mxu0
  %4720 = vmatprep.mubr.bf16.mxu0 %v3710
  %4721 = vmatmul.mubr.bf16.gmra.mrb[0].mxu0 %v3709
  %v4722 = vpop.f32.mrb[0].mxu0
  %v4723 = vadd.f32 %v4562, %v4722
  %v4724 = vpop.f32.mrb[0].mxu0
  %v4725 = vpop.f32.mrb[0].mxu0
  %v4726 = vadd.f32 %v4565, %v4725
  %v4727 = vpop.f32.mrb[0].mxu0
  %4728 = vmatprep.mubr.bf16.mxu0 %v3721
  %4729 = vmatmul.mubr.bf16.gmra.mrb[0].mxu0 %v3720
  %v4730 = vpop.f32.mrb[0].mxu0
  %v4731 = vadd.f32 %v4570, %v4730
  %v4732 = vpop.f32.mrb[0].mxu0
  %v4733 = vpop.f32.mrb[0].mxu0
  %v4734 = vadd.f32 %v4573, %v4733
  %v4735 = vpop.f32.mrb[0].mxu0
  %4736 = vmatprep.mubr.bf16.mxu0 %v3732
  %4737 = vmatmul.mubr.bf16.gmra.mrb[0].mxu0 %v3731
  %v4738 = vpop.f32.mrb[0].mxu0
  %v4739 = vadd.f32 %v4578, %v4738
  %v4740 = vpop.f32.mrb[0].mxu0
  %v4741 = vpop.f32.mrb[0].mxu0
  %v4742 = vadd.f32 %v4581, %v4741
  %v4743 = vpop.f32.mrb[0].mxu0
  %4744 = vmatprep.mubr.bf16.mxu0 %v3743
  %4745 = vmatmul.mubr.bf16.gmra.mrb[0].mxu0 %v3742
  %v4746 = vpop.f32.mrb[0].mxu0
  %v4747 = vadd.f32 %v4586, %v4746
  %v4748 = vpop.f32.mrb[0].mxu0
  %v4749 = vpop.f32.mrb[0].mxu0
  %v4750 = vadd.f32 %v4589, %v4749
  %v4751 = vpop.f32.mrb[0].mxu0
  %4752 = vmatprep.mubr.bf16.mxu0 %v3754
  %4753 = vmatmul.mubr.bf16.gmra.mrb[0].mxu0 %v3753
  %v4754 = vpop.f32.mrb[0].mxu0
  %v4755 = vadd.f32 %v4594, %v4754
  %v4756 = vpop.f32.mrb[0].mxu0
  %v4757 = vpop.f32.mrb[0].mxu0
  %v4758 = vadd.f32 %v4597, %v4757
  %v4759 = vpop.f32.mrb[0].mxu0
  %4760 = vmatprep.mubr.bf16.mxu0 %v3765
  %4761 = vmatmul.mubr.bf16.gmra.mrb[0].mxu0 %v3764
  %v4762 = vpop.f32.mrb[0].mxu0
  %v4763 = vadd.f32 %v4602, %v4762
  %v4764 = vpop.f32.mrb[0].mxu0
  %v4765 = vpop.f32.mrb[0].mxu0
  %v4766 = vadd.f32 %v4605, %v4765
  %v4767 = vpop.f32.mrb[0].mxu0
  %4768 = vmatprep.mubr.bf16.mxu0 %v3776
  %4769 = vmatmul.mubr.bf16.gmra.mrb[0].mxu0 %v3775
  %v4770 = vpop.f32.mrb[0].mxu0
  %v4771 = vadd.f32 %v4610, %v4770
  %v4772 = vpop.f32.mrb[0].mxu0
  %v4773 = vpop.f32.mrb[0].mxu0
  %v4774 = vadd.f32 %v4613, %v4773
  %v4775 = vpop.f32.mrb[0].mxu0
  %4776 = vmatprep.mubr.bf16.mxu0 %v3787
  %4777 = vmatmul.mubr.bf16.gmra.mrb[0].mxu0 %v3786
  %v4778 = vpop.f32.mrb[0].mxu0
  %v4779 = vadd.f32 %v4618, %v4778
  %v4780 = vpop.f32.mrb[0].mxu0
  %v4781 = vpop.f32.mrb[0].mxu0
  %v4782 = vadd.f32 %v4621, %v4781
  %v4783 = vpop.f32.mrb[0].mxu0
  %4784 = vmatprep.mubr.bf16.mxu0 %v3798
  %4785 = vmatmul.mubr.bf16.gmra.mrb[0].mxu0 %v3797
  %v4786 = vpop.f32.mrb[0].mxu0
  %v4787 = vadd.f32 %v4626, %v4786
  %v4788 = vpop.f32.mrb[0].mxu0
  %v4789 = vpop.f32.mrb[0].mxu0
  %v4790 = vadd.f32 %v4629, %v4789
  %v4791 = vpop.f32.mrb[0].mxu0
  %4792 = vmatprep.mubr.bf16.mxu0 %v3809
  %4793 = vmatmul.mubr.bf16.gmra.mrb[0].mxu0 %v3808
  %v4794 = vpop.f32.mrb[0].mxu0
  %v4795 = vadd.f32 %v4634, %v4794
  %v4796 = vpop.f32.mrb[0].mxu0
  %v4797 = vpop.f32.mrb[0].mxu0
  %v4798 = vadd.f32 %v4637, %v4797
  %v4799 = vpop.f32.mrb[0].mxu0
  %4800 = vmatprep.mubr.bf16.mxu0 %v3820
  %4801 = vmatmul.mubr.bf16.gmra.mrb[0].mxu0 %v3819
  %v4802 = vpop.f32.mrb[0].mxu0
  %v4803 = vadd.f32 %v4642, %v4802
  %v4804 = vpop.f32.mrb[0].mxu0
  %v4805 = vpop.f32.mrb[0].mxu0
  %v4806 = vadd.f32 %v4645, %v4805
  %v4807 = vpop.f32.mrb[0].mxu0
  %4808 = vmatprep.mubr.bf16.mxu0 %v3831
  %4809 = vmatmul.mubr.bf16.gmra.mrb[0].mxu0 %v3830
  %v4810 = vpop.f32.mrb[0].mxu0
  %v4811 = vadd.f32 %v4650, %v4810
  %v4812 = vpop.f32.mrb[0].mxu0
  %v4813 = vpop.f32.mrb[0].mxu0
  %v4814 = vadd.f32 %v4653, %v4813
  %v4815 = vpop.f32.mrb[0].mxu0
  %4816 = vmatprep.mubr.bf16.mxu0 %v3842
  %4817 = vmatmul.mubr.bf16.gmra.mrb[0].mxu0 %v3841
  %v4818 = vpop.f32.mrb[0].mxu0
  %v4819 = vadd.f32 %v4658, %v4818
  %v4820 = vpop.f32.mrb[0].mxu0
  %v4821 = vpop.f32.mrb[0].mxu0
  %v4822 = vadd.f32 %v4661, %v4821
  %v4823 = vpop.f32.mrb[0].mxu0
  %4824 = vdwg.mxu0
  %4825 = vmatprep.subr.bf16.mxu0 0
  %4826 = vmatpush1.bf16.msra.mxu0 %v1733
  %4827 = vmatprep.subr.bf16.mxu0 0
  %4828 = vmatpush1.bf16.msra.mxu0 %v1734
  %4829 = vmatprep.subr.bf16.mxu0 0
  %4830 = vmatpush1.bf16.msra.mxu0 %v1735
  %4831 = vmatprep.subr.bf16.mxu0 0
  %4832 = vmatpush1.bf16.msra.mxu0 %v1736
  %4833 = vmatprep.subr.bf16.mxu0 0
  %4834 = vmatpush1.bf16.msra.mxu0 %v1737
  %4835 = vmatprep.subr.bf16.mxu0 0
  %4836 = vmatpush1.bf16.msra.mxu0 %v1738
  %4837 = vmatprep.subr.bf16.mxu0 0
  %4838 = vmatpush1.bf16.msra.mxu0 %v1739
  %4839 = vmatprep.subr.bf16.mxu0 0
  %4840 = vmatpush1.bf16.msra.mxu0 %v1740
  %4841 = vmatprep.subr.bf16.mxu0 0
  %4842 = vmatpush1.bf16.msra.mxu0 0
  %4843 = vmatprep.subr.bf16.mxu0 0
  %4844 = vmatpush1.bf16.msra.mxu0 0
  %4845 = vmatprep.subr.bf16.mxu0 0
  %4846 = vmatpush1.bf16.msra.mxu0 0
  %4847 = vmatprep.subr.bf16.mxu0 0
  %4848 = vmatpush1.bf16.msra.mxu0 0
  %4849 = vmatprep.subr.bf16.mxu0 0
  %4850 = vmatpush1.bf16.msra.mxu0 0
  %4851 = vmatprep.subr.bf16.mxu0 0
  %4852 = vmatpush1.bf16.msra.mxu0 0
  %4853 = vmatprep.subr.bf16.mxu0 0
  %4854 = vmatpush1.bf16.msra.mxu0 0
  %4855 = vmatprep.subr.bf16.mxu0 0
  %4856 = vmatpush1.bf16.msra.mxu0 0
  %4857 = vmatprep.mubr.bf16.mxu0 0
  %4858 = vmatmul.mubr.bf16.gmra.mrb[0].mxu0 %v3678
  %v4859 = vpop.f32.mrb[0].mxu0
  %v4860 = vadd.f32 %v4699, %v4859
  %v4861 = vpop.f32.mrb[0].mxu0
  %v4862 = vpop.f32.mrb[0].mxu0
  %v4863 = vadd.f32 %v4702, %v4862
  %v4864 = vpop.f32.mrb[0].mxu0
  %4865 = vmatprep.mubr.bf16.mxu0 0
  %4866 = vmatmul.mubr.bf16.gmra.mrb[0].mxu0 %v3689
  %v4867 = vpop.f32.mrb[0].mxu0
  %v4868 = vadd.f32 %v4707, %v4867
  %v4869 = vpop.f32.mrb[0].mxu0
  %v4870 = vpop.f32.mrb[0].mxu0
  %v4871 = vadd.f32 %v4710, %v4870
  %v4872 = vpop.f32.mrb[0].mxu0
  %4873 = vmatprep.mubr.bf16.mxu0 0
  %4874 = vmatmul.mubr.bf16.gmra.mrb[0].mxu0 %v3700
  %v4875 = vpop.f32.mrb[0].mxu0
  %v4876 = vadd.f32 %v4715, %v4875
  %v4877 = vpop.f32.mrb[0].mxu0
  %v4878 = vpop.f32.mrb[0].mxu0
  %v4879 = vadd.f32 %v4718, %v4878
  %v4880 = vpop.f32.mrb[0].mxu0
  %4881 = vmatprep.mubr.bf16.mxu0 0
  %4882 = vmatmul.mubr.bf16.gmra.mrb[0].mxu0 %v3711
  %v4883 = vpop.f32.mrb[0].mxu0
  %v4884 = vadd.f32 %v4723, %v4883
  %v4885 = vpop.f32.mrb[0].mxu0
  %v4886 = vpop.f32.mrb[0].mxu0
  %v4887 = vadd.f32 %v4726, %v4886
  %v4888 = vpop.f32.mrb[0].mxu0
  %4889 = vmatprep.mubr.bf16.mxu0 0
  %4890 = vmatmul.mubr.bf16.gmra.mrb[0].mxu0 %v3722
  %v4891 = vpop.f32.mrb[0].mxu0
  %v4892 = vadd.f32 %v4731, %v4891
  %v4893 = vpop.f32.mrb[0].mxu0
  %v4894 = vpop.f32.mrb[0].mxu0
  %v4895 = vadd.f32 %v4734, %v4894
  %v4896 = vpop.f32.mrb[0].mxu0
  %4897 = vmatprep.mubr.bf16.mxu0 0
  %4898 = vmatmul.mubr.bf16.gmra.mrb[0].mxu0 %v3733
  %v4899 = vpop.f32.mrb[0].mxu0
  %v4900 = vadd.f32 %v4739, %v4899
  %v4901 = vpop.f32.mrb[0].mxu0
  %v4902 = vpop.f32.mrb[0].mxu0
  %v4903 = vadd.f32 %v4742, %v4902
  %v4904 = vpop.f32.mrb[0].mxu0
  %4905 = vmatprep.mubr.bf16.mxu0 0
  %4906 = vmatmul.mubr.bf16.gmra.mrb[0].mxu0 %v3744
  %v4907 = vpop.f32.mrb[0].mxu0
  %v4908 = vadd.f32 %v4747, %v4907
  %v4909 = vpop.f32.mrb[0].mxu0
  %v4910 = vpop.f32.mrb[0].mxu0
  %v4911 = vadd.f32 %v4750, %v4910
  %v4912 = vpop.f32.mrb[0].mxu0
  %4913 = vmatprep.mubr.bf16.mxu0 0
  %4914 = vmatmul.mubr.bf16.gmra.mrb[0].mxu0 %v3755
  %v4915 = vpop.f32.mrb[0].mxu0
  %v4916 = vadd.f32 %v4755, %v4915
  %v4917 = vpop.f32.mrb[0].mxu0
  %v4918 = vpop.f32.mrb[0].mxu0
  %v4919 = vadd.f32 %v4758, %v4918
  %v4920 = vpop.f32.mrb[0].mxu0
  %4921 = vmatprep.mubr.bf16.mxu0 0
  %4922 = vmatmul.mubr.bf16.gmra.mrb[0].mxu0 %v3766
  %v4923 = vpop.f32.mrb[0].mxu0
  %v4924 = vadd.f32 %v4763, %v4923
  %v4925 = vpop.f32.mrb[0].mxu0
  %v4926 = vpop.f32.mrb[0].mxu0
  %v4927 = vadd.f32 %v4766, %v4926
  %v4928 = vpop.f32.mrb[0].mxu0
  %4929 = vmatprep.mubr.bf16.mxu0 0
  %4930 = vmatmul.mubr.bf16.gmra.mrb[0].mxu0 %v3777
  %v4931 = vpop.f32.mrb[0].mxu0
  %v4932 = vadd.f32 %v4771, %v4931
  %v4933 = vpop.f32.mrb[0].mxu0
  %v4934 = vpop.f32.mrb[0].mxu0
  %v4935 = vadd.f32 %v4774, %v4934
  %v4936 = vpop.f32.mrb[0].mxu0
  %4937 = vmatprep.mubr.bf16.mxu0 0
  %4938 = vmatmul.mubr.bf16.gmra.mrb[0].mxu0 %v3788
  %v4939 = vpop.f32.mrb[0].mxu0
  %v4940 = vadd.f32 %v4779, %v4939
  %v4941 = vpop.f32.mrb[0].mxu0
  %v4942 = vpop.f32.mrb[0].mxu0
  %v4943 = vadd.f32 %v4782, %v4942
  %v4944 = vpop.f32.mrb[0].mxu0
  %4945 = vmatprep.mubr.bf16.mxu0 0
  %4946 = vmatmul.mubr.bf16.gmra.mrb[0].mxu0 %v3799
  %v4947 = vpop.f32.mrb[0].mxu0
  %v4948 = vadd.f32 %v4787, %v4947
  %v4949 = vpop.f32.mrb[0].mxu0
  %v4950 = vpop.f32.mrb[0].mxu0
  %v4951 = vadd.f32 %v4790, %v4950
  %v4952 = vpop.f32.mrb[0].mxu0
  %4953 = vmatprep.mubr.bf16.mxu0 0
  %4954 = vmatmul.mubr.bf16.gmra.mrb[0].mxu0 %v3810
  %v4955 = vpop.f32.mrb[0].mxu0
  %v4956 = vadd.f32 %v4795, %v4955
  %v4957 = vpop.f32.mrb[0].mxu0
  %v4958 = vpop.f32.mrb[0].mxu0
  %v4959 = vadd.f32 %v4798, %v4958
  %v4960 = vpop.f32.mrb[0].mxu0
  %4961 = vmatprep.mubr.bf16.mxu0 0
  %4962 = vmatmul.mubr.bf16.gmra.mrb[0].mxu0 %v3821
  %v4963 = vpop.f32.mrb[0].mxu0
  %v4964 = vadd.f32 %v4803, %v4963
  %v4965 = vpop.f32.mrb[0].mxu0
  %v4966 = vpop.f32.mrb[0].mxu0
  %v4967 = vadd.f32 %v4806, %v4966
  %v4968 = vpop.f32.mrb[0].mxu0
  %4969 = vmatprep.mubr.bf16.mxu0 0
  %4970 = vmatmul.mubr.bf16.gmra.mrb[0].mxu0 %v3832
  %v4971 = vpop.f32.mrb[0].mxu0
  %v4972 = vadd.f32 %v4811, %v4971
  %v4973 = vpop.f32.mrb[0].mxu0
  %v4974 = vpop.f32.mrb[0].mxu0
  %v4975 = vadd.f32 %v4814, %v4974
  %v4976 = vpop.f32.mrb[0].mxu0
  %4977 = vmatprep.mubr.bf16.mxu0 0
  %4978 = vmatmul.mubr.bf16.gmra.mrb[0].mxu0 %v3843
  %v4979 = vpop.f32.mrb[0].mxu0
  %v4980 = vadd.f32 %v4819, %v4979
  %v4981 = vpop.f32.mrb[0].mxu0
  %v4982 = vpop.f32.mrb[0].mxu0
  %v4983 = vadd.f32 %v4822, %v4982
  %v4984 = vpop.f32.mrb[0].mxu0
  %4985 = vdwg.mxu0
  %v4986 = vmul.f32 %v4860, %v2798
  %v4987 = vmul.f32 %v4863, %v2798
  %v4988 = vmul.f32 %v4868, %v2798
  %v4989 = vmul.f32 %v4871, %v2798
  %v4990 = vmul.f32 %v4876, %v2798
  %v4991 = vmul.f32 %v4879, %v2798
  %v4992 = vmul.f32 %v4884, %v2798
  %v4993 = vmul.f32 %v4887, %v2798
  %v4994 = vmul.f32 %v4892, %v2798
  %v4995 = vmul.f32 %v4895, %v2798
  %v4996 = vmul.f32 %v4900, %v2798
  %v4997 = vmul.f32 %v4903, %v2798
  %v4998 = vmul.f32 %v4908, %v2798
  %v4999 = vmul.f32 %v4911, %v2798
  %v5000 = vmul.f32 %v4916, %v2798
  %v5001 = vmul.f32 %v4919, %v2798
  %v5002 = vmul.f32 %v4924, %v2798
  %v5003 = vmul.f32 %v4927, %v2798
  %v5004 = vmul.f32 %v4932, %v2798
  %v5005 = vmul.f32 %v4935, %v2798
  %v5006 = vmul.f32 %v4940, %v2798
  %v5007 = vmul.f32 %v4943, %v2798
  %v5008 = vmul.f32 %v4948, %v2798
  %v5009 = vmul.f32 %v4951, %v2798
  %v5010 = vmul.f32 %v4956, %v2798
  %v5011 = vmul.f32 %v4959, %v2798
  %v5012 = vmul.f32 %v4964, %v2798
  %v5013 = vmul.f32 %v4967, %v2798
  %v5014 = vmul.f32 %v4972, %v2798
  %v5015 = vmul.f32 %v4975, %v2798
  %v5016 = vmul.f32 %v4980, %v2798
  %v5017 = vmul.f32 %v4983, %v2798
  %v5018 = vadd.f32 %v4986, %v2834
  %v5019 = vadd.f32 %v4987, %v2834
  %v5020 = vadd.f32 %v4988, %v2834
  %v5021 = vadd.f32 %v4989, %v2834
  %v5022 = vadd.f32 %v4990, %v2834
  %v5023 = vadd.f32 %v4991, %v2834
  %v5024 = vadd.f32 %v4992, %v2834
  %v5025 = vadd.f32 %v4993, %v2834
  %v5026 = vadd.f32 %v4994, %v2834
  %v5027 = vadd.f32 %v4995, %v2834
  %v5028 = vadd.f32 %v4996, %v2834
  %v5029 = vadd.f32 %v4997, %v2834
  %v5030 = vadd.f32 %v4998, %v2834
  %v5031 = vadd.f32 %v4999, %v2834
  %v5032 = vadd.f32 %v5000, %v2834
  %v5033 = vadd.f32 %v5001, %v2834
  %v5034 = vadd.f32 %v5002, %v2834
  %v5035 = vadd.f32 %v5003, %v2834
  %v5036 = vadd.f32 %v5004, %v2834
  %v5037 = vadd.f32 %v5005, %v2834
  %v5038 = vadd.f32 %v5006, %v2834
  %v5039 = vadd.f32 %v5007, %v2834
  %v5040 = vadd.f32 %v5008, %v2834
  %v5041 = vadd.f32 %v5009, %v2834
  %v5042 = vadd.f32 %v5010, %v2834
  %v5043 = vadd.f32 %v5011, %v2834
  %v5044 = vadd.f32 %v5012, %v2834
  %v5045 = vadd.f32 %v5013, %v2834
  %v5046 = vadd.f32 %v5014, %v2834
  %v5047 = vadd.f32 %v5015, %v2834
  %v5048 = vadd.f32 %v5016, %v2834
  %v5049 = vadd.f32 %v5017, %v2834
  %v5050 = vmax.f32 %v5018, 0.0
  %v5051 = vmax.f32 %v5019, 0.0
  %v5052 = vmax.f32 %v5020, 0.0
  %v5053 = vmax.f32 %v5021, 0.0
  %v5054 = vmax.f32 %v5022, 0.0
  %v5055 = vmax.f32 %v5023, 0.0
  %v5056 = vmax.f32 %v5024, 0.0
  %v5057 = vmax.f32 %v5025, 0.0
  %v5058 = vmax.f32 %v5026, 0.0
  %v5059 = vmax.f32 %v5027, 0.0
  %v5060 = vmax.f32 %v5028, 0.0
  %v5061 = vmax.f32 %v5029, 0.0
  %v5062 = vmax.f32 %v5030, 0.0
  %v5063 = vmax.f32 %v5031, 0.0
  %v5064 = vmax.f32 %v5032, 0.0
  %v5065 = vmax.f32 %v5033, 0.0
  %v5066 = vmax.f32 %v5034, 0.0
  %v5067 = vmax.f32 %v5035, 0.0
  %v5068 = vmax.f32 %v5036, 0.0
  %v5069 = vmax.f32 %v5037, 0.0
  %v5070 = vmax.f32 %v5038, 0.0
  %v5071 = vmax.f32 %v5039, 0.0
  %v5072 = vmax.f32 %v5040, 0.0
  %v5073 = vmax.f32 %v5041, 0.0
  %v5074 = vmax.f32 %v5042, 0.0
  %v5075 = vmax.f32 %v5043, 0.0
  %v5076 = vmax.f32 %v5044, 0.0
  %v5077 = vmax.f32 %v5045, 0.0
  %v5078 = vmax.f32 %v5046, 0.0
  %v5079 = vmax.f32 %v5047, 0.0
  %v5080 = vmax.f32 %v5048, 0.0
  %v5081 = vmax.f32 %v5049, 0.0
  %v5082 = vpack.c.bf16 %v5051, %v5050
  %v5083 = vpack.c.bf16 %v5053, %v5052
  %v5084 = vpack.c.bf16 %v5055, %v5054
  %v5085 = vpack.c.bf16 %v5057, %v5056
  %v5086 = vpack.c.bf16 %v5059, %v5058
  %v5087 = vpack.c.bf16 %v5061, %v5060
  %v5088 = vpack.c.bf16 %v5063, %v5062
  %v5089 = vpack.c.bf16 %v5065, %v5064
  %v5090 = vpack.c.bf16 %v5067, %v5066
  %v5091 = vpack.c.bf16 %v5069, %v5068
  %v5092 = vpack.c.bf16 %v5071, %v5070
  %v5093 = vpack.c.bf16 %v5073, %v5072
  %v5094 = vpack.c.bf16 %v5075, %v5074
  %v5095 = vpack.c.bf16 %v5077, %v5076
  %v5096 = vpack.c.bf16 %v5079, %v5078
  %v5097 = vpack.c.bf16 %v5081, %v5080
  %5098 = vst [vmem:[#allocation2 + $0x10] sm:$0xff] %v5082
  %5099 = vst [vmem:[#allocation2 + $0x38] sm:$0xff] %v5083
  %5100 = vst [vmem:[#allocation2 + $0x60] sm:$0xff] %v5084
  %5101 = vst [vmem:[#allocation2 + $0x88] sm:$0xff] %v5085
  %5102 = vst [vmem:[#allocation2 + $0xb0] sm:$0xff] %v5086
  %5103 = vst [vmem:[#allocation2 + $0xd8] sm:$0xff] %v5087
  %5104 = vst [vmem:[#allocation2 + $0x100] sm:$0xff] %v5088
  %5105 = vst [vmem:[#allocation2 + $0x128] sm:$0xff] %v5089
  %5106 = vst [vmem:[#allocation2 + $0x150] sm:$0xff] %v5090
  %5107 = vst [vmem:[#allocation2 + $0x178] sm:$0xff] %v5091
  %5108 = vst [vmem:[#allocation2 + $0x1a0] sm:$0xff] %v5092
  %5109 = vst [vmem:[#allocation2 + $0x1c8] sm:$0xff] %v5093
  %5110 = vst [vmem:[#allocation2 + $0x1f0] sm:$0xff] %v5094
  %5111 = vst [vmem:[#allocation2 + $0x218] sm:$0xff] %v5095
  %5112 = vst [vmem:[#allocation2 + $0x240] sm:$0xff] %v5096
  %5113 = vst [vmem:[#allocation2 + $0x268] sm:$0xff] %v5097
  %s5114 = scalar_lea.vmem %s0, 2816
  %v5115 = vld [vmem:[%s5114] sm:$0xff]
  %v5116 = vld [vmem:[%s5114 + $0x8] sm:$0xff]
  %v5117 = vld [vmem:[%s5114 + $0x10] sm:$0xff]
  %v5118 = vld [vmem:[%s5114 + $0x18] sm:$0xff]
  %v5119 = vld [vmem:[%s5114 + $0x20] sm:$0xff]
  %v5120 = vld [vmem:[%s5114 + $0x28] sm:$0xf]
  %v5121 = vld [vmem:[%s5114 + $0x2c] sm:$0xff]
  %v5122 = vld [vmem:[%s5114 + $0x34] sm:$0xff]
  %v5123 = vld [vmem:[%s5114 + $0x3c] sm:$0xff]
  %v5124 = vld [vmem:[%s5114 + $0x44] sm:$0xff]
  %v5125 = vld [vmem:[%s5114 + $0x4c] sm:$0xff]
  %v5126 = vld [vmem:[%s5114 + $0x54] sm:$0xf]
  %v5127 = vld [vmem:[%s5114 + $0x58] sm:$0xff]
  %v5128 = vld [vmem:[%s5114 + $0x60] sm:$0xff]
  %v5129 = vld [vmem:[%s5114 + $0x68] sm:$0xff]
  %v5130 = vld [vmem:[%s5114 + $0x70] sm:$0xff]
  %v5131 = vld [vmem:[%s5114 + $0x78] sm:$0xff]
  %v5132 = vld [vmem:[%s5114 + $0x80] sm:$0xf]
  %v5133 = vld [vmem:[%s5114 + $0x84] sm:$0xff]
  %v5134 = vld [vmem:[%s5114 + $0x8c] sm:$0xff]
  %v5135 = vld [vmem:[%s5114 + $0x94] sm:$0xff]
  %v5136 = vld [vmem:[%s5114 + $0x9c] sm:$0xff]
  %v5137 = vld [vmem:[%s5114 + $0xa4] sm:$0xff]
  %v5138 = vld [vmem:[%s5114 + $0xac] sm:$0xf]
  %v5139 = vld [vmem:[%s5114 + $0xb0] sm:$0xff]
  %v5140 = vld [vmem:[%s5114 + $0xb8] sm:$0xff]
  %v5141 = vld [vmem:[%s5114 + $0xc0] sm:$0xff]
  %v5142 = vld [vmem:[%s5114 + $0xc8] sm:$0xff]
  %v5143 = vld [vmem:[%s5114 + $0xd0] sm:$0xff]
  %v5144 = vld [vmem:[%s5114 + $0xd8] sm:$0xf]
  %v5145 = vld [vmem:[%s5114 + $0xdc] sm:$0xff]
  %v5146 = vld [vmem:[%s5114 + $0xe4] sm:$0xff]
  %v5147 = vld [vmem:[%s5114 + $0xec] sm:$0xff]
  %v5148 = vld [vmem:[%s5114 + $0xf4] sm:$0xff]
  %v5149 = vld [vmem:[%s5114 + $0xfc] sm:$0xff]
  %v5150 = vld [vmem:[%s5114 + $0x104] sm:$0xf]
  %v5151 = vld [vmem:[%s5114 + $0x108] sm:$0xff]
  %v5152 = vld [vmem:[%s5114 + $0x110] sm:$0xff]
  %v5153 = vld [vmem:[%s5114 + $0x118] sm:$0xff]
  %v5154 = vld [vmem:[%s5114 + $0x120] sm:$0xff]
  %v5155 = vld [vmem:[%s5114 + $0x128] sm:$0xff]
  %v5156 = vld [vmem:[%s5114 + $0x130] sm:$0xf]
  %v5157 = vld [vmem:[%s5114 + $0x134] sm:$0xff]
  %v5158 = vld [vmem:[%s5114 + $0x13c] sm:$0xff]
  %v5159 = vld [vmem:[%s5114 + $0x144] sm:$0xff]
  %v5160 = vld [vmem:[%s5114 + $0x14c] sm:$0xff]
  %v5161 = vld [vmem:[%s5114 + $0x154] sm:$0xff]
  %v5162 = vld [vmem:[%s5114 + $0x15c] sm:$0xf]
  %v5163 = vld [vmem:[%s5114 + $0x160] sm:$0xff]
  %v5164 = vld [vmem:[%s5114 + $0x168] sm:$0xff]
  %v5165 = vld [vmem:[%s5114 + $0x170] sm:$0xff]
  %v5166 = vld [vmem:[%s5114 + $0x178] sm:$0xff]
  %v5167 = vld [vmem:[%s5114 + $0x180] sm:$0xff]
  %v5168 = vld [vmem:[%s5114 + $0x188] sm:$0xf]
  %v5169 = vld [vmem:[%s5114 + $0x18c] sm:$0xff]
  %v5170 = vld [vmem:[%s5114 + $0x194] sm:$0xff]
  %v5171 = vld [vmem:[%s5114 + $0x19c] sm:$0xff]
  %v5172 = vld [vmem:[%s5114 + $0x1a4] sm:$0xff]
  %v5173 = vld [vmem:[%s5114 + $0x1ac] sm:$0xff]
  %v5174 = vld [vmem:[%s5114 + $0x1b4] sm:$0xf]
  %v5175 = vld [vmem:[%s5114 + $0x1b8] sm:$0xff]
  %v5176 = vld [vmem:[%s5114 + $0x1c0] sm:$0xff]
  %v5177 = vld [vmem:[%s5114 + $0x1c8] sm:$0xff]
  %v5178 = vld [vmem:[%s5114 + $0x1d0] sm:$0xff]
  %v5179 = vld [vmem:[%s5114 + $0x1d8] sm:$0xff]
  %v5180 = vld [vmem:[%s5114 + $0x1e0] sm:$0xf]
  %v5181 = vld [vmem:[%s5114 + $0x1e4] sm:$0xff]
  %v5182 = vld [vmem:[%s5114 + $0x1ec] sm:$0xff]
  %v5183 = vld [vmem:[%s5114 + $0x1f4] sm:$0xff]
  %v5184 = vld [vmem:[%s5114 + $0x1fc] sm:$0xff]
  %v5185 = vld [vmem:[%s5114 + $0x204] sm:$0xff]
  %v5186 = vld [vmem:[%s5114 + $0x20c] sm:$0xf]
  %v5187 = vld [vmem:[%s5114 + $0x210] sm:$0xff]
  %v5188 = vld [vmem:[%s5114 + $0x218] sm:$0xff]
  %v5189 = vld [vmem:[%s5114 + $0x220] sm:$0xff]
  %v5190 = vld [vmem:[%s5114 + $0x228] sm:$0xff]
  %v5191 = vld [vmem:[%s5114 + $0x230] sm:$0xff]
  %v5192 = vld [vmem:[%s5114 + $0x238] sm:$0xf]
  %v5193 = vld [vmem:[%s5114 + $0x23c] sm:$0xff]
  %v5194 = vld [vmem:[%s5114 + $0x244] sm:$0xff]
  %v5195 = vld [vmem:[%s5114 + $0x24c] sm:$0xff]
  %v5196 = vld [vmem:[%s5114 + $0x254] sm:$0xff]
  %v5197 = vld [vmem:[%s5114 + $0x25c] sm:$0xff]
  %v5198 = vld [vmem:[%s5114 + $0x264] sm:$0xf]
  %v5199 = vld [vmem:[%s5114 + $0x268] sm:$0xff]
  %v5200 = vld [vmem:[%s5114 + $0x270] sm:$0xff]
  %v5201 = vld [vmem:[%s5114 + $0x278] sm:$0xff]
  %v5202 = vld [vmem:[%s5114 + $0x280] sm:$0xff]
  %v5203 = vld [vmem:[%s5114 + $0x288] sm:$0xff]
  %v5204 = vld [vmem:[%s5114 + $0x290] sm:$0xf]
  %v5205 = vld [vmem:[%s5114 + $0x294] sm:$0xff]
  %v5206 = vld [vmem:[%s5114 + $0x29c] sm:$0xff]
  %v5207 = vld [vmem:[%s5114 + $0x2a4] sm:$0xff]
  %v5208 = vld [vmem:[%s5114 + $0x2ac] sm:$0xff]
  %v5209 = vld [vmem:[%s5114 + $0x2b4] sm:$0xff]
  %v5210 = vld [vmem:[%s5114 + $0x2bc] sm:$0xf]
  %v5211 = vld [vmem:[%s5114 + $0x2c0] sm:$0xff]
  %v5212 = vld [vmem:[%s5114 + $0x2c8] sm:$0xff]
  %v5213 = vld [vmem:[%s5114 + $0x2d0] sm:$0xff]
  %v5214 = vld [vmem:[%s5114 + $0x2d8] sm:$0xff]
  %v5215 = vld [vmem:[%s5114 + $0x2e0] sm:$0xff]
  %v5216 = vld [vmem:[%s5114 + $0x2e8] sm:$0xf]
  %v5217 = vld [vmem:[%s5114 + $0x2ec] sm:$0xff]
  %v5218 = vld [vmem:[%s5114 + $0x2f4] sm:$0xff]
  %v5219 = vld [vmem:[%s5114 + $0x2fc] sm:$0xff]
  %v5220 = vld [vmem:[%s5114 + $0x304] sm:$0xff]
  %v5221 = vld [vmem:[%s5114 + $0x30c] sm:$0xff]
  %v5222 = vld [vmem:[%s5114 + $0x314] sm:$0xf]
  %v5223 = vld [vmem:[%s5114 + $0x318] sm:$0xff]
  %v5224 = vld [vmem:[%s5114 + $0x320] sm:$0xff]
  %v5225 = vld [vmem:[%s5114 + $0x328] sm:$0xff]
  %v5226 = vld [vmem:[%s5114 + $0x330] sm:$0xff]
  %v5227 = vld [vmem:[%s5114 + $0x338] sm:$0xff]
  %v5228 = vld [vmem:[%s5114 + $0x340] sm:$0xf]
  %v5229 = vld [vmem:[%s5114 + $0x344] sm:$0xff]
  %v5230 = vld [vmem:[%s5114 + $0x34c] sm:$0xff]
  %v5231 = vld [vmem:[%s5114 + $0x354] sm:$0xff]
  %v5232 = vld [vmem:[%s5114 + $0x35c] sm:$0xff]
  %v5233 = vld [vmem:[%s5114 + $0x364] sm:$0xff]
  %v5234 = vld [vmem:[%s5114 + $0x36c] sm:$0xf]
  %v5235 = vld [vmem:[%s5114 + $0x370] sm:$0xff]
  %v5236 = vld [vmem:[%s5114 + $0x378] sm:$0xff]
  %v5237 = vld [vmem:[%s5114 + $0x380] sm:$0xff]
  %v5238 = vld [vmem:[%s5114 + $0x388] sm:$0xff]
  %v5239 = vld [vmem:[%s5114 + $0x390] sm:$0xff]
  %v5240 = vld [vmem:[%s5114 + $0x398] sm:$0xf]
  %v5241 = vld [vmem:[%s5114 + $0x39c] sm:$0xff]
  %v5242 = vld [vmem:[%s5114 + $0x3a4] sm:$0xff]
  %v5243 = vld [vmem:[%s5114 + $0x3ac] sm:$0xff]
  %v5244 = vld [vmem:[%s5114 + $0x3b4] sm:$0xff]
  %v5245 = vld [vmem:[%s5114 + $0x3bc] sm:$0xff]
  %v5246 = vld [vmem:[%s5114 + $0x3c4] sm:$0xf]
  %v5247 = vld [vmem:[%s5114 + $0x3c8] sm:$0xff]
  %v5248 = vld [vmem:[%s5114 + $0x3d0] sm:$0xff]
  %v5249 = vld [vmem:[%s5114 + $0x3d8] sm:$0xff]
  %v5250 = vld [vmem:[%s5114 + $0x3e0] sm:$0xff]
  %v5251 = vld [vmem:[%s5114 + $0x3e8] sm:$0xff]
  %v5252 = vld [vmem:[%s5114 + $0x3f0] sm:$0xf]
  %v5253 = vld [vmem:[%s5114 + $0x3f4] sm:$0xff]
  %v5254 = vld [vmem:[%s5114 + $0x3fc] sm:$0xff]
  %v5255 = vld [vmem:[%s5114 + $0x404] sm:$0xff]
  %v5256 = vld [vmem:[%s5114 + $0x40c] sm:$0xff]
  %v5257 = vld [vmem:[%s5114 + $0x414] sm:$0xff]
  %v5258 = vld [vmem:[%s5114 + $0x41c] sm:$0xf]
  %v5259 = vld [vmem:[%s5114 + $0x420] sm:$0xff]
  %v5260 = vld [vmem:[%s5114 + $0x428] sm:$0xff]
  %v5261 = vld [vmem:[%s5114 + $0x430] sm:$0xff]
  %v5262 = vld [vmem:[%s5114 + $0x438] sm:$0xff]
  %v5263 = vld [vmem:[%s5114 + $0x440] sm:$0xff]
  %v5264 = vld [vmem:[%s5114 + $0x448] sm:$0xf]
  %v5265 = vld [vmem:[%s5114 + $0x44c] sm:$0xff]
  %v5266 = vld [vmem:[%s5114 + $0x454] sm:$0xff]
  %v5267 = vld [vmem:[%s5114 + $0x45c] sm:$0xff]
  %v5268 = vld [vmem:[%s5114 + $0x464] sm:$0xff]
  %v5269 = vld [vmem:[%s5114 + $0x46c] sm:$0xff]
  %v5270 = vld [vmem:[%s5114 + $0x474] sm:$0xf]
  %v5271 = vld [vmem:[%s5114 + $0x478] sm:$0xff]
  %v5272 = vld [vmem:[%s5114 + $0x480] sm:$0xff]
  %v5273 = vld [vmem:[%s5114 + $0x488] sm:$0xff]
  %v5274 = vld [vmem:[%s5114 + $0x490] sm:$0xff]
  %v5275 = vld [vmem:[%s5114 + $0x498] sm:$0xff]
  %v5276 = vld [vmem:[%s5114 + $0x4a0] sm:$0xf]
  %v5277 = vld [vmem:[%s5114 + $0x4a4] sm:$0xff]
  %v5278 = vld [vmem:[%s5114 + $0x4ac] sm:$0xff]
  %v5279 = vld [vmem:[%s5114 + $0x4b4] sm:$0xff]
  %v5280 = vld [vmem:[%s5114 + $0x4bc] sm:$0xff]
  %v5281 = vld [vmem:[%s5114 + $0x4c4] sm:$0xff]
  %v5282 = vld [vmem:[%s5114 + $0x4cc] sm:$0xf]
  %v5283 = vld [vmem:[%s5114 + $0x4d0] sm:$0xff]
  %v5284 = vld [vmem:[%s5114 + $0x4d8] sm:$0xff]
  %v5285 = vld [vmem:[%s5114 + $0x4e0] sm:$0xff]
  %v5286 = vld [vmem:[%s5114 + $0x4e8] sm:$0xff]
  %v5287 = vld [vmem:[%s5114 + $0x4f0] sm:$0xff]
  %v5288 = vld [vmem:[%s5114 + $0x4f8] sm:$0xf]
  %v5289 = vld [vmem:[%s5114 + $0x4fc] sm:$0xff]
  %v5290 = vld [vmem:[%s5114 + $0x504] sm:$0xff]
  %v5291 = vld [vmem:[%s5114 + $0x50c] sm:$0xff]
  %v5292 = vld [vmem:[%s5114 + $0x514] sm:$0xff]
  %v5293 = vld [vmem:[%s5114 + $0x51c] sm:$0xff]
  %v5294 = vld [vmem:[%s5114 + $0x524] sm:$0xf]
  %v5295 = vld [vmem:[%s5114 + $0x528] sm:$0xff]
  %v5296 = vld [vmem:[%s5114 + $0x530] sm:$0xff]
  %v5297 = vld [vmem:[%s5114 + $0x538] sm:$0xff]
  %v5298 = vld [vmem:[%s5114 + $0x540] sm:$0xff]
  %v5299 = vld [vmem:[%s5114 + $0x548] sm:$0xff]
  %v5300 = vld [vmem:[%s5114 + $0x550] sm:$0xf]
  %v5301 = vld [vmem:[%s5114 + $0x554] sm:$0xff]
  %v5302 = vld [vmem:[%s5114 + $0x55c] sm:$0xff]
  %v5303 = vld [vmem:[%s5114 + $0x564] sm:$0xff]
  %v5304 = vld [vmem:[%s5114 + $0x56c] sm:$0xff]
  %v5305 = vld [vmem:[%s5114 + $0x574] sm:$0xff]
  %v5306 = vld [vmem:[%s5114 + $0x57c] sm:$0xf]
  %v5499 = vunpack.c.l.b16 %v5115
  %v5500 = vunpack.c.h.b16 %v5115
  %v5501 = vunpack.c.l.b16 %v5116
  %v5502 = vunpack.c.h.b16 %v5116
  %v5503 = vunpack.c.l.b16 %v5117
  %v5504 = vunpack.c.h.b16 %v5117
  %v5505 = vunpack.c.l.b16 %v5118
  %v5506 = vunpack.c.h.b16 %v5118
  %v5507 = vunpack.c.l.b16 %v5119
  %v5508 = vunpack.c.h.b16 %v5119
  %v5509 = vunpack.c.l.b16 %v5120
  %v5510 = vunpack.c.l.b16 %v5121
  %v5511 = vunpack.c.h.b16 %v5121
  %v5512 = vunpack.c.l.b16 %v5122
  %v5513 = vunpack.c.h.b16 %v5122
  %v5514 = vunpack.c.l.b16 %v5123
  %v5515 = vunpack.c.h.b16 %v5123
  %v5516 = vunpack.c.l.b16 %v5124
  %v5517 = vunpack.c.h.b16 %v5124
  %v5518 = vunpack.c.l.b16 %v5125
  %v5519 = vunpack.c.h.b16 %v5125
  %v5520 = vunpack.c.l.b16 %v5126
  %v5521 = vunpack.c.l.b16 %v5127
  %v5522 = vunpack.c.h.b16 %v5127
  %v5523 = vunpack.c.l.b16 %v5128
  %v5524 = vunpack.c.h.b16 %v5128
  %v5525 = vunpack.c.l.b16 %v5129
  %v5526 = vunpack.c.h.b16 %v5129
  %v5527 = vunpack.c.l.b16 %v5130
  %v5528 = vunpack.c.h.b16 %v5130
  %v5529 = vunpack.c.l.b16 %v5131
  %v5530 = vunpack.c.h.b16 %v5131
  %v5531 = vunpack.c.l.b16 %v5132
  %v5532 = vunpack.c.l.b16 %v5133
  %v5533 = vunpack.c.h.b16 %v5133
  %v5534 = vunpack.c.l.b16 %v5134
  %v5535 = vunpack.c.h.b16 %v5134
  %v5536 = vunpack.c.l.b16 %v5135
  %v5537 = vunpack.c.h.b16 %v5135
  %v5538 = vunpack.c.l.b16 %v5136
  %v5539 = vunpack.c.h.b16 %v5136
  %v5540 = vunpack.c.l.b16 %v5137
  %v5541 = vunpack.c.h.b16 %v5137
  %v5542 = vunpack.c.l.b16 %v5138
  %v5543 = vunpack.c.l.b16 %v5139
  %v5544 = vunpack.c.h.b16 %v5139
  %v5545 = vunpack.c.l.b16 %v5140
  %v5546 = vunpack.c.h.b16 %v5140
  %v5547 = vunpack.c.l.b16 %v5141
  %v5548 = vunpack.c.h.b16 %v5141
  %v5549 = vunpack.c.l.b16 %v5142
  %v5550 = vunpack.c.h.b16 %v5142
  %v5551 = vunpack.c.l.b16 %v5143
  %v5552 = vunpack.c.h.b16 %v5143
  %v5553 = vunpack.c.l.b16 %v5144
  %v5554 = vunpack.c.l.b16 %v5145
  %v5555 = vunpack.c.h.b16 %v5145
  %v5556 = vunpack.c.l.b16 %v5146
  %v5557 = vunpack.c.h.b16 %v5146
  %v5558 = vunpack.c.l.b16 %v5147
  %v5559 = vunpack.c.h.b16 %v5147
  %v5560 = vunpack.c.l.b16 %v5148
  %v5561 = vunpack.c.h.b16 %v5148
  %v5562 = vunpack.c.l.b16 %v5149
  %v5563 = vunpack.c.h.b16 %v5149
  %v5564 = vunpack.c.l.b16 %v5150
  %v5565 = vunpack.c.l.b16 %v5151
  %v5566 = vunpack.c.h.b16 %v5151
  %v5567 = vunpack.c.l.b16 %v5152
  %v5568 = vunpack.c.h.b16 %v5152
  %v5569 = vunpack.c.l.b16 %v5153
  %v5570 = vunpack.c.h.b16 %v5153
  %v5571 = vunpack.c.l.b16 %v5154
  %v5572 = vunpack.c.h.b16 %v5154
  %v5573 = vunpack.c.l.b16 %v5155
  %v5574 = vunpack.c.h.b16 %v5155
  %v5575 = vunpack.c.l.b16 %v5156
  %v5576 = vunpack.c.l.b16 %v5157
  %v5577 = vunpack.c.h.b16 %v5157
  %v5578 = vunpack.c.l.b16 %v5158
  %v5579 = vunpack.c.h.b16 %v5158
  %v5580 = vunpack.c.l.b16 %v5159
  %v5581 = vunpack.c.h.b16 %v5159
  %v5582 = vunpack.c.l.b16 %v5160
  %v5583 = vunpack.c.h.b16 %v5160
  %v5584 = vunpack.c.l.b16 %v5161
  %v5585 = vunpack.c.h.b16 %v5161
  %v5586 = vunpack.c.l.b16 %v5162
  %v5587 = vunpack.c.l.b16 %v5163
  %v5588 = vunpack.c.h.b16 %v5163
  %v5589 = vunpack.c.l.b16 %v5164
  %v5590 = vunpack.c.h.b16 %v5164
  %v5591 = vunpack.c.l.b16 %v5165
  %v5592 = vunpack.c.h.b16 %v5165
  %v5593 = vunpack.c.l.b16 %v5166
  %v5594 = vunpack.c.h.b16 %v5166
  %v5595 = vunpack.c.l.b16 %v5167
  %v5596 = vunpack.c.h.b16 %v5167
  %v5597 = vunpack.c.l.b16 %v5168
  %v5598 = vunpack.c.l.b16 %v5169
  %v5599 = vunpack.c.h.b16 %v5169
  %v5600 = vunpack.c.l.b16 %v5170
  %v5601 = vunpack.c.h.b16 %v5170
  %v5602 = vunpack.c.l.b16 %v5171
  %v5603 = vunpack.c.h.b16 %v5171
  %v5604 = vunpack.c.l.b16 %v5172
  %v5605 = vunpack.c.h.b16 %v5172
  %v5606 = vunpack.c.l.b16 %v5173
  %v5607 = vunpack.c.h.b16 %v5173
  %v5608 = vunpack.c.l.b16 %v5174
  %v5609 = vunpack.c.l.b16 %v5175
  %v5610 = vunpack.c.h.b16 %v5175
  %v5611 = vunpack.c.l.b16 %v5176
  %v5612 = vunpack.c.h.b16 %v5176
  %v5613 = vunpack.c.l.b16 %v5177
  %v5614 = vunpack.c.h.b16 %v5177
  %v5615 = vunpack.c.l.b16 %v5178
  %v5616 = vunpack.c.h.b16 %v5178
  %v5617 = vunpack.c.l.b16 %v5179
  %v5618 = vunpack.c.h.b16 %v5179
  %v5619 = vunpack.c.l.b16 %v5180
  %v5620 = vunpack.c.l.b16 %v5181
  %v5621 = vunpack.c.h.b16 %v5181
  %v5622 = vunpack.c.l.b16 %v5182
  %v5623 = vunpack.c.h.b16 %v5182
  %v5624 = vunpack.c.l.b16 %v5183
  %v5625 = vunpack.c.h.b16 %v5183
  %v5626 = vunpack.c.l.b16 %v5184
  %v5627 = vunpack.c.h.b16 %v5184
  %v5628 = vunpack.c.l.b16 %v5185
  %v5629 = vunpack.c.h.b16 %v5185
  %v5630 = vunpack.c.l.b16 %v5186
  %v5631 = vunpack.c.l.b16 %v5187
  %v5632 = vunpack.c.h.b16 %v5187
  %v5633 = vunpack.c.l.b16 %v5188
  %v5634 = vunpack.c.h.b16 %v5188
  %v5635 = vunpack.c.l.b16 %v5189
  %v5636 = vunpack.c.h.b16 %v5189
  %v5637 = vunpack.c.l.b16 %v5190
  %v5638 = vunpack.c.h.b16 %v5190
  %v5639 = vunpack.c.l.b16 %v5191
  %v5640 = vunpack.c.h.b16 %v5191
  %v5641 = vunpack.c.l.b16 %v5192
  %v5642 = vunpack.c.l.b16 %v5193
  %v5643 = vunpack.c.h.b16 %v5193
  %v5644 = vunpack.c.l.b16 %v5194
  %v5645 = vunpack.c.h.b16 %v5194
  %v5646 = vunpack.c.l.b16 %v5195
  %v5647 = vunpack.c.h.b16 %v5195
  %v5648 = vunpack.c.l.b16 %v5196
  %v5649 = vunpack.c.h.b16 %v5196
  %v5650 = vunpack.c.l.b16 %v5197
  %v5651 = vunpack.c.h.b16 %v5197
  %v5652 = vunpack.c.l.b16 %v5198
  %v5653 = vunpack.c.l.b16 %v5199
  %v5654 = vunpack.c.h.b16 %v5199
  %v5655 = vunpack.c.l.b16 %v5200
  %v5656 = vunpack.c.h.b16 %v5200
  %v5657 = vunpack.c.l.b16 %v5201
  %v5658 = vunpack.c.h.b16 %v5201
  %v5659 = vunpack.c.l.b16 %v5202
  %v5660 = vunpack.c.h.b16 %v5202
  %v5661 = vunpack.c.l.b16 %v5203
  %v5662 = vunpack.c.h.b16 %v5203
  %v5663 = vunpack.c.l.b16 %v5204
  %v5664 = vunpack.c.l.b16 %v5205
  %v5665 = vunpack.c.h.b16 %v5205
  %v5666 = vunpack.c.l.b16 %v5206
  %v5667 = vunpack.c.h.b16 %v5206
  %v5668 = vunpack.c.l.b16 %v5207
  %v5669 = vunpack.c.h.b16 %v5207
  %v5670 = vunpack.c.l.b16 %v5208
  %v5671 = vunpack.c.h.b16 %v5208
  %v5672 = vunpack.c.l.b16 %v5209
  %v5673 = vunpack.c.h.b16 %v5209
  %v5674 = vunpack.c.l.b16 %v5210
  %v5675 = vunpack.c.l.b16 %v5211
  %v5676 = vunpack.c.h.b16 %v5211
  %v5677 = vunpack.c.l.b16 %v5212
  %v5678 = vunpack.c.h.b16 %v5212
  %v5679 = vunpack.c.l.b16 %v5213
  %v5680 = vunpack.c.h.b16 %v5213
  %v5681 = vunpack.c.l.b16 %v5214
  %v5682 = vunpack.c.h.b16 %v5214
  %v5683 = vunpack.c.l.b16 %v5215
  %v5684 = vunpack.c.h.b16 %v5215
  %v5685 = vunpack.c.l.b16 %v5216
  %v5686 = vunpack.c.l.b16 %v5217
  %v5687 = vunpack.c.h.b16 %v5217
  %v5688 = vunpack.c.l.b16 %v5218
  %v5689 = vunpack.c.h.b16 %v5218
  %v5690 = vunpack.c.l.b16 %v5219
  %v5691 = vunpack.c.h.b16 %v5219
  %v5692 = vunpack.c.l.b16 %v5220
  %v5693 = vunpack.c.h.b16 %v5220
  %v5694 = vunpack.c.l.b16 %v5221
  %v5695 = vunpack.c.h.b16 %v5221
  %v5696 = vunpack.c.l.b16 %v5222
  %v5697 = vunpack.c.l.b16 %v5223
  %v5698 = vunpack.c.h.b16 %v5223
  %v5699 = vunpack.c.l.b16 %v5224
  %v5700 = vunpack.c.h.b16 %v5224
  %v5701 = vunpack.c.l.b16 %v5225
  %v5702 = vunpack.c.h.b16 %v5225
  %v5703 = vunpack.c.l.b16 %v5226
  %v5704 = vunpack.c.h.b16 %v5226
  %v5705 = vunpack.c.l.b16 %v5227
  %v5706 = vunpack.c.h.b16 %v5227
  %v5707 = vunpack.c.l.b16 %v5228
  %v5708 = vunpack.c.l.b16 %v5229
  %v5709 = vunpack.c.h.b16 %v5229
  %v5710 = vunpack.c.l.b16 %v5230
  %v5711 = vunpack.c.h.b16 %v5230
  %v5712 = vunpack.c.l.b16 %v5231
  %v5713 = vunpack.c.h.b16 %v5231
  %v5714 = vunpack.c.l.b16 %v5232
  %v5715 = vunpack.c.h.b16 %v5232
  %v5716 = vunpack.c.l.b16 %v5233
  %v5717 = vunpack.c.h.b16 %v5233
  %v5718 = vunpack.c.l.b16 %v5234
  %v5719 = vunpack.c.l.b16 %v5235
  %v5720 = vunpack.c.h.b16 %v5235
  %v5721 = vunpack.c.l.b16 %v5236
  %v5722 = vunpack.c.h.b16 %v5236
  %v5723 = vunpack.c.l.b16 %v5237
  %v5724 = vunpack.c.h.b16 %v5237
  %v5725 = vunpack.c.l.b16 %v5238
  %v5726 = vunpack.c.h.b16 %v5238
  %v5727 = vunpack.c.l.b16 %v5239
  %v5728 = vunpack.c.h.b16 %v5239
  %v5729 = vunpack.c.l.b16 %v5240
  %v5730 = vunpack.c.l.b16 %v5241
  %v5731 = vunpack.c.h.b16 %v5241
  %v5732 = vunpack.c.l.b16 %v5242
  %v5733 = vunpack.c.h.b16 %v5242
  %v5734 = vunpack.c.l.b16 %v5243
  %v5735 = vunpack.c.h.b16 %v5243
  %v5736 = vunpack.c.l.b16 %v5244
  %v5737 = vunpack.c.h.b16 %v5244
  %v5738 = vunpack.c.l.b16 %v5245
  %v5739 = vunpack.c.h.b16 %v5245
  %v5740 = vunpack.c.l.b16 %v5246
  %v5741 = vunpack.c.l.b16 %v5247
  %v5742 = vunpack.c.h.b16 %v5247
  %v5743 = vunpack.c.l.b16 %v5248
  %v5744 = vunpack.c.h.b16 %v5248
  %v5745 = vunpack.c.l.b16 %v5249
  %v5746 = vunpack.c.h.b16 %v5249
  %v5747 = vunpack.c.l.b16 %v5250
  %v5748 = vunpack.c.h.b16 %v5250
  %v5749 = vunpack.c.l.b16 %v5251
  %v5750 = vunpack.c.h.b16 %v5251
  %v5751 = vunpack.c.l.b16 %v5252
  %v5752 = vunpack.c.l.b16 %v5253
  %v5753 = vunpack.c.h.b16 %v5253
  %v5754 = vunpack.c.l.b16 %v5254
  %v5755 = vunpack.c.h.b16 %v5254
  %v5756 = vunpack.c.l.b16 %v5255
  %v5757 = vunpack.c.h.b16 %v5255
  %v5758 = vunpack.c.l.b16 %v5256
  %v5759 = vunpack.c.h.b16 %v5256
  %v5760 = vunpack.c.l.b16 %v5257
  %v5761 = vunpack.c.h.b16 %v5257
  %v5762 = vunpack.c.l.b16 %v5258
  %v5763 = vunpack.c.l.b16 %v5259
  %v5764 = vunpack.c.h.b16 %v5259
  %v5765 = vunpack.c.l.b16 %v5260
  %v5766 = vunpack.c.h.b16 %v5260
  %v5767 = vunpack.c.l.b16 %v5261
  %v5768 = vunpack.c.h.b16 %v5261
  %v5769 = vunpack.c.l.b16 %v5262
  %v5770 = vunpack.c.h.b16 %v5262
  %v5771 = vunpack.c.l.b16 %v5263
  %v5772 = vunpack.c.h.b16 %v5263
  %v5773 = vunpack.c.l.b16 %v5264
  %v5774 = vunpack.c.l.b16 %v5265
  %v5775 = vunpack.c.h.b16 %v5265
  %v5776 = vunpack.c.l.b16 %v5266
  %v5777 = vunpack.c.h.b16 %v5266
  %v5778 = vunpack.c.l.b16 %v5267
  %v5779 = vunpack.c.h.b16 %v5267
  %v5780 = vunpack.c.l.b16 %v5268
  %v5781 = vunpack.c.h.b16 %v5268
  %v5782 = vunpack.c.l.b16 %v5269
  %v5783 = vunpack.c.h.b16 %v5269
  %v5784 = vunpack.c.l.b16 %v5270
  %v5785 = vunpack.c.l.b16 %v5271
  %v5786 = vunpack.c.h.b16 %v5271
  %v5787 = vunpack.c.l.b16 %v5272
  %v5788 = vunpack.c.h.b16 %v5272
  %v5789 = vunpack.c.l.b16 %v5273
  %v5790 = vunpack.c.h.b16 %v5273
  %v5791 = vunpack.c.l.b16 %v5274
  %v5792 = vunpack.c.h.b16 %v5274
  %v5793 = vunpack.c.l.b16 %v5275
  %v5794 = vunpack.c.h.b16 %v5275
  %v5795 = vunpack.c.l.b16 %v5276
  %v5796 = vunpack.c.l.b16 %v5277
  %v5797 = vunpack.c.h.b16 %v5277
  %v5798 = vunpack.c.l.b16 %v5278
  %v5799 = vunpack.c.h.b16 %v5278
  %v5800 = vunpack.c.l.b16 %v5279
  %v5801 = vunpack.c.h.b16 %v5279
  %v5802 = vunpack.c.l.b16 %v5280
  %v5803 = vunpack.c.h.b16 %v5280
  %v5804 = vunpack.c.l.b16 %v5281
  %v5805 = vunpack.c.h.b16 %v5281
  %v5806 = vunpack.c.l.b16 %v5282
  %v5807 = vunpack.c.l.b16 %v5283
  %v5808 = vunpack.c.h.b16 %v5283
  %v5809 = vunpack.c.l.b16 %v5284
  %v5810 = vunpack.c.h.b16 %v5284
  %v5811 = vunpack.c.l.b16 %v5285
  %v5812 = vunpack.c.h.b16 %v5285
  %v5813 = vunpack.c.l.b16 %v5286
  %v5814 = vunpack.c.h.b16 %v5286
  %v5815 = vunpack.c.l.b16 %v5287
  %v5816 = vunpack.c.h.b16 %v5287
  %v5817 = vunpack.c.l.b16 %v5288
  %v5818 = vunpack.c.l.b16 %v5289
  %v5819 = vunpack.c.h.b16 %v5289
  %v5820 = vunpack.c.l.b16 %v5290
  %v5821 = vunpack.c.h.b16 %v5290
  %v5822 = vunpack.c.l.b16 %v5291
  %v5823 = vunpack.c.h.b16 %v5291
  %v5824 = vunpack.c.l.b16 %v5292
  %v5825 = vunpack.c.h.b16 %v5292
  %v5826 = vunpack.c.l.b16 %v5293
  %v5827 = vunpack.c.h.b16 %v5293
  %v5828 = vunpack.c.l.b16 %v5294
  %v5829 = vunpack.c.l.b16 %v5295
  %v5830 = vunpack.c.h.b16 %v5295
  %v5831 = vunpack.c.l.b16 %v5296
  %v5832 = vunpack.c.h.b16 %v5296
  %v5833 = vunpack.c.l.b16 %v5297
  %v5834 = vunpack.c.h.b16 %v5297
  %v5835 = vunpack.c.l.b16 %v5298
  %v5836 = vunpack.c.h.b16 %v5298
  %v5837 = vunpack.c.l.b16 %v5299
  %v5838 = vunpack.c.h.b16 %v5299
  %v5839 = vunpack.c.l.b16 %v5300
  %v5840 = vunpack.c.l.b16 %v5301
  %v5841 = vunpack.c.h.b16 %v5301
  %v5842 = vunpack.c.l.b16 %v5302
  %v5843 = vunpack.c.h.b16 %v5302
  %v5844 = vunpack.c.l.b16 %v5303
  %v5845 = vunpack.c.h.b16 %v5303
  %v5846 = vunpack.c.l.b16 %v5304
  %v5847 = vunpack.c.h.b16 %v5304
  %v5848 = vunpack.c.l.b16 %v5305
  %v5849 = vunpack.c.h.b16 %v5305
  %v5850 = vunpack.c.l.b16 %v5306
  %v5851 = vpack.c.b16 %v5510, %v5499
  %v5852 = vpack.c.b16 %v5511, %v5500
  %v5853 = vpack.c.b16 %v5512, %v5501
  %v5854 = vpack.c.b16 %v5513, %v5502
  %v5855 = vpack.c.b16 %v5514, %v5503
  %v5856 = vpack.c.b16 %v5515, %v5504
  %v5857 = vpack.c.b16 %v5516, %v5505
  %v5858 = vpack.c.b16 %v5517, %v5506
  %v5859 = vpack.c.b16 %v5518, %v5507
  %v5860 = vpack.c.b16 %v5519, %v5508
  %v5861 = vpack.c.b16 %v5520, %v5509
  %v5862 = vpack.c.b16 %v5532, %v5521
  %v5863 = vpack.c.b16 %v5533, %v5522
  %v5864 = vpack.c.b16 %v5534, %v5523
  %v5865 = vpack.c.b16 %v5535, %v5524
  %v5866 = vpack.c.b16 %v5536, %v5525
  %v5867 = vpack.c.b16 %v5537, %v5526
  %v5868 = vpack.c.b16 %v5538, %v5527
  %v5869 = vpack.c.b16 %v5539, %v5528
  %v5870 = vpack.c.b16 %v5540, %v5529
  %v5871 = vpack.c.b16 %v5541, %v5530
  %v5872 = vpack.c.b16 %v5542, %v5531
  %v5873 = vpack.c.b16 %v5554, %v5543
  %v5874 = vpack.c.b16 %v5555, %v5544
  %v5875 = vpack.c.b16 %v5556, %v5545
  %v5876 = vpack.c.b16 %v5557, %v5546
  %v5877 = vpack.c.b16 %v5558, %v5547
  %v5878 = vpack.c.b16 %v5559, %v5548
  %v5879 = vpack.c.b16 %v5560, %v5549
  %v5880 = vpack.c.b16 %v5561, %v5550
  %v5881 = vpack.c.b16 %v5562, %v5551
  %v5882 = vpack.c.b16 %v5563, %v5552
  %v5883 = vpack.c.b16 %v5564, %v5553
  %v5884 = vpack.c.b16 %v5576, %v5565
  %v5885 = vpack.c.b16 %v5577, %v5566
  %v5886 = vpack.c.b16 %v5578, %v5567
  %v5887 = vpack.c.b16 %v5579, %v5568
  %v5888 = vpack.c.b16 %v5580, %v5569
  %v5889 = vpack.c.b16 %v5581, %v5570
  %v5890 = vpack.c.b16 %v5582, %v5571
  %v5891 = vpack.c.b16 %v5583, %v5572
  %v5892 = vpack.c.b16 %v5584, %v5573
  %v5893 = vpack.c.b16 %v5585, %v5574
  %v5894 = vpack.c.b16 %v5586, %v5575
  %v5895 = vpack.c.b16 %v5598, %v5587
  %v5896 = vpack.c.b16 %v5599, %v5588
  %v5897 = vpack.c.b16 %v5600, %v5589
  %v5898 = vpack.c.b16 %v5601, %v5590
  %v5899 = vpack.c.b16 %v5602, %v5591
  %v5900 = vpack.c.b16 %v5603, %v5592
  %v5901 = vpack.c.b16 %v5604, %v5593
  %v5902 = vpack.c.b16 %v5605, %v5594
  %v5903 = vpack.c.b16 %v5606, %v5595
  %v5904 = vpack.c.b16 %v5607, %v5596
  %v5905 = vpack.c.b16 %v5608, %v5597
  %v5906 = vpack.c.b16 %v5620, %v5609
  %v5907 = vpack.c.b16 %v5621, %v5610
  %v5908 = vpack.c.b16 %v5622, %v5611
  %v5909 = vpack.c.b16 %v5623, %v5612
  %v5910 = vpack.c.b16 %v5624, %v5613
  %v5911 = vpack.c.b16 %v5625, %v5614
  %v5912 = vpack.c.b16 %v5626, %v5615
  %v5913 = vpack.c.b16 %v5627, %v5616
  %v5914 = vpack.c.b16 %v5628, %v5617
  %v5915 = vpack.c.b16 %v5629, %v5618
  %v5916 = vpack.c.b16 %v5630, %v5619
  %v5917 = vpack.c.b16 %v5642, %v5631
  %v5918 = vpack.c.b16 %v5643, %v5632
  %v5919 = vpack.c.b16 %v5644, %v5633
  %v5920 = vpack.c.b16 %v5645, %v5634
  %v5921 = vpack.c.b16 %v5646, %v5635
  %v5922 = vpack.c.b16 %v5647, %v5636
  %v5923 = vpack.c.b16 %v5648, %v5637
  %v5924 = vpack.c.b16 %v5649, %v5638
  %v5925 = vpack.c.b16 %v5650, %v5639
  %v5926 = vpack.c.b16 %v5651, %v5640
  %v5927 = vpack.c.b16 %v5652, %v5641
  %v5928 = vpack.c.b16 %v5664, %v5653
  %v5929 = vpack.c.b16 %v5665, %v5654
  %v5930 = vpack.c.b16 %v5666, %v5655
  %v5931 = vpack.c.b16 %v5667, %v5656
  %v5932 = vpack.c.b16 %v5668, %v5657
  %v5933 = vpack.c.b16 %v5669, %v5658
  %v5934 = vpack.c.b16 %v5670, %v5659
  %v5935 = vpack.c.b16 %v5671, %v5660
  %v5936 = vpack.c.b16 %v5672, %v5661
  %v5937 = vpack.c.b16 %v5673, %v5662
  %v5938 = vpack.c.b16 %v5674, %v5663
  %v5939 = vpack.c.b16 %v5686, %v5675
  %v5940 = vpack.c.b16 %v5687, %v5676
  %v5941 = vpack.c.b16 %v5688, %v5677
  %v5942 = vpack.c.b16 %v5689, %v5678
  %v5943 = vpack.c.b16 %v5690, %v5679
  %v5944 = vpack.c.b16 %v5691, %v5680
  %v5945 = vpack.c.b16 %v5692, %v5681
  %v5946 = vpack.c.b16 %v5693, %v5682
  %v5947 = vpack.c.b16 %v5694, %v5683
  %v5948 = vpack.c.b16 %v5695, %v5684
  %v5949 = vpack.c.b16 %v5696, %v5685
  %v5950 = vpack.c.b16 %v5708, %v5697
  %v5951 = vpack.c.b16 %v5709, %v5698
  %v5952 = vpack.c.b16 %v5710, %v5699
  %v5953 = vpack.c.b16 %v5711, %v5700
  %v5954 = vpack.c.b16 %v5712, %v5701
  %v5955 = vpack.c.b16 %v5713, %v5702
  %v5956 = vpack.c.b16 %v5714, %v5703
  %v5957 = vpack.c.b16 %v5715, %v5704
  %v5958 = vpack.c.b16 %v5716, %v5705
  %v5959 = vpack.c.b16 %v5717, %v5706
  %v5960 = vpack.c.b16 %v5718, %v5707
  %v5961 = vpack.c.b16 %v5730, %v5719
  %v5962 = vpack.c.b16 %v5731, %v5720
  %v5963 = vpack.c.b16 %v5732, %v5721
  %v5964 = vpack.c.b16 %v5733, %v5722
  %v5965 = vpack.c.b16 %v5734, %v5723
  %v5966 = vpack.c.b16 %v5735, %v5724
  %v5967 = vpack.c.b16 %v5736, %v5725
  %v5968 = vpack.c.b16 %v5737, %v5726
  %v5969 = vpack.c.b16 %v5738, %v5727
  %v5970 = vpack.c.b16 %v5739, %v5728
  %v5971 = vpack.c.b16 %v5740, %v5729
  %v5972 = vpack.c.b16 %v5752, %v5741
  %v5973 = vpack.c.b16 %v5753, %v5742
  %v5974 = vpack.c.b16 %v5754, %v5743
  %v5975 = vpack.c.b16 %v5755, %v5744
  %v5976 = vpack.c.b16 %v5756, %v5745
  %v5977 = vpack.c.b16 %v5757, %v5746
  %v5978 = vpack.c.b16 %v5758, %v5747
  %v5979 = vpack.c.b16 %v5759, %v5748
  %v5980 = vpack.c.b16 %v5760, %v5749
  %v5981 = vpack.c.b16 %v5761, %v5750
  %v5982 = vpack.c.b16 %v5762, %v5751
  %v5983 = vpack.c.b16 %v5774, %v5763
  %v5984 = vpack.c.b16 %v5775, %v5764
  %v5985 = vpack.c.b16 %v5776, %v5765
  %v5986 = vpack.c.b16 %v5777, %v5766
  %v5987 = vpack.c.b16 %v5778, %v5767
  %v5988 = vpack.c.b16 %v5779, %v5768
  %v5989 = vpack.c.b16 %v5780, %v5769
  %v5990 = vpack.c.b16 %v5781, %v5770
  %v5991 = vpack.c.b16 %v5782, %v5771
  %v5992 = vpack.c.b16 %v5783, %v5772
  %v5993 = vpack.c.b16 %v5784, %v5773
  %v5994 = vpack.c.b16 %v5796, %v5785
  %v5995 = vpack.c.b16 %v5797, %v5786
  %v5996 = vpack.c.b16 %v5798, %v5787
  %v5997 = vpack.c.b16 %v5799, %v5788
  %v5998 = vpack.c.b16 %v5800, %v5789
  %v5999 = vpack.c.b16 %v5801, %v5790
  %v6000 = vpack.c.b16 %v5802, %v5791
  %v6001 = vpack.c.b16 %v5803, %v5792
  %v6002 = vpack.c.b16 %v5804, %v5793
  %v6003 = vpack.c.b16 %v5805, %v5794
  %v6004 = vpack.c.b16 %v5806, %v5795
  %v6005 = vpack.c.b16 %v5818, %v5807
  %v6006 = vpack.c.b16 %v5819, %v5808
  %v6007 = vpack.c.b16 %v5820, %v5809
  %v6008 = vpack.c.b16 %v5821, %v5810
  %v6009 = vpack.c.b16 %v5822, %v5811
  %v6010 = vpack.c.b16 %v5823, %v5812
  %v6011 = vpack.c.b16 %v5824, %v5813
  %v6012 = vpack.c.b16 %v5825, %v5814
  %v6013 = vpack.c.b16 %v5826, %v5815
  %v6014 = vpack.c.b16 %v5827, %v5816
  %v6015 = vpack.c.b16 %v5828, %v5817
  %v6016 = vpack.c.b16 %v5840, %v5829
  %v6017 = vpack.c.b16 %v5841, %v5830
  %v6018 = vpack.c.b16 %v5842, %v5831
  %v6019 = vpack.c.b16 %v5843, %v5832
  %v6020 = vpack.c.b16 %v5844, %v5833
  %v6021 = vpack.c.b16 %v5845, %v5834
  %v6022 = vpack.c.b16 %v5846, %v5835
  %v6023 = vpack.c.b16 %v5847, %v5836
  %v6024 = vpack.c.b16 %v5848, %v5837
  %v6025 = vpack.c.b16 %v5849, %v5838
  %v6026 = vpack.c.b16 %v5850, %v5839
  %6203 = vmatprep.subr.bf16.mxu0 0
  %6204 = vmatpush1.bf16.msra.mxu0 %v1653
  %6205 = vmatprep.subr.bf16.mxu0 0
  %6206 = vmatpush1.bf16.msra.mxu0 %v1654
  %6207 = vmatprep.subr.bf16.mxu0 0
  %6208 = vmatpush1.bf16.msra.mxu0 %v1655
  %6209 = vmatprep.subr.bf16.mxu0 0
  %6210 = vmatpush1.bf16.msra.mxu0 %v1656
  %6211 = vmatprep.subr.bf16.mxu0 0
  %6212 = vmatpush1.bf16.msra.mxu0 %v1657
  %6213 = vmatprep.subr.bf16.mxu0 0
  %6214 = vmatpush1.bf16.msra.mxu0 %v1658
  %6215 = vmatprep.subr.bf16.mxu0 0
  %6216 = vmatpush1.bf16.msra.mxu0 %v1659
  %6217 = vmatprep.subr.bf16.mxu0 0
  %6218 = vmatpush1.bf16.msra.mxu0 %v1660
  %6219 = vmatprep.subr.bf16.mxu0 0
  %6220 = vmatpush1.bf16.msra.mxu0 %v1661
  %6221 = vmatprep.subr.bf16.mxu0 0
  %6222 = vmatpush1.bf16.msra.mxu0 %v1662
  %6223 = vmatprep.subr.bf16.mxu0 0
  %6224 = vmatpush1.bf16.msra.mxu0 %v1663
  %6225 = vmatprep.subr.bf16.mxu0 0
  %6226 = vmatpush1.bf16.msra.mxu0 %v1664
  %6227 = vmatprep.subr.bf16.mxu0 0
  %6228 = vmatpush1.bf16.msra.mxu0 %v1665
  %6229 = vmatprep.subr.bf16.mxu0 0
  %6230 = vmatpush1.bf16.msra.mxu0 %v1666
  %6231 = vmatprep.subr.bf16.mxu0 0
  %6232 = vmatpush1.bf16.msra.mxu0 %v1667
  %6233 = vmatprep.subr.bf16.mxu0 0
  %6234 = vmatpush1.bf16.msra.mxu0 %v1668
  %6235 = vmatprep.mubr.bf16.mxu0 %v5852
  %6236 = vmatmul.mubr.bf16.gmra.mrb[0].mxu0 %v5851
  %v6237 = vpop.f32.mrb[0].mxu0
  %v6238 = vadd.f32 0.0, %v6237
  %v6239 = vpop.f32.mrb[0].mxu0
  %v6240 = vpop.f32.mrb[0].mxu0
  %v6241 = vadd.f32 0.0, %v6240
  %v6242 = vpop.f32.mrb[0].mxu0
  %6243 = vmatprep.mubr.bf16.mxu0 %v5863
  %6244 = vmatmul.mubr.bf16.gmra.mrb[0].mxu0 %v5862
  %v6245 = vpop.f32.mrb[0].mxu0
  %v6246 = vadd.f32 0.0, %v6245
  %v6247 = vpop.f32.mrb[0].mxu0
  %v6248 = vpop.f32.mrb[0].mxu0
  %v6249 = vadd.f32 0.0, %v6248
  %v6250 = vpop.f32.mrb[0].mxu0
  %6251 = vmatprep.mubr.bf16.mxu0 %v5874
  %6252 = vmatmul.mubr.bf16.gmra.mrb[0].mxu0 %v5873
  %v6253 = vpop.f32.mrb[0].mxu0
  %v6254 = vadd.f32 0.0, %v6253
  %v6255 = vpop.f32.mrb[0].mxu0
  %v6256 = vpop.f32.mrb[0].mxu0
  %v6257 = vadd.f32 0.0, %v6256
  %v6258 = vpop.f32.mrb[0].mxu0
  %6259 = vmatprep.mubr.bf16.mxu0 %v5885
  %6260 = vmatmul.mubr.bf16.gmra.mrb[0].mxu0 %v5884
  %v6261 = vpop.f32.mrb[0].mxu0
  %v6262 = vadd.f32 0.0, %v6261
  %v6263 = vpop.f32.mrb[0].mxu0
  %v6264 = vpop.f32.mrb[0].mxu0
  %v6265 = vadd.f32 0.0, %v6264
  %v6266 = vpop.f32.mrb[0].mxu0
  %6267 = vmatprep.mubr.bf16.mxu0 %v5896
  %6268 = vmatmul.mubr.bf16.gmra.mrb[0].mxu0 %v5895
  %v6269 = vpop.f32.mrb[0].mxu0
  %v6270 = vadd.f32 0.0, %v6269
  %v6271 = vpop.f32.mrb[0].mxu0
  %v6272 = vpop.f32.mrb[0].mxu0
  %v6273 = vadd.f32 0.0, %v6272
  %v6274 = vpop.f32.mrb[0].mxu0
  %6275 = vmatprep.mubr.bf16.mxu0 %v5907
  %6276 = vmatmul.mubr.bf16.gmra.mrb[0].mxu0 %v5906
  %v6277 = vpop.f32.mrb[0].mxu0
  %v6278 = vadd.f32 0.0, %v6277
  %v6279 = vpop.f32.mrb[0].mxu0
  %v6280 = vpop.f32.mrb[0].mxu0
  %v6281 = vadd.f32 0.0, %v6280
  %v6282 = vpop.f32.mrb[0].mxu0
  %6283 = vmatprep.mubr.bf16.mxu0 %v5918
  %6284 = vmatmul.mubr.bf16.gmra.mrb[0].mxu0 %v5917
  %v6285 = vpop.f32.mrb[0].mxu0
  %v6286 = vadd.f32 0.0, %v6285
  %v6287 = vpop.f32.mrb[0].mxu0
  %v6288 = vpop.f32.mrb[0].mxu0
  %v6289 = vadd.f32 0.0, %v6288
  %v6290 = vpop.f32.mrb[0].mxu0
  %6291 = vmatprep.mubr.bf16.mxu0 %v5929
  %6292 = vmatmul.mubr.bf16.gmra.mrb[0].mxu0 %v5928
  %v6293 = vpop.f32.mrb[0].mxu0
  %v6294 = vadd.f32 0.0, %v6293
  %v6295 = vpop.f32.mrb[0].mxu0
  %v6296 = vpop.f32.mrb[0].mxu0
  %v6297 = vadd.f32 0.0, %v6296
  %v6298 = vpop.f32.mrb[0].mxu0
  %6299 = vmatprep.mubr.bf16.mxu0 %v5940
  %6300 = vmatmul.mubr.bf16.gmra.mrb[0].mxu0 %v5939
  %v6301 = vpop.f32.mrb[0].mxu0
  %v6302 = vadd.f32 0.0, %v6301
  %v6303 = vpop.f32.mrb[0].mxu0
  %v6304 = vpop.f32.mrb[0].mxu0
  %v6305 = vadd.f32 0.0, %v6304
  %v6306 = vpop.f32.mrb[0].mxu0
  %6307 = vmatprep.mubr.bf16.mxu0 %v5951
  %6308 = vmatmul.mubr.bf16.gmra.mrb[0].mxu0 %v5950
  %v6309 = vpop.f32.mrb[0].mxu0
  %v6310 = vadd.f32 0.0, %v6309
  %v6311 = vpop.f32.mrb[0].mxu0
  %v6312 = vpop.f32.mrb[0].mxu0
  %v6313 = vadd.f32 0.0, %v6312
  %v6314 = vpop.f32.mrb[0].mxu0
  %6315 = vmatprep.mubr.bf16.mxu0 %v5962
  %6316 = vmatmul.mubr.bf16.gmra.mrb[0].mxu0 %v5961
  %v6317 = vpop.f32.mrb[0].mxu0
  %v6318 = vadd.f32 0.0, %v6317
  %v6319 = vpop.f32.mrb[0].mxu0
  %v6320 = vpop.f32.mrb[0].mxu0
  %v6321 = vadd.f32 0.0, %v6320
  %v6322 = vpop.f32.mrb[0].mxu0
  %6323 = vmatprep.mubr.bf16.mxu0 %v5973
  %6324 = vmatmul.mubr.bf16.gmra.mrb[0].mxu0 %v5972
  %v6325 = vpop.f32.mrb[0].mxu0
  %v6326 = vadd.f32 0.0, %v6325
  %v6327 = vpop.f32.mrb[0].mxu0
  %v6328 = vpop.f32.mrb[0].mxu0
  %v6329 = vadd.f32 0.0, %v6328
  %v6330 = vpop.f32.mrb[0].mxu0
  %6331 = vmatprep.mubr.bf16.mxu0 %v5984
  %6332 = vmatmul.mubr.bf16.gmra.mrb[0].mxu0 %v5983
  %v6333 = vpop.f32.mrb[0].mxu0
  %v6334 = vadd.f32 0.0, %v6333
  %v6335 = vpop.f32.mrb[0].mxu0
  %v6336 = vpop.f32.mrb[0].mxu0
  %v6337 = vadd.f32 0.0, %v6336
  %v6338 = vpop.f32.mrb[0].mxu0
  %6339 = vmatprep.mubr.bf16.mxu0 %v5995
  %6340 = vmatmul.mubr.bf16.gmra.mrb[0].mxu0 %v5994
  %v6341 = vpop.f32.mrb[0].mxu0
  %v6342 = vadd.f32 0.0, %v6341
  %v6343 = vpop.f32.mrb[0].mxu0
  %v6344 = vpop.f32.mrb[0].mxu0
  %v6345 = vadd.f32 0.0, %v6344
  %v6346 = vpop.f32.mrb[0].mxu0
  %6347 = vmatprep.mubr.bf16.mxu0 %v6006
  %6348 = vmatmul.mubr.bf16.gmra.mrb[0].mxu0 %v6005
  %v6349 = vpop.f32.mrb[0].mxu0
  %v6350 = vadd.f32 0.0, %v6349
  %v6351 = vpop.f32.mrb[0].mxu0
  %v6352 = vpop.f32.mrb[0].mxu0
  %v6353 = vadd.f32 0.0, %v6352
  %v6354 = vpop.f32.mrb[0].mxu0
  %6355 = vmatprep.mubr.bf16.mxu0 %v6017
  %6356 = vmatmul.mubr.bf16.gmra.mrb[0].mxu0 %v6016
  %v6357 = vpop.f32.mrb[0].mxu0
  %v6358 = vadd.f32 0.0, %v6357
  %v6359 = vpop.f32.mrb[0].mxu0
  %v6360 = vpop.f32.mrb[0].mxu0
  %v6361 = vadd.f32 0.0, %v6360
  %v6362 = vpop.f32.mrb[0].mxu0
  %6363 = vdwg.mxu0
  %6364 = vmatprep.subr.bf16.mxu0 0
  %6365 = vmatpush1.bf16.msra.mxu0 %v1669
  %6366 = vmatprep.subr.bf16.mxu0 0
  %6367 = vmatpush1.bf16.msra.mxu0 %v1670
  %6368 = vmatprep.subr.bf16.mxu0 0
  %6369 = vmatpush1.bf16.msra.mxu0 %v1671
  %6370 = vmatprep.subr.bf16.mxu0 0
  %6371 = vmatpush1.bf16.msra.mxu0 %v1672
  %6372 = vmatprep.subr.bf16.mxu0 0
  %6373 = vmatpush1.bf16.msra.mxu0 %v1673
  %6374 = vmatprep.subr.bf16.mxu0 0
  %6375 = vmatpush1.bf16.msra.mxu0 %v1674
  %6376 = vmatprep.subr.bf16.mxu0 0
  %6377 = vmatpush1.bf16.msra.mxu0 %v1675
  %6378 = vmatprep.subr.bf16.mxu0 0
  %6379 = vmatpush1.bf16.msra.mxu0 %v1676
  %6380 = vmatprep.subr.bf16.mxu0 0
  %6381 = vmatpush1.bf16.msra.mxu0 %v1677
  %6382 = vmatprep.subr.bf16.mxu0 0
  %6383 = vmatpush1.bf16.msra.mxu0 %v1678
  %6384 = vmatprep.subr.bf16.mxu0 0
  %6385 = vmatpush1.bf16.msra.mxu0 %v1679
  %6386 = vmatprep.subr.bf16.mxu0 0
  %6387 = vmatpush1.bf16.msra.mxu0 %v1680
  %6388 = vmatprep.subr.bf16.mxu0 0
  %6389 = vmatpush1.bf16.msra.mxu0 %v1681
  %6390 = vmatprep.subr.bf16.mxu0 0
  %6391 = vmatpush1.bf16.msra.mxu0 %v1682
  %6392 = vmatprep.subr.bf16.mxu0 0
  %6393 = vmatpush1.bf16.msra.mxu0 %v1683
  %6394 = vmatprep.subr.bf16.mxu0 0
  %6395 = vmatpush1.bf16.msra.mxu0 %v1684
  %6396 = vmatprep.mubr.bf16.mxu0 %v5854
  %6397 = vmatmul.mubr.bf16.gmra.mrb[0].mxu0 %v5853
  %v6398 = vpop.f32.mrb[0].mxu0
  %v6399 = vadd.f32 %v6238, %v6398
  %v6400 = vpop.f32.mrb[0].mxu0
  %v6401 = vpop.f32.mrb[0].mxu0
  %v6402 = vadd.f32 %v6241, %v6401
  %v6403 = vpop.f32.mrb[0].mxu0
  %6404 = vmatprep.mubr.bf16.mxu0 %v5865
  %6405 = vmatmul.mubr.bf16.gmra.mrb[0].mxu0 %v5864
  %v6406 = vpop.f32.mrb[0].mxu0
  %v6407 = vadd.f32 %v6246, %v6406
  %v6408 = vpop.f32.mrb[0].mxu0
  %v6409 = vpop.f32.mrb[0].mxu0
  %v6410 = vadd.f32 %v6249, %v6409
  %v6411 = vpop.f32.mrb[0].mxu0
  %6412 = vmatprep.mubr.bf16.mxu0 %v5876
  %6413 = vmatmul.mubr.bf16.gmra.mrb[0].mxu0 %v5875
  %v6414 = vpop.f32.mrb[0].mxu0
  %v6415 = vadd.f32 %v6254, %v6414
  %v6416 = vpop.f32.mrb[0].mxu0
  %v6417 = vpop.f32.mrb[0].mxu0
  %v6418 = vadd.f32 %v6257, %v6417
  %v6419 = vpop.f32.mrb[0].mxu0
  %6420 = vmatprep.mubr.bf16.mxu0 %v5887
  %6421 = vmatmul.mubr.bf16.gmra.mrb[0].mxu0 %v5886
  %v6422 = vpop.f32.mrb[0].mxu0
  %v6423 = vadd.f32 %v6262, %v6422
  %v6424 = vpop.f32.mrb[0].mxu0
  %v6425 = vpop.f32.mrb[0].mxu0
  %v6426 = vadd.f32 %v6265, %v6425
  %v6427 = vpop.f32.mrb[0].mxu0
  %6428 = vmatprep.mubr.bf16.mxu0 %v5898
  %6429 = vmatmul.mubr.bf16.gmra.mrb[0].mxu0 %v5897
  %v6430 = vpop.f32.mrb[0].mxu0
  %v6431 = vadd.f32 %v6270, %v6430
  %v6432 = vpop.f32.mrb[0].mxu0
  %v6433 = vpop.f32.mrb[0].mxu0
  %v6434 = vadd.f32 %v6273, %v6433
  %v6435 = vpop.f32.mrb[0].mxu0
  %6436 = vmatprep.mubr.bf16.mxu0 %v5909
  %6437 = vmatmul.mubr.bf16.gmra.mrb[0].mxu0 %v5908
  %v6438 = vpop.f32.mrb[0].mxu0
  %v6439 = vadd.f32 %v6278, %v6438
  %v6440 = vpop.f32.mrb[0].mxu0
  %v6441 = vpop.f32.mrb[0].mxu0
  %v6442 = vadd.f32 %v6281, %v6441
  %v6443 = vpop.f32.mrb[0].mxu0
  %6444 = vmatprep.mubr.bf16.mxu0 %v5920
  %6445 = vmatmul.mubr.bf16.gmra.mrb[0].mxu0 %v5919
  %v6446 = vpop.f32.mrb[0].mxu0
  %v6447 = vadd.f32 %v6286, %v6446
  %v6448 = vpop.f32.mrb[0].mxu0
  %v6449 = vpop.f32.mrb[0].mxu0
  %v6450 = vadd.f32 %v6289, %v6449
  %v6451 = vpop.f32.mrb[0].mxu0
  %6452 = vmatprep.mubr.bf16.mxu0 %v5931
  %6453 = vmatmul.mubr.bf16.gmra.mrb[0].mxu0 %v5930
  %v6454 = vpop.f32.mrb[0].mxu0
  %v6455 = vadd.f32 %v6294, %v6454
  %v6456 = vpop.f32.mrb[0].mxu0
  %v6457 = vpop.f32.mrb[0].mxu0
  %v6458 = vadd.f32 %v6297, %v6457
  %v6459 = vpop.f32.mrb[0].mxu0
  %6460 = vmatprep.mubr.bf16.mxu0 %v5942
  %6461 = vmatmul.mubr.bf16.gmra.mrb[0].mxu0 %v5941
  %v6462 = vpop.f32.mrb[0].mxu0
  %v6463 = vadd.f32 %v6302, %v6462
  %v6464 = vpop.f32.mrb[0].mxu0
  %v6465 = vpop.f32.mrb[0].mxu0
  %v6466 = vadd.f32 %v6305, %v6465
  %v6467 = vpop.f32.mrb[0].mxu0
  %6468 = vmatprep.mubr.bf16.mxu0 %v5953
  %6469 = vmatmul.mubr.bf16.gmra.mrb[0].mxu0 %v5952
  %v6470 = vpop.f32.mrb[0].mxu0
  %v6471 = vadd.f32 %v6310, %v6470
  %v6472 = vpop.f32.mrb[0].mxu0
  %v6473 = vpop.f32.mrb[0].mxu0
  %v6474 = vadd.f32 %v6313, %v6473
  %v6475 = vpop.f32.mrb[0].mxu0
  %6476 = vmatprep.mubr.bf16.mxu0 %v5964
  %6477 = vmatmul.mubr.bf16.gmra.mrb[0].mxu0 %v5963
  %v6478 = vpop.f32.mrb[0].mxu0
  %v6479 = vadd.f32 %v6318, %v6478
  %v6480 = vpop.f32.mrb[0].mxu0
  %v6481 = vpop.f32.mrb[0].mxu0
  %v6482 = vadd.f32 %v6321, %v6481
  %v6483 = vpop.f32.mrb[0].mxu0
  %6484 = vmatprep.mubr.bf16.mxu0 %v5975
  %6485 = vmatmul.mubr.bf16.gmra.mrb[0].mxu0 %v5974
  %v6486 = vpop.f32.mrb[0].mxu0
  %v6487 = vadd.f32 %v6326, %v6486
  %v6488 = vpop.f32.mrb[0].mxu0
  %v6489 = vpop.f32.mrb[0].mxu0
  %v6490 = vadd.f32 %v6329, %v6489
  %v6491 = vpop.f32.mrb[0].mxu0
  %6492 = vmatprep.mubr.bf16.mxu0 %v5986
  %6493 = vmatmul.mubr.bf16.gmra.mrb[0].mxu0 %v5985
  %v6494 = vpop.f32.mrb[0].mxu0
  %v6495 = vadd.f32 %v6334, %v6494
  %v6496 = vpop.f32.mrb[0].mxu0
  %v6497 = vpop.f32.mrb[0].mxu0
  %v6498 = vadd.f32 %v6337, %v6497
  %v6499 = vpop.f32.mrb[0].mxu0
  %6500 = vmatprep.mubr.bf16.mxu0 %v5997
  %6501 = vmatmul.mubr.bf16.gmra.mrb[0].mxu0 %v5996
  %v6502 = vpop.f32.mrb[0].mxu0
  %v6503 = vadd.f32 %v6342, %v6502
  %v6504 = vpop.f32.mrb[0].mxu0
  %v6505 = vpop.f32.mrb[0].mxu0
  %v6506 = vadd.f32 %v6345, %v6505
  %v6507 = vpop.f32.mrb[0].mxu0
  %6508 = vmatprep.mubr.bf16.mxu0 %v6008
  %6509 = vmatmul.mubr.bf16.gmra.mrb[0].mxu0 %v6007
  %v6510 = vpop.f32.mrb[0].mxu0
  %v6511 = vadd.f32 %v6350, %v6510
  %v6512 = vpop.f32.mrb[0].mxu0
  %v6513 = vpop.f32.mrb[0].mxu0
  %v6514 = vadd.f32 %v6353, %v6513
  %v6515 = vpop.f32.mrb[0].mxu0
  %6516 = vmatprep.mubr.bf16.mxu0 %v6019
  %6517 = vmatmul.mubr.bf16.gmra.mrb[0].mxu0 %v6018
  %v6518 = vpop.f32.mrb[0].mxu0
  %v6519 = vadd.f32 %v6358, %v6518
  %v6520 = vpop.f32.mrb[0].mxu0
  %v6521 = vpop.f32.mrb[0].mxu0
  %v6522 = vadd.f32 %v6361, %v6521
  %v6523 = vpop.f32.mrb[0].mxu0
  %6524 = vdwg.mxu0
  %6525 = vmatprep.subr.bf16.mxu0 0
  %6526 = vmatpush1.bf16.msra.mxu0 %v1685
  %6527 = vmatprep.subr.bf16.mxu0 0
  %6528 = vmatpush1.bf16.msra.mxu0 %v1686
  %6529 = vmatprep.subr.bf16.mxu0 0
  %6530 = vmatpush1.bf16.msra.mxu0 %v1687
  %6531 = vmatprep.subr.bf16.mxu0 0
  %6532 = vmatpush1.bf16.msra.mxu0 %v1688
  %6533 = vmatprep.subr.bf16.mxu0 0
  %6534 = vmatpush1.bf16.msra.mxu0 %v1689
  %6535 = vmatprep.subr.bf16.mxu0 0
  %6536 = vmatpush1.bf16.msra.mxu0 %v1690
  %6537 = vmatprep.subr.bf16.mxu0 0
  %6538 = vmatpush1.bf16.msra.mxu0 %v1691
  %6539 = vmatprep.subr.bf16.mxu0 0
  %6540 = vmatpush1.bf16.msra.mxu0 %v1692
  %6541 = vmatprep.subr.bf16.mxu0 0
  %6542 = vmatpush1.bf16.msra.mxu0 %v1693
  %6543 = vmatprep.subr.bf16.mxu0 0
  %6544 = vmatpush1.bf16.msra.mxu0 %v1694
  %6545 = vmatprep.subr.bf16.mxu0 0
  %6546 = vmatpush1.bf16.msra.mxu0 %v1695
  %6547 = vmatprep.subr.bf16.mxu0 0
  %6548 = vmatpush1.bf16.msra.mxu0 %v1696
  %6549 = vmatprep.subr.bf16.mxu0 0
  %6550 = vmatpush1.bf16.msra.mxu0 %v1697
  %6551 = vmatprep.subr.bf16.mxu0 0
  %6552 = vmatpush1.bf16.msra.mxu0 %v1698
  %6553 = vmatprep.subr.bf16.mxu0 0
  %6554 = vmatpush1.bf16.msra.mxu0 %v1699
  %6555 = vmatprep.subr.bf16.mxu0 0
  %6556 = vmatpush1.bf16.msra.mxu0 %v1700
  %6557 = vmatprep.mubr.bf16.mxu0 %v5856
  %6558 = vmatmul.mubr.bf16.gmra.mrb[0].mxu0 %v5855
  %v6559 = vpop.f32.mrb[0].mxu0
  %v6560 = vadd.f32 %v6399, %v6559
  %v6561 = vpop.f32.mrb[0].mxu0
  %v6562 = vpop.f32.mrb[0].mxu0
  %v6563 = vadd.f32 %v6402, %v6562
  %v6564 = vpop.f32.mrb[0].mxu0
  %6565 = vmatprep.mubr.bf16.mxu0 %v5867
  %6566 = vmatmul.mubr.bf16.gmra.mrb[0].mxu0 %v5866
  %v6567 = vpop.f32.mrb[0].mxu0
  %v6568 = vadd.f32 %v6407, %v6567
  %v6569 = vpop.f32.mrb[0].mxu0
  %v6570 = vpop.f32.mrb[0].mxu0
  %v6571 = vadd.f32 %v6410, %v6570
  %v6572 = vpop.f32.mrb[0].mxu0
  %6573 = vmatprep.mubr.bf16.mxu0 %v5878
  %6574 = vmatmul.mubr.bf16.gmra.mrb[0].mxu0 %v5877
  %v6575 = vpop.f32.mrb[0].mxu0
  %v6576 = vadd.f32 %v6415, %v6575
  %v6577 = vpop.f32.mrb[0].mxu0
  %v6578 = vpop.f32.mrb[0].mxu0
  %v6579 = vadd.f32 %v6418, %v6578
  %v6580 = vpop.f32.mrb[0].mxu0
  %6581 = vmatprep.mubr.bf16.mxu0 %v5889
  %6582 = vmatmul.mubr.bf16.gmra.mrb[0].mxu0 %v5888
  %v6583 = vpop.f32.mrb[0].mxu0
  %v6584 = vadd.f32 %v6423, %v6583
  %v6585 = vpop.f32.mrb[0].mxu0
  %v6586 = vpop.f32.mrb[0].mxu0
  %v6587 = vadd.f32 %v6426, %v6586
  %v6588 = vpop.f32.mrb[0].mxu0
  %6589 = vmatprep.mubr.bf16.mxu0 %v5900
  %6590 = vmatmul.mubr.bf16.gmra.mrb[0].mxu0 %v5899
  %v6591 = vpop.f32.mrb[0].mxu0
  %v6592 = vadd.f32 %v6431, %v6591
  %v6593 = vpop.f32.mrb[0].mxu0
  %v6594 = vpop.f32.mrb[0].mxu0
  %v6595 = vadd.f32 %v6434, %v6594
  %v6596 = vpop.f32.mrb[0].mxu0
  %6597 = vmatprep.mubr.bf16.mxu0 %v5911
  %6598 = vmatmul.mubr.bf16.gmra.mrb[0].mxu0 %v5910
  %v6599 = vpop.f32.mrb[0].mxu0
  %v6600 = vadd.f32 %v6439, %v6599
  %v6601 = vpop.f32.mrb[0].mxu0
  %v6602 = vpop.f32.mrb[0].mxu0
  %v6603 = vadd.f32 %v6442, %v6602
  %v6604 = vpop.f32.mrb[0].mxu0
  %6605 = vmatprep.mubr.bf16.mxu0 %v5922
  %6606 = vmatmul.mubr.bf16.gmra.mrb[0].mxu0 %v5921
  %v6607 = vpop.f32.mrb[0].mxu0
  %v6608 = vadd.f32 %v6447, %v6607
  %v6609 = vpop.f32.mrb[0].mxu0
  %v6610 = vpop.f32.mrb[0].mxu0
  %v6611 = vadd.f32 %v6450, %v6610
  %v6612 = vpop.f32.mrb[0].mxu0
  %6613 = vmatprep.mubr.bf16.mxu0 %v5933
  %6614 = vmatmul.mubr.bf16.gmra.mrb[0].mxu0 %v5932
  %v6615 = vpop.f32.mrb[0].mxu0
  %v6616 = vadd.f32 %v6455, %v6615
  %v6617 = vpop.f32.mrb[0].mxu0
  %v6618 = vpop.f32.mrb[0].mxu0
  %v6619 = vadd.f32 %v6458, %v6618
  %v6620 = vpop.f32.mrb[0].mxu0
  %6621 = vmatprep.mubr.bf16.mxu0 %v5944
  %6622 = vmatmul.mubr.bf16.gmra.mrb[0].mxu0 %v5943
  %v6623 = vpop.f32.mrb[0].mxu0
  %v6624 = vadd.f32 %v6463, %v6623
  %v6625 = vpop.f32.mrb[0].mxu0
  %v6626 = vpop.f32.mrb[0].mxu0
  %v6627 = vadd.f32 %v6466, %v6626
  %v6628 = vpop.f32.mrb[0].mxu0
  %6629 = vmatprep.mubr.bf16.mxu0 %v5955
  %6630 = vmatmul.mubr.bf16.gmra.mrb[0].mxu0 %v5954
  %v6631 = vpop.f32.mrb[0].mxu0
  %v6632 = vadd.f32 %v6471, %v6631
  %v6633 = vpop.f32.mrb[0].mxu0
  %v6634 = vpop.f32.mrb[0].mxu0
  %v6635 = vadd.f32 %v6474, %v6634
  %v6636 = vpop.f32.mrb[0].mxu0
  %6637 = vmatprep.mubr.bf16.mxu0 %v5966
  %6638 = vmatmul.mubr.bf16.gmra.mrb[0].mxu0 %v5965
  %v6639 = vpop.f32.mrb[0].mxu0
  %v6640 = vadd.f32 %v6479, %v6639
  %v6641 = vpop.f32.mrb[0].mxu0
  %v6642 = vpop.f32.mrb[0].mxu0
  %v6643 = vadd.f32 %v6482, %v6642
  %v6644 = vpop.f32.mrb[0].mxu0
  %6645 = vmatprep.mubr.bf16.mxu0 %v5977
  %6646 = vmatmul.mubr.bf16.gmra.mrb[0].mxu0 %v5976
  %v6647 = vpop.f32.mrb[0].mxu0
  %v6648 = vadd.f32 %v6487, %v6647
  %v6649 = vpop.f32.mrb[0].mxu0
  %v6650 = vpop.f32.mrb[0].mxu0
  %v6651 = vadd.f32 %v6490, %v6650
  %v6652 = vpop.f32.mrb[0].mxu0
  %6653 = vmatprep.mubr.bf16.mxu0 %v5988
  %6654 = vmatmul.mubr.bf16.gmra.mrb[0].mxu0 %v5987
  %v6655 = vpop.f32.mrb[0].mxu0
  %v6656 = vadd.f32 %v6495, %v6655
  %v6657 = vpop.f32.mrb[0].mxu0
  %v6658 = vpop.f32.mrb[0].mxu0
  %v6659 = vadd.f32 %v6498, %v6658
  %v6660 = vpop.f32.mrb[0].mxu0
  %6661 = vmatprep.mubr.bf16.mxu0 %v5999
  %6662 = vmatmul.mubr.bf16.gmra.mrb[0].mxu0 %v5998
  %v6663 = vpop.f32.mrb[0].mxu0
  %v6664 = vadd.f32 %v6503, %v6663
  %v6665 = vpop.f32.mrb[0].mxu0
  %v6666 = vpop.f32.mrb[0].mxu0
  %v6667 = vadd.f32 %v6506, %v6666
  %v6668 = vpop.f32.mrb[0].mxu0
  %6669 = vmatprep.mubr.bf16.mxu0 %v6010
  %6670 = vmatmul.mubr.bf16.gmra.mrb[0].mxu0 %v6009
  %v6671 = vpop.f32.mrb[0].mxu0
  %v6672 = vadd.f32 %v6511, %v6671
  %v6673 = vpop.f32.mrb[0].mxu0
  %v6674 = vpop.f32.mrb[0].mxu0
  %v6675 = vadd.f32 %v6514, %v6674
  %v6676 = vpop.f32.mrb[0].mxu0
  %6677 = vmatprep.mubr.bf16.mxu0 %v6021
  %6678 = vmatmul.mubr.bf16.gmra.mrb[0].mxu0 %v6020
  %v6679 = vpop.f32.mrb[0].mxu0
  %v6680 = vadd.f32 %v6519, %v6679
  %v6681 = vpop.f32.mrb[0].mxu0
  %v6682 = vpop.f32.mrb[0].mxu0
  %v6683 = vadd.f32 %v6522, %v6682
  %v6684 = vpop.f32.mrb[0].mxu0
  %6685 = vdwg.mxu0
  %6686 = vmatprep.subr.bf16.mxu0 0
  %6687 = vmatpush1.bf16.msra.mxu0 %v1701
  %6688 = vmatprep.subr.bf16.mxu0 0
  %6689 = vmatpush1.bf16.msra.mxu0 %v1702
  %6690 = vmatprep.subr.bf16.mxu0 0
  %6691 = vmatpush1.bf16.msra.mxu0 %v1703
  %6692 = vmatprep.subr.bf16.mxu0 0
  %6693 = vmatpush1.bf16.msra.mxu0 %v1704
  %6694 = vmatprep.subr.bf16.mxu0 0
  %6695 = vmatpush1.bf16.msra.mxu0 %v1705
  %6696 = vmatprep.subr.bf16.mxu0 0
  %6697 = vmatpush1.bf16.msra.mxu0 %v1706
  %6698 = vmatprep.subr.bf16.mxu0 0
  %6699 = vmatpush1.bf16.msra.mxu0 %v1707
  %6700 = vmatprep.subr.bf16.mxu0 0
  %6701 = vmatpush1.bf16.msra.mxu0 %v1708
  %6702 = vmatprep.subr.bf16.mxu0 0
  %6703 = vmatpush1.bf16.msra.mxu0 %v1709
  %6704 = vmatprep.subr.bf16.mxu0 0
  %6705 = vmatpush1.bf16.msra.mxu0 %v1710
  %6706 = vmatprep.subr.bf16.mxu0 0
  %6707 = vmatpush1.bf16.msra.mxu0 %v1711
  %6708 = vmatprep.subr.bf16.mxu0 0
  %6709 = vmatpush1.bf16.msra.mxu0 %v1712
  %6710 = vmatprep.subr.bf16.mxu0 0
  %6711 = vmatpush1.bf16.msra.mxu0 %v1713
  %6712 = vmatprep.subr.bf16.mxu0 0
  %6713 = vmatpush1.bf16.msra.mxu0 %v1714
  %6714 = vmatprep.subr.bf16.mxu0 0
  %6715 = vmatpush1.bf16.msra.mxu0 %v1715
  %6716 = vmatprep.subr.bf16.mxu0 0
  %6717 = vmatpush1.bf16.msra.mxu0 %v1716
  %6718 = vmatprep.mubr.bf16.mxu0 %v5858
  %6719 = vmatmul.mubr.bf16.gmra.mrb[0].mxu0 %v5857
  %v6720 = vpop.f32.mrb[0].mxu0
  %v6721 = vadd.f32 %v6560, %v6720
  %v6722 = vpop.f32.mrb[0].mxu0
  %v6723 = vpop.f32.mrb[0].mxu0
  %v6724 = vadd.f32 %v6563, %v6723
  %v6725 = vpop.f32.mrb[0].mxu0
  %6726 = vmatprep.mubr.bf16.mxu0 %v5869
  %6727 = vmatmul.mubr.bf16.gmra.mrb[0].mxu0 %v5868
  %v6728 = vpop.f32.mrb[0].mxu0
  %v6729 = vadd.f32 %v6568, %v6728
  %v6730 = vpop.f32.mrb[0].mxu0
  %v6731 = vpop.f32.mrb[0].mxu0
  %v6732 = vadd.f32 %v6571, %v6731
  %v6733 = vpop.f32.mrb[0].mxu0
  %6734 = vmatprep.mubr.bf16.mxu0 %v5880
  %6735 = vmatmul.mubr.bf16.gmra.mrb[0].mxu0 %v5879
  %v6736 = vpop.f32.mrb[0].mxu0
  %v6737 = vadd.f32 %v6576, %v6736
  %v6738 = vpop.f32.mrb[0].mxu0
  %v6739 = vpop.f32.mrb[0].mxu0
  %v6740 = vadd.f32 %v6579, %v6739
  %v6741 = vpop.f32.mrb[0].mxu0
  %6742 = vmatprep.mubr.bf16.mxu0 %v5891
  %6743 = vmatmul.mubr.bf16.gmra.mrb[0].mxu0 %v5890
  %v6744 = vpop.f32.mrb[0].mxu0
  %v6745 = vadd.f32 %v6584, %v6744
  %v6746 = vpop.f32.mrb[0].mxu0
  %v6747 = vpop.f32.mrb[0].mxu0
  %v6748 = vadd.f32 %v6587, %v6747
  %v6749 = vpop.f32.mrb[0].mxu0
  %6750 = vmatprep.mubr.bf16.mxu0 %v5902
  %6751 = vmatmul.mubr.bf16.gmra.mrb[0].mxu0 %v5901
  %v6752 = vpop.f32.mrb[0].mxu0
  %v6753 = vadd.f32 %v6592, %v6752
  %v6754 = vpop.f32.mrb[0].mxu0
  %v6755 = vpop.f32.mrb[0].mxu0
  %v6756 = vadd.f32 %v6595, %v6755
  %v6757 = vpop.f32.mrb[0].mxu0
  %6758 = vmatprep.mubr.bf16.mxu0 %v5913
  %6759 = vmatmul.mubr.bf16.gmra.mrb[0].mxu0 %v5912
  %v6760 = vpop.f32.mrb[0].mxu0
  %v6761 = vadd.f32 %v6600, %v6760
  %v6762 = vpop.f32.mrb[0].mxu0
  %v6763 = vpop.f32.mrb[0].mxu0
  %v6764 = vadd.f32 %v6603, %v6763
  %v6765 = vpop.f32.mrb[0].mxu0
  %6766 = vmatprep.mubr.bf16.mxu0 %v5924
  %6767 = vmatmul.mubr.bf16.gmra.mrb[0].mxu0 %v5923
  %v6768 = vpop.f32.mrb[0].mxu0
  %v6769 = vadd.f32 %v6608, %v6768
  %v6770 = vpop.f32.mrb[0].mxu0
  %v6771 = vpop.f32.mrb[0].mxu0
  %v6772 = vadd.f32 %v6611, %v6771
  %v6773 = vpop.f32.mrb[0].mxu0
  %6774 = vmatprep.mubr.bf16.mxu0 %v5935
  %6775 = vmatmul.mubr.bf16.gmra.mrb[0].mxu0 %v5934
  %v6776 = vpop.f32.mrb[0].mxu0
  %v6777 = vadd.f32 %v6616, %v6776
  %v6778 = vpop.f32.mrb[0].mxu0
  %v6779 = vpop.f32.mrb[0].mxu0
  %v6780 = vadd.f32 %v6619, %v6779
  %v6781 = vpop.f32.mrb[0].mxu0
  %6782 = vmatprep.mubr.bf16.mxu0 %v5946
  %6783 = vmatmul.mubr.bf16.gmra.mrb[0].mxu0 %v5945
  %v6784 = vpop.f32.mrb[0].mxu0
  %v6785 = vadd.f32 %v6624, %v6784
  %v6786 = vpop.f32.mrb[0].mxu0
  %v6787 = vpop.f32.mrb[0].mxu0
  %v6788 = vadd.f32 %v6627, %v6787
  %v6789 = vpop.f32.mrb[0].mxu0
  %6790 = vmatprep.mubr.bf16.mxu0 %v5957
  %6791 = vmatmul.mubr.bf16.gmra.mrb[0].mxu0 %v5956
  %v6792 = vpop.f32.mrb[0].mxu0
  %v6793 = vadd.f32 %v6632, %v6792
  %v6794 = vpop.f32.mrb[0].mxu0
  %v6795 = vpop.f32.mrb[0].mxu0
  %v6796 = vadd.f32 %v6635, %v6795
  %v6797 = vpop.f32.mrb[0].mxu0
  %6798 = vmatprep.mubr.bf16.mxu0 %v5968
  %6799 = vmatmul.mubr.bf16.gmra.mrb[0].mxu0 %v5967
  %v6800 = vpop.f32.mrb[0].mxu0
  %v6801 = vadd.f32 %v6640, %v6800
  %v6802 = vpop.f32.mrb[0].mxu0
  %v6803 = vpop.f32.mrb[0].mxu0
  %v6804 = vadd.f32 %v6643, %v6803
  %v6805 = vpop.f32.mrb[0].mxu0
  %6806 = vmatprep.mubr.bf16.mxu0 %v5979
  %6807 = vmatmul.mubr.bf16.gmra.mrb[0].mxu0 %v5978
  %v6808 = vpop.f32.mrb[0].mxu0
  %v6809 = vadd.f32 %v6648, %v6808
  %v6810 = vpop.f32.mrb[0].mxu0
  %v6811 = vpop.f32.mrb[0].mxu0
  %v6812 = vadd.f32 %v6651, %v6811
  %v6813 = vpop.f32.mrb[0].mxu0
  %6814 = vmatprep.mubr.bf16.mxu0 %v5990
  %6815 = vmatmul.mubr.bf16.gmra.mrb[0].mxu0 %v5989
  %v6816 = vpop.f32.mrb[0].mxu0
  %v6817 = vadd.f32 %v6656, %v6816
  %v6818 = vpop.f32.mrb[0].mxu0
  %v6819 = vpop.f32.mrb[0].mxu0
  %v6820 = vadd.f32 %v6659, %v6819
  %v6821 = vpop.f32.mrb[0].mxu0
  %6822 = vmatprep.mubr.bf16.mxu0 %v6001
  %6823 = vmatmul.mubr.bf16.gmra.mrb[0].mxu0 %v6000
  %v6824 = vpop.f32.mrb[0].mxu0
  %v6825 = vadd.f32 %v6664, %v6824
  %v6826 = vpop.f32.mrb[0].mxu0
  %v6827 = vpop.f32.mrb[0].mxu0
  %v6828 = vadd.f32 %v6667, %v6827
  %v6829 = vpop.f32.mrb[0].mxu0
  %6830 = vmatprep.mubr.bf16.mxu0 %v6012
  %6831 = vmatmul.mubr.bf16.gmra.mrb[0].mxu0 %v6011
  %v6832 = vpop.f32.mrb[0].mxu0
  %v6833 = vadd.f32 %v6672, %v6832
  %v6834 = vpop.f32.mrb[0].mxu0
  %v6835 = vpop.f32.mrb[0].mxu0
  %v6836 = vadd.f32 %v6675, %v6835
  %v6837 = vpop.f32.mrb[0].mxu0
  %6838 = vmatprep.mubr.bf16.mxu0 %v6023
  %6839 = vmatmul.mubr.bf16.gmra.mrb[0].mxu0 %v6022
  %v6840 = vpop.f32.mrb[0].mxu0
  %v6841 = vadd.f32 %v6680, %v6840
  %v6842 = vpop.f32.mrb[0].mxu0
  %v6843 = vpop.f32.mrb[0].mxu0
  %v6844 = vadd.f32 %v6683, %v6843
  %v6845 = vpop.f32.mrb[0].mxu0
  %6846 = vdwg.mxu0
  %6847 = vmatprep.subr.bf16.mxu0 0
  %6848 = vmatpush1.bf16.msra.mxu0 %v1717
  %6849 = vmatprep.subr.bf16.mxu0 0
  %6850 = vmatpush1.bf16.msra.mxu0 %v1718
  %6851 = vmatprep.subr.bf16.mxu0 0
  %6852 = vmatpush1.bf16.msra.mxu0 %v1719
  %6853 = vmatprep.subr.bf16.mxu0 0
  %6854 = vmatpush1.bf16.msra.mxu0 %v1720
  %6855 = vmatprep.subr.bf16.mxu0 0
  %6856 = vmatpush1.bf16.msra.mxu0 %v1721
  %6857 = vmatprep.subr.bf16.mxu0 0
  %6858 = vmatpush1.bf16.msra.mxu0 %v1722
  %6859 = vmatprep.subr.bf16.mxu0 0
  %6860 = vmatpush1.bf16.msra.mxu0 %v1723
  %6861 = vmatprep.subr.bf16.mxu0 0
  %6862 = vmatpush1.bf16.msra.mxu0 %v1724
  %6863 = vmatprep.subr.bf16.mxu0 0
  %6864 = vmatpush1.bf16.msra.mxu0 %v1725
  %6865 = vmatprep.subr.bf16.mxu0 0
  %6866 = vmatpush1.bf16.msra.mxu0 %v1726
  %6867 = vmatprep.subr.bf16.mxu0 0
  %6868 = vmatpush1.bf16.msra.mxu0 %v1727
  %6869 = vmatprep.subr.bf16.mxu0 0
  %6870 = vmatpush1.bf16.msra.mxu0 %v1728
  %6871 = vmatprep.subr.bf16.mxu0 0
  %6872 = vmatpush1.bf16.msra.mxu0 %v1729
  %6873 = vmatprep.subr.bf16.mxu0 0
  %6874 = vmatpush1.bf16.msra.mxu0 %v1730
  %6875 = vmatprep.subr.bf16.mxu0 0
  %6876 = vmatpush1.bf16.msra.mxu0 %v1731
  %6877 = vmatprep.subr.bf16.mxu0 0
  %6878 = vmatpush1.bf16.msra.mxu0 %v1732
  %6879 = vmatprep.mubr.bf16.mxu0 %v5860
  %6880 = vmatmul.mubr.bf16.gmra.mrb[0].mxu0 %v5859
  %v6881 = vpop.f32.mrb[0].mxu0
  %v6882 = vadd.f32 %v6721, %v6881
  %v6883 = vpop.f32.mrb[0].mxu0
  %v6884 = vpop.f32.mrb[0].mxu0
  %v6885 = vadd.f32 %v6724, %v6884
  %v6886 = vpop.f32.mrb[0].mxu0
  %6887 = vmatprep.mubr.bf16.mxu0 %v5871
  %6888 = vmatmul.mubr.bf16.gmra.mrb[0].mxu0 %v5870
  %v6889 = vpop.f32.mrb[0].mxu0
  %v6890 = vadd.f32 %v6729, %v6889
  %v6891 = vpop.f32.mrb[0].mxu0
  %v6892 = vpop.f32.mrb[0].mxu0
  %v6893 = vadd.f32 %v6732, %v6892
  %v6894 = vpop.f32.mrb[0].mxu0
  %6895 = vmatprep.mubr.bf16.mxu0 %v5882
  %6896 = vmatmul.mubr.bf16.gmra.mrb[0].mxu0 %v5881
  %v6897 = vpop.f32.mrb[0].mxu0
  %v6898 = vadd.f32 %v6737, %v6897
  %v6899 = vpop.f32.mrb[0].mxu0
  %v6900 = vpop.f32.mrb[0].mxu0
  %v6901 = vadd.f32 %v6740, %v6900
  %v6902 = vpop.f32.mrb[0].mxu0
  %6903 = vmatprep.mubr.bf16.mxu0 %v5893
  %6904 = vmatmul.mubr.bf16.gmra.mrb[0].mxu0 %v5892
  %v6905 = vpop.f32.mrb[0].mxu0
  %v6906 = vadd.f32 %v6745, %v6905
  %v6907 = vpop.f32.mrb[0].mxu0
  %v6908 = vpop.f32.mrb[0].mxu0
  %v6909 = vadd.f32 %v6748, %v6908
  %v6910 = vpop.f32.mrb[0].mxu0
  %6911 = vmatprep.mubr.bf16.mxu0 %v5904
  %6912 = vmatmul.mubr.bf16.gmra.mrb[0].mxu0 %v5903
  %v6913 = vpop.f32.mrb[0].mxu0
  %v6914 = vadd.f32 %v6753, %v6913
  %v6915 = vpop.f32.mrb[0].mxu0
  %v6916 = vpop.f32.mrb[0].mxu0
  %v6917 = vadd.f32 %v6756, %v6916
  %v6918 = vpop.f32.mrb[0].mxu0
  %6919 = vmatprep.mubr.bf16.mxu0 %v5915
  %6920 = vmatmul.mubr.bf16.gmra.mrb[0].mxu0 %v5914
  %v6921 = vpop.f32.mrb[0].mxu0
  %v6922 = vadd.f32 %v6761, %v6921
  %v6923 = vpop.f32.mrb[0].mxu0
  %v6924 = vpop.f32.mrb[0].mxu0
  %v6925 = vadd.f32 %v6764, %v6924
  %v6926 = vpop.f32.mrb[0].mxu0
  %6927 = vmatprep.mubr.bf16.mxu0 %v5926
  %6928 = vmatmul.mubr.bf16.gmra.mrb[0].mxu0 %v5925
  %v6929 = vpop.f32.mrb[0].mxu0
  %v6930 = vadd.f32 %v6769, %v6929
  %v6931 = vpop.f32.mrb[0].mxu0
  %v6932 = vpop.f32.mrb[0].mxu0
  %v6933 = vadd.f32 %v6772, %v6932
  %v6934 = vpop.f32.mrb[0].mxu0
  %6935 = vmatprep.mubr.bf16.mxu0 %v5937
  %6936 = vmatmul.mubr.bf16.gmra.mrb[0].mxu0 %v5936
  %v6937 = vpop.f32.mrb[0].mxu0
  %v6938 = vadd.f32 %v6777, %v6937
  %v6939 = vpop.f32.mrb[0].mxu0
  %v6940 = vpop.f32.mrb[0].mxu0
  %v6941 = vadd.f32 %v6780, %v6940
  %v6942 = vpop.f32.mrb[0].mxu0
  %6943 = vmatprep.mubr.bf16.mxu0 %v5948
  %6944 = vmatmul.mubr.bf16.gmra.mrb[0].mxu0 %v5947
  %v6945 = vpop.f32.mrb[0].mxu0
  %v6946 = vadd.f32 %v6785, %v6945
  %v6947 = vpop.f32.mrb[0].mxu0
  %v6948 = vpop.f32.mrb[0].mxu0
  %v6949 = vadd.f32 %v6788, %v6948
  %v6950 = vpop.f32.mrb[0].mxu0
  %6951 = vmatprep.mubr.bf16.mxu0 %v5959
  %6952 = vmatmul.mubr.bf16.gmra.mrb[0].mxu0 %v5958
  %v6953 = vpop.f32.mrb[0].mxu0
  %v6954 = vadd.f32 %v6793, %v6953
  %v6955 = vpop.f32.mrb[0].mxu0
  %v6956 = vpop.f32.mrb[0].mxu0
  %v6957 = vadd.f32 %v6796, %v6956
  %v6958 = vpop.f32.mrb[0].mxu0
  %6959 = vmatprep.mubr.bf16.mxu0 %v5970
  %6960 = vmatmul.mubr.bf16.gmra.mrb[0].mxu0 %v5969
  %v6961 = vpop.f32.mrb[0].mxu0
  %v6962 = vadd.f32 %v6801, %v6961
  %v6963 = vpop.f32.mrb[0].mxu0
  %v6964 = vpop.f32.mrb[0].mxu0
  %v6965 = vadd.f32 %v6804, %v6964
  %v6966 = vpop.f32.mrb[0].mxu0
  %6967 = vmatprep.mubr.bf16.mxu0 %v5981
  %6968 = vmatmul.mubr.bf16.gmra.mrb[0].mxu0 %v5980
  %v6969 = vpop.f32.mrb[0].mxu0
  %v6970 = vadd.f32 %v6809, %v6969
  %v6971 = vpop.f32.mrb[0].mxu0
  %v6972 = vpop.f32.mrb[0].mxu0
  %v6973 = vadd.f32 %v6812, %v6972
  %v6974 = vpop.f32.mrb[0].mxu0
  %6975 = vmatprep.mubr.bf16.mxu0 %v5992
  %6976 = vmatmul.mubr.bf16.gmra.mrb[0].mxu0 %v5991
  %v6977 = vpop.f32.mrb[0].mxu0
  %v6978 = vadd.f32 %v6817, %v6977
  %v6979 = vpop.f32.mrb[0].mxu0
  %v6980 = vpop.f32.mrb[0].mxu0
  %v6981 = vadd.f32 %v6820, %v6980
  %v6982 = vpop.f32.mrb[0].mxu0
  %6983 = vmatprep.mubr.bf16.mxu0 %v6003
  %6984 = vmatmul.mubr.bf16.gmra.mrb[0].mxu0 %v6002
  %v6985 = vpop.f32.mrb[0].mxu0
  %v6986 = vadd.f32 %v6825, %v6985
  %v6987 = vpop.f32.mrb[0].mxu0
  %v6988 = vpop.f32.mrb[0].mxu0
  %v6989 = vadd.f32 %v6828, %v6988
  %v6990 = vpop.f32.mrb[0].mxu0
  %6991 = vmatprep.mubr.bf16.mxu0 %v6014
  %6992 = vmatmul.mubr.bf16.gmra.mrb[0].mxu0 %v6013
  %v6993 = vpop.f32.mrb[0].mxu0
  %v6994 = vadd.f32 %v6833, %v6993
  %v6995 = vpop.f32.mrb[0].mxu0
  %v6996 = vpop.f32.mrb[0].mxu0
  %v6997 = vadd.f32 %v6836, %v6996
  %v6998 = vpop.f32.mrb[0].mxu0
  %6999 = vmatprep.mubr.bf16.mxu0 %v6025
  %7000 = vmatmul.mubr.bf16.gmra.mrb[0].mxu0 %v6024
  %v7001 = vpop.f32.mrb[0].mxu0
  %v7002 = vadd.f32 %v6841, %v7001
  %v7003 = vpop.f32.mrb[0].mxu0
  %v7004 = vpop.f32.mrb[0].mxu0
  %v7005 = vadd.f32 %v6844, %v7004
  %v7006 = vpop.f32.mrb[0].mxu0
  %7007 = vdwg.mxu0
  %7008 = vmatprep.subr.bf16.mxu0 0
  %7009 = vmatpush1.bf16.msra.mxu0 %v1733
  %7010 = vmatprep.subr.bf16.mxu0 0
  %7011 = vmatpush1.bf16.msra.mxu0 %v1734
  %7012 = vmatprep.subr.bf16.mxu0 0
  %7013 = vmatpush1.bf16.msra.mxu0 %v1735
  %7014 = vmatprep.subr.bf16.mxu0 0
  %7015 = vmatpush1.bf16.msra.mxu0 %v1736
  %7016 = vmatprep.subr.bf16.mxu0 0
  %7017 = vmatpush1.bf16.msra.mxu0 %v1737
  %7018 = vmatprep.subr.bf16.mxu0 0
  %7019 = vmatpush1.bf16.msra.mxu0 %v1738
  %7020 = vmatprep.subr.bf16.mxu0 0
  %7021 = vmatpush1.bf16.msra.mxu0 %v1739
  %7022 = vmatprep.subr.bf16.mxu0 0
  %7023 = vmatpush1.bf16.msra.mxu0 %v1740
  %7024 = vmatprep.subr.bf16.mxu0 0
  %7025 = vmatpush1.bf16.msra.mxu0 0
  %7026 = vmatprep.subr.bf16.mxu0 0
  %7027 = vmatpush1.bf16.msra.mxu0 0
  %7028 = vmatprep.subr.bf16.mxu0 0
  %7029 = vmatpush1.bf16.msra.mxu0 0
  %7030 = vmatprep.subr.bf16.mxu0 0
  %7031 = vmatpush1.bf16.msra.mxu0 0
  %7032 = vmatprep.subr.bf16.mxu0 0
  %7033 = vmatpush1.bf16.msra.mxu0 0
  %7034 = vmatprep.subr.bf16.mxu0 0
  %7035 = vmatpush1.bf16.msra.mxu0 0
  %7036 = vmatprep.subr.bf16.mxu0 0
  %7037 = vmatpush1.bf16.msra.mxu0 0
  %7038 = vmatprep.subr.bf16.mxu0 0
  %7039 = vmatpush1.bf16.msra.mxu0 0
  %7040 = vmatprep.mubr.bf16.mxu0 0
  %7041 = vmatmul.mubr.bf16.gmra.mrb[0].mxu0 %v5861
  %v7042 = vpop.f32.mrb[0].mxu0
  %v7043 = vadd.f32 %v6882, %v7042
  %v7044 = vpop.f32.mrb[0].mxu0
  %v7045 = vpop.f32.mrb[0].mxu0
  %v7046 = vadd.f32 %v6885, %v7045
  %v7047 = vpop.f32.mrb[0].mxu0
  %7048 = vmatprep.mubr.bf16.mxu0 0
  %7049 = vmatmul.mubr.bf16.gmra.mrb[0].mxu0 %v5872
  %v7050 = vpop.f32.mrb[0].mxu0
  %v7051 = vadd.f32 %v6890, %v7050
  %v7052 = vpop.f32.mrb[0].mxu0
  %v7053 = vpop.f32.mrb[0].mxu0
  %v7054 = vadd.f32 %v6893, %v7053
  %v7055 = vpop.f32.mrb[0].mxu0
  %7056 = vmatprep.mubr.bf16.mxu0 0
  %7057 = vmatmul.mubr.bf16.gmra.mrb[0].mxu0 %v5883
  %v7058 = vpop.f32.mrb[0].mxu0
  %v7059 = vadd.f32 %v6898, %v7058
  %v7060 = vpop.f32.mrb[0].mxu0
  %v7061 = vpop.f32.mrb[0].mxu0
  %v7062 = vadd.f32 %v6901, %v7061
  %v7063 = vpop.f32.mrb[0].mxu0
  %7064 = vmatprep.mubr.bf16.mxu0 0
  %7065 = vmatmul.mubr.bf16.gmra.mrb[0].mxu0 %v5894
  %v7066 = vpop.f32.mrb[0].mxu0
  %v7067 = vadd.f32 %v6906, %v7066
  %v7068 = vpop.f32.mrb[0].mxu0
  %v7069 = vpop.f32.mrb[0].mxu0
  %v7070 = vadd.f32 %v6909, %v7069
  %v7071 = vpop.f32.mrb[0].mxu0
  %7072 = vmatprep.mubr.bf16.mxu0 0
  %7073 = vmatmul.mubr.bf16.gmra.mrb[0].mxu0 %v5905
  %v7074 = vpop.f32.mrb[0].mxu0
  %v7075 = vadd.f32 %v6914, %v7074
  %v7076 = vpop.f32.mrb[0].mxu0
  %v7077 = vpop.f32.mrb[0].mxu0
  %v7078 = vadd.f32 %v6917, %v7077
  %v7079 = vpop.f32.mrb[0].mxu0
  %7080 = vmatprep.mubr.bf16.mxu0 0
  %7081 = vmatmul.mubr.bf16.gmra.mrb[0].mxu0 %v5916
  %v7082 = vpop.f32.mrb[0].mxu0
  %v7083 = vadd.f32 %v6922, %v7082
  %v7084 = vpop.f32.mrb[0].mxu0
  %v7085 = vpop.f32.mrb[0].mxu0
  %v7086 = vadd.f32 %v6925, %v7085
  %v7087 = vpop.f32.mrb[0].mxu0
  %7088 = vmatprep.mubr.bf16.mxu0 0
  %7089 = vmatmul.mubr.bf16.gmra.mrb[0].mxu0 %v5927
  %v7090 = vpop.f32.mrb[0].mxu0
  %v7091 = vadd.f32 %v6930, %v7090
  %v7092 = vpop.f32.mrb[0].mxu0
  %v7093 = vpop.f32.mrb[0].mxu0
  %v7094 = vadd.f32 %v6933, %v7093
  %v7095 = vpop.f32.mrb[0].mxu0
  %7096 = vmatprep.mubr.bf16.mxu0 0
  %7097 = vmatmul.mubr.bf16.gmra.mrb[0].mxu0 %v5938
  %v7098 = vpop.f32.mrb[0].mxu0
  %v7099 = vadd.f32 %v6938, %v7098
  %v7100 = vpop.f32.mrb[0].mxu0
  %v7101 = vpop.f32.mrb[0].mxu0
  %v7102 = vadd.f32 %v6941, %v7101
  %v7103 = vpop.f32.mrb[0].mxu0
  %7104 = vmatprep.mubr.bf16.mxu0 0
  %7105 = vmatmul.mubr.bf16.gmra.mrb[0].mxu0 %v5949
  %v7106 = vpop.f32.mrb[0].mxu0
  %v7107 = vadd.f32 %v6946, %v7106
  %v7108 = vpop.f32.mrb[0].mxu0
  %v7109 = vpop.f32.mrb[0].mxu0
  %v7110 = vadd.f32 %v6949, %v7109
  %v7111 = vpop.f32.mrb[0].mxu0
  %7112 = vmatprep.mubr.bf16.mxu0 0
  %7113 = vmatmul.mubr.bf16.gmra.mrb[0].mxu0 %v5960
  %v7114 = vpop.f32.mrb[0].mxu0
  %v7115 = vadd.f32 %v6954, %v7114
  %v7116 = vpop.f32.mrb[0].mxu0
  %v7117 = vpop.f32.mrb[0].mxu0
  %v7118 = vadd.f32 %v6957, %v7117
  %v7119 = vpop.f32.mrb[0].mxu0
  %7120 = vmatprep.mubr.bf16.mxu0 0
  %7121 = vmatmul.mubr.bf16.gmra.mrb[0].mxu0 %v5971
  %v7122 = vpop.f32.mrb[0].mxu0
  %v7123 = vadd.f32 %v6962, %v7122
  %v7124 = vpop.f32.mrb[0].mxu0
  %v7125 = vpop.f32.mrb[0].mxu0
  %v7126 = vadd.f32 %v6965, %v7125
  %v7127 = vpop.f32.mrb[0].mxu0
  %7128 = vmatprep.mubr.bf16.mxu0 0
  %7129 = vmatmul.mubr.bf16.gmra.mrb[0].mxu0 %v5982
  %v7130 = vpop.f32.mrb[0].mxu0
  %v7131 = vadd.f32 %v6970, %v7130
  %v7132 = vpop.f32.mrb[0].mxu0
  %v7133 = vpop.f32.mrb[0].mxu0
  %v7134 = vadd.f32 %v6973, %v7133
  %v7135 = vpop.f32.mrb[0].mxu0
  %7136 = vmatprep.mubr.bf16.mxu0 0
  %7137 = vmatmul.mubr.bf16.gmra.mrb[0].mxu0 %v5993
  %v7138 = vpop.f32.mrb[0].mxu0
  %v7139 = vadd.f32 %v6978, %v7138
  %v7140 = vpop.f32.mrb[0].mxu0
  %v7141 = vpop.f32.mrb[0].mxu0
  %v7142 = vadd.f32 %v6981, %v7141
  %v7143 = vpop.f32.mrb[0].mxu0
  %7144 = vmatprep.mubr.bf16.mxu0 0
  %7145 = vmatmul.mubr.bf16.gmra.mrb[0].mxu0 %v6004
  %v7146 = vpop.f32.mrb[0].mxu0
  %v7147 = vadd.f32 %v6986, %v7146
  %v7148 = vpop.f32.mrb[0].mxu0
  %v7149 = vpop.f32.mrb[0].mxu0
  %v7150 = vadd.f32 %v6989, %v7149
  %v7151 = vpop.f32.mrb[0].mxu0
  %7152 = vmatprep.mubr.bf16.mxu0 0
  %7153 = vmatmul.mubr.bf16.gmra.mrb[0].mxu0 %v6015
  %v7154 = vpop.f32.mrb[0].mxu0
  %v7155 = vadd.f32 %v6994, %v7154
  %v7156 = vpop.f32.mrb[0].mxu0
  %v7157 = vpop.f32.mrb[0].mxu0
  %v7158 = vadd.f32 %v6997, %v7157
  %v7159 = vpop.f32.mrb[0].mxu0
  %7160 = vmatprep.mubr.bf16.mxu0 0
  %7161 = vmatmul.mubr.bf16.gmra.mrb[0].mxu0 %v6026
  %v7162 = vpop.f32.mrb[0].mxu0
  %v7163 = vadd.f32 %v7002, %v7162
  %v7164 = vpop.f32.mrb[0].mxu0
  %v7165 = vpop.f32.mrb[0].mxu0
  %v7166 = vadd.f32 %v7005, %v7165
  %v7167 = vpop.f32.mrb[0].mxu0
  %7168 = vdwg.mxu0
  %v7169 = vmul.f32 %v7043, %v2798
  %v7170 = vmul.f32 %v7046, %v2798
  %v7171 = vmul.f32 %v7051, %v2798
  %v7172 = vmul.f32 %v7054, %v2798
  %v7173 = vmul.f32 %v7059, %v2798
  %v7174 = vmul.f32 %v7062, %v2798
  %v7175 = vmul.f32 %v7067, %v2798
  %v7176 = vmul.f32 %v7070, %v2798
  %v7177 = vmul.f32 %v7075, %v2798
  %v7178 = vmul.f32 %v7078, %v2798
  %v7179 = vmul.f32 %v7083, %v2798
  %v7180 = vmul.f32 %v7086, %v2798
  %v7181 = vmul.f32 %v7091, %v2798
  %v7182 = vmul.f32 %v7094, %v2798
  %v7183 = vmul.f32 %v7099, %v2798
  %v7184 = vmul.f32 %v7102, %v2798
  %v7185 = vmul.f32 %v7107, %v2798
  %v7186 = vmul.f32 %v7110, %v2798
  %v7187 = vmul.f32 %v7115, %v2798
  %v7188 = vmul.f32 %v7118, %v2798
  %v7189 = vmul.f32 %v7123, %v2798
  %v7190 = vmul.f32 %v7126, %v2798
  %v7191 = vmul.f32 %v7131, %v2798
  %v7192 = vmul.f32 %v7134, %v2798
  %v7193 = vmul.f32 %v7139, %v2798
  %v7194 = vmul.f32 %v7142, %v2798
  %v7195 = vmul.f32 %v7147, %v2798
  %v7196 = vmul.f32 %v7150, %v2798
  %v7197 = vmul.f32 %v7155, %v2798
  %v7198 = vmul.f32 %v7158, %v2798
  %v7199 = vmul.f32 %v7163, %v2798
  %v7200 = vmul.f32 %v7166, %v2798
  %v7201 = vadd.f32 %v7169, %v2834
  %v7202 = vadd.f32 %v7170, %v2834
  %v7203 = vadd.f32 %v7171, %v2834
  %v7204 = vadd.f32 %v7172, %v2834
  %v7205 = vadd.f32 %v7173, %v2834
  %v7206 = vadd.f32 %v7174, %v2834
  %v7207 = vadd.f32 %v7175, %v2834
  %v7208 = vadd.f32 %v7176, %v2834
  %v7209 = vadd.f32 %v7177, %v2834
  %v7210 = vadd.f32 %v7178, %v2834
  %v7211 = vadd.f32 %v7179, %v2834
  %v7212 = vadd.f32 %v7180, %v2834
  %v7213 = vadd.f32 %v7181, %v2834
  %v7214 = vadd.f32 %v7182, %v2834
  %v7215 = vadd.f32 %v7183, %v2834
  %v7216 = vadd.f32 %v7184, %v2834
  %v7217 = vadd.f32 %v7185, %v2834
  %v7218 = vadd.f32 %v7186, %v2834
  %v7219 = vadd.f32 %v7187, %v2834
  %v7220 = vadd.f32 %v7188, %v2834
  %v7221 = vadd.f32 %v7189, %v2834
  %v7222 = vadd.f32 %v7190, %v2834
  %v7223 = vadd.f32 %v7191, %v2834
  %v7224 = vadd.f32 %v7192, %v2834
  %v7225 = vadd.f32 %v7193, %v2834
  %v7226 = vadd.f32 %v7194, %v2834
  %v7227 = vadd.f32 %v7195, %v2834
  %v7228 = vadd.f32 %v7196, %v2834
  %v7229 = vadd.f32 %v7197, %v2834
  %v7230 = vadd.f32 %v7198, %v2834
  %v7231 = vadd.f32 %v7199, %v2834
  %v7232 = vadd.f32 %v7200, %v2834
  %v7233 = vmax.f32 %v7201, 0.0
  %v7234 = vmax.f32 %v7202, 0.0
  %v7235 = vmax.f32 %v7203, 0.0
  %v7236 = vmax.f32 %v7204, 0.0
  %v7237 = vmax.f32 %v7205, 0.0
  %v7238 = vmax.f32 %v7206, 0.0
  %v7239 = vmax.f32 %v7207, 0.0
  %v7240 = vmax.f32 %v7208, 0.0
  %v7241 = vmax.f32 %v7209, 0.0
  %v7242 = vmax.f32 %v7210, 0.0
  %v7243 = vmax.f32 %v7211, 0.0
  %v7244 = vmax.f32 %v7212, 0.0
  %v7245 = vmax.f32 %v7213, 0.0
  %v7246 = vmax.f32 %v7214, 0.0
  %v7247 = vmax.f32 %v7215, 0.0
  %v7248 = vmax.f32 %v7216, 0.0
  %v7249 = vmax.f32 %v7217, 0.0
  %v7250 = vmax.f32 %v7218, 0.0
  %v7251 = vmax.f32 %v7219, 0.0
  %v7252 = vmax.f32 %v7220, 0.0
  %v7253 = vmax.f32 %v7221, 0.0
  %v7254 = vmax.f32 %v7222, 0.0
  %v7255 = vmax.f32 %v7223, 0.0
  %v7256 = vmax.f32 %v7224, 0.0
  %v7257 = vmax.f32 %v7225, 0.0
  %v7258 = vmax.f32 %v7226, 0.0
  %v7259 = vmax.f32 %v7227, 0.0
  %v7260 = vmax.f32 %v7228, 0.0
  %v7261 = vmax.f32 %v7229, 0.0
  %v7262 = vmax.f32 %v7230, 0.0
  %v7263 = vmax.f32 %v7231, 0.0
  %v7264 = vmax.f32 %v7232, 0.0
  %v7265 = vpack.c.bf16 %v7234, %v7233
  %v7266 = vpack.c.bf16 %v7236, %v7235
  %v7267 = vpack.c.bf16 %v7238, %v7237
  %v7268 = vpack.c.bf16 %v7240, %v7239
  %v7269 = vpack.c.bf16 %v7242, %v7241
  %v7270 = vpack.c.bf16 %v7244, %v7243
  %v7271 = vpack.c.bf16 %v7246, %v7245
  %v7272 = vpack.c.bf16 %v7248, %v7247
  %v7273 = vpack.c.bf16 %v7250, %v7249
  %v7274 = vpack.c.bf16 %v7252, %v7251
  %v7275 = vpack.c.bf16 %v7254, %v7253
  %v7276 = vpack.c.bf16 %v7256, %v7255
  %v7277 = vpack.c.bf16 %v7258, %v7257
  %v7278 = vpack.c.bf16 %v7260, %v7259
  %v7279 = vpack.c.bf16 %v7262, %v7261
  %v7280 = vpack.c.bf16 %v7264, %v7263
  %7281 = vst [vmem:[#allocation2 + $0x18] sm:$0xff] %v7265
  %7282 = vst [vmem:[#allocation2 + $0x40] sm:$0xff] %v7266
  %7283 = vst [vmem:[#allocation2 + $0x68] sm:$0xff] %v7267
  %7284 = vst [vmem:[#allocation2 + $0x90] sm:$0xff] %v7268
  %7285 = vst [vmem:[#allocation2 + $0xb8] sm:$0xff] %v7269
  %7286 = vst [vmem:[#allocation2 + $0xe0] sm:$0xff] %v7270
  %7287 = vst [vmem:[#allocation2 + $0x108] sm:$0xff] %v7271
  %7288 = vst [vmem:[#allocation2 + $0x130] sm:$0xff] %v7272
  %7289 = vst [vmem:[#allocation2 + $0x158] sm:$0xff] %v7273
  %7290 = vst [vmem:[#allocation2 + $0x180] sm:$0xff] %v7274
  %7291 = vst [vmem:[#allocation2 + $0x1a8] sm:$0xff] %v7275
  %7292 = vst [vmem:[#allocation2 + $0x1d0] sm:$0xff] %v7276
  %7293 = vst [vmem:[#allocation2 + $0x1f8] sm:$0xff] %v7277
  %7294 = vst [vmem:[#allocation2 + $0x220] sm:$0xff] %v7278
  %7295 = vst [vmem:[#allocation2 + $0x248] sm:$0xff] %v7279
  %7296 = vst [vmem:[#allocation2 + $0x270] sm:$0xff] %v7280
  %s7297 = scalar_lea.vmem %s0, 4224
  %v7298 = vld [vmem:[%s7297] sm:$0xff]
  %v7299 = vld [vmem:[%s7297 + $0x8] sm:$0xff]
  %v7300 = vld [vmem:[%s7297 + $0x10] sm:$0xff]
  %v7301 = vld [vmem:[%s7297 + $0x18] sm:$0xff]
  %v7302 = vld [vmem:[%s7297 + $0x20] sm:$0xff]
  %v7303 = vld [vmem:[%s7297 + $0x28] sm:$0xf]
  %v7304 = vld [vmem:[%s7297 + $0x2c] sm:$0xff]
  %v7305 = vld [vmem:[%s7297 + $0x34] sm:$0xff]
  %v7306 = vld [vmem:[%s7297 + $0x3c] sm:$0xff]
  %v7307 = vld [vmem:[%s7297 + $0x44] sm:$0xff]
  %v7308 = vld [vmem:[%s7297 + $0x4c] sm:$0xff]
  %v7309 = vld [vmem:[%s7297 + $0x54] sm:$0xf]
  %v7310 = vld [vmem:[%s7297 + $0x58] sm:$0xff]
  %v7311 = vld [vmem:[%s7297 + $0x60] sm:$0xff]
  %v7312 = vld [vmem:[%s7297 + $0x68] sm:$0xff]
  %v7313 = vld [vmem:[%s7297 + $0x70] sm:$0xff]
  %v7314 = vld [vmem:[%s7297 + $0x78] sm:$0xff]
  %v7315 = vld [vmem:[%s7297 + $0x80] sm:$0xf]
  %v7316 = vld [vmem:[%s7297 + $0x84] sm:$0xff]
  %v7317 = vld [vmem:[%s7297 + $0x8c] sm:$0xff]
  %v7318 = vld [vmem:[%s7297 + $0x94] sm:$0xff]
  %v7319 = vld [vmem:[%s7297 + $0x9c] sm:$0xff]
  %v7320 = vld [vmem:[%s7297 + $0xa4] sm:$0xff]
  %v7321 = vld [vmem:[%s7297 + $0xac] sm:$0xf]
  %v7322 = vld [vmem:[%s7297 + $0xb0] sm:$0xff]
  %v7323 = vld [vmem:[%s7297 + $0xb8] sm:$0xff]
  %v7324 = vld [vmem:[%s7297 + $0xc0] sm:$0xff]
  %v7325 = vld [vmem:[%s7297 + $0xc8] sm:$0xff]
  %v7326 = vld [vmem:[%s7297 + $0xd0] sm:$0xff]
  %v7327 = vld [vmem:[%s7297 + $0xd8] sm:$0xf]
  %v7328 = vld [vmem:[%s7297 + $0xdc] sm:$0xff]
  %v7329 = vld [vmem:[%s7297 + $0xe4] sm:$0xff]
  %v7330 = vld [vmem:[%s7297 + $0xec] sm:$0xff]
  %v7331 = vld [vmem:[%s7297 + $0xf4] sm:$0xff]
  %v7332 = vld [vmem:[%s7297 + $0xfc] sm:$0xff]
  %v7333 = vld [vmem:[%s7297 + $0x104] sm:$0xf]
  %v7334 = vld [vmem:[%s7297 + $0x108] sm:$0xff]
  %v7335 = vld [vmem:[%s7297 + $0x110] sm:$0xff]
  %v7336 = vld [vmem:[%s7297 + $0x118] sm:$0xff]
  %v7337 = vld [vmem:[%s7297 + $0x120] sm:$0xff]
  %v7338 = vld [vmem:[%s7297 + $0x128] sm:$0xff]
  %v7339 = vld [vmem:[%s7297 + $0x130] sm:$0xf]
  %v7340 = vld [vmem:[%s7297 + $0x134] sm:$0xff]
  %v7341 = vld [vmem:[%s7297 + $0x13c] sm:$0xff]
  %v7342 = vld [vmem:[%s7297 + $0x144] sm:$0xff]
  %v7343 = vld [vmem:[%s7297 + $0x14c] sm:$0xff]
  %v7344 = vld [vmem:[%s7297 + $0x154] sm:$0xff]
  %v7345 = vld [vmem:[%s7297 + $0x15c] sm:$0xf]
  %v7346 = vld [vmem:[%s7297 + $0x160] sm:$0xff]
  %v7347 = vld [vmem:[%s7297 + $0x168] sm:$0xff]
  %v7348 = vld [vmem:[%s7297 + $0x170] sm:$0xff]
  %v7349 = vld [vmem:[%s7297 + $0x178] sm:$0xff]
  %v7350 = vld [vmem:[%s7297 + $0x180] sm:$0xff]
  %v7351 = vld [vmem:[%s7297 + $0x188] sm:$0xf]
  %v7352 = vld [vmem:[%s7297 + $0x18c] sm:$0xff]
  %v7353 = vld [vmem:[%s7297 + $0x194] sm:$0xff]
  %v7354 = vld [vmem:[%s7297 + $0x19c] sm:$0xff]
  %v7355 = vld [vmem:[%s7297 + $0x1a4] sm:$0xff]
  %v7356 = vld [vmem:[%s7297 + $0x1ac] sm:$0xff]
  %v7357 = vld [vmem:[%s7297 + $0x1b4] sm:$0xf]
  %v7358 = vld [vmem:[%s7297 + $0x1b8] sm:$0xff]
  %v7359 = vld [vmem:[%s7297 + $0x1c0] sm:$0xff]
  %v7360 = vld [vmem:[%s7297 + $0x1c8] sm:$0xff]
  %v7361 = vld [vmem:[%s7297 + $0x1d0] sm:$0xff]
  %v7362 = vld [vmem:[%s7297 + $0x1d8] sm:$0xff]
  %v7363 = vld [vmem:[%s7297 + $0x1e0] sm:$0xf]
  %v7364 = vld [vmem:[%s7297 + $0x1e4] sm:$0xff]
  %v7365 = vld [vmem:[%s7297 + $0x1ec] sm:$0xff]
  %v7366 = vld [vmem:[%s7297 + $0x1f4] sm:$0xff]
  %v7367 = vld [vmem:[%s7297 + $0x1fc] sm:$0xff]
  %v7368 = vld [vmem:[%s7297 + $0x204] sm:$0xff]
  %v7369 = vld [vmem:[%s7297 + $0x20c] sm:$0xf]
  %v7370 = vld [vmem:[%s7297 + $0x210] sm:$0xff]
  %v7371 = vld [vmem:[%s7297 + $0x218] sm:$0xff]
  %v7372 = vld [vmem:[%s7297 + $0x220] sm:$0xff]
  %v7373 = vld [vmem:[%s7297 + $0x228] sm:$0xff]
  %v7374 = vld [vmem:[%s7297 + $0x230] sm:$0xff]
  %v7375 = vld [vmem:[%s7297 + $0x238] sm:$0xf]
  %v7376 = vld [vmem:[%s7297 + $0x23c] sm:$0xff]
  %v7377 = vld [vmem:[%s7297 + $0x244] sm:$0xff]
  %v7378 = vld [vmem:[%s7297 + $0x24c] sm:$0xff]
  %v7379 = vld [vmem:[%s7297 + $0x254] sm:$0xff]
  %v7380 = vld [vmem:[%s7297 + $0x25c] sm:$0xff]
  %v7381 = vld [vmem:[%s7297 + $0x264] sm:$0xf]
  %v7382 = vld [vmem:[%s7297 + $0x268] sm:$0xff]
  %v7383 = vld [vmem:[%s7297 + $0x270] sm:$0xff]
  %v7384 = vld [vmem:[%s7297 + $0x278] sm:$0xff]
  %v7385 = vld [vmem:[%s7297 + $0x280] sm:$0xff]
  %v7386 = vld [vmem:[%s7297 + $0x288] sm:$0xff]
  %v7387 = vld [vmem:[%s7297 + $0x290] sm:$0xf]
  %v7388 = vld [vmem:[%s7297 + $0x294] sm:$0xff]
  %v7389 = vld [vmem:[%s7297 + $0x29c] sm:$0xff]
  %v7390 = vld [vmem:[%s7297 + $0x2a4] sm:$0xff]
  %v7391 = vld [vmem:[%s7297 + $0x2ac] sm:$0xff]
  %v7392 = vld [vmem:[%s7297 + $0x2b4] sm:$0xff]
  %v7393 = vld [vmem:[%s7297 + $0x2bc] sm:$0xf]
  %v7394 = vld [vmem:[%s7297 + $0x2c0] sm:$0xff]
  %v7395 = vld [vmem:[%s7297 + $0x2c8] sm:$0xff]
  %v7396 = vld [vmem:[%s7297 + $0x2d0] sm:$0xff]
  %v7397 = vld [vmem:[%s7297 + $0x2d8] sm:$0xff]
  %v7398 = vld [vmem:[%s7297 + $0x2e0] sm:$0xff]
  %v7399 = vld [vmem:[%s7297 + $0x2e8] sm:$0xf]
  %v7400 = vld [vmem:[%s7297 + $0x2ec] sm:$0xff]
  %v7401 = vld [vmem:[%s7297 + $0x2f4] sm:$0xff]
  %v7402 = vld [vmem:[%s7297 + $0x2fc] sm:$0xff]
  %v7403 = vld [vmem:[%s7297 + $0x304] sm:$0xff]
  %v7404 = vld [vmem:[%s7297 + $0x30c] sm:$0xff]
  %v7405 = vld [vmem:[%s7297 + $0x314] sm:$0xf]
  %v7406 = vld [vmem:[%s7297 + $0x318] sm:$0xff]
  %v7407 = vld [vmem:[%s7297 + $0x320] sm:$0xff]
  %v7408 = vld [vmem:[%s7297 + $0x328] sm:$0xff]
  %v7409 = vld [vmem:[%s7297 + $0x330] sm:$0xff]
  %v7410 = vld [vmem:[%s7297 + $0x338] sm:$0xff]
  %v7411 = vld [vmem:[%s7297 + $0x340] sm:$0xf]
  %v7412 = vld [vmem:[%s7297 + $0x344] sm:$0xff]
  %v7413 = vld [vmem:[%s7297 + $0x34c] sm:$0xff]
  %v7414 = vld [vmem:[%s7297 + $0x354] sm:$0xff]
  %v7415 = vld [vmem:[%s7297 + $0x35c] sm:$0xff]
  %v7416 = vld [vmem:[%s7297 + $0x364] sm:$0xff]
  %v7417 = vld [vmem:[%s7297 + $0x36c] sm:$0xf]
  %v7418 = vld [vmem:[%s7297 + $0x370] sm:$0xff]
  %v7419 = vld [vmem:[%s7297 + $0x378] sm:$0xff]
  %v7420 = vld [vmem:[%s7297 + $0x380] sm:$0xff]
  %v7421 = vld [vmem:[%s7297 + $0x388] sm:$0xff]
  %v7422 = vld [vmem:[%s7297 + $0x390] sm:$0xff]
  %v7423 = vld [vmem:[%s7297 + $0x398] sm:$0xf]
  %v7424 = vld [vmem:[%s7297 + $0x39c] sm:$0xff]
  %v7425 = vld [vmem:[%s7297 + $0x3a4] sm:$0xff]
  %v7426 = vld [vmem:[%s7297 + $0x3ac] sm:$0xff]
  %v7427 = vld [vmem:[%s7297 + $0x3b4] sm:$0xff]
  %v7428 = vld [vmem:[%s7297 + $0x3bc] sm:$0xff]
  %v7429 = vld [vmem:[%s7297 + $0x3c4] sm:$0xf]
  %v7430 = vld [vmem:[%s7297 + $0x3c8] sm:$0xff]
  %v7431 = vld [vmem:[%s7297 + $0x3d0] sm:$0xff]
  %v7432 = vld [vmem:[%s7297 + $0x3d8] sm:$0xff]
  %v7433 = vld [vmem:[%s7297 + $0x3e0] sm:$0xff]
  %v7434 = vld [vmem:[%s7297 + $0x3e8] sm:$0xff]
  %v7435 = vld [vmem:[%s7297 + $0x3f0] sm:$0xf]
  %v7436 = vld [vmem:[%s7297 + $0x3f4] sm:$0xff]
  %v7437 = vld [vmem:[%s7297 + $0x3fc] sm:$0xff]
  %v7438 = vld [vmem:[%s7297 + $0x404] sm:$0xff]
  %v7439 = vld [vmem:[%s7297 + $0x40c] sm:$0xff]
  %v7440 = vld [vmem:[%s7297 + $0x414] sm:$0xff]
  %v7441 = vld [vmem:[%s7297 + $0x41c] sm:$0xf]
  %v7442 = vld [vmem:[%s7297 + $0x420] sm:$0xff]
  %v7443 = vld [vmem:[%s7297 + $0x428] sm:$0xff]
  %v7444 = vld [vmem:[%s7297 + $0x430] sm:$0xff]
  %v7445 = vld [vmem:[%s7297 + $0x438] sm:$0xff]
  %v7446 = vld [vmem:[%s7297 + $0x440] sm:$0xff]
  %v7447 = vld [vmem:[%s7297 + $0x448] sm:$0xf]
  %v7448 = vld [vmem:[%s7297 + $0x44c] sm:$0xff]
  %v7449 = vld [vmem:[%s7297 + $0x454] sm:$0xff]
  %v7450 = vld [vmem:[%s7297 + $0x45c] sm:$0xff]
  %v7451 = vld [vmem:[%s7297 + $0x464] sm:$0xff]
  %v7452 = vld [vmem:[%s7297 + $0x46c] sm:$0xff]
  %v7453 = vld [vmem:[%s7297 + $0x474] sm:$0xf]
  %v7454 = vld [vmem:[%s7297 + $0x478] sm:$0xff]
  %v7455 = vld [vmem:[%s7297 + $0x480] sm:$0xff]
  %v7456 = vld [vmem:[%s7297 + $0x488] sm:$0xff]
  %v7457 = vld [vmem:[%s7297 + $0x490] sm:$0xff]
  %v7458 = vld [vmem:[%s7297 + $0x498] sm:$0xff]
  %v7459 = vld [vmem:[%s7297 + $0x4a0] sm:$0xf]
  %v7460 = vld [vmem:[%s7297 + $0x4a4] sm:$0xff]
  %v7461 = vld [vmem:[%s7297 + $0x4ac] sm:$0xff]
  %v7462 = vld [vmem:[%s7297 + $0x4b4] sm:$0xff]
  %v7463 = vld [vmem:[%s7297 + $0x4bc] sm:$0xff]
  %v7464 = vld [vmem:[%s7297 + $0x4c4] sm:$0xff]
  %v7465 = vld [vmem:[%s7297 + $0x4cc] sm:$0xf]
  %v7466 = vld [vmem:[%s7297 + $0x4d0] sm:$0xff]
  %v7467 = vld [vmem:[%s7297 + $0x4d8] sm:$0xff]
  %v7468 = vld [vmem:[%s7297 + $0x4e0] sm:$0xff]
  %v7469 = vld [vmem:[%s7297 + $0x4e8] sm:$0xff]
  %v7470 = vld [vmem:[%s7297 + $0x4f0] sm:$0xff]
  %v7471 = vld [vmem:[%s7297 + $0x4f8] sm:$0xf]
  %v7472 = vld [vmem:[%s7297 + $0x4fc] sm:$0xff]
  %v7473 = vld [vmem:[%s7297 + $0x504] sm:$0xff]
  %v7474 = vld [vmem:[%s7297 + $0x50c] sm:$0xff]
  %v7475 = vld [vmem:[%s7297 + $0x514] sm:$0xff]
  %v7476 = vld [vmem:[%s7297 + $0x51c] sm:$0xff]
  %v7477 = vld [vmem:[%s7297 + $0x524] sm:$0xf]
  %v7478 = vld [vmem:[%s7297 + $0x528] sm:$0xff]
  %v7479 = vld [vmem:[%s7297 + $0x530] sm:$0xff]
  %v7480 = vld [vmem:[%s7297 + $0x538] sm:$0xff]
  %v7481 = vld [vmem:[%s7297 + $0x540] sm:$0xff]
  %v7482 = vld [vmem:[%s7297 + $0x548] sm:$0xff]
  %v7483 = vld [vmem:[%s7297 + $0x550] sm:$0xf]
  %v7484 = vld [vmem:[%s7297 + $0x554] sm:$0xff]
  %v7485 = vld [vmem:[%s7297 + $0x55c] sm:$0xff]
  %v7486 = vld [vmem:[%s7297 + $0x564] sm:$0xff]
  %v7487 = vld [vmem:[%s7297 + $0x56c] sm:$0xff]
  %v7488 = vld [vmem:[%s7297 + $0x574] sm:$0xff]
  %v7489 = vld [vmem:[%s7297 + $0x57c] sm:$0xf]
  %v7682 = vunpack.c.l.b16 %v7298
  %v7683 = vunpack.c.h.b16 %v7298
  %v7684 = vunpack.c.l.b16 %v7299
  %v7685 = vunpack.c.h.b16 %v7299
  %v7686 = vunpack.c.l.b16 %v7300
  %v7687 = vunpack.c.h.b16 %v7300
  %v7688 = vunpack.c.l.b16 %v7301
  %v7689 = vunpack.c.h.b16 %v7301
  %v7690 = vunpack.c.l.b16 %v7302
  %v7691 = vunpack.c.h.b16 %v7302
  %v7692 = vunpack.c.l.b16 %v7303
  %v7693 = vunpack.c.l.b16 %v7304
  %v7694 = vunpack.c.h.b16 %v7304
  %v7695 = vunpack.c.l.b16 %v7305
  %v7696 = vunpack.c.h.b16 %v7305
  %v7697 = vunpack.c.l.b16 %v7306
  %v7698 = vunpack.c.h.b16 %v7306
  %v7699 = vunpack.c.l.b16 %v7307
  %v7700 = vunpack.c.h.b16 %v7307
  %v7701 = vunpack.c.l.b16 %v7308
  %v7702 = vunpack.c.h.b16 %v7308
  %v7703 = vunpack.c.l.b16 %v7309
  %v7704 = vunpack.c.l.b16 %v7310
  %v7705 = vunpack.c.h.b16 %v7310
  %v7706 = vunpack.c.l.b16 %v7311
  %v7707 = vunpack.c.h.b16 %v7311
  %v7708 = vunpack.c.l.b16 %v7312
  %v7709 = vunpack.c.h.b16 %v7312
  %v7710 = vunpack.c.l.b16 %v7313
  %v7711 = vunpack.c.h.b16 %v7313
  %v7712 = vunpack.c.l.b16 %v7314
  %v7713 = vunpack.c.h.b16 %v7314
  %v7714 = vunpack.c.l.b16 %v7315
  %v7715 = vunpack.c.l.b16 %v7316
  %v7716 = vunpack.c.h.b16 %v7316
  %v7717 = vunpack.c.l.b16 %v7317
  %v7718 = vunpack.c.h.b16 %v7317
  %v7719 = vunpack.c.l.b16 %v7318
  %v7720 = vunpack.c.h.b16 %v7318
  %v7721 = vunpack.c.l.b16 %v7319
  %v7722 = vunpack.c.h.b16 %v7319
  %v7723 = vunpack.c.l.b16 %v7320
  %v7724 = vunpack.c.h.b16 %v7320
  %v7725 = vunpack.c.l.b16 %v7321
  %v7726 = vunpack.c.l.b16 %v7322
  %v7727 = vunpack.c.h.b16 %v7322
  %v7728 = vunpack.c.l.b16 %v7323
  %v7729 = vunpack.c.h.b16 %v7323
  %v7730 = vunpack.c.l.b16 %v7324
  %v7731 = vunpack.c.h.b16 %v7324
  %v7732 = vunpack.c.l.b16 %v7325
  %v7733 = vunpack.c.h.b16 %v7325
  %v7734 = vunpack.c.l.b16 %v7326
  %v7735 = vunpack.c.h.b16 %v7326
  %v7736 = vunpack.c.l.b16 %v7327
  %v7737 = vunpack.c.l.b16 %v7328
  %v7738 = vunpack.c.h.b16 %v7328
  %v7739 = vunpack.c.l.b16 %v7329
  %v7740 = vunpack.c.h.b16 %v7329
  %v7741 = vunpack.c.l.b16 %v7330
  %v7742 = vunpack.c.h.b16 %v7330
  %v7743 = vunpack.c.l.b16 %v7331
  %v7744 = vunpack.c.h.b16 %v7331
  %v7745 = vunpack.c.l.b16 %v7332
  %v7746 = vunpack.c.h.b16 %v7332
  %v7747 = vunpack.c.l.b16 %v7333
  %v7748 = vunpack.c.l.b16 %v7334
  %v7749 = vunpack.c.h.b16 %v7334
  %v7750 = vunpack.c.l.b16 %v7335
  %v7751 = vunpack.c.h.b16 %v7335
  %v7752 = vunpack.c.l.b16 %v7336
  %v7753 = vunpack.c.h.b16 %v7336
  %v7754 = vunpack.c.l.b16 %v7337
  %v7755 = vunpack.c.h.b16 %v7337
  %v7756 = vunpack.c.l.b16 %v7338
  %v7757 = vunpack.c.h.b16 %v7338
  %v7758 = vunpack.c.l.b16 %v7339
  %v7759 = vunpack.c.l.b16 %v7340
  %v7760 = vunpack.c.h.b16 %v7340
  %v7761 = vunpack.c.l.b16 %v7341
  %v7762 = vunpack.c.h.b16 %v7341
  %v7763 = vunpack.c.l.b16 %v7342
  %v7764 = vunpack.c.h.b16 %v7342
  %v7765 = vunpack.c.l.b16 %v7343
  %v7766 = vunpack.c.h.b16 %v7343
  %v7767 = vunpack.c.l.b16 %v7344
  %v7768 = vunpack.c.h.b16 %v7344
  %v7769 = vunpack.c.l.b16 %v7345
  %v7770 = vunpack.c.l.b16 %v7346
  %v7771 = vunpack.c.h.b16 %v7346
  %v7772 = vunpack.c.l.b16 %v7347
  %v7773 = vunpack.c.h.b16 %v7347
  %v7774 = vunpack.c.l.b16 %v7348
  %v7775 = vunpack.c.h.b16 %v7348
  %v7776 = vunpack.c.l.b16 %v7349
  %v7777 = vunpack.c.h.b16 %v7349
  %v7778 = vunpack.c.l.b16 %v7350
  %v7779 = vunpack.c.h.b16 %v7350
  %v7780 = vunpack.c.l.b16 %v7351
  %v7781 = vunpack.c.l.b16 %v7352
  %v7782 = vunpack.c.h.b16 %v7352
  %v7783 = vunpack.c.l.b16 %v7353
  %v7784 = vunpack.c.h.b16 %v7353
  %v7785 = vunpack.c.l.b16 %v7354
  %v7786 = vunpack.c.h.b16 %v7354
  %v7787 = vunpack.c.l.b16 %v7355
  %v7788 = vunpack.c.h.b16 %v7355
  %v7789 = vunpack.c.l.b16 %v7356
  %v7790 = vunpack.c.h.b16 %v7356
  %v7791 = vunpack.c.l.b16 %v7357
  %v7792 = vunpack.c.l.b16 %v7358
  %v7793 = vunpack.c.h.b16 %v7358
  %v7794 = vunpack.c.l.b16 %v7359
  %v7795 = vunpack.c.h.b16 %v7359
  %v7796 = vunpack.c.l.b16 %v7360
  %v7797 = vunpack.c.h.b16 %v7360
  %v7798 = vunpack.c.l.b16 %v7361
  %v7799 = vunpack.c.h.b16 %v7361
  %v7800 = vunpack.c.l.b16 %v7362
  %v7801 = vunpack.c.h.b16 %v7362
  %v7802 = vunpack.c.l.b16 %v7363
  %v7803 = vunpack.c.l.b16 %v7364
  %v7804 = vunpack.c.h.b16 %v7364
  %v7805 = vunpack.c.l.b16 %v7365
  %v7806 = vunpack.c.h.b16 %v7365
  %v7807 = vunpack.c.l.b16 %v7366
  %v7808 = vunpack.c.h.b16 %v7366
  %v7809 = vunpack.c.l.b16 %v7367
  %v7810 = vunpack.c.h.b16 %v7367
  %v7811 = vunpack.c.l.b16 %v7368
  %v7812 = vunpack.c.h.b16 %v7368
  %v7813 = vunpack.c.l.b16 %v7369
  %v7814 = vunpack.c.l.b16 %v7370
  %v7815 = vunpack.c.h.b16 %v7370
  %v7816 = vunpack.c.l.b16 %v7371
  %v7817 = vunpack.c.h.b16 %v7371
  %v7818 = vunpack.c.l.b16 %v7372
  %v7819 = vunpack.c.h.b16 %v7372
  %v7820 = vunpack.c.l.b16 %v7373
  %v7821 = vunpack.c.h.b16 %v7373
  %v7822 = vunpack.c.l.b16 %v7374
  %v7823 = vunpack.c.h.b16 %v7374
  %v7824 = vunpack.c.l.b16 %v7375
  %v7825 = vunpack.c.l.b16 %v7376
  %v7826 = vunpack.c.h.b16 %v7376
  %v7827 = vunpack.c.l.b16 %v7377
  %v7828 = vunpack.c.h.b16 %v7377
  %v7829 = vunpack.c.l.b16 %v7378
  %v7830 = vunpack.c.h.b16 %v7378
  %v7831 = vunpack.c.l.b16 %v7379
  %v7832 = vunpack.c.h.b16 %v7379
  %v7833 = vunpack.c.l.b16 %v7380
  %v7834 = vunpack.c.h.b16 %v7380
  %v7835 = vunpack.c.l.b16 %v7381
  %v7836 = vunpack.c.l.b16 %v7382
  %v7837 = vunpack.c.h.b16 %v7382
  %v7838 = vunpack.c.l.b16 %v7383
  %v7839 = vunpack.c.h.b16 %v7383
  %v7840 = vunpack.c.l.b16 %v7384
  %v7841 = vunpack.c.h.b16 %v7384
  %v7842 = vunpack.c.l.b16 %v7385
  %v7843 = vunpack.c.h.b16 %v7385
  %v7844 = vunpack.c.l.b16 %v7386
  %v7845 = vunpack.c.h.b16 %v7386
  %v7846 = vunpack.c.l.b16 %v7387
  %v7847 = vunpack.c.l.b16 %v7388
  %v7848 = vunpack.c.h.b16 %v7388
  %v7849 = vunpack.c.l.b16 %v7389
  %v7850 = vunpack.c.h.b16 %v7389
  %v7851 = vunpack.c.l.b16 %v7390
  %v7852 = vunpack.c.h.b16 %v7390
  %v7853 = vunpack.c.l.b16 %v7391
  %v7854 = vunpack.c.h.b16 %v7391
  %v7855 = vunpack.c.l.b16 %v7392
  %v7856 = vunpack.c.h.b16 %v7392
  %v7857 = vunpack.c.l.b16 %v7393
  %v7858 = vunpack.c.l.b16 %v7394
  %v7859 = vunpack.c.h.b16 %v7394
  %v7860 = vunpack.c.l.b16 %v7395
  %v7861 = vunpack.c.h.b16 %v7395
  %v7862 = vunpack.c.l.b16 %v7396
  %v7863 = vunpack.c.h.b16 %v7396
  %v7864 = vunpack.c.l.b16 %v7397
  %v7865 = vunpack.c.h.b16 %v7397
  %v7866 = vunpack.c.l.b16 %v7398
  %v7867 = vunpack.c.h.b16 %v7398
  %v7868 = vunpack.c.l.b16 %v7399
  %v7869 = vunpack.c.l.b16 %v7400
  %v7870 = vunpack.c.h.b16 %v7400
  %v7871 = vunpack.c.l.b16 %v7401
  %v7872 = vunpack.c.h.b16 %v7401
  %v7873 = vunpack.c.l.b16 %v7402
  %v7874 = vunpack.c.h.b16 %v7402
  %v7875 = vunpack.c.l.b16 %v7403
  %v7876 = vunpack.c.h.b16 %v7403
  %v7877 = vunpack.c.l.b16 %v7404
  %v7878 = vunpack.c.h.b16 %v7404
  %v7879 = vunpack.c.l.b16 %v7405
  %v7880 = vunpack.c.l.b16 %v7406
  %v7881 = vunpack.c.h.b16 %v7406
  %v7882 = vunpack.c.l.b16 %v7407
  %v7883 = vunpack.c.h.b16 %v7407
  %v7884 = vunpack.c.l.b16 %v7408
  %v7885 = vunpack.c.h.b16 %v7408
  %v7886 = vunpack.c.l.b16 %v7409
  %v7887 = vunpack.c.h.b16 %v7409
  %v7888 = vunpack.c.l.b16 %v7410
  %v7889 = vunpack.c.h.b16 %v7410
  %v7890 = vunpack.c.l.b16 %v7411
  %v7891 = vunpack.c.l.b16 %v7412
  %v7892 = vunpack.c.h.b16 %v7412
  %v7893 = vunpack.c.l.b16 %v7413
  %v7894 = vunpack.c.h.b16 %v7413
  %v7895 = vunpack.c.l.b16 %v7414
  %v7896 = vunpack.c.h.b16 %v7414
  %v7897 = vunpack.c.l.b16 %v7415
  %v7898 = vunpack.c.h.b16 %v7415
  %v7899 = vunpack.c.l.b16 %v7416
  %v7900 = vunpack.c.h.b16 %v7416
  %v7901 = vunpack.c.l.b16 %v7417
  %v7902 = vunpack.c.l.b16 %v7418
  %v7903 = vunpack.c.h.b16 %v7418
  %v7904 = vunpack.c.l.b16 %v7419
  %v7905 = vunpack.c.h.b16 %v7419
  %v7906 = vunpack.c.l.b16 %v7420
  %v7907 = vunpack.c.h.b16 %v7420
  %v7908 = vunpack.c.l.b16 %v7421
  %v7909 = vunpack.c.h.b16 %v7421
  %v7910 = vunpack.c.l.b16 %v7422
  %v7911 = vunpack.c.h.b16 %v7422
  %v7912 = vunpack.c.l.b16 %v7423
  %v7913 = vunpack.c.l.b16 %v7424
  %v7914 = vunpack.c.h.b16 %v7424
  %v7915 = vunpack.c.l.b16 %v7425
  %v7916 = vunpack.c.h.b16 %v7425
  %v7917 = vunpack.c.l.b16 %v7426
  %v7918 = vunpack.c.h.b16 %v7426
  %v7919 = vunpack.c.l.b16 %v7427
  %v7920 = vunpack.c.h.b16 %v7427
  %v7921 = vunpack.c.l.b16 %v7428
  %v7922 = vunpack.c.h.b16 %v7428
  %v7923 = vunpack.c.l.b16 %v7429
  %v7924 = vunpack.c.l.b16 %v7430
  %v7925 = vunpack.c.h.b16 %v7430
  %v7926 = vunpack.c.l.b16 %v7431
  %v7927 = vunpack.c.h.b16 %v7431
  %v7928 = vunpack.c.l.b16 %v7432
  %v7929 = vunpack.c.h.b16 %v7432
  %v7930 = vunpack.c.l.b16 %v7433
  %v7931 = vunpack.c.h.b16 %v7433
  %v7932 = vunpack.c.l.b16 %v7434
  %v7933 = vunpack.c.h.b16 %v7434
  %v7934 = vunpack.c.l.b16 %v7435
  %v7935 = vunpack.c.l.b16 %v7436
  %v7936 = vunpack.c.h.b16 %v7436
  %v7937 = vunpack.c.l.b16 %v7437
  %v7938 = vunpack.c.h.b16 %v7437
  %v7939 = vunpack.c.l.b16 %v7438
  %v7940 = vunpack.c.h.b16 %v7438
  %v7941 = vunpack.c.l.b16 %v7439
  %v7942 = vunpack.c.h.b16 %v7439
  %v7943 = vunpack.c.l.b16 %v7440
  %v7944 = vunpack.c.h.b16 %v7440
  %v7945 = vunpack.c.l.b16 %v7441
  %v7946 = vunpack.c.l.b16 %v7442
  %v7947 = vunpack.c.h.b16 %v7442
  %v7948 = vunpack.c.l.b16 %v7443
  %v7949 = vunpack.c.h.b16 %v7443
  %v7950 = vunpack.c.l.b16 %v7444
  %v7951 = vunpack.c.h.b16 %v7444
  %v7952 = vunpack.c.l.b16 %v7445
  %v7953 = vunpack.c.h.b16 %v7445
  %v7954 = vunpack.c.l.b16 %v7446
  %v7955 = vunpack.c.h.b16 %v7446
  %v7956 = vunpack.c.l.b16 %v7447
  %v7957 = vunpack.c.l.b16 %v7448
  %v7958 = vunpack.c.h.b16 %v7448
  %v7959 = vunpack.c.l.b16 %v7449
  %v7960 = vunpack.c.h.b16 %v7449
  %v7961 = vunpack.c.l.b16 %v7450
  %v7962 = vunpack.c.h.b16 %v7450
  %v7963 = vunpack.c.l.b16 %v7451
  %v7964 = vunpack.c.h.b16 %v7451
  %v7965 = vunpack.c.l.b16 %v7452
  %v7966 = vunpack.c.h.b16 %v7452
  %v7967 = vunpack.c.l.b16 %v7453
  %v7968 = vunpack.c.l.b16 %v7454
  %v7969 = vunpack.c.h.b16 %v7454
  %v7970 = vunpack.c.l.b16 %v7455
  %v7971 = vunpack.c.h.b16 %v7455
  %v7972 = vunpack.c.l.b16 %v7456
  %v7973 = vunpack.c.h.b16 %v7456
  %v7974 = vunpack.c.l.b16 %v7457
  %v7975 = vunpack.c.h.b16 %v7457
  %v7976 = vunpack.c.l.b16 %v7458
  %v7977 = vunpack.c.h.b16 %v7458
  %v7978 = vunpack.c.l.b16 %v7459
  %v7979 = vunpack.c.l.b16 %v7460
  %v7980 = vunpack.c.h.b16 %v7460
  %v7981 = vunpack.c.l.b16 %v7461
  %v7982 = vunpack.c.h.b16 %v7461
  %v7983 = vunpack.c.l.b16 %v7462
  %v7984 = vunpack.c.h.b16 %v7462
  %v7985 = vunpack.c.l.b16 %v7463
  %v7986 = vunpack.c.h.b16 %v7463
  %v7987 = vunpack.c.l.b16 %v7464
  %v7988 = vunpack.c.h.b16 %v7464
  %v7989 = vunpack.c.l.b16 %v7465
  %v7990 = vunpack.c.l.b16 %v7466
  %v7991 = vunpack.c.h.b16 %v7466
  %v7992 = vunpack.c.l.b16 %v7467
  %v7993 = vunpack.c.h.b16 %v7467
  %v7994 = vunpack.c.l.b16 %v7468
  %v7995 = vunpack.c.h.b16 %v7468
  %v7996 = vunpack.c.l.b16 %v7469
  %v7997 = vunpack.c.h.b16 %v7469
  %v7998 = vunpack.c.l.b16 %v7470
  %v7999 = vunpack.c.h.b16 %v7470
  %v8000 = vunpack.c.l.b16 %v7471
  %v8001 = vunpack.c.l.b16 %v7472
  %v8002 = vunpack.c.h.b16 %v7472
  %v8003 = vunpack.c.l.b16 %v7473
  %v8004 = vunpack.c.h.b16 %v7473
  %v8005 = vunpack.c.l.b16 %v7474
  %v8006 = vunpack.c.h.b16 %v7474
  %v8007 = vunpack.c.l.b16 %v7475
  %v8008 = vunpack.c.h.b16 %v7475
  %v8009 = vunpack.c.l.b16 %v7476
  %v8010 = vunpack.c.h.b16 %v7476
  %v8011 = vunpack.c.l.b16 %v7477
  %v8012 = vunpack.c.l.b16 %v7478
  %v8013 = vunpack.c.h.b16 %v7478
  %v8014 = vunpack.c.l.b16 %v7479
  %v8015 = vunpack.c.h.b16 %v7479
  %v8016 = vunpack.c.l.b16 %v7480
  %v8017 = vunpack.c.h.b16 %v7480
  %v8018 = vunpack.c.l.b16 %v7481
  %v8019 = vunpack.c.h.b16 %v7481
  %v8020 = vunpack.c.l.b16 %v7482
  %v8021 = vunpack.c.h.b16 %v7482
  %v8022 = vunpack.c.l.b16 %v7483
  %v8023 = vunpack.c.l.b16 %v7484
  %v8024 = vunpack.c.h.b16 %v7484
  %v8025 = vunpack.c.l.b16 %v7485
  %v8026 = vunpack.c.h.b16 %v7485
  %v8027 = vunpack.c.l.b16 %v7486
  %v8028 = vunpack.c.h.b16 %v7486
  %v8029 = vunpack.c.l.b16 %v7487
  %v8030 = vunpack.c.h.b16 %v7487
  %v8031 = vunpack.c.l.b16 %v7488
  %v8032 = vunpack.c.h.b16 %v7488
  %v8033 = vunpack.c.l.b16 %v7489
  %v8034 = vpack.c.b16 %v7693, %v7682
  %v8035 = vpack.c.b16 %v7694, %v7683
  %v8036 = vpack.c.b16 %v7695, %v7684
  %v8037 = vpack.c.b16 %v7696, %v7685
  %v8038 = vpack.c.b16 %v7697, %v7686
  %v8039 = vpack.c.b16 %v7698, %v7687
  %v8040 = vpack.c.b16 %v7699, %v7688
  %v8041 = vpack.c.b16 %v7700, %v7689
  %v8042 = vpack.c.b16 %v7701, %v7690
  %v8043 = vpack.c.b16 %v7702, %v7691
  %v8044 = vpack.c.b16 %v7703, %v7692
  %v8045 = vpack.c.b16 %v7715, %v7704
  %v8046 = vpack.c.b16 %v7716, %v7705
  %v8047 = vpack.c.b16 %v7717, %v7706
  %v8048 = vpack.c.b16 %v7718, %v7707
  %v8049 = vpack.c.b16 %v7719, %v7708
  %v8050 = vpack.c.b16 %v7720, %v7709
  %v8051 = vpack.c.b16 %v7721, %v7710
  %v8052 = vpack.c.b16 %v7722, %v7711
  %v8053 = vpack.c.b16 %v7723, %v7712
  %v8054 = vpack.c.b16 %v7724, %v7713
  %v8055 = vpack.c.b16 %v7725, %v7714
  %v8056 = vpack.c.b16 %v7737, %v7726
  %v8057 = vpack.c.b16 %v7738, %v7727
  %v8058 = vpack.c.b16 %v7739, %v7728
  %v8059 = vpack.c.b16 %v7740, %v7729
  %v8060 = vpack.c.b16 %v7741, %v7730
  %v8061 = vpack.c.b16 %v7742, %v7731
  %v8062 = vpack.c.b16 %v7743, %v7732
  %v8063 = vpack.c.b16 %v7744, %v7733
  %v8064 = vpack.c.b16 %v7745, %v7734
  %v8065 = vpack.c.b16 %v7746, %v7735
  %v8066 = vpack.c.b16 %v7747, %v7736
  %v8067 = vpack.c.b16 %v7759, %v7748
  %v8068 = vpack.c.b16 %v7760, %v7749
  %v8069 = vpack.c.b16 %v7761, %v7750
  %v8070 = vpack.c.b16 %v7762, %v7751
  %v8071 = vpack.c.b16 %v7763, %v7752
  %v8072 = vpack.c.b16 %v7764, %v7753
  %v8073 = vpack.c.b16 %v7765, %v7754
  %v8074 = vpack.c.b16 %v7766, %v7755
  %v8075 = vpack.c.b16 %v7767, %v7756
  %v8076 = vpack.c.b16 %v7768, %v7757
  %v8077 = vpack.c.b16 %v7769, %v7758
  %v8078 = vpack.c.b16 %v7781, %v7770
  %v8079 = vpack.c.b16 %v7782, %v7771
  %v8080 = vpack.c.b16 %v7783, %v7772
  %v8081 = vpack.c.b16 %v7784, %v7773
  %v8082 = vpack.c.b16 %v7785, %v7774
  %v8083 = vpack.c.b16 %v7786, %v7775
  %v8084 = vpack.c.b16 %v7787, %v7776
  %v8085 = vpack.c.b16 %v7788, %v7777
  %v8086 = vpack.c.b16 %v7789, %v7778
  %v8087 = vpack.c.b16 %v7790, %v7779
  %v8088 = vpack.c.b16 %v7791, %v7780
  %v8089 = vpack.c.b16 %v7803, %v7792
  %v8090 = vpack.c.b16 %v7804, %v7793
  %v8091 = vpack.c.b16 %v7805, %v7794
  %v8092 = vpack.c.b16 %v7806, %v7795
  %v8093 = vpack.c.b16 %v7807, %v7796
  %v8094 = vpack.c.b16 %v7808, %v7797
  %v8095 = vpack.c.b16 %v7809, %v7798
  %v8096 = vpack.c.b16 %v7810, %v7799
  %v8097 = vpack.c.b16 %v7811, %v7800
  %v8098 = vpack.c.b16 %v7812, %v7801
  %v8099 = vpack.c.b16 %v7813, %v7802
  %v8100 = vpack.c.b16 %v7825, %v7814
  %v8101 = vpack.c.b16 %v7826, %v7815
  %v8102 = vpack.c.b16 %v7827, %v7816
  %v8103 = vpack.c.b16 %v7828, %v7817
  %v8104 = vpack.c.b16 %v7829, %v7818
  %v8105 = vpack.c.b16 %v7830, %v7819
  %v8106 = vpack.c.b16 %v7831, %v7820
  %v8107 = vpack.c.b16 %v7832, %v7821
  %v8108 = vpack.c.b16 %v7833, %v7822
  %v8109 = vpack.c.b16 %v7834, %v7823
  %v8110 = vpack.c.b16 %v7835, %v7824
  %v8111 = vpack.c.b16 %v7847, %v7836
  %v8112 = vpack.c.b16 %v7848, %v7837
  %v8113 = vpack.c.b16 %v7849, %v7838
  %v8114 = vpack.c.b16 %v7850, %v7839
  %v8115 = vpack.c.b16 %v7851, %v7840
  %v8116 = vpack.c.b16 %v7852, %v7841
  %v8117 = vpack.c.b16 %v7853, %v7842
  %v8118 = vpack.c.b16 %v7854, %v7843
  %v8119 = vpack.c.b16 %v7855, %v7844
  %v8120 = vpack.c.b16 %v7856, %v7845
  %v8121 = vpack.c.b16 %v7857, %v7846
  %v8122 = vpack.c.b16 %v7869, %v7858
  %v8123 = vpack.c.b16 %v7870, %v7859
  %v8124 = vpack.c.b16 %v7871, %v7860
  %v8125 = vpack.c.b16 %v7872, %v7861
  %v8126 = vpack.c.b16 %v7873, %v7862
  %v8127 = vpack.c.b16 %v7874, %v7863
  %v8128 = vpack.c.b16 %v7875, %v7864
  %v8129 = vpack.c.b16 %v7876, %v7865
  %v8130 = vpack.c.b16 %v7877, %v7866
  %v8131 = vpack.c.b16 %v7878, %v7867
  %v8132 = vpack.c.b16 %v7879, %v7868
  %v8133 = vpack.c.b16 %v7891, %v7880
  %v8134 = vpack.c.b16 %v7892, %v7881
  %v8135 = vpack.c.b16 %v7893, %v7882
  %v8136 = vpack.c.b16 %v7894, %v7883
  %v8137 = vpack.c.b16 %v7895, %v7884
  %v8138 = vpack.c.b16 %v7896, %v7885
  %v8139 = vpack.c.b16 %v7897, %v7886
  %v8140 = vpack.c.b16 %v7898, %v7887
  %v8141 = vpack.c.b16 %v7899, %v7888
  %v8142 = vpack.c.b16 %v7900, %v7889
  %v8143 = vpack.c.b16 %v7901, %v7890
  %v8144 = vpack.c.b16 %v7913, %v7902
  %v8145 = vpack.c.b16 %v7914, %v7903
  %v8146 = vpack.c.b16 %v7915, %v7904
  %v8147 = vpack.c.b16 %v7916, %v7905
  %v8148 = vpack.c.b16 %v7917, %v7906
  %v8149 = vpack.c.b16 %v7918, %v7907
  %v8150 = vpack.c.b16 %v7919, %v7908
  %v8151 = vpack.c.b16 %v7920, %v7909
  %v8152 = vpack.c.b16 %v7921, %v7910
  %v8153 = vpack.c.b16 %v7922, %v7911
  %v8154 = vpack.c.b16 %v7923, %v7912
  %v8155 = vpack.c.b16 %v7935, %v7924
  %v8156 = vpack.c.b16 %v7936, %v7925
  %v8157 = vpack.c.b16 %v7937, %v7926
  %v8158 = vpack.c.b16 %v7938, %v7927
  %v8159 = vpack.c.b16 %v7939, %v7928
  %v8160 = vpack.c.b16 %v7940, %v7929
  %v8161 = vpack.c.b16 %v7941, %v7930
  %v8162 = vpack.c.b16 %v7942, %v7931
  %v8163 = vpack.c.b16 %v7943, %v7932
  %v8164 = vpack.c.b16 %v7944, %v7933
  %v8165 = vpack.c.b16 %v7945, %v7934
  %v8166 = vpack.c.b16 %v7957, %v7946
  %v8167 = vpack.c.b16 %v7958, %v7947
  %v8168 = vpack.c.b16 %v7959, %v7948
  %v8169 = vpack.c.b16 %v7960, %v7949
  %v8170 = vpack.c.b16 %v7961, %v7950
  %v8171 = vpack.c.b16 %v7962, %v7951
  %v8172 = vpack.c.b16 %v7963, %v7952
  %v8173 = vpack.c.b16 %v7964, %v7953
  %v8174 = vpack.c.b16 %v7965, %v7954
  %v8175 = vpack.c.b16 %v7966, %v7955
  %v8176 = vpack.c.b16 %v7967, %v7956
  %v8177 = vpack.c.b16 %v7979, %v7968
  %v8178 = vpack.c.b16 %v7980, %v7969
  %v8179 = vpack.c.b16 %v7981, %v7970
  %v8180 = vpack.c.b16 %v7982, %v7971
  %v8181 = vpack.c.b16 %v7983, %v7972
  %v8182 = vpack.c.b16 %v7984, %v7973
  %v8183 = vpack.c.b16 %v7985, %v7974
  %v8184 = vpack.c.b16 %v7986, %v7975
  %v8185 = vpack.c.b16 %v7987, %v7976
  %v8186 = vpack.c.b16 %v7988, %v7977
  %v8187 = vpack.c.b16 %v7989, %v7978
  %v8188 = vpack.c.b16 %v8001, %v7990
  %v8189 = vpack.c.b16 %v8002, %v7991
  %v8190 = vpack.c.b16 %v8003, %v7992
  %v8191 = vpack.c.b16 %v8004, %v7993
  %v8192 = vpack.c.b16 %v8005, %v7994
  %v8193 = vpack.c.b16 %v8006, %v7995
  %v8194 = vpack.c.b16 %v8007, %v7996
  %v8195 = vpack.c.b16 %v8008, %v7997
  %v8196 = vpack.c.b16 %v8009, %v7998
  %v8197 = vpack.c.b16 %v8010, %v7999
  %v8198 = vpack.c.b16 %v8011, %v8000
  %v8199 = vpack.c.b16 %v8023, %v8012
  %v8200 = vpack.c.b16 %v8024, %v8013
  %v8201 = vpack.c.b16 %v8025, %v8014
  %v8202 = vpack.c.b16 %v8026, %v8015
  %v8203 = vpack.c.b16 %v8027, %v8016
  %v8204 = vpack.c.b16 %v8028, %v8017
  %v8205 = vpack.c.b16 %v8029, %v8018
  %v8206 = vpack.c.b16 %v8030, %v8019
  %v8207 = vpack.c.b16 %v8031, %v8020
  %v8208 = vpack.c.b16 %v8032, %v8021
  %v8209 = vpack.c.b16 %v8033, %v8022
  %8386 = vmatprep.subr.bf16.mxu0 0
  %8387 = vmatpush1.bf16.msra.mxu0 %v1653
  %8388 = vmatprep.subr.bf16.mxu0 0
  %8389 = vmatpush1.bf16.msra.mxu0 %v1654
  %8390 = vmatprep.subr.bf16.mxu0 0
  %8391 = vmatpush1.bf16.msra.mxu0 %v1655
  %8392 = vmatprep.subr.bf16.mxu0 0
  %8393 = vmatpush1.bf16.msra.mxu0 %v1656
  %8394 = vmatprep.subr.bf16.mxu0 0
  %8395 = vmatpush1.bf16.msra.mxu0 %v1657
  %8396 = vmatprep.subr.bf16.mxu0 0
  %8397 = vmatpush1.bf16.msra.mxu0 %v1658
  %8398 = vmatprep.subr.bf16.mxu0 0
  %8399 = vmatpush1.bf16.msra.mxu0 %v1659
  %8400 = vmatprep.subr.bf16.mxu0 0
  %8401 = vmatpush1.bf16.msra.mxu0 %v1660
  %8402 = vmatprep.subr.bf16.mxu0 0
  %8403 = vmatpush1.bf16.msra.mxu0 %v1661
  %8404 = vmatprep.subr.bf16.mxu0 0
  %8405 = vmatpush1.bf16.msra.mxu0 %v1662
  %8406 = vmatprep.subr.bf16.mxu0 0
  %8407 = vmatpush1.bf16.msra.mxu0 %v1663
  %8408 = vmatprep.subr.bf16.mxu0 0
  %8409 = vmatpush1.bf16.msra.mxu0 %v1664
  %8410 = vmatprep.subr.bf16.mxu0 0
  %8411 = vmatpush1.bf16.msra.mxu0 %v1665
  %8412 = vmatprep.subr.bf16.mxu0 0
  %8413 = vmatpush1.bf16.msra.mxu0 %v1666
  %8414 = vmatprep.subr.bf16.mxu0 0
  %8415 = vmatpush1.bf16.msra.mxu0 %v1667
  %8416 = vmatprep.subr.bf16.mxu0 0
  %8417 = vmatpush1.bf16.msra.mxu0 %v1668
  %8418 = vmatprep.mubr.bf16.mxu0 %v8035
  %8419 = vmatmul.mubr.bf16.gmra.mrb[0].mxu0 %v8034
  %v8420 = vpop.f32.mrb[0].mxu0
  %v8421 = vadd.f32 0.0, %v8420
  %v8422 = vpop.f32.mrb[0].mxu0
  %v8423 = vpop.f32.mrb[0].mxu0
  %v8424 = vadd.f32 0.0, %v8423
  %v8425 = vpop.f32.mrb[0].mxu0
  %8426 = vmatprep.mubr.bf16.mxu0 %v8046
  %8427 = vmatmul.mubr.bf16.gmra.mrb[0].mxu0 %v8045
  %v8428 = vpop.f32.mrb[0].mxu0
  %v8429 = vadd.f32 0.0, %v8428
  %v8430 = vpop.f32.mrb[0].mxu0
  %v8431 = vpop.f32.mrb[0].mxu0
  %v8432 = vadd.f32 0.0, %v8431
  %v8433 = vpop.f32.mrb[0].mxu0
  %8434 = vmatprep.mubr.bf16.mxu0 %v8057
  %8435 = vmatmul.mubr.bf16.gmra.mrb[0].mxu0 %v8056
  %v8436 = vpop.f32.mrb[0].mxu0
  %v8437 = vadd.f32 0.0, %v8436
  %v8438 = vpop.f32.mrb[0].mxu0
  %v8439 = vpop.f32.mrb[0].mxu0
  %v8440 = vadd.f32 0.0, %v8439
  %v8441 = vpop.f32.mrb[0].mxu0
  %8442 = vmatprep.mubr.bf16.mxu0 %v8068
  %8443 = vmatmul.mubr.bf16.gmra.mrb[0].mxu0 %v8067
  %v8444 = vpop.f32.mrb[0].mxu0
  %v8445 = vadd.f32 0.0, %v8444
  %v8446 = vpop.f32.mrb[0].mxu0
  %v8447 = vpop.f32.mrb[0].mxu0
  %v8448 = vadd.f32 0.0, %v8447
  %v8449 = vpop.f32.mrb[0].mxu0
  %8450 = vmatprep.mubr.bf16.mxu0 %v8079
  %8451 = vmatmul.mubr.bf16.gmra.mrb[0].mxu0 %v8078
  %v8452 = vpop.f32.mrb[0].mxu0
  %v8453 = vadd.f32 0.0, %v8452
  %v8454 = vpop.f32.mrb[0].mxu0
  %v8455 = vpop.f32.mrb[0].mxu0
  %v8456 = vadd.f32 0.0, %v8455
  %v8457 = vpop.f32.mrb[0].mxu0
  %8458 = vmatprep.mubr.bf16.mxu0 %v8090
  %8459 = vmatmul.mubr.bf16.gmra.mrb[0].mxu0 %v8089
  %v8460 = vpop.f32.mrb[0].mxu0
  %v8461 = vadd.f32 0.0, %v8460
  %v8462 = vpop.f32.mrb[0].mxu0
  %v8463 = vpop.f32.mrb[0].mxu0
  %v8464 = vadd.f32 0.0, %v8463
  %v8465 = vpop.f32.mrb[0].mxu0
  %8466 = vmatprep.mubr.bf16.mxu0 %v8101
  %8467 = vmatmul.mubr.bf16.gmra.mrb[0].mxu0 %v8100
  %v8468 = vpop.f32.mrb[0].mxu0
  %v8469 = vadd.f32 0.0, %v8468
  %v8470 = vpop.f32.mrb[0].mxu0
  %v8471 = vpop.f32.mrb[0].mxu0
  %v8472 = vadd.f32 0.0, %v8471
  %v8473 = vpop.f32.mrb[0].mxu0
  %8474 = vmatprep.mubr.bf16.mxu0 %v8112
  %8475 = vmatmul.mubr.bf16.gmra.mrb[0].mxu0 %v8111
  %v8476 = vpop.f32.mrb[0].mxu0
  %v8477 = vadd.f32 0.0, %v8476
  %v8478 = vpop.f32.mrb[0].mxu0
  %v8479 = vpop.f32.mrb[0].mxu0
  %v8480 = vadd.f32 0.0, %v8479
  %v8481 = vpop.f32.mrb[0].mxu0
  %8482 = vmatprep.mubr.bf16.mxu0 %v8123
  %8483 = vmatmul.mubr.bf16.gmra.mrb[0].mxu0 %v8122
  %v8484 = vpop.f32.mrb[0].mxu0
  %v8485 = vadd.f32 0.0, %v8484
  %v8486 = vpop.f32.mrb[0].mxu0
  %v8487 = vpop.f32.mrb[0].mxu0
  %v8488 = vadd.f32 0.0, %v8487
  %v8489 = vpop.f32.mrb[0].mxu0
  %8490 = vmatprep.mubr.bf16.mxu0 %v8134
  %8491 = vmatmul.mubr.bf16.gmra.mrb[0].mxu0 %v8133
  %v8492 = vpop.f32.mrb[0].mxu0
  %v8493 = vadd.f32 0.0, %v8492
  %v8494 = vpop.f32.mrb[0].mxu0
  %v8495 = vpop.f32.mrb[0].mxu0
  %v8496 = vadd.f32 0.0, %v8495
  %v8497 = vpop.f32.mrb[0].mxu0
  %8498 = vmatprep.mubr.bf16.mxu0 %v8145
  %8499 = vmatmul.mubr.bf16.gmra.mrb[0].mxu0 %v8144
  %v8500 = vpop.f32.mrb[0].mxu0
  %v8501 = vadd.f32 0.0, %v8500
  %v8502 = vpop.f32.mrb[0].mxu0
  %v8503 = vpop.f32.mrb[0].mxu0
  %v8504 = vadd.f32 0.0, %v8503
  %v8505 = vpop.f32.mrb[0].mxu0
  %8506 = vmatprep.mubr.bf16.mxu0 %v8156
  %8507 = vmatmul.mubr.bf16.gmra.mrb[0].mxu0 %v8155
  %v8508 = vpop.f32.mrb[0].mxu0
  %v8509 = vadd.f32 0.0, %v8508
  %v8510 = vpop.f32.mrb[0].mxu0
  %v8511 = vpop.f32.mrb[0].mxu0
  %v8512 = vadd.f32 0.0, %v8511
  %v8513 = vpop.f32.mrb[0].mxu0
  %8514 = vmatprep.mubr.bf16.mxu0 %v8167
  %8515 = vmatmul.mubr.bf16.gmra.mrb[0].mxu0 %v8166
  %v8516 = vpop.f32.mrb[0].mxu0
  %v8517 = vadd.f32 0.0, %v8516
  %v8518 = vpop.f32.mrb[0].mxu0
  %v8519 = vpop.f32.mrb[0].mxu0
  %v8520 = vadd.f32 0.0, %v8519
  %v8521 = vpop.f32.mrb[0].mxu0
  %8522 = vmatprep.mubr.bf16.mxu0 %v8178
  %8523 = vmatmul.mubr.bf16.gmra.mrb[0].mxu0 %v8177
  %v8524 = vpop.f32.mrb[0].mxu0
  %v8525 = vadd.f32 0.0, %v8524
  %v8526 = vpop.f32.mrb[0].mxu0
  %v8527 = vpop.f32.mrb[0].mxu0
  %v8528 = vadd.f32 0.0, %v8527
  %v8529 = vpop.f32.mrb[0].mxu0
  %8530 = vmatprep.mubr.bf16.mxu0 %v8189
  %8531 = vmatmul.mubr.bf16.gmra.mrb[0].mxu0 %v8188
  %v8532 = vpop.f32.mrb[0].mxu0
  %v8533 = vadd.f32 0.0, %v8532
  %v8534 = vpop.f32.mrb[0].mxu0
  %v8535 = vpop.f32.mrb[0].mxu0
  %v8536 = vadd.f32 0.0, %v8535
  %v8537 = vpop.f32.mrb[0].mxu0
  %8538 = vmatprep.mubr.bf16.mxu0 %v8200
  %8539 = vmatmul.mubr.bf16.gmra.mrb[0].mxu0 %v8199
  %v8540 = vpop.f32.mrb[0].mxu0
  %v8541 = vadd.f32 0.0, %v8540
  %v8542 = vpop.f32.mrb[0].mxu0
  %v8543 = vpop.f32.mrb[0].mxu0
  %v8544 = vadd.f32 0.0, %v8543
  %v8545 = vpop.f32.mrb[0].mxu0
  %8546 = vdwg.mxu0
  %8547 = vmatprep.subr.bf16.mxu0 0
  %8548 = vmatpush1.bf16.msra.mxu0 %v1669
  %8549 = vmatprep.subr.bf16.mxu0 0
  %8550 = vmatpush1.bf16.msra.mxu0 %v1670
  %8551 = vmatprep.subr.bf16.mxu0 0
  %8552 = vmatpush1.bf16.msra.mxu0 %v1671
  %8553 = vmatprep.subr.bf16.mxu0 0
  %8554 = vmatpush1.bf16.msra.mxu0 %v1672
  %8555 = vmatprep.subr.bf16.mxu0 0
  %8556 = vmatpush1.bf16.msra.mxu0 %v1673
  %8557 = vmatprep.subr.bf16.mxu0 0
  %8558 = vmatpush1.bf16.msra.mxu0 %v1674
  %8559 = vmatprep.subr.bf16.mxu0 0
  %8560 = vmatpush1.bf16.msra.mxu0 %v1675
  %8561 = vmatprep.subr.bf16.mxu0 0
  %8562 = vmatpush1.bf16.msra.mxu0 %v1676
  %8563 = vmatprep.subr.bf16.mxu0 0
  %8564 = vmatpush1.bf16.msra.mxu0 %v1677
  %8565 = vmatprep.subr.bf16.mxu0 0
  %8566 = vmatpush1.bf16.msra.mxu0 %v1678
  %8567 = vmatprep.subr.bf16.mxu0 0
  %8568 = vmatpush1.bf16.msra.mxu0 %v1679
  %8569 = vmatprep.subr.bf16.mxu0 0
  %8570 = vmatpush1.bf16.msra.mxu0 %v1680
  %8571 = vmatprep.subr.bf16.mxu0 0
  %8572 = vmatpush1.bf16.msra.mxu0 %v1681
  %8573 = vmatprep.subr.bf16.mxu0 0
  %8574 = vmatpush1.bf16.msra.mxu0 %v1682
  %8575 = vmatprep.subr.bf16.mxu0 0
  %8576 = vmatpush1.bf16.msra.mxu0 %v1683
  %8577 = vmatprep.subr.bf16.mxu0 0
  %8578 = vmatpush1.bf16.msra.mxu0 %v1684
  %8579 = vmatprep.mubr.bf16.mxu0 %v8037
  %8580 = vmatmul.mubr.bf16.gmra.mrb[0].mxu0 %v8036
  %v8581 = vpop.f32.mrb[0].mxu0
  %v8582 = vadd.f32 %v8421, %v8581
  %v8583 = vpop.f32.mrb[0].mxu0
  %v8584 = vpop.f32.mrb[0].mxu0
  %v8585 = vadd.f32 %v8424, %v8584
  %v8586 = vpop.f32.mrb[0].mxu0
  %8587 = vmatprep.mubr.bf16.mxu0 %v8048
  %8588 = vmatmul.mubr.bf16.gmra.mrb[0].mxu0 %v8047
  %v8589 = vpop.f32.mrb[0].mxu0
  %v8590 = vadd.f32 %v8429, %v8589
  %v8591 = vpop.f32.mrb[0].mxu0
  %v8592 = vpop.f32.mrb[0].mxu0
  %v8593 = vadd.f32 %v8432, %v8592
  %v8594 = vpop.f32.mrb[0].mxu0
  %8595 = vmatprep.mubr.bf16.mxu0 %v8059
  %8596 = vmatmul.mubr.bf16.gmra.mrb[0].mxu0 %v8058
  %v8597 = vpop.f32.mrb[0].mxu0
  %v8598 = vadd.f32 %v8437, %v8597
  %v8599 = vpop.f32.mrb[0].mxu0
  %v8600 = vpop.f32.mrb[0].mxu0
  %v8601 = vadd.f32 %v8440, %v8600
  %v8602 = vpop.f32.mrb[0].mxu0
  %8603 = vmatprep.mubr.bf16.mxu0 %v8070
  %8604 = vmatmul.mubr.bf16.gmra.mrb[0].mxu0 %v8069
  %v8605 = vpop.f32.mrb[0].mxu0
  %v8606 = vadd.f32 %v8445, %v8605
  %v8607 = vpop.f32.mrb[0].mxu0
  %v8608 = vpop.f32.mrb[0].mxu0
  %v8609 = vadd.f32 %v8448, %v8608
  %v8610 = vpop.f32.mrb[0].mxu0
  %8611 = vmatprep.mubr.bf16.mxu0 %v8081
  %8612 = vmatmul.mubr.bf16.gmra.mrb[0].mxu0 %v8080
  %v8613 = vpop.f32.mrb[0].mxu0
  %v8614 = vadd.f32 %v8453, %v8613
  %v8615 = vpop.f32.mrb[0].mxu0
  %v8616 = vpop.f32.mrb[0].mxu0
  %v8617 = vadd.f32 %v8456, %v8616
  %v8618 = vpop.f32.mrb[0].mxu0
  %8619 = vmatprep.mubr.bf16.mxu0 %v8092
  %8620 = vmatmul.mubr.bf16.gmra.mrb[0].mxu0 %v8091
  %v8621 = vpop.f32.mrb[0].mxu0
  %v8622 = vadd.f32 %v8461, %v8621
  %v8623 = vpop.f32.mrb[0].mxu0
  %v8624 = vpop.f32.mrb[0].mxu0
  %v8625 = vadd.f32 %v8464, %v8624
  %v8626 = vpop.f32.mrb[0].mxu0
  %8627 = vmatprep.mubr.bf16.mxu0 %v8103
  %8628 = vmatmul.mubr.bf16.gmra.mrb[0].mxu0 %v8102
  %v8629 = vpop.f32.mrb[0].mxu0
  %v8630 = vadd.f32 %v8469, %v8629
  %v8631 = vpop.f32.mrb[0].mxu0
  %v8632 = vpop.f32.mrb[0].mxu0
  %v8633 = vadd.f32 %v8472, %v8632
  %v8634 = vpop.f32.mrb[0].mxu0
  %8635 = vmatprep.mubr.bf16.mxu0 %v8114
  %8636 = vmatmul.mubr.bf16.gmra.mrb[0].mxu0 %v8113
  %v8637 = vpop.f32.mrb[0].mxu0
  %v8638 = vadd.f32 %v8477, %v8637
  %v8639 = vpop.f32.mrb[0].mxu0
  %v8640 = vpop.f32.mrb[0].mxu0
  %v8641 = vadd.f32 %v8480, %v8640
  %v8642 = vpop.f32.mrb[0].mxu0
  %8643 = vmatprep.mubr.bf16.mxu0 %v8125
  %8644 = vmatmul.mubr.bf16.gmra.mrb[0].mxu0 %v8124
  %v8645 = vpop.f32.mrb[0].mxu0
  %v8646 = vadd.f32 %v8485, %v8645
  %v8647 = vpop.f32.mrb[0].mxu0
  %v8648 = vpop.f32.mrb[0].mxu0
  %v8649 = vadd.f32 %v8488, %v8648
  %v8650 = vpop.f32.mrb[0].mxu0
  %8651 = vmatprep.mubr.bf16.mxu0 %v8136
  %8652 = vmatmul.mubr.bf16.gmra.mrb[0].mxu0 %v8135
  %v8653 = vpop.f32.mrb[0].mxu0
  %v8654 = vadd.f32 %v8493, %v8653
  %v8655 = vpop.f32.mrb[0].mxu0
  %v8656 = vpop.f32.mrb[0].mxu0
  %v8657 = vadd.f32 %v8496, %v8656
  %v8658 = vpop.f32.mrb[0].mxu0
  %8659 = vmatprep.mubr.bf16.mxu0 %v8147
  %8660 = vmatmul.mubr.bf16.gmra.mrb[0].mxu0 %v8146
  %v8661 = vpop.f32.mrb[0].mxu0
  %v8662 = vadd.f32 %v8501, %v8661
  %v8663 = vpop.f32.mrb[0].mxu0
  %v8664 = vpop.f32.mrb[0].mxu0
  %v8665 = vadd.f32 %v8504, %v8664
  %v8666 = vpop.f32.mrb[0].mxu0
  %8667 = vmatprep.mubr.bf16.mxu0 %v8158
  %8668 = vmatmul.mubr.bf16.gmra.mrb[0].mxu0 %v8157
  %v8669 = vpop.f32.mrb[0].mxu0
  %v8670 = vadd.f32 %v8509, %v8669
  %v8671 = vpop.f32.mrb[0].mxu0
  %v8672 = vpop.f32.mrb[0].mxu0
  %v8673 = vadd.f32 %v8512, %v8672
  %v8674 = vpop.f32.mrb[0].mxu0
  %8675 = vmatprep.mubr.bf16.mxu0 %v8169
  %8676 = vmatmul.mubr.bf16.gmra.mrb[0].mxu0 %v8168
  %v8677 = vpop.f32.mrb[0].mxu0
  %v8678 = vadd.f32 %v8517, %v8677
  %v8679 = vpop.f32.mrb[0].mxu0
  %v8680 = vpop.f32.mrb[0].mxu0
  %v8681 = vadd.f32 %v8520, %v8680
  %v8682 = vpop.f32.mrb[0].mxu0
  %8683 = vmatprep.mubr.bf16.mxu0 %v8180
  %8684 = vmatmul.mubr.bf16.gmra.mrb[0].mxu0 %v8179
  %v8685 = vpop.f32.mrb[0].mxu0
  %v8686 = vadd.f32 %v8525, %v8685
  %v8687 = vpop.f32.mrb[0].mxu0
  %v8688 = vpop.f32.mrb[0].mxu0
  %v8689 = vadd.f32 %v8528, %v8688
  %v8690 = vpop.f32.mrb[0].mxu0
  %8691 = vmatprep.mubr.bf16.mxu0 %v8191
  %8692 = vmatmul.mubr.bf16.gmra.mrb[0].mxu0 %v8190
  %v8693 = vpop.f32.mrb[0].mxu0
  %v8694 = vadd.f32 %v8533, %v8693
  %v8695 = vpop.f32.mrb[0].mxu0
  %v8696 = vpop.f32.mrb[0].mxu0
  %v8697 = vadd.f32 %v8536, %v8696
  %v8698 = vpop.f32.mrb[0].mxu0
  %8699 = vmatprep.mubr.bf16.mxu0 %v8202
  %8700 = vmatmul.mubr.bf16.gmra.mrb[0].mxu0 %v8201
  %v8701 = vpop.f32.mrb[0].mxu0
  %v8702 = vadd.f32 %v8541, %v8701
  %v8703 = vpop.f32.mrb[0].mxu0
  %v8704 = vpop.f32.mrb[0].mxu0
  %v8705 = vadd.f32 %v8544, %v8704
  %v8706 = vpop.f32.mrb[0].mxu0
  %8707 = vdwg.mxu0
  %8708 = vmatprep.subr.bf16.mxu0 0
  %8709 = vmatpush1.bf16.msra.mxu0 %v1685
  %8710 = vmatprep.subr.bf16.mxu0 0
  %8711 = vmatpush1.bf16.msra.mxu0 %v1686
  %8712 = vmatprep.subr.bf16.mxu0 0
  %8713 = vmatpush1.bf16.msra.mxu0 %v1687
  %8714 = vmatprep.subr.bf16.mxu0 0
  %8715 = vmatpush1.bf16.msra.mxu0 %v1688
  %8716 = vmatprep.subr.bf16.mxu0 0
  %8717 = vmatpush1.bf16.msra.mxu0 %v1689
  %8718 = vmatprep.subr.bf16.mxu0 0
  %8719 = vmatpush1.bf16.msra.mxu0 %v1690
  %8720 = vmatprep.subr.bf16.mxu0 0
  %8721 = vmatpush1.bf16.msra.mxu0 %v1691
  %8722 = vmatprep.subr.bf16.mxu0 0
  %8723 = vmatpush1.bf16.msra.mxu0 %v1692
  %8724 = vmatprep.subr.bf16.mxu0 0
  %8725 = vmatpush1.bf16.msra.mxu0 %v1693
  %8726 = vmatprep.subr.bf16.mxu0 0
  %8727 = vmatpush1.bf16.msra.mxu0 %v1694
  %8728 = vmatprep.subr.bf16.mxu0 0
  %8729 = vmatpush1.bf16.msra.mxu0 %v1695
  %8730 = vmatprep.subr.bf16.mxu0 0
  %8731 = vmatpush1.bf16.msra.mxu0 %v1696
  %8732 = vmatprep.subr.bf16.mxu0 0
  %8733 = vmatpush1.bf16.msra.mxu0 %v1697
  %8734 = vmatprep.subr.bf16.mxu0 0
  %8735 = vmatpush1.bf16.msra.mxu0 %v1698
  %8736 = vmatprep.subr.bf16.mxu0 0
  %8737 = vmatpush1.bf16.msra.mxu0 %v1699
  %8738 = vmatprep.subr.bf16.mxu0 0
  %8739 = vmatpush1.bf16.msra.mxu0 %v1700
  %8740 = vmatprep.mubr.bf16.mxu0 %v8039
  %8741 = vmatmul.mubr.bf16.gmra.mrb[0].mxu0 %v8038
  %v8742 = vpop.f32.mrb[0].mxu0
  %v8743 = vadd.f32 %v8582, %v8742
  %v8744 = vpop.f32.mrb[0].mxu0
  %v8745 = vpop.f32.mrb[0].mxu0
  %v8746 = vadd.f32 %v8585, %v8745
  %v8747 = vpop.f32.mrb[0].mxu0
  %8748 = vmatprep.mubr.bf16.mxu0 %v8050
  %8749 = vmatmul.mubr.bf16.gmra.mrb[0].mxu0 %v8049
  %v8750 = vpop.f32.mrb[0].mxu0
  %v8751 = vadd.f32 %v8590, %v8750
  %v8752 = vpop.f32.mrb[0].mxu0
  %v8753 = vpop.f32.mrb[0].mxu0
  %v8754 = vadd.f32 %v8593, %v8753
  %v8755 = vpop.f32.mrb[0].mxu0
  %8756 = vmatprep.mubr.bf16.mxu0 %v8061
  %8757 = vmatmul.mubr.bf16.gmra.mrb[0].mxu0 %v8060
  %v8758 = vpop.f32.mrb[0].mxu0
  %v8759 = vadd.f32 %v8598, %v8758
  %v8760 = vpop.f32.mrb[0].mxu0
  %v8761 = vpop.f32.mrb[0].mxu0
  %v8762 = vadd.f32 %v8601, %v8761
  %v8763 = vpop.f32.mrb[0].mxu0
  %8764 = vmatprep.mubr.bf16.mxu0 %v8072
  %8765 = vmatmul.mubr.bf16.gmra.mrb[0].mxu0 %v8071
  %v8766 = vpop.f32.mrb[0].mxu0
  %v8767 = vadd.f32 %v8606, %v8766
  %v8768 = vpop.f32.mrb[0].mxu0
  %v8769 = vpop.f32.mrb[0].mxu0
  %v8770 = vadd.f32 %v8609, %v8769
  %v8771 = vpop.f32.mrb[0].mxu0
  %8772 = vmatprep.mubr.bf16.mxu0 %v8083
  %8773 = vmatmul.mubr.bf16.gmra.mrb[0].mxu0 %v8082
  %v8774 = vpop.f32.mrb[0].mxu0
  %v8775 = vadd.f32 %v8614, %v8774
  %v8776 = vpop.f32.mrb[0].mxu0
  %v8777 = vpop.f32.mrb[0].mxu0
  %v8778 = vadd.f32 %v8617, %v8777
  %v8779 = vpop.f32.mrb[0].mxu0
  %8780 = vmatprep.mubr.bf16.mxu0 %v8094
  %8781 = vmatmul.mubr.bf16.gmra.mrb[0].mxu0 %v8093
  %v8782 = vpop.f32.mrb[0].mxu0
  %v8783 = vadd.f32 %v8622, %v8782
  %v8784 = vpop.f32.mrb[0].mxu0
  %v8785 = vpop.f32.mrb[0].mxu0
  %v8786 = vadd.f32 %v8625, %v8785
  %v8787 = vpop.f32.mrb[0].mxu0
  %8788 = vmatprep.mubr.bf16.mxu0 %v8105
  %8789 = vmatmul.mubr.bf16.gmra.mrb[0].mxu0 %v8104
  %v8790 = vpop.f32.mrb[0].mxu0
  %v8791 = vadd.f32 %v8630, %v8790
  %v8792 = vpop.f32.mrb[0].mxu0
  %v8793 = vpop.f32.mrb[0].mxu0
  %v8794 = vadd.f32 %v8633, %v8793
  %v8795 = vpop.f32.mrb[0].mxu0
  %8796 = vmatprep.mubr.bf16.mxu0 %v8116
  %8797 = vmatmul.mubr.bf16.gmra.mrb[0].mxu0 %v8115
  %v8798 = vpop.f32.mrb[0].mxu0
  %v8799 = vadd.f32 %v8638, %v8798
  %v8800 = vpop.f32.mrb[0].mxu0
  %v8801 = vpop.f32.mrb[0].mxu0
  %v8802 = vadd.f32 %v8641, %v8801
  %v8803 = vpop.f32.mrb[0].mxu0
  %8804 = vmatprep.mubr.bf16.mxu0 %v8127
  %8805 = vmatmul.mubr.bf16.gmra.mrb[0].mxu0 %v8126
  %v8806 = vpop.f32.mrb[0].mxu0
  %v8807 = vadd.f32 %v8646, %v8806
  %v8808 = vpop.f32.mrb[0].mxu0
  %v8809 = vpop.f32.mrb[0].mxu0
  %v8810 = vadd.f32 %v8649, %v8809
  %v8811 = vpop.f32.mrb[0].mxu0
  %8812 = vmatprep.mubr.bf16.mxu0 %v8138
  %8813 = vmatmul.mubr.bf16.gmra.mrb[0].mxu0 %v8137
  %v8814 = vpop.f32.mrb[0].mxu0
  %v8815 = vadd.f32 %v8654, %v8814
  %v8816 = vpop.f32.mrb[0].mxu0
  %v8817 = vpop.f32.mrb[0].mxu0
  %v8818 = vadd.f32 %v8657, %v8817
  %v8819 = vpop.f32.mrb[0].mxu0
  %8820 = vmatprep.mubr.bf16.mxu0 %v8149
  %8821 = vmatmul.mubr.bf16.gmra.mrb[0].mxu0 %v8148
  %v8822 = vpop.f32.mrb[0].mxu0
  %v8823 = vadd.f32 %v8662, %v8822
  %v8824 = vpop.f32.mrb[0].mxu0
  %v8825 = vpop.f32.mrb[0].mxu0
  %v8826 = vadd.f32 %v8665, %v8825
  %v8827 = vpop.f32.mrb[0].mxu0
  %8828 = vmatprep.mubr.bf16.mxu0 %v8160
  %8829 = vmatmul.mubr.bf16.gmra.mrb[0].mxu0 %v8159
  %v8830 = vpop.f32.mrb[0].mxu0
  %v8831 = vadd.f32 %v8670, %v8830
  %v8832 = vpop.f32.mrb[0].mxu0
  %v8833 = vpop.f32.mrb[0].mxu0
  %v8834 = vadd.f32 %v8673, %v8833
  %v8835 = vpop.f32.mrb[0].mxu0
  %8836 = vmatprep.mubr.bf16.mxu0 %v8171
  %8837 = vmatmul.mubr.bf16.gmra.mrb[0].mxu0 %v8170
  %v8838 = vpop.f32.mrb[0].mxu0
  %v8839 = vadd.f32 %v8678, %v8838
  %v8840 = vpop.f32.mrb[0].mxu0
  %v8841 = vpop.f32.mrb[0].mxu0
  %v8842 = vadd.f32 %v8681, %v8841
  %v8843 = vpop.f32.mrb[0].mxu0
  %8844 = vmatprep.mubr.bf16.mxu0 %v8182
  %8845 = vmatmul.mubr.bf16.gmra.mrb[0].mxu0 %v8181
  %v8846 = vpop.f32.mrb[0].mxu0
  %v8847 = vadd.f32 %v8686, %v8846
  %v8848 = vpop.f32.mrb[0].mxu0
  %v8849 = vpop.f32.mrb[0].mxu0
  %v8850 = vadd.f32 %v8689, %v8849
  %v8851 = vpop.f32.mrb[0].mxu0
  %8852 = vmatprep.mubr.bf16.mxu0 %v8193
  %8853 = vmatmul.mubr.bf16.gmra.mrb[0].mxu0 %v8192
  %v8854 = vpop.f32.mrb[0].mxu0
  %v8855 = vadd.f32 %v8694, %v8854
  %v8856 = vpop.f32.mrb[0].mxu0
  %v8857 = vpop.f32.mrb[0].mxu0
  %v8858 = vadd.f32 %v8697, %v8857
  %v8859 = vpop.f32.mrb[0].mxu0
  %8860 = vmatprep.mubr.bf16.mxu0 %v8204
  %8861 = vmatmul.mubr.bf16.gmra.mrb[0].mxu0 %v8203
  %v8862 = vpop.f32.mrb[0].mxu0
  %v8863 = vadd.f32 %v8702, %v8862
  %v8864 = vpop.f32.mrb[0].mxu0
  %v8865 = vpop.f32.mrb[0].mxu0
  %v8866 = vadd.f32 %v8705, %v8865
  %v8867 = vpop.f32.mrb[0].mxu0
  %8868 = vdwg.mxu0
  %8869 = vmatprep.subr.bf16.mxu0 0
  %8870 = vmatpush1.bf16.msra.mxu0 %v1701
  %8871 = vmatprep.subr.bf16.mxu0 0
  %8872 = vmatpush1.bf16.msra.mxu0 %v1702
  %8873 = vmatprep.subr.bf16.mxu0 0
  %8874 = vmatpush1.bf16.msra.mxu0 %v1703
  %8875 = vmatprep.subr.bf16.mxu0 0
  %8876 = vmatpush1.bf16.msra.mxu0 %v1704
  %8877 = vmatprep.subr.bf16.mxu0 0
  %8878 = vmatpush1.bf16.msra.mxu0 %v1705
  %8879 = vmatprep.subr.bf16.mxu0 0
  %8880 = vmatpush1.bf16.msra.mxu0 %v1706
  %8881 = vmatprep.subr.bf16.mxu0 0
  %8882 = vmatpush1.bf16.msra.mxu0 %v1707
  %8883 = vmatprep.subr.bf16.mxu0 0
  %8884 = vmatpush1.bf16.msra.mxu0 %v1708
  %8885 = vmatprep.subr.bf16.mxu0 0
  %8886 = vmatpush1.bf16.msra.mxu0 %v1709
  %8887 = vmatprep.subr.bf16.mxu0 0
  %8888 = vmatpush1.bf16.msra.mxu0 %v1710
  %8889 = vmatprep.subr.bf16.mxu0 0
  %8890 = vmatpush1.bf16.msra.mxu0 %v1711
  %8891 = vmatprep.subr.bf16.mxu0 0
  %8892 = vmatpush1.bf16.msra.mxu0 %v1712
  %8893 = vmatprep.subr.bf16.mxu0 0
  %8894 = vmatpush1.bf16.msra.mxu0 %v1713
  %8895 = vmatprep.subr.bf16.mxu0 0
  %8896 = vmatpush1.bf16.msra.mxu0 %v1714
  %8897 = vmatprep.subr.bf16.mxu0 0
  %8898 = vmatpush1.bf16.msra.mxu0 %v1715
  %8899 = vmatprep.subr.bf16.mxu0 0
  %8900 = vmatpush1.bf16.msra.mxu0 %v1716
  %8901 = vmatprep.mubr.bf16.mxu0 %v8041
  %8902 = vmatmul.mubr.bf16.gmra.mrb[0].mxu0 %v8040
  %v8903 = vpop.f32.mrb[0].mxu0
  %v8904 = vadd.f32 %v8743, %v8903
  %v8905 = vpop.f32.mrb[0].mxu0
  %v8906 = vpop.f32.mrb[0].mxu0
  %v8907 = vadd.f32 %v8746, %v8906
  %v8908 = vpop.f32.mrb[0].mxu0
  %8909 = vmatprep.mubr.bf16.mxu0 %v8052
  %8910 = vmatmul.mubr.bf16.gmra.mrb[0].mxu0 %v8051
  %v8911 = vpop.f32.mrb[0].mxu0
  %v8912 = vadd.f32 %v8751, %v8911
  %v8913 = vpop.f32.mrb[0].mxu0
  %v8914 = vpop.f32.mrb[0].mxu0
  %v8915 = vadd.f32 %v8754, %v8914
  %v8916 = vpop.f32.mrb[0].mxu0
  %8917 = vmatprep.mubr.bf16.mxu0 %v8063
  %8918 = vmatmul.mubr.bf16.gmra.mrb[0].mxu0 %v8062
  %v8919 = vpop.f32.mrb[0].mxu0
  %v8920 = vadd.f32 %v8759, %v8919
  %v8921 = vpop.f32.mrb[0].mxu0
  %v8922 = vpop.f32.mrb[0].mxu0
  %v8923 = vadd.f32 %v8762, %v8922
  %v8924 = vpop.f32.mrb[0].mxu0
  %8925 = vmatprep.mubr.bf16.mxu0 %v8074
  %8926 = vmatmul.mubr.bf16.gmra.mrb[0].mxu0 %v8073
  %v8927 = vpop.f32.mrb[0].mxu0
  %v8928 = vadd.f32 %v8767, %v8927
  %v8929 = vpop.f32.mrb[0].mxu0
  %v8930 = vpop.f32.mrb[0].mxu0
  %v8931 = vadd.f32 %v8770, %v8930
  %v8932 = vpop.f32.mrb[0].mxu0
  %8933 = vmatprep.mubr.bf16.mxu0 %v8085
  %8934 = vmatmul.mubr.bf16.gmra.mrb[0].mxu0 %v8084
  %v8935 = vpop.f32.mrb[0].mxu0
  %v8936 = vadd.f32 %v8775, %v8935
  %v8937 = vpop.f32.mrb[0].mxu0
  %v8938 = vpop.f32.mrb[0].mxu0
  %v8939 = vadd.f32 %v8778, %v8938
  %v8940 = vpop.f32.mrb[0].mxu0
  %8941 = vmatprep.mubr.bf16.mxu0 %v8096
  %8942 = vmatmul.mubr.bf16.gmra.mrb[0].mxu0 %v8095
  %v8943 = vpop.f32.mrb[0].mxu0
  %v8944 = vadd.f32 %v8783, %v8943
  %v8945 = vpop.f32.mrb[0].mxu0
  %v8946 = vpop.f32.mrb[0].mxu0
  %v8947 = vadd.f32 %v8786, %v8946
  %v8948 = vpop.f32.mrb[0].mxu0
  %8949 = vmatprep.mubr.bf16.mxu0 %v8107
  %8950 = vmatmul.mubr.bf16.gmra.mrb[0].mxu0 %v8106
  %v8951 = vpop.f32.mrb[0].mxu0
  %v8952 = vadd.f32 %v8791, %v8951
  %v8953 = vpop.f32.mrb[0].mxu0
  %v8954 = vpop.f32.mrb[0].mxu0
  %v8955 = vadd.f32 %v8794, %v8954
  %v8956 = vpop.f32.mrb[0].mxu0
  %8957 = vmatprep.mubr.bf16.mxu0 %v8118
  %8958 = vmatmul.mubr.bf16.gmra.mrb[0].mxu0 %v8117
  %v8959 = vpop.f32.mrb[0].mxu0
  %v8960 = vadd.f32 %v8799, %v8959
  %v8961 = vpop.f32.mrb[0].mxu0
  %v8962 = vpop.f32.mrb[0].mxu0
  %v8963 = vadd.f32 %v8802, %v8962
  %v8964 = vpop.f32.mrb[0].mxu0
  %8965 = vmatprep.mubr.bf16.mxu0 %v8129
  %8966 = vmatmul.mubr.bf16.gmra.mrb[0].mxu0 %v8128
  %v8967 = vpop.f32.mrb[0].mxu0
  %v8968 = vadd.f32 %v8807, %v8967
  %v8969 = vpop.f32.mrb[0].mxu0
  %v8970 = vpop.f32.mrb[0].mxu0
  %v8971 = vadd.f32 %v8810, %v8970
  %v8972 = vpop.f32.mrb[0].mxu0
  %8973 = vmatprep.mubr.bf16.mxu0 %v8140
  %8974 = vmatmul.mubr.bf16.gmra.mrb[0].mxu0 %v8139
  %v8975 = vpop.f32.mrb[0].mxu0
  %v8976 = vadd.f32 %v8815, %v8975
  %v8977 = vpop.f32.mrb[0].mxu0
  %v8978 = vpop.f32.mrb[0].mxu0
  %v8979 = vadd.f32 %v8818, %v8978
  %v8980 = vpop.f32.mrb[0].mxu0
  %8981 = vmatprep.mubr.bf16.mxu0 %v8151
  %8982 = vmatmul.mubr.bf16.gmra.mrb[0].mxu0 %v8150
  %v8983 = vpop.f32.mrb[0].mxu0
  %v8984 = vadd.f32 %v8823, %v8983
  %v8985 = vpop.f32.mrb[0].mxu0
  %v8986 = vpop.f32.mrb[0].mxu0
  %v8987 = vadd.f32 %v8826, %v8986
  %v8988 = vpop.f32.mrb[0].mxu0
  %8989 = vmatprep.mubr.bf16.mxu0 %v8162
  %8990 = vmatmul.mubr.bf16.gmra.mrb[0].mxu0 %v8161
  %v8991 = vpop.f32.mrb[0].mxu0
  %v8992 = vadd.f32 %v8831, %v8991
  %v8993 = vpop.f32.mrb[0].mxu0
  %v8994 = vpop.f32.mrb[0].mxu0
  %v8995 = vadd.f32 %v8834, %v8994
  %v8996 = vpop.f32.mrb[0].mxu0
  %8997 = vmatprep.mubr.bf16.mxu0 %v8173
  %8998 = vmatmul.mubr.bf16.gmra.mrb[0].mxu0 %v8172
  %v8999 = vpop.f32.mrb[0].mxu0
  %v9000 = vadd.f32 %v8839, %v8999
  %v9001 = vpop.f32.mrb[0].mxu0
  %v9002 = vpop.f32.mrb[0].mxu0
  %v9003 = vadd.f32 %v8842, %v9002
  %v9004 = vpop.f32.mrb[0].mxu0
  %9005 = vmatprep.mubr.bf16.mxu0 %v8184
  %9006 = vmatmul.mubr.bf16.gmra.mrb[0].mxu0 %v8183
  %v9007 = vpop.f32.mrb[0].mxu0
  %v9008 = vadd.f32 %v8847, %v9007
  %v9009 = vpop.f32.mrb[0].mxu0
  %v9010 = vpop.f32.mrb[0].mxu0
  %v9011 = vadd.f32 %v8850, %v9010
  %v9012 = vpop.f32.mrb[0].mxu0
  %9013 = vmatprep.mubr.bf16.mxu0 %v8195
  %9014 = vmatmul.mubr.bf16.gmra.mrb[0].mxu0 %v8194
  %v9015 = vpop.f32.mrb[0].mxu0
  %v9016 = vadd.f32 %v8855, %v9015
  %v9017 = vpop.f32.mrb[0].mxu0
  %v9018 = vpop.f32.mrb[0].mxu0
  %v9019 = vadd.f32 %v8858, %v9018
  %v9020 = vpop.f32.mrb[0].mxu0
  %9021 = vmatprep.mubr.bf16.mxu0 %v8206
  %9022 = vmatmul.mubr.bf16.gmra.mrb[0].mxu0 %v8205
  %v9023 = vpop.f32.mrb[0].mxu0
  %v9024 = vadd.f32 %v8863, %v9023
  %v9025 = vpop.f32.mrb[0].mxu0
  %v9026 = vpop.f32.mrb[0].mxu0
  %v9027 = vadd.f32 %v8866, %v9026
  %v9028 = vpop.f32.mrb[0].mxu0
  %9029 = vdwg.mxu0
  %9030 = vmatprep.subr.bf16.mxu0 0
  %9031 = vmatpush1.bf16.msra.mxu0 %v1717
  %9032 = vmatprep.subr.bf16.mxu0 0
  %9033 = vmatpush1.bf16.msra.mxu0 %v1718
  %9034 = vmatprep.subr.bf16.mxu0 0
  %9035 = vmatpush1.bf16.msra.mxu0 %v1719
  %9036 = vmatprep.subr.bf16.mxu0 0
  %9037 = vmatpush1.bf16.msra.mxu0 %v1720
  %9038 = vmatprep.subr.bf16.mxu0 0
  %9039 = vmatpush1.bf16.msra.mxu0 %v1721
  %9040 = vmatprep.subr.bf16.mxu0 0
  %9041 = vmatpush1.bf16.msra.mxu0 %v1722
  %9042 = vmatprep.subr.bf16.mxu0 0
  %9043 = vmatpush1.bf16.msra.mxu0 %v1723
  %9044 = vmatprep.subr.bf16.mxu0 0
  %9045 = vmatpush1.bf16.msra.mxu0 %v1724
  %9046 = vmatprep.subr.bf16.mxu0 0
  %9047 = vmatpush1.bf16.msra.mxu0 %v1725
  %9048 = vmatprep.subr.bf16.mxu0 0
  %9049 = vmatpush1.bf16.msra.mxu0 %v1726
  %9050 = vmatprep.subr.bf16.mxu0 0
  %9051 = vmatpush1.bf16.msra.mxu0 %v1727
  %9052 = vmatprep.subr.bf16.mxu0 0
  %9053 = vmatpush1.bf16.msra.mxu0 %v1728
  %9054 = vmatprep.subr.bf16.mxu0 0
  %9055 = vmatpush1.bf16.msra.mxu0 %v1729
  %9056 = vmatprep.subr.bf16.mxu0 0
  %9057 = vmatpush1.bf16.msra.mxu0 %v1730
  %9058 = vmatprep.subr.bf16.mxu0 0
  %9059 = vmatpush1.bf16.msra.mxu0 %v1731
  %9060 = vmatprep.subr.bf16.mxu0 0
  %9061 = vmatpush1.bf16.msra.mxu0 %v1732
  %9062 = vmatprep.mubr.bf16.mxu0 %v8043
  %9063 = vmatmul.mubr.bf16.gmra.mrb[0].mxu0 %v8042
  %v9064 = vpop.f32.mrb[0].mxu0
  %v9065 = vadd.f32 %v8904, %v9064
  %v9066 = vpop.f32.mrb[0].mxu0
  %v9067 = vpop.f32.mrb[0].mxu0
  %v9068 = vadd.f32 %v8907, %v9067
  %v9069 = vpop.f32.mrb[0].mxu0
  %9070 = vmatprep.mubr.bf16.mxu0 %v8054
  %9071 = vmatmul.mubr.bf16.gmra.mrb[0].mxu0 %v8053
  %v9072 = vpop.f32.mrb[0].mxu0
  %v9073 = vadd.f32 %v8912, %v9072
  %v9074 = vpop.f32.mrb[0].mxu0
  %v9075 = vpop.f32.mrb[0].mxu0
  %v9076 = vadd.f32 %v8915, %v9075
  %v9077 = vpop.f32.mrb[0].mxu0
  %9078 = vmatprep.mubr.bf16.mxu0 %v8065
  %9079 = vmatmul.mubr.bf16.gmra.mrb[0].mxu0 %v8064
  %v9080 = vpop.f32.mrb[0].mxu0
  %v9081 = vadd.f32 %v8920, %v9080
  %v9082 = vpop.f32.mrb[0].mxu0
  %v9083 = vpop.f32.mrb[0].mxu0
  %v9084 = vadd.f32 %v8923, %v9083
  %v9085 = vpop.f32.mrb[0].mxu0
  %9086 = vmatprep.mubr.bf16.mxu0 %v8076
  %9087 = vmatmul.mubr.bf16.gmra.mrb[0].mxu0 %v8075
  %v9088 = vpop.f32.mrb[0].mxu0
  %v9089 = vadd.f32 %v8928, %v9088
  %v9090 = vpop.f32.mrb[0].mxu0
  %v9091 = vpop.f32.mrb[0].mxu0
  %v9092 = vadd.f32 %v8931, %v9091
  %v9093 = vpop.f32.mrb[0].mxu0
  %9094 = vmatprep.mubr.bf16.mxu0 %v8087
  %9095 = vmatmul.mubr.bf16.gmra.mrb[0].mxu0 %v8086
  %v9096 = vpop.f32.mrb[0].mxu0
  %v9097 = vadd.f32 %v8936, %v9096
  %v9098 = vpop.f32.mrb[0].mxu0
  %v9099 = vpop.f32.mrb[0].mxu0
  %v9100 = vadd.f32 %v8939, %v9099
  %v9101 = vpop.f32.mrb[0].mxu0
  %9102 = vmatprep.mubr.bf16.mxu0 %v8098
  %9103 = vmatmul.mubr.bf16.gmra.mrb[0].mxu0 %v8097
  %v9104 = vpop.f32.mrb[0].mxu0
  %v9105 = vadd.f32 %v8944, %v9104
  %v9106 = vpop.f32.mrb[0].mxu0
  %v9107 = vpop.f32.mrb[0].mxu0
  %v9108 = vadd.f32 %v8947, %v9107
  %v9109 = vpop.f32.mrb[0].mxu0
  %9110 = vmatprep.mubr.bf16.mxu0 %v8109
  %9111 = vmatmul.mubr.bf16.gmra.mrb[0].mxu0 %v8108
  %v9112 = vpop.f32.mrb[0].mxu0
  %v9113 = vadd.f32 %v8952, %v9112
  %v9114 = vpop.f32.mrb[0].mxu0
  %v9115 = vpop.f32.mrb[0].mxu0
  %v9116 = vadd.f32 %v8955, %v9115
  %v9117 = vpop.f32.mrb[0].mxu0
  %9118 = vmatprep.mubr.bf16.mxu0 %v8120
  %9119 = vmatmul.mubr.bf16.gmra.mrb[0].mxu0 %v8119
  %v9120 = vpop.f32.mrb[0].mxu0
  %v9121 = vadd.f32 %v8960, %v9120
  %v9122 = vpop.f32.mrb[0].mxu0
  %v9123 = vpop.f32.mrb[0].mxu0
  %v9124 = vadd.f32 %v8963, %v9123
  %v9125 = vpop.f32.mrb[0].mxu0
  %9126 = vmatprep.mubr.bf16.mxu0 %v8131
  %9127 = vmatmul.mubr.bf16.gmra.mrb[0].mxu0 %v8130
  %v9128 = vpop.f32.mrb[0].mxu0
  %v9129 = vadd.f32 %v8968, %v9128
  %v9130 = vpop.f32.mrb[0].mxu0
  %v9131 = vpop.f32.mrb[0].mxu0
  %v9132 = vadd.f32 %v8971, %v9131
  %v9133 = vpop.f32.mrb[0].mxu0
  %9134 = vmatprep.mubr.bf16.mxu0 %v8142
  %9135 = vmatmul.mubr.bf16.gmra.mrb[0].mxu0 %v8141
  %v9136 = vpop.f32.mrb[0].mxu0
  %v9137 = vadd.f32 %v8976, %v9136
  %v9138 = vpop.f32.mrb[0].mxu0
  %v9139 = vpop.f32.mrb[0].mxu0
  %v9140 = vadd.f32 %v8979, %v9139
  %v9141 = vpop.f32.mrb[0].mxu0
  %9142 = vmatprep.mubr.bf16.mxu0 %v8153
  %9143 = vmatmul.mubr.bf16.gmra.mrb[0].mxu0 %v8152
  %v9144 = vpop.f32.mrb[0].mxu0
  %v9145 = vadd.f32 %v8984, %v9144
  %v9146 = vpop.f32.mrb[0].mxu0
  %v9147 = vpop.f32.mrb[0].mxu0
  %v9148 = vadd.f32 %v8987, %v9147
  %v9149 = vpop.f32.mrb[0].mxu0
  %9150 = vmatprep.mubr.bf16.mxu0 %v8164
  %9151 = vmatmul.mubr.bf16.gmra.mrb[0].mxu0 %v8163
  %v9152 = vpop.f32.mrb[0].mxu0
  %v9153 = vadd.f32 %v8992, %v9152
  %v9154 = vpop.f32.mrb[0].mxu0
  %v9155 = vpop.f32.mrb[0].mxu0
  %v9156 = vadd.f32 %v8995, %v9155
  %v9157 = vpop.f32.mrb[0].mxu0
  %9158 = vmatprep.mubr.bf16.mxu0 %v8175
  %9159 = vmatmul.mubr.bf16.gmra.mrb[0].mxu0 %v8174
  %v9160 = vpop.f32.mrb[0].mxu0
  %v9161 = vadd.f32 %v9000, %v9160
  %v9162 = vpop.f32.mrb[0].mxu0
  %v9163 = vpop.f32.mrb[0].mxu0
  %v9164 = vadd.f32 %v9003, %v9163
  %v9165 = vpop.f32.mrb[0].mxu0
  %9166 = vmatprep.mubr.bf16.mxu0 %v8186
  %9167 = vmatmul.mubr.bf16.gmra.mrb[0].mxu0 %v8185
  %v9168 = vpop.f32.mrb[0].mxu0
  %v9169 = vadd.f32 %v9008, %v9168
  %v9170 = vpop.f32.mrb[0].mxu0
  %v9171 = vpop.f32.mrb[0].mxu0
  %v9172 = vadd.f32 %v9011, %v9171
  %v9173 = vpop.f32.mrb[0].mxu0
  %9174 = vmatprep.mubr.bf16.mxu0 %v8197
  %9175 = vmatmul.mubr.bf16.gmra.mrb[0].mxu0 %v8196
  %v9176 = vpop.f32.mrb[0].mxu0
  %v9177 = vadd.f32 %v9016, %v9176
  %v9178 = vpop.f32.mrb[0].mxu0
  %v9179 = vpop.f32.mrb[0].mxu0
  %v9180 = vadd.f32 %v9019, %v9179
  %v9181 = vpop.f32.mrb[0].mxu0
  %9182 = vmatprep.mubr.bf16.mxu0 %v8208
  %9183 = vmatmul.mubr.bf16.gmra.mrb[0].mxu0 %v8207
  %v9184 = vpop.f32.mrb[0].mxu0
  %v9185 = vadd.f32 %v9024, %v9184
  %v9186 = vpop.f32.mrb[0].mxu0
  %v9187 = vpop.f32.mrb[0].mxu0
  %v9188 = vadd.f32 %v9027, %v9187
  %v9189 = vpop.f32.mrb[0].mxu0
  %9190 = vdwg.mxu0
  %9191 = vmatprep.subr.bf16.mxu0 0
  %9192 = vmatpush1.bf16.msra.mxu0 %v1733
  %9193 = vmatprep.subr.bf16.mxu0 0
  %9194 = vmatpush1.bf16.msra.mxu0 %v1734
  %9195 = vmatprep.subr.bf16.mxu0 0
  %9196 = vmatpush1.bf16.msra.mxu0 %v1735
  %9197 = vmatprep.subr.bf16.mxu0 0
  %9198 = vmatpush1.bf16.msra.mxu0 %v1736
  %9199 = vmatprep.subr.bf16.mxu0 0
  %9200 = vmatpush1.bf16.msra.mxu0 %v1737
  %9201 = vmatprep.subr.bf16.mxu0 0
  %9202 = vmatpush1.bf16.msra.mxu0 %v1738
  %9203 = vmatprep.subr.bf16.mxu0 0
  %9204 = vmatpush1.bf16.msra.mxu0 %v1739
  %9205 = vmatprep.subr.bf16.mxu0 0
  %9206 = vmatpush1.bf16.msra.mxu0 %v1740
  %9207 = vmatprep.subr.bf16.mxu0 0
  %9208 = vmatpush1.bf16.msra.mxu0 0
  %9209 = vmatprep.subr.bf16.mxu0 0
  %9210 = vmatpush1.bf16.msra.mxu0 0
  %9211 = vmatprep.subr.bf16.mxu0 0
  %9212 = vmatpush1.bf16.msra.mxu0 0
  %9213 = vmatprep.subr.bf16.mxu0 0
  %9214 = vmatpush1.bf16.msra.mxu0 0
  %9215 = vmatprep.subr.bf16.mxu0 0
  %9216 = vmatpush1.bf16.msra.mxu0 0
  %9217 = vmatprep.subr.bf16.mxu0 0
  %9218 = vmatpush1.bf16.msra.mxu0 0
  %9219 = vmatprep.subr.bf16.mxu0 0
  %9220 = vmatpush1.bf16.msra.mxu0 0
  %9221 = vmatprep.subr.bf16.mxu0 0
  %9222 = vmatpush1.bf16.msra.mxu0 0
  %9223 = vmatprep.mubr.bf16.mxu0 0
  %9224 = vmatmul.mubr.bf16.gmra.mrb[0].mxu0 %v8044
  %v9225 = vpop.f32.mrb[0].mxu0
  %v9226 = vadd.f32 %v9065, %v9225
  %v9227 = vpop.f32.mrb[0].mxu0
  %v9228 = vpop.f32.mrb[0].mxu0
  %v9229 = vadd.f32 %v9068, %v9228
  %v9230 = vpop.f32.mrb[0].mxu0
  %9231 = vmatprep.mubr.bf16.mxu0 0
  %9232 = vmatmul.mubr.bf16.gmra.mrb[0].mxu0 %v8055
  %v9233 = vpop.f32.mrb[0].mxu0
  %v9234 = vadd.f32 %v9073, %v9233
  %v9235 = vpop.f32.mrb[0].mxu0
  %v9236 = vpop.f32.mrb[0].mxu0
  %v9237 = vadd.f32 %v9076, %v9236
  %v9238 = vpop.f32.mrb[0].mxu0
  %9239 = vmatprep.mubr.bf16.mxu0 0
  %9240 = vmatmul.mubr.bf16.gmra.mrb[0].mxu0 %v8066
  %v9241 = vpop.f32.mrb[0].mxu0
  %v9242 = vadd.f32 %v9081, %v9241
  %v9243 = vpop.f32.mrb[0].mxu0
  %v9244 = vpop.f32.mrb[0].mxu0
  %v9245 = vadd.f32 %v9084, %v9244
  %v9246 = vpop.f32.mrb[0].mxu0
  %9247 = vmatprep.mubr.bf16.mxu0 0
  %9248 = vmatmul.mubr.bf16.gmra.mrb[0].mxu0 %v8077
  %v9249 = vpop.f32.mrb[0].mxu0
  %v9250 = vadd.f32 %v9089, %v9249
  %v9251 = vpop.f32.mrb[0].mxu0
  %v9252 = vpop.f32.mrb[0].mxu0
  %v9253 = vadd.f32 %v9092, %v9252
  %v9254 = vpop.f32.mrb[0].mxu0
  %9255 = vmatprep.mubr.bf16.mxu0 0
  %9256 = vmatmul.mubr.bf16.gmra.mrb[0].mxu0 %v8088
  %v9257 = vpop.f32.mrb[0].mxu0
  %v9258 = vadd.f32 %v9097, %v9257
  %v9259 = vpop.f32.mrb[0].mxu0
  %v9260 = vpop.f32.mrb[0].mxu0
  %v9261 = vadd.f32 %v9100, %v9260
  %v9262 = vpop.f32.mrb[0].mxu0
  %9263 = vmatprep.mubr.bf16.mxu0 0
  %9264 = vmatmul.mubr.bf16.gmra.mrb[0].mxu0 %v8099
  %v9265 = vpop.f32.mrb[0].mxu0
  %v9266 = vadd.f32 %v9105, %v9265
  %v9267 = vpop.f32.mrb[0].mxu0
  %v9268 = vpop.f32.mrb[0].mxu0
  %v9269 = vadd.f32 %v9108, %v9268
  %v9270 = vpop.f32.mrb[0].mxu0
  %9271 = vmatprep.mubr.bf16.mxu0 0
  %9272 = vmatmul.mubr.bf16.gmra.mrb[0].mxu0 %v8110
  %v9273 = vpop.f32.mrb[0].mxu0
  %v9274 = vadd.f32 %v9113, %v9273
  %v9275 = vpop.f32.mrb[0].mxu0
  %v9276 = vpop.f32.mrb[0].mxu0
  %v9277 = vadd.f32 %v9116, %v9276
  %v9278 = vpop.f32.mrb[0].mxu0
  %9279 = vmatprep.mubr.bf16.mxu0 0
  %9280 = vmatmul.mubr.bf16.gmra.mrb[0].mxu0 %v8121
  %v9281 = vpop.f32.mrb[0].mxu0
  %v9282 = vadd.f32 %v9121, %v9281
  %v9283 = vpop.f32.mrb[0].mxu0
  %v9284 = vpop.f32.mrb[0].mxu0
  %v9285 = vadd.f32 %v9124, %v9284
  %v9286 = vpop.f32.mrb[0].mxu0
  %9287 = vmatprep.mubr.bf16.mxu0 0
  %9288 = vmatmul.mubr.bf16.gmra.mrb[0].mxu0 %v8132
  %v9289 = vpop.f32.mrb[0].mxu0
  %v9290 = vadd.f32 %v9129, %v9289
  %v9291 = vpop.f32.mrb[0].mxu0
  %v9292 = vpop.f32.mrb[0].mxu0
  %v9293 = vadd.f32 %v9132, %v9292
  %v9294 = vpop.f32.mrb[0].mxu0
  %9295 = vmatprep.mubr.bf16.mxu0 0
  %9296 = vmatmul.mubr.bf16.gmra.mrb[0].mxu0 %v8143
  %v9297 = vpop.f32.mrb[0].mxu0
  %v9298 = vadd.f32 %v9137, %v9297
  %v9299 = vpop.f32.mrb[0].mxu0
  %v9300 = vpop.f32.mrb[0].mxu0
  %v9301 = vadd.f32 %v9140, %v9300
  %v9302 = vpop.f32.mrb[0].mxu0
  %9303 = vmatprep.mubr.bf16.mxu0 0
  %9304 = vmatmul.mubr.bf16.gmra.mrb[0].mxu0 %v8154
  %v9305 = vpop.f32.mrb[0].mxu0
  %v9306 = vadd.f32 %v9145, %v9305
  %v9307 = vpop.f32.mrb[0].mxu0
  %v9308 = vpop.f32.mrb[0].mxu0
  %v9309 = vadd.f32 %v9148, %v9308
  %v9310 = vpop.f32.mrb[0].mxu0
  %9311 = vmatprep.mubr.bf16.mxu0 0
  %9312 = vmatmul.mubr.bf16.gmra.mrb[0].mxu0 %v8165
  %v9313 = vpop.f32.mrb[0].mxu0
  %v9314 = vadd.f32 %v9153, %v9313
  %v9315 = vpop.f32.mrb[0].mxu0
  %v9316 = vpop.f32.mrb[0].mxu0
  %v9317 = vadd.f32 %v9156, %v9316
  %v9318 = vpop.f32.mrb[0].mxu0
  %9319 = vmatprep.mubr.bf16.mxu0 0
  %9320 = vmatmul.mubr.bf16.gmra.mrb[0].mxu0 %v8176
  %v9321 = vpop.f32.mrb[0].mxu0
  %v9322 = vadd.f32 %v9161, %v9321
  %v9323 = vpop.f32.mrb[0].mxu0
  %v9324 = vpop.f32.mrb[0].mxu0
  %v9325 = vadd.f32 %v9164, %v9324
  %v9326 = vpop.f32.mrb[0].mxu0
  %9327 = vmatprep.mubr.bf16.mxu0 0
  %9328 = vmatmul.mubr.bf16.gmra.mrb[0].mxu0 %v8187
  %v9329 = vpop.f32.mrb[0].mxu0
  %v9330 = vadd.f32 %v9169, %v9329
  %v9331 = vpop.f32.mrb[0].mxu0
  %v9332 = vpop.f32.mrb[0].mxu0
  %v9333 = vadd.f32 %v9172, %v9332
  %v9334 = vpop.f32.mrb[0].mxu0
  %9335 = vmatprep.mubr.bf16.mxu0 0
  %9336 = vmatmul.mubr.bf16.gmra.mrb[0].mxu0 %v8198
  %v9337 = vpop.f32.mrb[0].mxu0
  %v9338 = vadd.f32 %v9177, %v9337
  %v9339 = vpop.f32.mrb[0].mxu0
  %v9340 = vpop.f32.mrb[0].mxu0
  %v9341 = vadd.f32 %v9180, %v9340
  %v9342 = vpop.f32.mrb[0].mxu0
  %9343 = vmatprep.mubr.bf16.mxu0 0
  %9344 = vmatmul.mubr.bf16.gmra.mrb[0].mxu0 %v8209
  %v9345 = vpop.f32.mrb[0].mxu0
  %v9346 = vadd.f32 %v9185, %v9345
  %v9347 = vpop.f32.mrb[0].mxu0
  %v9348 = vpop.f32.mrb[0].mxu0
  %v9349 = vadd.f32 %v9188, %v9348
  %v9350 = vpop.f32.mrb[0].mxu0
  %9351 = vdwg.mxu0
  %v9352 = vmul.f32 %v9226, %v2798
  %v9353 = vmul.f32 %v9229, %v2798
  %v9354 = vmul.f32 %v9234, %v2798
  %v9355 = vmul.f32 %v9237, %v2798
  %v9356 = vmul.f32 %v9242, %v2798
  %v9357 = vmul.f32 %v9245, %v2798
  %v9358 = vmul.f32 %v9250, %v2798
  %v9359 = vmul.f32 %v9253, %v2798
  %v9360 = vmul.f32 %v9258, %v2798
  %v9361 = vmul.f32 %v9261, %v2798
  %v9362 = vmul.f32 %v9266, %v2798
  %v9363 = vmul.f32 %v9269, %v2798
  %v9364 = vmul.f32 %v9274, %v2798
  %v9365 = vmul.f32 %v9277, %v2798
  %v9366 = vmul.f32 %v9282, %v2798
  %v9367 = vmul.f32 %v9285, %v2798
  %v9368 = vmul.f32 %v9290, %v2798
  %v9369 = vmul.f32 %v9293, %v2798
  %v9370 = vmul.f32 %v9298, %v2798
  %v9371 = vmul.f32 %v9301, %v2798
  %v9372 = vmul.f32 %v9306, %v2798
  %v9373 = vmul.f32 %v9309, %v2798
  %v9374 = vmul.f32 %v9314, %v2798
  %v9375 = vmul.f32 %v9317, %v2798
  %v9376 = vmul.f32 %v9322, %v2798
  %v9377 = vmul.f32 %v9325, %v2798
  %v9378 = vmul.f32 %v9330, %v2798
  %v9379 = vmul.f32 %v9333, %v2798
  %v9380 = vmul.f32 %v9338, %v2798
  %v9381 = vmul.f32 %v9341, %v2798
  %v9382 = vmul.f32 %v9346, %v2798
  %v9383 = vmul.f32 %v9349, %v2798
  %v9384 = vadd.f32 %v9352, %v2834
  %v9385 = vadd.f32 %v9353, %v2834
  %v9386 = vadd.f32 %v9354, %v2834
  %v9387 = vadd.f32 %v9355, %v2834
  %v9388 = vadd.f32 %v9356, %v2834
  %v9389 = vadd.f32 %v9357, %v2834
  %v9390 = vadd.f32 %v9358, %v2834
  %v9391 = vadd.f32 %v9359, %v2834
  %v9392 = vadd.f32 %v9360, %v2834
  %v9393 = vadd.f32 %v9361, %v2834
  %v9394 = vadd.f32 %v9362, %v2834
  %v9395 = vadd.f32 %v9363, %v2834
  %v9396 = vadd.f32 %v9364, %v2834
  %v9397 = vadd.f32 %v9365, %v2834
  %v9398 = vadd.f32 %v9366, %v2834
  %v9399 = vadd.f32 %v9367, %v2834
  %v9400 = vadd.f32 %v9368, %v2834
  %v9401 = vadd.f32 %v9369, %v2834
  %v9402 = vadd.f32 %v9370, %v2834
  %v9403 = vadd.f32 %v9371, %v2834
  %v9404 = vadd.f32 %v9372, %v2834
  %v9405 = vadd.f32 %v9373, %v2834
  %v9406 = vadd.f32 %v9374, %v2834
  %v9407 = vadd.f32 %v9375, %v2834
  %v9408 = vadd.f32 %v9376, %v2834
  %v9409 = vadd.f32 %v9377, %v2834
  %v9410 = vadd.f32 %v9378, %v2834
  %v9411 = vadd.f32 %v9379, %v2834
  %v9412 = vadd.f32 %v9380, %v2834
  %v9413 = vadd.f32 %v9381, %v2834
  %v9414 = vadd.f32 %v9382, %v2834
  %v9415 = vadd.f32 %v9383, %v2834
  %v9416 = vmax.f32 %v9384, 0.0
  %v9417 = vmax.f32 %v9385, 0.0
  %v9418 = vmax.f32 %v9386, 0.0
  %v9419 = vmax.f32 %v9387, 0.0
  %v9420 = vmax.f32 %v9388, 0.0
  %v9421 = vmax.f32 %v9389, 0.0
  %v9422 = vmax.f32 %v9390, 0.0
  %v9423 = vmax.f32 %v9391, 0.0
  %v9424 = vmax.f32 %v9392, 0.0
  %v9425 = vmax.f32 %v9393, 0.0
  %v9426 = vmax.f32 %v9394, 0.0
  %v9427 = vmax.f32 %v9395, 0.0
  %v9428 = vmax.f32 %v9396, 0.0
  %v9429 = vmax.f32 %v9397, 0.0
  %v9430 = vmax.f32 %v9398, 0.0
  %v9431 = vmax.f32 %v9399, 0.0
  %v9432 = vmax.f32 %v9400, 0.0
  %v9433 = vmax.f32 %v9401, 0.0
  %v9434 = vmax.f32 %v9402, 0.0
  %v9435 = vmax.f32 %v9403, 0.0
  %v9436 = vmax.f32 %v9404, 0.0
  %v9437 = vmax.f32 %v9405, 0.0
  %v9438 = vmax.f32 %v9406, 0.0
  %v9439 = vmax.f32 %v9407, 0.0
  %v9440 = vmax.f32 %v9408, 0.0
  %v9441 = vmax.f32 %v9409, 0.0
  %v9442 = vmax.f32 %v9410, 0.0
  %v9443 = vmax.f32 %v9411, 0.0
  %v9444 = vmax.f32 %v9412, 0.0
  %v9445 = vmax.f32 %v9413, 0.0
  %v9446 = vmax.f32 %v9414, 0.0
  %v9447 = vmax.f32 %v9415, 0.0
  %v9448 = vpack.c.bf16 %v9417, %v9416
  %v9449 = vpack.c.bf16 %v9419, %v9418
  %v9450 = vpack.c.bf16 %v9421, %v9420
  %v9451 = vpack.c.bf16 %v9423, %v9422
  %v9452 = vpack.c.bf16 %v9425, %v9424
  %v9453 = vpack.c.bf16 %v9427, %v9426
  %v9454 = vpack.c.bf16 %v9429, %v9428
  %v9455 = vpack.c.bf16 %v9431, %v9430
  %v9456 = vpack.c.bf16 %v9433, %v9432
  %v9457 = vpack.c.bf16 %v9435, %v9434
  %v9458 = vpack.c.bf16 %v9437, %v9436
  %v9459 = vpack.c.bf16 %v9439, %v9438
  %v9460 = vpack.c.bf16 %v9441, %v9440
  %v9461 = vpack.c.bf16 %v9443, %v9442
  %v9462 = vpack.c.bf16 %v9445, %v9444
  %v9463 = vpack.c.bf16 %v9447, %v9446
  %9464 = vst [vmem:[#allocation2 + $0x20] sm:$0xff] %v9448
  %9465 = vst [vmem:[#allocation2 + $0x48] sm:$0xff] %v9449
  %9466 = vst [vmem:[#allocation2 + $0x70] sm:$0xff] %v9450
  %9467 = vst [vmem:[#allocation2 + $0x98] sm:$0xff] %v9451
  %9468 = vst [vmem:[#allocation2 + $0xc0] sm:$0xff] %v9452
  %9469 = vst [vmem:[#allocation2 + $0xe8] sm:$0xff] %v9453
  %9470 = vst [vmem:[#allocation2 + $0x110] sm:$0xff] %v9454
  %9471 = vst [vmem:[#allocation2 + $0x138] sm:$0xff] %v9455
  %9472 = vst [vmem:[#allocation2 + $0x160] sm:$0xff] %v9456
  %9473 = vst [vmem:[#allocation2 + $0x188] sm:$0xff] %v9457
  %9474 = vst [vmem:[#allocation2 + $0x1b0] sm:$0xff] %v9458
  %9475 = vst [vmem:[#allocation2 + $0x1d8] sm:$0xff] %v9459
  %9476 = vst [vmem:[#allocation2 + $0x200] sm:$0xff] %v9460
  %9477 = vst [vmem:[#allocation2 + $0x228] sm:$0xff] %v9461
  %9478 = vst [vmem:[#allocation2 + $0x250] sm:$0xff] %v9462
  %9479 = vst [vmem:[#allocation2 + $0x278] sm:$0xff] %v9463
  %v9480 = vlaneseq
  %v9481 = vshrl.u32 %v9480, 7
  %v9482 = vadd.s32 %v9481, 8
  %v9483 = vadd.s32 %v9481, 16
  %v9484 = vadd.s32 %v9481, 24
  %v9485 = vadd.s32 %v9481, 32
  %v9486 = vadd.s32 %v9481, 40
  %v9487 = vadd.s32 %v9481, 48
  %v9488 = vadd.s32 %v9481, 56
  %v9489 = vadd.s32 %v9481, 64
  %v9490 = vadd.s32 %v9481, 72
  %v9491 = vadd.s32 %v9481, 80
  %v9492 = vadd.s32 %v9481, 88
  %v9493 = vadd.s32 %v9481, 96
  %v9494 = vadd.s32 %v9481, 104
  %v9495 = vadd.s32 %v9481, 112
  %v9496 = vadd.s32 %v9481, 120
  %v9497 = vadd.s32 %v9481, 128
  %v9498 = vadd.s32 %v9481, 136
  %v9499 = vadd.s32 %v9481, 144
  %v9500 = vadd.s32 %v9481, 152
  %v9501 = vadd.s32 %v9481, 160
  %v9502 = vadd.s32 %v9481, 168
  %v9503 = vadd.s32 %v9481, 176
  %v9504 = vadd.s32 %v9481, 184
  %v9505 = vadd.s32 %v9481, 192
  %v9506 = vadd.s32 %v9481, 200
  %v9507 = vadd.s32 %v9481, 208
  %v9508 = vadd.s32 %v9481, 216
  %v9509 = vadd.s32 %v9481, 224
  %v9510 = vadd.s32 %v9481, 232
  %v9511 = vadd.s32 %v9481, 240
  %v9512 = vadd.s32 %v9481, 248
  %vm9513 = vcmp.lt.s32.totalorder %v9481, 32
  %vm9514 = vcmp.lt.s32.totalorder %v9482, 32
  %vm9515 = vcmp.lt.s32.totalorder %v9483, 32
  %vm9516 = vcmp.lt.s32.totalorder %v9484, 32
  %vm9517 = vcmp.lt.s32.totalorder %v9485, 32
  %vm9518 = vcmp.lt.s32.totalorder %v9486, 32
  %vm9519 = vcmp.lt.s32.totalorder %v9487, 32
  %vm9520 = vcmp.lt.s32.totalorder %v9488, 32
  %vm9521 = vcmp.lt.s32.totalorder %v9489, 32
  %vm9522 = vcmp.lt.s32.totalorder %v9490, 32
  %vm9523 = vcmp.lt.s32.totalorder %v9491, 32
  %vm9524 = vcmp.lt.s32.totalorder %v9492, 32
  %vm9525 = vcmp.lt.s32.totalorder %v9493, 32
  %vm9526 = vcmp.lt.s32.totalorder %v9494, 32
  %vm9527 = vcmp.lt.s32.totalorder %v9495, 32
  %vm9528 = vcmp.lt.s32.totalorder %v9496, 32
  %vm9529 = vcmp.lt.s32.totalorder %v9497, 32
  %vm9530 = vcmp.lt.s32.totalorder %v9498, 32
  %vm9531 = vcmp.lt.s32.totalorder %v9499, 32
  %vm9532 = vcmp.lt.s32.totalorder %v9500, 32
  %vm9533 = vcmp.lt.s32.totalorder %v9501, 32
  %vm9534 = vcmp.lt.s32.totalorder %v9502, 32
  %vm9535 = vcmp.lt.s32.totalorder %v9503, 32
  %vm9536 = vcmp.lt.s32.totalorder %v9504, 32
  %vm9537 = vcmp.lt.s32.totalorder %v9505, 32
  %vm9538 = vcmp.lt.s32.totalorder %v9506, 32
  %vm9539 = vcmp.lt.s32.totalorder %v9507, 32
  %vm9540 = vcmp.lt.s32.totalorder %v9508, 32
  %vm9541 = vcmp.lt.s32.totalorder %v9509, 32
  %vm9542 = vcmp.lt.s32.totalorder %v9510, 32
  %vm9543 = vcmp.lt.s32.totalorder %v9511, 32
  %vm9544 = vcmp.lt.s32.totalorder %v9512, 32
  %v9545 = vsel %vm9513, 0.0, %v9444
  %v9546 = vsel %vm9514, 0.0, %v9445
  %v9547 = vsel %vm9515, 0.0, %v9446
  %v9548 = vsel %vm9516, 0.0, %v9447
  %v9549 = vsel %vm9517, 0.0, %v9416
  %v9550 = vsel %vm9518, 0.0, %v9417
  %v9551 = vsel %vm9519, 0.0, %v9418
  %v9552 = vsel %vm9520, 0.0, %v9419
  %v9553 = vsel %vm9521, 0.0, %v9420
  %v9554 = vsel %vm9522, 0.0, %v9421
  %v9555 = vsel %vm9523, 0.0, %v9422
  %v9556 = vsel %vm9524, 0.0, %v9423
  %v9557 = vsel %vm9525, 0.0, %v9424
  %v9558 = vsel %vm9526, 0.0, %v9425
  %v9559 = vsel %vm9527, 0.0, %v9426
  %v9560 = vsel %vm9528, 0.0, %v9427
  %v9561 = vsel %vm9529, 0.0, %v9428
  %v9562 = vsel %vm9530, 0.0, %v9429
  %v9563 = vsel %vm9531, 0.0, %v9430
  %v9564 = vsel %vm9532, 0.0, %v9431
  %v9565 = vsel %vm9533, 0.0, %v9432
  %v9566 = vsel %vm9534, 0.0, %v9433
  %v9567 = vsel %vm9535, 0.0, %v9434
  %v9568 = vsel %vm9536, 0.0, %v9435
  %v9569 = vsel %vm9537, 0.0, %v9436
  %v9570 = vsel %vm9538, 0.0, %v9437
  %v9571 = vsel %vm9539, 0.0, %v9438
  %v9572 = vsel %vm9540, 0.0, %v9439
  %v9573 = vsel %vm9541, 0.0, %v9440
  %v9574 = vsel %vm9542, 0.0, %v9441
  %v9575 = vsel %vm9543, 0.0, %v9442
  %v9576 = vsel %vm9544, 0.0, %v9443
  %v9577 = vpack.c.bf16 %v9546, %v9545
  %v9578 = vpack.c.bf16 %v9548, %v9547
  %v9579 = vpack.c.bf16 %v9550, %v9549
  %v9580 = vpack.c.bf16 %v9552, %v9551
  %v9581 = vpack.c.bf16 %v9554, %v9553
  %v9582 = vpack.c.bf16 %v9556, %v9555
  %v9583 = vpack.c.bf16 %v9558, %v9557
  %v9584 = vpack.c.bf16 %v9560, %v9559
  %v9585 = vpack.c.bf16 %v9562, %v9561
  %v9586 = vpack.c.bf16 %v9564, %v9563
  %v9587 = vpack.c.bf16 %v9566, %v9565
  %v9588 = vpack.c.bf16 %v9568, %v9567
  %v9589 = vpack.c.bf16 %v9570, %v9569
  %v9590 = vpack.c.bf16 %v9572, %v9571
  %v9591 = vpack.c.bf16 %v9574, %v9573
  %v9592 = vpack.c.bf16 %v9576, %v9575
  %9593 = vst [vmem:[#allocation2] sm:$0xff] %v9577
  %9594 = vst [vmem:[#allocation2 + $0x28] sm:$0xff] %v9578
  %9595 = vst [vmem:[#allocation2 + $0x50] sm:$0xff] %v9579
  %9596 = vst [vmem:[#allocation2 + $0x78] sm:$0xff] %v9580
  %9597 = vst [vmem:[#allocation2 + $0xa0] sm:$0xff] %v9581
  %9598 = vst [vmem:[#allocation2 + $0xc8] sm:$0xff] %v9582
  %9599 = vst [vmem:[#allocation2 + $0xf0] sm:$0xff] %v9583
  %9600 = vst [vmem:[#allocation2 + $0x118] sm:$0xff] %v9584
  %9601 = vst [vmem:[#allocation2 + $0x140] sm:$0xff] %v9585
  %9602 = vst [vmem:[#allocation2 + $0x168] sm:$0xff] %v9586
  %9603 = vst [vmem:[#allocation2 + $0x190] sm:$0xff] %v9587
  %9604 = vst [vmem:[#allocation2 + $0x1b8] sm:$0xff] %v9588
  %9605 = vst [vmem:[#allocation2 + $0x1e0] sm:$0xff] %v9589
  %9606 = vst [vmem:[#allocation2 + $0x208] sm:$0xff] %v9590
  %9607 = vst [vmem:[#allocation2 + $0x230] sm:$0xff] %v9591
  %9608 = vst [vmem:[#allocation2 + $0x258] sm:$0xff] %v9592
  %v9609 = vld [vmem:[%s3] sm:$0xf]
  %v9610 = vld [vmem:[%s3 + $0x4] sm:$0xf]
  %v9611 = vld [vmem:[%s3 + $0x8] sm:$0xf]
  %v9612 = vld [vmem:[%s3 + $0xc] sm:$0xf]
  %v9613 = vld [vmem:[%s3 + $0x10] sm:$0xf]
  %v9614 = vld [vmem:[%s3 + $0x14] sm:$0xf]
  %v9615 = vld [vmem:[%s3 + $0x18] sm:$0xf]
  %v9616 = vld [vmem:[%s3 + $0x1c] sm:$0xf]
  %v9617 = vld [vmem:[%s3 + $0x20] sm:$0xf]
  %v9618 = vld [vmem:[%s3 + $0x24] sm:$0xf]
  %v9619 = vld [vmem:[%s3 + $0x28] sm:$0xf]
  %v9620 = vld [vmem:[%s3 + $0x2c] sm:$0xf]
  %v9621 = vld [vmem:[%s3 + $0x30] sm:$0xf]
  %v9622 = vld [vmem:[%s3 + $0x34] sm:$0xf]
  %v9623 = vld [vmem:[%s3 + $0x38] sm:$0xf]
  %v9624 = vld [vmem:[%s3 + $0x3c] sm:$0xf]
  %v9625 = vld [vmem:[%s3 + $0x40] sm:$0xf]
  %v9626 = vld [vmem:[%s3 + $0x44] sm:$0xf]
  %v9627 = vld [vmem:[%s3 + $0x48] sm:$0xf]
  %v9628 = vld [vmem:[%s3 + $0x4c] sm:$0xf]
  %v9629 = vld [vmem:[%s3 + $0x50] sm:$0xf]
  %v9630 = vld [vmem:[%s3 + $0x54] sm:$0xf]
  %v9631 = vld [vmem:[%s3 + $0x58] sm:$0xf]
  %v9632 = vld [vmem:[%s3 + $0x5c] sm:$0xf]
  %v9633 = vld [vmem:[%s3 + $0x60] sm:$0xf]
  %v9634 = vld [vmem:[%s3 + $0x64] sm:$0xf]
  %v9635 = vld [vmem:[%s3 + $0x68] sm:$0xf]
  %v9636 = vld [vmem:[%s3 + $0x6c] sm:$0xf]
  %v9637 = vld [vmem:[%s3 + $0x70] sm:$0xf]
  %v9638 = vld [vmem:[%s3 + $0x74] sm:$0xf]
  %v9639 = vld [vmem:[%s3 + $0x78] sm:$0xf]
  %v9640 = vld [vmem:[%s3 + $0x7c] sm:$0xf]
  %v9641 = vld [vmem:[%s3 + $0x80] sm:$0xf]
  %v9642 = vld [vmem:[%s3 + $0x84] sm:$0xf]
  %v9643 = vld [vmem:[%s3 + $0x88] sm:$0xf]
  %v9644 = vld [vmem:[%s3 + $0x8c] sm:$0xf]
  %v9645 = vld [vmem:[%s3 + $0x90] sm:$0xf]
  %v9646 = vld [vmem:[%s3 + $0x94] sm:$0xf]
  %v9647 = vld [vmem:[%s3 + $0x98] sm:$0xf]
  %v9648 = vld [vmem:[%s3 + $0x9c] sm:$0xf]
  %v9649 = vld [vmem:[%s3 + $0xa0] sm:$0xf]
  %v9650 = vld [vmem:[%s3 + $0xa4] sm:$0xf]
  %v9651 = vld [vmem:[%s3 + $0xa8] sm:$0xf]
  %v9652 = vld [vmem:[%s3 + $0xac] sm:$0xf]
  %v9653 = vld [vmem:[%s3 + $0xb0] sm:$0xf]
  %v9654 = vld [vmem:[%s3 + $0xb4] sm:$0xf]
  %v9655 = vld [vmem:[%s3 + $0xb8] sm:$0xf]
  %v9656 = vld [vmem:[%s3 + $0xbc] sm:$0xf]
  %v9657 = vld [vmem:[#allocation2] sm:$0xff]
  %v9658 = vld [vmem:[#allocation2 + $0x8] sm:$0xff]
  %v9659 = vld [vmem:[#allocation2 + $0x10] sm:$0xff]
  %v9660 = vld [vmem:[#allocation2 + $0x28] sm:$0xff]
  %v9661 = vld [vmem:[#allocation2 + $0x30] sm:$0xff]
  %v9662 = vld [vmem:[#allocation2 + $0x38] sm:$0xff]
  %v9663 = vld [vmem:[#allocation2 + $0x50] sm:$0xff]
  %v9664 = vld [vmem:[#allocation2 + $0x58] sm:$0xff]
  %v9665 = vld [vmem:[#allocation2 + $0x60] sm:$0xff]
  %v9666 = vld [vmem:[#allocation2 + $0x78] sm:$0xff]
  %v9667 = vld [vmem:[#allocation2 + $0x80] sm:$0xff]
  %v9668 = vld [vmem:[#allocation2 + $0x88] sm:$0xff]
  %v9669 = vld [vmem:[#allocation2 + $0xa0] sm:$0xff]
  %v9670 = vld [vmem:[#allocation2 + $0xa8] sm:$0xff]
  %v9671 = vld [vmem:[#allocation2 + $0xb0] sm:$0xff]
  %v9672 = vld [vmem:[#allocation2 + $0xc8] sm:$0xff]
  %v9673 = vld [vmem:[#allocation2 + $0xd0] sm:$0xff]
  %v9674 = vld [vmem:[#allocation2 + $0xd8] sm:$0xff]
  %v9675 = vld [vmem:[#allocation2 + $0xf0] sm:$0xff]
  %v9676 = vld [vmem:[#allocation2 + $0xf8] sm:$0xff]
  %v9677 = vld [vmem:[#allocation2 + $0x100] sm:$0xff]
  %v9678 = vld [vmem:[#allocation2 + $0x118] sm:$0xff]
  %v9679 = vld [vmem:[#allocation2 + $0x120] sm:$0xff]
  %v9680 = vld [vmem:[#allocation2 + $0x128] sm:$0xff]
  %v9681 = vld [vmem:[#allocation2 + $0x140] sm:$0xff]
  %v9682 = vld [vmem:[#allocation2 + $0x148] sm:$0xff]
  %v9683 = vld [vmem:[#allocation2 + $0x150] sm:$0xff]
  %v9684 = vld [vmem:[#allocation2 + $0x168] sm:$0xff]
  %v9685 = vld [vmem:[#allocation2 + $0x170] sm:$0xff]
  %v9686 = vld [vmem:[#allocation2 + $0x178] sm:$0xff]
  %v9687 = vld [vmem:[#allocation2 + $0x190] sm:$0xff]
  %v9688 = vld [vmem:[#allocation2 + $0x198] sm:$0xff]
  %v9689 = vld [vmem:[#allocation2 + $0x1a0] sm:$0xff]
  %v9690 = vld [vmem:[#allocation2 + $0x1b8] sm:$0xff]
  %v9691 = vld [vmem:[#allocation2 + $0x1c0] sm:$0xff]
  %v9692 = vld [vmem:[#allocation2 + $0x1c8] sm:$0xff]
  %v9693 = vld [vmem:[#allocation2 + $0x1e0] sm:$0xff]
  %v9694 = vld [vmem:[#allocation2 + $0x1e8] sm:$0xff]
  %v9695 = vld [vmem:[#allocation2 + $0x1f0] sm:$0xff]
  %v9696 = vld [vmem:[#allocation2 + $0x208] sm:$0xff]
  %v9697 = vld [vmem:[#allocation2 + $0x210] sm:$0xff]
  %v9698 = vld [vmem:[#allocation2 + $0x218] sm:$0xff]
  %v9699 = vld [vmem:[#allocation2 + $0x230] sm:$0xff]
  %v9700 = vld [vmem:[#allocation2 + $0x238] sm:$0xff]
  %v9701 = vld [vmem:[#allocation2 + $0x240] sm:$0xff]
  %v9702 = vld [vmem:[#allocation2 + $0x258] sm:$0xff]
  %v9703 = vld [vmem:[#allocation2 + $0x260] sm:$0xff]
  %v9704 = vld [vmem:[#allocation2 + $0x268] sm:$0xff]
  %v9753 = vunpack.c.l.b16 %v9609
  %v9754 = vunpack.c.l.b16 %v9610
  %v9755 = vunpack.c.l.b16 %v9611
  %v9756 = vunpack.c.l.b16 %v9612
  %v9757 = vunpack.c.l.b16 %v9613
  %v9758 = vunpack.c.l.b16 %v9614
  %v9759 = vunpack.c.l.b16 %v9615
  %v9760 = vunpack.c.l.b16 %v9616
  %v9761 = vunpack.c.l.b16 %v9617
  %v9762 = vunpack.c.l.b16 %v9618
  %v9763 = vunpack.c.l.b16 %v9619
  %v9764 = vunpack.c.l.b16 %v9620
  %v9765 = vunpack.c.l.b16 %v9621
  %v9766 = vunpack.c.l.b16 %v9622
  %v9767 = vunpack.c.l.b16 %v9623
  %v9768 = vunpack.c.l.b16 %v9624
  %v9769 = vunpack.c.l.b16 %v9625
  %v9770 = vunpack.c.l.b16 %v9626
  %v9771 = vunpack.c.l.b16 %v9627
  %v9772 = vunpack.c.l.b16 %v9628
  %v9773 = vunpack.c.l.b16 %v9629
  %v9774 = vunpack.c.l.b16 %v9630
  %v9775 = vunpack.c.l.b16 %v9631
  %v9776 = vunpack.c.l.b16 %v9632
  %v9777 = vunpack.c.l.b16 %v9633
  %v9778 = vunpack.c.l.b16 %v9634
  %v9779 = vunpack.c.l.b16 %v9635
  %v9780 = vunpack.c.l.b16 %v9636
  %v9781 = vunpack.c.l.b16 %v9637
  %v9782 = vunpack.c.l.b16 %v9638
  %v9783 = vunpack.c.l.b16 %v9639
  %v9784 = vunpack.c.l.b16 %v9640
  %v9785 = vunpack.c.l.b16 %v9641
  %v9786 = vunpack.c.l.b16 %v9642
  %v9787 = vunpack.c.l.b16 %v9643
  %v9788 = vunpack.c.l.b16 %v9644
  %v9789 = vunpack.c.l.b16 %v9645
  %v9790 = vunpack.c.l.b16 %v9646
  %v9791 = vunpack.c.l.b16 %v9647
  %v9792 = vunpack.c.l.b16 %v9648
  %v9793 = vunpack.c.l.b16 %v9649
  %v9794 = vunpack.c.l.b16 %v9650
  %v9795 = vunpack.c.l.b16 %v9651
  %v9796 = vunpack.c.l.b16 %v9652
  %v9797 = vunpack.c.l.b16 %v9653
  %v9798 = vunpack.c.l.b16 %v9654
  %v9799 = vunpack.c.l.b16 %v9655
  %v9800 = vunpack.c.l.b16 %v9656
  %v9801 = vpack.c.b16 %v9754, %v9753
  %v9802 = vpack.c.b16 %v9756, %v9755
  %v9803 = vpack.c.b16 %v9758, %v9757
  %v9804 = vpack.c.b16 %v9760, %v9759
  %v9805 = vpack.c.b16 %v9762, %v9761
  %v9806 = vpack.c.b16 %v9764, %v9763
  %v9807 = vpack.c.b16 %v9766, %v9765
  %v9808 = vpack.c.b16 %v9768, %v9767
  %v9809 = vpack.c.b16 %v9770, %v9769
  %v9810 = vpack.c.b16 %v9772, %v9771
  %v9811 = vpack.c.b16 %v9774, %v9773
  %v9812 = vpack.c.b16 %v9776, %v9775
  %v9813 = vpack.c.b16 %v9778, %v9777
  %v9814 = vpack.c.b16 %v9780, %v9779
  %v9815 = vpack.c.b16 %v9782, %v9781
  %v9816 = vpack.c.b16 %v9784, %v9783
  %v9817 = vpack.c.b16 %v9786, %v9785
  %v9818 = vpack.c.b16 %v9788, %v9787
  %v9819 = vpack.c.b16 %v9790, %v9789
  %v9820 = vpack.c.b16 %v9792, %v9791
  %v9821 = vpack.c.b16 %v9794, %v9793
  %v9822 = vpack.c.b16 %v9796, %v9795
  %v9823 = vpack.c.b16 %v9798, %v9797
  %v9824 = vpack.c.b16 %v9800, %v9799
  %9849 = vmatprep.subr.bf16.mxu0 0
  %9850 = vmatpush1.bf16.msra.mxu0 %v9801
  %9851 = vmatprep.subr.bf16.mxu0 0
  %9852 = vmatpush1.bf16.msra.mxu0 %v9802
  %9853 = vmatprep.subr.bf16.mxu0 0
  %9854 = vmatpush1.bf16.msra.mxu0 %v9803
  %9855 = vmatprep.subr.bf16.mxu0 0
  %9856 = vmatpush1.bf16.msra.mxu0 %v9804
  %9857 = vmatprep.subr.bf16.mxu0 0
  %9858 = vmatpush1.bf16.msra.mxu0 %v9805
  %9859 = vmatprep.subr.bf16.mxu0 0
  %9860 = vmatpush1.bf16.msra.mxu0 %v9806
  %9861 = vmatprep.subr.bf16.mxu0 0
  %9862 = vmatpush1.bf16.msra.mxu0 %v9807
  %9863 = vmatprep.subr.bf16.mxu0 0
  %9864 = vmatpush1.bf16.msra.mxu0 %v9808
  %9865 = vmatprep.subr.bf16.mxu0 0
  %9866 = vmatpush1.bf16.msra.mxu0 %v9809
  %9867 = vmatprep.subr.bf16.mxu0 0
  %9868 = vmatpush1.bf16.msra.mxu0 %v9810
  %9869 = vmatprep.subr.bf16.mxu0 0
  %9870 = vmatpush1.bf16.msra.mxu0 %v9811
  %9871 = vmatprep.subr.bf16.mxu0 0
  %9872 = vmatpush1.bf16.msra.mxu0 %v9812
  %9873 = vmatprep.subr.bf16.mxu0 0
  %9874 = vmatpush1.bf16.msra.mxu0 %v9813
  %9875 = vmatprep.subr.bf16.mxu0 0
  %9876 = vmatpush1.bf16.msra.mxu0 %v9814
  %9877 = vmatprep.subr.bf16.mxu0 0
  %9878 = vmatpush1.bf16.msra.mxu0 %v9815
  %9879 = vmatprep.subr.bf16.mxu0 0
  %9880 = vmatpush1.bf16.msra.mxu0 %v9816
  %9881 = vmatprep.mubr.bf16.mxu0 %v9658
  %9882 = vmatmul.mubr.bf16.gmra.mrb[0].mxu0 %v9657
  %v9883 = vpop.f32.mrb[0].mxu0
  %v9884 = vadd.f32 0.0, %v9883
  %v9885 = vpop.f32.mrb[0].mxu0
  %v9886 = vpop.f32.mrb[0].mxu0
  %v9887 = vadd.f32 0.0, %v9886
  %v9888 = vpop.f32.mrb[0].mxu0
  %9889 = vmatprep.mubr.bf16.mxu0 %v9661
  %9890 = vmatmul.mubr.bf16.gmra.mrb[0].mxu0 %v9660
  %v9891 = vpop.f32.mrb[0].mxu0
  %v9892 = vadd.f32 0.0, %v9891
  %v9893 = vpop.f32.mrb[0].mxu0
  %v9894 = vpop.f32.mrb[0].mxu0
  %v9895 = vadd.f32 0.0, %v9894
  %v9896 = vpop.f32.mrb[0].mxu0
  %9897 = vmatprep.mubr.bf16.mxu0 %v9664
  %9898 = vmatmul.mubr.bf16.gmra.mrb[0].mxu0 %v9663
  %v9899 = vpop.f32.mrb[0].mxu0
  %v9900 = vadd.f32 0.0, %v9899
  %v9901 = vpop.f32.mrb[0].mxu0
  %v9902 = vpop.f32.mrb[0].mxu0
  %v9903 = vadd.f32 0.0, %v9902
  %v9904 = vpop.f32.mrb[0].mxu0
  %9905 = vmatprep.mubr.bf16.mxu0 %v9667
  %9906 = vmatmul.mubr.bf16.gmra.mrb[0].mxu0 %v9666
  %v9907 = vpop.f32.mrb[0].mxu0
  %v9908 = vadd.f32 0.0, %v9907
  %v9909 = vpop.f32.mrb[0].mxu0
  %v9910 = vpop.f32.mrb[0].mxu0
  %v9911 = vadd.f32 0.0, %v9910
  %v9912 = vpop.f32.mrb[0].mxu0
  %9913 = vmatprep.mubr.bf16.mxu0 %v9670
  %9914 = vmatmul.mubr.bf16.gmra.mrb[0].mxu0 %v9669
  %v9915 = vpop.f32.mrb[0].mxu0
  %v9916 = vadd.f32 0.0, %v9915
  %v9917 = vpop.f32.mrb[0].mxu0
  %v9918 = vpop.f32.mrb[0].mxu0
  %v9919 = vadd.f32 0.0, %v9918
  %v9920 = vpop.f32.mrb[0].mxu0
  %9921 = vmatprep.mubr.bf16.mxu0 %v9673
  %9922 = vmatmul.mubr.bf16.gmra.mrb[0].mxu0 %v9672
  %v9923 = vpop.f32.mrb[0].mxu0
  %v9924 = vadd.f32 0.0, %v9923
  %v9925 = vpop.f32.mrb[0].mxu0
  %v9926 = vpop.f32.mrb[0].mxu0
  %v9927 = vadd.f32 0.0, %v9926
  %v9928 = vpop.f32.mrb[0].mxu0
  %9929 = vmatprep.mubr.bf16.mxu0 %v9676
  %9930 = vmatmul.mubr.bf16.gmra.mrb[0].mxu0 %v9675
  %v9931 = vpop.f32.mrb[0].mxu0
  %v9932 = vadd.f32 0.0, %v9931
  %v9933 = vpop.f32.mrb[0].mxu0
  %v9934 = vpop.f32.mrb[0].mxu0
  %v9935 = vadd.f32 0.0, %v9934
  %v9936 = vpop.f32.mrb[0].mxu0
  %9937 = vmatprep.mubr.bf16.mxu0 %v9679
  %9938 = vmatmul.mubr.bf16.gmra.mrb[0].mxu0 %v9678
  %v9939 = vpop.f32.mrb[0].mxu0
  %v9940 = vadd.f32 0.0, %v9939
  %v9941 = vpop.f32.mrb[0].mxu0
  %v9942 = vpop.f32.mrb[0].mxu0
  %v9943 = vadd.f32 0.0, %v9942
  %v9944 = vpop.f32.mrb[0].mxu0
  %9945 = vmatprep.mubr.bf16.mxu0 %v9682
  %9946 = vmatmul.mubr.bf16.gmra.mrb[0].mxu0 %v9681
  %v9947 = vpop.f32.mrb[0].mxu0
  %v9948 = vadd.f32 0.0, %v9947
  %v9949 = vpop.f32.mrb[0].mxu0
  %v9950 = vpop.f32.mrb[0].mxu0
  %v9951 = vadd.f32 0.0, %v9950
  %v9952 = vpop.f32.mrb[0].mxu0
  %9953 = vmatprep.mubr.bf16.mxu0 %v9685
  %9954 = vmatmul.mubr.bf16.gmra.mrb[0].mxu0 %v9684
  %v9955 = vpop.f32.mrb[0].mxu0
  %v9956 = vadd.f32 0.0, %v9955
  %v9957 = vpop.f32.mrb[0].mxu0
  %v9958 = vpop.f32.mrb[0].mxu0
  %v9959 = vadd.f32 0.0, %v9958
  %v9960 = vpop.f32.mrb[0].mxu0
  %9961 = vmatprep.mubr.bf16.mxu0 %v9688
  %9962 = vmatmul.mubr.bf16.gmra.mrb[0].mxu0 %v9687
  %v9963 = vpop.f32.mrb[0].mxu0
  %v9964 = vadd.f32 0.0, %v9963
  %v9965 = vpop.f32.mrb[0].mxu0
  %v9966 = vpop.f32.mrb[0].mxu0
  %v9967 = vadd.f32 0.0, %v9966
  %v9968 = vpop.f32.mrb[0].mxu0
  %9969 = vmatprep.mubr.bf16.mxu0 %v9691
  %9970 = vmatmul.mubr.bf16.gmra.mrb[0].mxu0 %v9690
  %v9971 = vpop.f32.mrb[0].mxu0
  %v9972 = vadd.f32 0.0, %v9971
  %v9973 = vpop.f32.mrb[0].mxu0
  %v9974 = vpop.f32.mrb[0].mxu0
  %v9975 = vadd.f32 0.0, %v9974
  %v9976 = vpop.f32.mrb[0].mxu0
  %9977 = vmatprep.mubr.bf16.mxu0 %v9694
  %9978 = vmatmul.mubr.bf16.gmra.mrb[0].mxu0 %v9693
  %v9979 = vpop.f32.mrb[0].mxu0
  %v9980 = vadd.f32 0.0, %v9979
  %v9981 = vpop.f32.mrb[0].mxu0
  %v9982 = vpop.f32.mrb[0].mxu0
  %v9983 = vadd.f32 0.0, %v9982
  %v9984 = vpop.f32.mrb[0].mxu0
  %9985 = vmatprep.mubr.bf16.mxu0 %v9697
  %9986 = vmatmul.mubr.bf16.gmra.mrb[0].mxu0 %v9696
  %v9987 = vpop.f32.mrb[0].mxu0
  %v9988 = vadd.f32 0.0, %v9987
  %v9989 = vpop.f32.mrb[0].mxu0
  %v9990 = vpop.f32.mrb[0].mxu0
  %v9991 = vadd.f32 0.0, %v9990
  %v9992 = vpop.f32.mrb[0].mxu0
  %9993 = vmatprep.mubr.bf16.mxu0 %v9700
  %9994 = vmatmul.mubr.bf16.gmra.mrb[0].mxu0 %v9699
  %v9995 = vpop.f32.mrb[0].mxu0
  %v9996 = vadd.f32 0.0, %v9995
  %v9997 = vpop.f32.mrb[0].mxu0
  %v9998 = vpop.f32.mrb[0].mxu0
  %v9999 = vadd.f32 0.0, %v9998
  %v10000 = vpop.f32.mrb[0].mxu0
  %10001 = vmatprep.mubr.bf16.mxu0 %v9703
  %10002 = vmatmul.mubr.bf16.gmra.mrb[0].mxu0 %v9702
  %v10003 = vpop.f32.mrb[0].mxu0
  %v10004 = vadd.f32 0.0, %v10003
  %v10005 = vpop.f32.mrb[0].mxu0
  %v10006 = vpop.f32.mrb[0].mxu0
  %v10007 = vadd.f32 0.0, %v10006
  %v10008 = vpop.f32.mrb[0].mxu0
  %10009 = vdwg.mxu0
  %10010 = vmatprep.subr.bf16.mxu0 0
  %10011 = vmatpush1.bf16.msra.mxu0 %v9817
  %10012 = vmatprep.subr.bf16.mxu0 0
  %10013 = vmatpush1.bf16.msra.mxu0 %v9818
  %10014 = vmatprep.subr.bf16.mxu0 0
  %10015 = vmatpush1.bf16.msra.mxu0 %v9819
  %10016 = vmatprep.subr.bf16.mxu0 0
  %10017 = vmatpush1.bf16.msra.mxu0 %v9820
  %10018 = vmatprep.subr.bf16.mxu0 0
  %10019 = vmatpush1.bf16.msra.mxu0 %v9821
  %10020 = vmatprep.subr.bf16.mxu0 0
  %10021 = vmatpush1.bf16.msra.mxu0 %v9822
  %10022 = vmatprep.subr.bf16.mxu0 0
  %10023 = vmatpush1.bf16.msra.mxu0 %v9823
  %10024 = vmatprep.subr.bf16.mxu0 0
  %10025 = vmatpush1.bf16.msra.mxu0 %v9824
  %10026 = vmatprep.subr.bf16.mxu0 0
  %10027 = vmatpush1.bf16.msra.mxu0 0
  %10028 = vmatprep.subr.bf16.mxu0 0
  %10029 = vmatpush1.bf16.msra.mxu0 0
  %10030 = vmatprep.subr.bf16.mxu0 0
  %10031 = vmatpush1.bf16.msra.mxu0 0
  %10032 = vmatprep.subr.bf16.mxu0 0
  %10033 = vmatpush1.bf16.msra.mxu0 0
  %10034 = vmatprep.subr.bf16.mxu0 0
  %10035 = vmatpush1.bf16.msra.mxu0 0
  %10036 = vmatprep.subr.bf16.mxu0 0
  %10037 = vmatpush1.bf16.msra.mxu0 0
  %10038 = vmatprep.subr.bf16.mxu0 0
  %10039 = vmatpush1.bf16.msra.mxu0 0
  %10040 = vmatprep.subr.bf16.mxu0 0
  %10041 = vmatpush1.bf16.msra.mxu0 0
  %10042 = vmatprep.mubr.bf16.mxu0 0
  %10043 = vmatmul.mubr.bf16.gmra.mrb[0].mxu0 %v9659
  %v10044 = vpop.f32.mrb[0].mxu0
  %v10045 = vadd.f32 %v9884, %v10044
  %v10046 = vpop.f32.mrb[0].mxu0
  %v10047 = vpop.f32.mrb[0].mxu0
  %v10048 = vadd.f32 %v9887, %v10047
  %v10049 = vpop.f32.mrb[0].mxu0
  %10050 = vmatprep.mubr.bf16.mxu0 0
  %10051 = vmatmul.mubr.bf16.gmra.mrb[0].mxu0 %v9662
  %v10052 = vpop.f32.mrb[0].mxu0
  %v10053 = vadd.f32 %v9892, %v10052
  %v10054 = vpop.f32.mrb[0].mxu0
  %v10055 = vpop.f32.mrb[0].mxu0
  %v10056 = vadd.f32 %v9895, %v10055
  %v10057 = vpop.f32.mrb[0].mxu0
  %10058 = vmatprep.mubr.bf16.mxu0 0
  %10059 = vmatmul.mubr.bf16.gmra.mrb[0].mxu0 %v9665
  %v10060 = vpop.f32.mrb[0].mxu0
  %v10061 = vadd.f32 %v9900, %v10060
  %v10062 = vpop.f32.mrb[0].mxu0
  %v10063 = vpop.f32.mrb[0].mxu0
  %v10064 = vadd.f32 %v9903, %v10063
  %v10065 = vpop.f32.mrb[0].mxu0
  %10066 = vmatprep.mubr.bf16.mxu0 0
  %10067 = vmatmul.mubr.bf16.gmra.mrb[0].mxu0 %v9668
  %v10068 = vpop.f32.mrb[0].mxu0
  %v10069 = vadd.f32 %v9908, %v10068
  %v10070 = vpop.f32.mrb[0].mxu0
  %v10071 = vpop.f32.mrb[0].mxu0
  %v10072 = vadd.f32 %v9911, %v10071
  %v10073 = vpop.f32.mrb[0].mxu0
  %10074 = vmatprep.mubr.bf16.mxu0 0
  %10075 = vmatmul.mubr.bf16.gmra.mrb[0].mxu0 %v9671
  %v10076 = vpop.f32.mrb[0].mxu0
  %v10077 = vadd.f32 %v9916, %v10076
  %v10078 = vpop.f32.mrb[0].mxu0
  %v10079 = vpop.f32.mrb[0].mxu0
  %v10080 = vadd.f32 %v9919, %v10079
  %v10081 = vpop.f32.mrb[0].mxu0
  %10082 = vmatprep.mubr.bf16.mxu0 0
  %10083 = vmatmul.mubr.bf16.gmra.mrb[0].mxu0 %v9674
  %v10084 = vpop.f32.mrb[0].mxu0
  %v10085 = vadd.f32 %v9924, %v10084
  %v10086 = vpop.f32.mrb[0].mxu0
  %v10087 = vpop.f32.mrb[0].mxu0
  %v10088 = vadd.f32 %v9927, %v10087
  %v10089 = vpop.f32.mrb[0].mxu0
  %10090 = vmatprep.mubr.bf16.mxu0 0
  %10091 = vmatmul.mubr.bf16.gmra.mrb[0].mxu0 %v9677
  %v10092 = vpop.f32.mrb[0].mxu0
  %v10093 = vadd.f32 %v9932, %v10092
  %v10094 = vpop.f32.mrb[0].mxu0
  %v10095 = vpop.f32.mrb[0].mxu0
  %v10096 = vadd.f32 %v9935, %v10095
  %v10097 = vpop.f32.mrb[0].mxu0
  %10098 = vmatprep.mubr.bf16.mxu0 0
  %10099 = vmatmul.mubr.bf16.gmra.mrb[0].mxu0 %v9680
  %v10100 = vpop.f32.mrb[0].mxu0
  %v10101 = vadd.f32 %v9940, %v10100
  %v10102 = vpop.f32.mrb[0].mxu0
  %v10103 = vpop.f32.mrb[0].mxu0
  %v10104 = vadd.f32 %v9943, %v10103
  %v10105 = vpop.f32.mrb[0].mxu0
  %10106 = vmatprep.mubr.bf16.mxu0 0
  %10107 = vmatmul.mubr.bf16.gmra.mrb[0].mxu0 %v9683
  %v10108 = vpop.f32.mrb[0].mxu0
  %v10109 = vadd.f32 %v9948, %v10108
  %v10110 = vpop.f32.mrb[0].mxu0
  %v10111 = vpop.f32.mrb[0].mxu0
  %v10112 = vadd.f32 %v9951, %v10111
  %v10113 = vpop.f32.mrb[0].mxu0
  %10114 = vmatprep.mubr.bf16.mxu0 0
  %10115 = vmatmul.mubr.bf16.gmra.mrb[0].mxu0 %v9686
  %v10116 = vpop.f32.mrb[0].mxu0
  %v10117 = vadd.f32 %v9956, %v10116
  %v10118 = vpop.f32.mrb[0].mxu0
  %v10119 = vpop.f32.mrb[0].mxu0
  %v10120 = vadd.f32 %v9959, %v10119
  %v10121 = vpop.f32.mrb[0].mxu0
  %10122 = vmatprep.mubr.bf16.mxu0 0
  %10123 = vmatmul.mubr.bf16.gmra.mrb[0].mxu0 %v9689
  %v10124 = vpop.f32.mrb[0].mxu0
  %v10125 = vadd.f32 %v9964, %v10124
  %v10126 = vpop.f32.mrb[0].mxu0
  %v10127 = vpop.f32.mrb[0].mxu0
  %v10128 = vadd.f32 %v9967, %v10127
  %v10129 = vpop.f32.mrb[0].mxu0
  %10130 = vmatprep.mubr.bf16.mxu0 0
  %10131 = vmatmul.mubr.bf16.gmra.mrb[0].mxu0 %v9692
  %v10132 = vpop.f32.mrb[0].mxu0
  %v10133 = vadd.f32 %v9972, %v10132
  %v10134 = vpop.f32.mrb[0].mxu0
  %v10135 = vpop.f32.mrb[0].mxu0
  %v10136 = vadd.f32 %v9975, %v10135
  %v10137 = vpop.f32.mrb[0].mxu0
  %10138 = vmatprep.mubr.bf16.mxu0 0
  %10139 = vmatmul.mubr.bf16.gmra.mrb[0].mxu0 %v9695
  %v10140 = vpop.f32.mrb[0].mxu0
  %v10141 = vadd.f32 %v9980, %v10140
  %v10142 = vpop.f32.mrb[0].mxu0
  %v10143 = vpop.f32.mrb[0].mxu0
  %v10144 = vadd.f32 %v9983, %v10143
  %v10145 = vpop.f32.mrb[0].mxu0
  %10146 = vmatprep.mubr.bf16.mxu0 0
  %10147 = vmatmul.mubr.bf16.gmra.mrb[0].mxu0 %v9698
  %v10148 = vpop.f32.mrb[0].mxu0
  %v10149 = vadd.f32 %v9988, %v10148
  %v10150 = vpop.f32.mrb[0].mxu0
  %v10151 = vpop.f32.mrb[0].mxu0
  %v10152 = vadd.f32 %v9991, %v10151
  %v10153 = vpop.f32.mrb[0].mxu0
  %10154 = vmatprep.mubr.bf16.mxu0 0
  %10155 = vmatmul.mubr.bf16.gmra.mrb[0].mxu0 %v9701
  %v10156 = vpop.f32.mrb[0].mxu0
  %v10157 = vadd.f32 %v9996, %v10156
  %v10158 = vpop.f32.mrb[0].mxu0
  %v10159 = vpop.f32.mrb[0].mxu0
  %v10160 = vadd.f32 %v9999, %v10159
  %v10161 = vpop.f32.mrb[0].mxu0
  %10162 = vmatprep.mubr.bf16.mxu0 0
  %10163 = vmatmul.mubr.bf16.gmra.mrb[0].mxu0 %v9704
  %v10164 = vpop.f32.mrb[0].mxu0
  %v10165 = vadd.f32 %v10004, %v10164
  %v10166 = vpop.f32.mrb[0].mxu0
  %v10167 = vpop.f32.mrb[0].mxu0
  %v10168 = vadd.f32 %v10007, %v10167
  %v10169 = vpop.f32.mrb[0].mxu0
  %10170 = vdwg.mxu0
  %v10171 = vld [vmem:[#allocation2 + $0x10] sm:$0xff]
  %v10172 = vld [vmem:[#allocation2 + $0x18] sm:$0xff]
  %v10173 = vld [vmem:[#allocation2 + $0x20] sm:$0xff]
  %v10174 = vld [vmem:[#allocation2 + $0x38] sm:$0xff]
  %v10175 = vld [vmem:[#allocation2 + $0x40] sm:$0xff]
  %v10176 = vld [vmem:[#allocation2 + $0x48] sm:$0xff]
  %v10177 = vld [vmem:[#allocation2 + $0x60] sm:$0xff]
  %v10178 = vld [vmem:[#allocation2 + $0x68] sm:$0xff]
  %v10179 = vld [vmem:[#allocation2 + $0x70] sm:$0xff]
  %v10180 = vld [vmem:[#allocation2 + $0x88] sm:$0xff]
  %v10181 = vld [vmem:[#allocation2 + $0x90] sm:$0xff]
  %v10182 = vld [vmem:[#allocation2 + $0x98] sm:$0xff]
  %v10183 = vld [vmem:[#allocation2 + $0xb0] sm:$0xff]
  %v10184 = vld [vmem:[#allocation2 + $0xb8] sm:$0xff]
  %v10185 = vld [vmem:[#allocation2 + $0xc0] sm:$0xff]
  %v10186 = vld [vmem:[#allocation2 + $0xd8] sm:$0xff]
  %v10187 = vld [vmem:[#allocation2 + $0xe0] sm:$0xff]
  %v10188 = vld [vmem:[#allocation2 + $0xe8] sm:$0xff]
  %v10189 = vld [vmem:[#allocation2 + $0x100] sm:$0xff]
  %v10190 = vld [vmem:[#allocation2 + $0x108] sm:$0xff]
  %v10191 = vld [vmem:[#allocation2 + $0x110] sm:$0xff]
  %v10192 = vld [vmem:[#allocation2 + $0x128] sm:$0xff]
  %v10193 = vld [vmem:[#allocation2 + $0x130] sm:$0xff]
  %v10194 = vld [vmem:[#allocation2 + $0x138] sm:$0xff]
  %v10195 = vld [vmem:[#allocation2 + $0x150] sm:$0xff]
  %v10196 = vld [vmem:[#allocation2 + $0x158] sm:$0xff]
  %v10197 = vld [vmem:[#allocation2 + $0x160] sm:$0xff]
  %v10198 = vld [vmem:[#allocation2 + $0x178] sm:$0xff]
  %v10199 = vld [vmem:[#allocation2 + $0x180] sm:$0xff]
  %v10200 = vld [vmem:[#allocation2 + $0x188] sm:$0xff]
  %v10201 = vld [vmem:[#allocation2 + $0x1a0] sm:$0xff]
  %v10202 = vld [vmem:[#allocation2 + $0x1a8] sm:$0xff]
  %v10203 = vld [vmem:[#allocation2 + $0x1b0] sm:$0xff]
  %v10204 = vld [vmem:[#allocation2 + $0x1c8] sm:$0xff]
  %v10205 = vld [vmem:[#allocation2 + $0x1d0] sm:$0xff]
  %v10206 = vld [vmem:[#allocation2 + $0x1d8] sm:$0xff]
  %v10207 = vld [vmem:[#allocation2 + $0x1f0] sm:$0xff]
  %v10208 = vld [vmem:[#allocation2 + $0x1f8] sm:$0xff]
  %v10209 = vld [vmem:[#allocation2 + $0x200] sm:$0xff]
  %v10210 = vld [vmem:[#allocation2 + $0x218] sm:$0xff]
  %v10211 = vld [vmem:[#allocation2 + $0x220] sm:$0xff]
  %v10212 = vld [vmem:[#allocation2 + $0x228] sm:$0xff]
  %v10213 = vld [vmem:[#allocation2 + $0x240] sm:$0xff]
  %v10214 = vld [vmem:[#allocation2 + $0x248] sm:$0xff]
  %v10215 = vld [vmem:[#allocation2 + $0x250] sm:$0xff]
  %v10216 = vld [vmem:[#allocation2 + $0x268] sm:$0xff]
  %v10217 = vld [vmem:[#allocation2 + $0x270] sm:$0xff]
  %v10218 = vld [vmem:[#allocation2 + $0x278] sm:$0xff]
  %10219 = vmatprep.subr.bf16.mxu0 0
  %10220 = vmatpush1.bf16.msra.mxu0 %v9801
  %10221 = vmatprep.subr.bf16.mxu0 0
  %10222 = vmatpush1.bf16.msra.mxu0 %v9802
  %10223 = vmatprep.subr.bf16.mxu0 0
  %10224 = vmatpush1.bf16.msra.mxu0 %v9803
  %10225 = vmatprep.subr.bf16.mxu0 0
  %10226 = vmatpush1.bf16.msra.mxu0 %v9804
  %10227 = vmatprep.subr.bf16.mxu0 0
  %10228 = vmatpush1.bf16.msra.mxu0 %v9805
  %10229 = vmatprep.subr.bf16.mxu0 0
  %10230 = vmatpush1.bf16.msra.mxu0 %v9806
  %10231 = vmatprep.subr.bf16.mxu0 0
  %10232 = vmatpush1.bf16.msra.mxu0 %v9807
  %10233 = vmatprep.subr.bf16.mxu0 0
  %10234 = vmatpush1.bf16.msra.mxu0 %v9808
  %10235 = vmatprep.subr.bf16.mxu0 0
  %10236 = vmatpush1.bf16.msra.mxu0 %v9809
  %10237 = vmatprep.subr.bf16.mxu0 0
  %10238 = vmatpush1.bf16.msra.mxu0 %v9810
  %10239 = vmatprep.subr.bf16.mxu0 0
  %10240 = vmatpush1.bf16.msra.mxu0 %v9811
  %10241 = vmatprep.subr.bf16.mxu0 0
  %10242 = vmatpush1.bf16.msra.mxu0 %v9812
  %10243 = vmatprep.subr.bf16.mxu0 0
  %10244 = vmatpush1.bf16.msra.mxu0 %v9813
  %10245 = vmatprep.subr.bf16.mxu0 0
  %10246 = vmatpush1.bf16.msra.mxu0 %v9814
  %10247 = vmatprep.subr.bf16.mxu0 0
  %10248 = vmatpush1.bf16.msra.mxu0 %v9815
  %10249 = vmatprep.subr.bf16.mxu0 0
  %10250 = vmatpush1.bf16.msra.mxu0 %v9816
  %10251 = vmatprep.mubr.bf16.mxu0 %v10172
  %10252 = vmatmul.mubr.bf16.gmra.mrb[0].mxu0 %v10171
  %v10253 = vpop.f32.mrb[0].mxu0
  %v10254 = vadd.f32 0.0, %v10253
  %v10255 = vpop.f32.mrb[0].mxu0
  %v10256 = vpop.f32.mrb[0].mxu0
  %v10257 = vadd.f32 0.0, %v10256
  %v10258 = vpop.f32.mrb[0].mxu0
  %10259 = vmatprep.mubr.bf16.mxu0 %v10175
  %10260 = vmatmul.mubr.bf16.gmra.mrb[0].mxu0 %v10174
  %v10261 = vpop.f32.mrb[0].mxu0
  %v10262 = vadd.f32 0.0, %v10261
  %v10263 = vpop.f32.mrb[0].mxu0
  %v10264 = vpop.f32.mrb[0].mxu0
  %v10265 = vadd.f32 0.0, %v10264
  %v10266 = vpop.f32.mrb[0].mxu0
  %10267 = vmatprep.mubr.bf16.mxu0 %v10178
  %10268 = vmatmul.mubr.bf16.gmra.mrb[0].mxu0 %v10177
  %v10269 = vpop.f32.mrb[0].mxu0
  %v10270 = vadd.f32 0.0, %v10269
  %v10271 = vpop.f32.mrb[0].mxu0
  %v10272 = vpop.f32.mrb[0].mxu0
  %v10273 = vadd.f32 0.0, %v10272
  %v10274 = vpop.f32.mrb[0].mxu0
  %10275 = vmatprep.mubr.bf16.mxu0 %v10181
  %10276 = vmatmul.mubr.bf16.gmra.mrb[0].mxu0 %v10180
  %v10277 = vpop.f32.mrb[0].mxu0
  %v10278 = vadd.f32 0.0, %v10277
  %v10279 = vpop.f32.mrb[0].mxu0
  %v10280 = vpop.f32.mrb[0].mxu0
  %v10281 = vadd.f32 0.0, %v10280
  %v10282 = vpop.f32.mrb[0].mxu0
  %10283 = vmatprep.mubr.bf16.mxu0 %v10184
  %10284 = vmatmul.mubr.bf16.gmra.mrb[0].mxu0 %v10183
  %v10285 = vpop.f32.mrb[0].mxu0
  %v10286 = vadd.f32 0.0, %v10285
  %v10287 = vpop.f32.mrb[0].mxu0
  %v10288 = vpop.f32.mrb[0].mxu0
  %v10289 = vadd.f32 0.0, %v10288
  %v10290 = vpop.f32.mrb[0].mxu0
  %10291 = vmatprep.mubr.bf16.mxu0 %v10187
  %10292 = vmatmul.mubr.bf16.gmra.mrb[0].mxu0 %v10186
  %v10293 = vpop.f32.mrb[0].mxu0
  %v10294 = vadd.f32 0.0, %v10293
  %v10295 = vpop.f32.mrb[0].mxu0
  %v10296 = vpop.f32.mrb[0].mxu0
  %v10297 = vadd.f32 0.0, %v10296
  %v10298 = vpop.f32.mrb[0].mxu0
  %10299 = vmatprep.mubr.bf16.mxu0 %v10190
  %10300 = vmatmul.mubr.bf16.gmra.mrb[0].mxu0 %v10189
  %v10301 = vpop.f32.mrb[0].mxu0
  %v10302 = vadd.f32 0.0, %v10301
  %v10303 = vpop.f32.mrb[0].mxu0
  %v10304 = vpop.f32.mrb[0].mxu0
  %v10305 = vadd.f32 0.0, %v10304
  %v10306 = vpop.f32.mrb[0].mxu0
  %10307 = vmatprep.mubr.bf16.mxu0 %v10193
  %10308 = vmatmul.mubr.bf16.gmra.mrb[0].mxu0 %v10192
  %v10309 = vpop.f32.mrb[0].mxu0
  %v10310 = vadd.f32 0.0, %v10309
  %v10311 = vpop.f32.mrb[0].mxu0
  %v10312 = vpop.f32.mrb[0].mxu0
  %v10313 = vadd.f32 0.0, %v10312
  %v10314 = vpop.f32.mrb[0].mxu0
  %10315 = vmatprep.mubr.bf16.mxu0 %v10196
  %10316 = vmatmul.mubr.bf16.gmra.mrb[0].mxu0 %v10195
  %v10317 = vpop.f32.mrb[0].mxu0
  %v10318 = vadd.f32 0.0, %v10317
  %v10319 = vpop.f32.mrb[0].mxu0
  %v10320 = vpop.f32.mrb[0].mxu0
  %v10321 = vadd.f32 0.0, %v10320
  %v10322 = vpop.f32.mrb[0].mxu0
  %10323 = vmatprep.mubr.bf16.mxu0 %v10199
  %10324 = vmatmul.mubr.bf16.gmra.mrb[0].mxu0 %v10198
  %v10325 = vpop.f32.mrb[0].mxu0
  %v10326 = vadd.f32 0.0, %v10325
  %v10327 = vpop.f32.mrb[0].mxu0
  %v10328 = vpop.f32.mrb[0].mxu0
  %v10329 = vadd.f32 0.0, %v10328
  %v10330 = vpop.f32.mrb[0].mxu0
  %10331 = vmatprep.mubr.bf16.mxu0 %v10202
  %10332 = vmatmul.mubr.bf16.gmra.mrb[0].mxu0 %v10201
  %v10333 = vpop.f32.mrb[0].mxu0
  %v10334 = vadd.f32 0.0, %v10333
  %v10335 = vpop.f32.mrb[0].mxu0
  %v10336 = vpop.f32.mrb[0].mxu0
  %v10337 = vadd.f32 0.0, %v10336
  %v10338 = vpop.f32.mrb[0].mxu0
  %10339 = vmatprep.mubr.bf16.mxu0 %v10205
  %10340 = vmatmul.mubr.bf16.gmra.mrb[0].mxu0 %v10204
  %v10341 = vpop.f32.mrb[0].mxu0
  %v10342 = vadd.f32 0.0, %v10341
  %v10343 = vpop.f32.mrb[0].mxu0
  %v10344 = vpop.f32.mrb[0].mxu0
  %v10345 = vadd.f32 0.0, %v10344
  %v10346 = vpop.f32.mrb[0].mxu0
  %10347 = vmatprep.mubr.bf16.mxu0 %v10208
  %10348 = vmatmul.mubr.bf16.gmra.mrb[0].mxu0 %v10207
  %v10349 = vpop.f32.mrb[0].mxu0
  %v10350 = vadd.f32 0.0, %v10349
  %v10351 = vpop.f32.mrb[0].mxu0
  %v10352 = vpop.f32.mrb[0].mxu0
  %v10353 = vadd.f32 0.0, %v10352
  %v10354 = vpop.f32.mrb[0].mxu0
  %10355 = vmatprep.mubr.bf16.mxu0 %v10211
  %10356 = vmatmul.mubr.bf16.gmra.mrb[0].mxu0 %v10210
  %v10357 = vpop.f32.mrb[0].mxu0
  %v10358 = vadd.f32 0.0, %v10357
  %v10359 = vpop.f32.mrb[0].mxu0
  %v10360 = vpop.f32.mrb[0].mxu0
  %v10361 = vadd.f32 0.0, %v10360
  %v10362 = vpop.f32.mrb[0].mxu0
  %10363 = vmatprep.mubr.bf16.mxu0 %v10214
  %10364 = vmatmul.mubr.bf16.gmra.mrb[0].mxu0 %v10213
  %v10365 = vpop.f32.mrb[0].mxu0
  %v10366 = vadd.f32 0.0, %v10365
  %v10367 = vpop.f32.mrb[0].mxu0
  %v10368 = vpop.f32.mrb[0].mxu0
  %v10369 = vadd.f32 0.0, %v10368
  %v10370 = vpop.f32.mrb[0].mxu0
  %10371 = vmatprep.mubr.bf16.mxu0 %v10217
  %10372 = vmatmul.mubr.bf16.gmra.mrb[0].mxu0 %v10216
  %v10373 = vpop.f32.mrb[0].mxu0
  %v10374 = vadd.f32 0.0, %v10373
  %v10375 = vpop.f32.mrb[0].mxu0
  %v10376 = vpop.f32.mrb[0].mxu0
  %v10377 = vadd.f32 0.0, %v10376
  %v10378 = vpop.f32.mrb[0].mxu0
  %10379 = vdwg.mxu0
  %10380 = vmatprep.subr.bf16.mxu0 0
  %10381 = vmatpush1.bf16.msra.mxu0 %v9817
  %10382 = vmatprep.subr.bf16.mxu0 0
  %10383 = vmatpush1.bf16.msra.mxu0 %v9818
  %10384 = vmatprep.subr.bf16.mxu0 0
  %10385 = vmatpush1.bf16.msra.mxu0 %v9819
  %10386 = vmatprep.subr.bf16.mxu0 0
  %10387 = vmatpush1.bf16.msra.mxu0 %v9820
  %10388 = vmatprep.subr.bf16.mxu0 0
  %10389 = vmatpush1.bf16.msra.mxu0 %v9821
  %10390 = vmatprep.subr.bf16.mxu0 0
  %10391 = vmatpush1.bf16.msra.mxu0 %v9822
  %10392 = vmatprep.subr.bf16.mxu0 0
  %10393 = vmatpush1.bf16.msra.mxu0 %v9823
  %10394 = vmatprep.subr.bf16.mxu0 0
  %10395 = vmatpush1.bf16.msra.mxu0 %v9824
  %10396 = vmatprep.subr.bf16.mxu0 0
  %10397 = vmatpush1.bf16.msra.mxu0 0
  %10398 = vmatprep.subr.bf16.mxu0 0
  %10399 = vmatpush1.bf16.msra.mxu0 0
  %10400 = vmatprep.subr.bf16.mxu0 0
  %10401 = vmatpush1.bf16.msra.mxu0 0
  %10402 = vmatprep.subr.bf16.mxu0 0
  %10403 = vmatpush1.bf16.msra.mxu0 0
  %10404 = vmatprep.subr.bf16.mxu0 0
  %10405 = vmatpush1.bf16.msra.mxu0 0
  %10406 = vmatprep.subr.bf16.mxu0 0
  %10407 = vmatpush1.bf16.msra.mxu0 0
  %10408 = vmatprep.subr.bf16.mxu0 0
  %10409 = vmatpush1.bf16.msra.mxu0 0
  %10410 = vmatprep.subr.bf16.mxu0 0
  %10411 = vmatpush1.bf16.msra.mxu0 0
  %10412 = vmatprep.mubr.bf16.mxu0 0
  %10413 = vmatmul.mubr.bf16.gmra.mrb[0].mxu0 %v10173
  %v10414 = vpop.f32.mrb[0].mxu0
  %v10415 = vadd.f32 %v10254, %v10414
  %v10416 = vpop.f32.mrb[0].mxu0
  %v10417 = vpop.f32.mrb[0].mxu0
  %v10418 = vadd.f32 %v10257, %v10417
  %v10419 = vpop.f32.mrb[0].mxu0
  %10420 = vmatprep.mubr.bf16.mxu0 0
  %10421 = vmatmul.mubr.bf16.gmra.mrb[0].mxu0 %v10176
  %v10422 = vpop.f32.mrb[0].mxu0
  %v10423 = vadd.f32 %v10262, %v10422
  %v10424 = vpop.f32.mrb[0].mxu0
  %v10425 = vpop.f32.mrb[0].mxu0
  %v10426 = vadd.f32 %v10265, %v10425
  %v10427 = vpop.f32.mrb[0].mxu0
  %10428 = vmatprep.mubr.bf16.mxu0 0
  %10429 = vmatmul.mubr.bf16.gmra.mrb[0].mxu0 %v10179
  %v10430 = vpop.f32.mrb[0].mxu0
  %v10431 = vadd.f32 %v10270, %v10430
  %v10432 = vpop.f32.mrb[0].mxu0
  %v10433 = vpop.f32.mrb[0].mxu0
  %v10434 = vadd.f32 %v10273, %v10433
  %v10435 = vpop.f32.mrb[0].mxu0
  %10436 = vmatprep.mubr.bf16.mxu0 0
  %10437 = vmatmul.mubr.bf16.gmra.mrb[0].mxu0 %v10182
  %v10438 = vpop.f32.mrb[0].mxu0
  %v10439 = vadd.f32 %v10278, %v10438
  %v10440 = vpop.f32.mrb[0].mxu0
  %v10441 = vpop.f32.mrb[0].mxu0
  %v10442 = vadd.f32 %v10281, %v10441
  %v10443 = vpop.f32.mrb[0].mxu0
  %10444 = vmatprep.mubr.bf16.mxu0 0
  %10445 = vmatmul.mubr.bf16.gmra.mrb[0].mxu0 %v10185
  %v10446 = vpop.f32.mrb[0].mxu0
  %v10447 = vadd.f32 %v10286, %v10446
  %v10448 = vpop.f32.mrb[0].mxu0
  %v10449 = vpop.f32.mrb[0].mxu0
  %v10450 = vadd.f32 %v10289, %v10449
  %v10451 = vpop.f32.mrb[0].mxu0
  %10452 = vmatprep.mubr.bf16.mxu0 0
  %10453 = vmatmul.mubr.bf16.gmra.mrb[0].mxu0 %v10188
  %v10454 = vpop.f32.mrb[0].mxu0
  %v10455 = vadd.f32 %v10294, %v10454
  %v10456 = vpop.f32.mrb[0].mxu0
  %v10457 = vpop.f32.mrb[0].mxu0
  %v10458 = vadd.f32 %v10297, %v10457
  %v10459 = vpop.f32.mrb[0].mxu0
  %10460 = vmatprep.mubr.bf16.mxu0 0
  %10461 = vmatmul.mubr.bf16.gmra.mrb[0].mxu0 %v10191
  %v10462 = vpop.f32.mrb[0].mxu0
  %v10463 = vadd.f32 %v10302, %v10462
  %v10464 = vpop.f32.mrb[0].mxu0
  %v10465 = vpop.f32.mrb[0].mxu0
  %v10466 = vadd.f32 %v10305, %v10465
  %v10467 = vpop.f32.mrb[0].mxu0
  %10468 = vmatprep.mubr.bf16.mxu0 0
  %10469 = vmatmul.mubr.bf16.gmra.mrb[0].mxu0 %v10194
  %v10470 = vpop.f32.mrb[0].mxu0
  %v10471 = vadd.f32 %v10310, %v10470
  %v10472 = vpop.f32.mrb[0].mxu0
  %v10473 = vpop.f32.mrb[0].mxu0
  %v10474 = vadd.f32 %v10313, %v10473
  %v10475 = vpop.f32.mrb[0].mxu0
  %10476 = vmatprep.mubr.bf16.mxu0 0
  %10477 = vmatmul.mubr.bf16.gmra.mrb[0].mxu0 %v10197
  %v10478 = vpop.f32.mrb[0].mxu0
  %v10479 = vadd.f32 %v10318, %v10478
  %v10480 = vpop.f32.mrb[0].mxu0
  %v10481 = vpop.f32.mrb[0].mxu0
  %v10482 = vadd.f32 %v10321, %v10481
  %v10483 = vpop.f32.mrb[0].mxu0
  %10484 = vmatprep.mubr.bf16.mxu0 0
  %10485 = vmatmul.mubr.bf16.gmra.mrb[0].mxu0 %v10200
  %v10486 = vpop.f32.mrb[0].mxu0
  %v10487 = vadd.f32 %v10326, %v10486
  %v10488 = vpop.f32.mrb[0].mxu0
  %v10489 = vpop.f32.mrb[0].mxu0
  %v10490 = vadd.f32 %v10329, %v10489
  %v10491 = vpop.f32.mrb[0].mxu0
  %10492 = vmatprep.mubr.bf16.mxu0 0
  %10493 = vmatmul.mubr.bf16.gmra.mrb[0].mxu0 %v10203
  %v10494 = vpop.f32.mrb[0].mxu0
  %v10495 = vadd.f32 %v10334, %v10494
  %v10496 = vpop.f32.mrb[0].mxu0
  %v10497 = vpop.f32.mrb[0].mxu0
  %v10498 = vadd.f32 %v10337, %v10497
  %v10499 = vpop.f32.mrb[0].mxu0
  %10500 = vmatprep.mubr.bf16.mxu0 0
  %10501 = vmatmul.mubr.bf16.gmra.mrb[0].mxu0 %v10206
  %v10502 = vpop.f32.mrb[0].mxu0
  %v10503 = vadd.f32 %v10342, %v10502
  %v10504 = vpop.f32.mrb[0].mxu0
  %v10505 = vpop.f32.mrb[0].mxu0
  %v10506 = vadd.f32 %v10345, %v10505
  %v10507 = vpop.f32.mrb[0].mxu0
  %10508 = vmatprep.mubr.bf16.mxu0 0
  %10509 = vmatmul.mubr.bf16.gmra.mrb[0].mxu0 %v10209
  %v10510 = vpop.f32.mrb[0].mxu0
  %v10511 = vadd.f32 %v10350, %v10510
  %v10512 = vpop.f32.mrb[0].mxu0
  %v10513 = vpop.f32.mrb[0].mxu0
  %v10514 = vadd.f32 %v10353, %v10513
  %v10515 = vpop.f32.mrb[0].mxu0
  %10516 = vmatprep.mubr.bf16.mxu0 0
  %10517 = vmatmul.mubr.bf16.gmra.mrb[0].mxu0 %v10212
  %v10518 = vpop.f32.mrb[0].mxu0
  %v10519 = vadd.f32 %v10358, %v10518
  %v10520 = vpop.f32.mrb[0].mxu0
  %v10521 = vpop.f32.mrb[0].mxu0
  %v10522 = vadd.f32 %v10361, %v10521
  %v10523 = vpop.f32.mrb[0].mxu0
  %10524 = vmatprep.mubr.bf16.mxu0 0
  %10525 = vmatmul.mubr.bf16.gmra.mrb[0].mxu0 %v10215
  %v10526 = vpop.f32.mrb[0].mxu0
  %v10527 = vadd.f32 %v10366, %v10526
  %v10528 = vpop.f32.mrb[0].mxu0
  %v10529 = vpop.f32.mrb[0].mxu0
  %v10530 = vadd.f32 %v10369, %v10529
  %v10531 = vpop.f32.mrb[0].mxu0
  %10532 = vmatprep.mubr.bf16.mxu0 0
  %10533 = vmatmul.mubr.bf16.gmra.mrb[0].mxu0 %v10218
  %v10534 = vpop.f32.mrb[0].mxu0
  %v10535 = vadd.f32 %v10374, %v10534
  %v10536 = vpop.f32.mrb[0].mxu0
  %v10537 = vpop.f32.mrb[0].mxu0
  %v10538 = vadd.f32 %v10377, %v10537
  %v10539 = vpop.f32.mrb[0].mxu0
  %10540 = vdwg.mxu0
  %v10541 = vlaneseq
  %v10542 = vshrl.u32 %v10541, 7
  %v10543 = vsub.s32 0, %v10542
  %v10544 = vrot.slane %v35, %v10543
  %v10545 = vmul.f32 %v10045, %v10544
  %v10546 = vmul.f32 %v10048, %v10544
  %v10547 = vmul.f32 %v10053, %v10544
  %v10548 = vmul.f32 %v10056, %v10544
  %v10549 = vmul.f32 %v10061, %v10544
  %v10550 = vmul.f32 %v10064, %v10544
  %v10551 = vmul.f32 %v10069, %v10544
  %v10552 = vmul.f32 %v10072, %v10544
  %v10553 = vmul.f32 %v10077, %v10544
  %v10554 = vmul.f32 %v10080, %v10544
  %v10555 = vmul.f32 %v10085, %v10544
  %v10556 = vmul.f32 %v10088, %v10544
  %v10557 = vmul.f32 %v10093, %v10544
  %v10558 = vmul.f32 %v10096, %v10544
  %v10559 = vmul.f32 %v10101, %v10544
  %v10560 = vmul.f32 %v10104, %v10544
  %v10561 = vmul.f32 %v10109, %v10544
  %v10562 = vmul.f32 %v10112, %v10544
  %v10563 = vmul.f32 %v10117, %v10544
  %v10564 = vmul.f32 %v10120, %v10544
  %v10565 = vmul.f32 %v10125, %v10544
  %v10566 = vmul.f32 %v10128, %v10544
  %v10567 = vmul.f32 %v10133, %v10544
  %v10568 = vmul.f32 %v10136, %v10544
  %v10569 = vmul.f32 %v10141, %v10544
  %v10570 = vmul.f32 %v10144, %v10544
  %v10571 = vmul.f32 %v10149, %v10544
  %v10572 = vmul.f32 %v10152, %v10544
  %v10573 = vmul.f32 %v10157, %v10544
  %v10574 = vmul.f32 %v10160, %v10544
  %v10575 = vmul.f32 %v10165, %v10544
  %v10576 = vmul.f32 %v10168, %v10544
  %v10577 = vlaneseq
  %v10578 = vshrl.u32 %v10577, 7
  %v10579 = vsub.s32 0, %v10578
  %v10580 = vrot.slane %v36, %v10579
  %v10581 = vadd.f32 %v10545, %v10580
  %v10582 = vadd.f32 %v10546, %v10580
  %v10583 = vadd.f32 %v10547, %v10580
  %v10584 = vadd.f32 %v10548, %v10580
  %v10585 = vadd.f32 %v10549, %v10580
  %v10586 = vadd.f32 %v10550, %v10580
  %v10587 = vadd.f32 %v10551, %v10580
  %v10588 = vadd.f32 %v10552, %v10580
  %v10589 = vadd.f32 %v10553, %v10580
  %v10590 = vadd.f32 %v10554, %v10580
  %v10591 = vadd.f32 %v10555, %v10580
  %v10592 = vadd.f32 %v10556, %v10580
  %v10593 = vadd.f32 %v10557, %v10580
  %v10594 = vadd.f32 %v10558, %v10580
  %v10595 = vadd.f32 %v10559, %v10580
  %v10596 = vadd.f32 %v10560, %v10580
  %v10597 = vadd.f32 %v10561, %v10580
  %v10598 = vadd.f32 %v10562, %v10580
  %v10599 = vadd.f32 %v10563, %v10580
  %v10600 = vadd.f32 %v10564, %v10580
  %v10601 = vadd.f32 %v10565, %v10580
  %v10602 = vadd.f32 %v10566, %v10580
  %v10603 = vadd.f32 %v10567, %v10580
  %v10604 = vadd.f32 %v10568, %v10580
  %v10605 = vadd.f32 %v10569, %v10580
  %v10606 = vadd.f32 %v10570, %v10580
  %v10607 = vadd.f32 %v10571, %v10580
  %v10608 = vadd.f32 %v10572, %v10580
  %v10609 = vadd.f32 %v10573, %v10580
  %v10610 = vadd.f32 %v10574, %v10580
  %v10611 = vadd.f32 %v10575, %v10580
  %v10612 = vadd.f32 %v10576, %v10580
  %v10613 = vmax.f32 %v10581, 0.0
  %v10614 = vmax.f32 %v10582, 0.0
  %v10615 = vmax.f32 %v10583, 0.0
  %v10616 = vmax.f32 %v10584, 0.0
  %v10617 = vmax.f32 %v10585, 0.0
  %v10618 = vmax.f32 %v10586, 0.0
  %v10619 = vmax.f32 %v10587, 0.0
  %v10620 = vmax.f32 %v10588, 0.0
  %v10621 = vmax.f32 %v10589, 0.0
  %v10622 = vmax.f32 %v10590, 0.0
  %v10623 = vmax.f32 %v10591, 0.0
  %v10624 = vmax.f32 %v10592, 0.0
  %v10625 = vmax.f32 %v10593, 0.0
  %v10626 = vmax.f32 %v10594, 0.0
  %v10627 = vmax.f32 %v10595, 0.0
  %v10628 = vmax.f32 %v10596, 0.0
  %v10629 = vmax.f32 %v10597, 0.0
  %v10630 = vmax.f32 %v10598, 0.0
  %v10631 = vmax.f32 %v10599, 0.0
  %v10632 = vmax.f32 %v10600, 0.0
  %v10633 = vmax.f32 %v10601, 0.0
  %v10634 = vmax.f32 %v10602, 0.0
  %v10635 = vmax.f32 %v10603, 0.0
  %v10636 = vmax.f32 %v10604, 0.0
  %v10637 = vmax.f32 %v10605, 0.0
  %v10638 = vmax.f32 %v10606, 0.0
  %v10639 = vmax.f32 %v10607, 0.0
  %v10640 = vmax.f32 %v10608, 0.0
  %v10641 = vmax.f32 %v10609, 0.0
  %v10642 = vmax.f32 %v10610, 0.0
  %v10643 = vmax.f32 %v10611, 0.0
  %v10644 = vmax.f32 %v10612, 0.0
  %v10645 = vmul.f32 %v10415, %v10544
  %v10646 = vmul.f32 %v10418, %v10544
  %v10647 = vmul.f32 %v10423, %v10544
  %v10648 = vmul.f32 %v10426, %v10544
  %v10649 = vmul.f32 %v10431, %v10544
  %v10650 = vmul.f32 %v10434, %v10544
  %v10651 = vmul.f32 %v10439, %v10544
  %v10652 = vmul.f32 %v10442, %v10544
  %v10653 = vmul.f32 %v10447, %v10544
  %v10654 = vmul.f32 %v10450, %v10544
  %v10655 = vmul.f32 %v10455, %v10544
  %v10656 = vmul.f32 %v10458, %v10544
  %v10657 = vmul.f32 %v10463, %v10544
  %v10658 = vmul.f32 %v10466, %v10544
  %v10659 = vmul.f32 %v10471, %v10544
  %v10660 = vmul.f32 %v10474, %v10544
  %v10661 = vmul.f32 %v10479, %v10544
  %v10662 = vmul.f32 %v10482, %v10544
  %v10663 = vmul.f32 %v10487, %v10544
  %v10664 = vmul.f32 %v10490, %v10544
  %v10665 = vmul.f32 %v10495, %v10544
  %v10666 = vmul.f32 %v10498, %v10544
  %v10667 = vmul.f32 %v10503, %v10544
  %v10668 = vmul.f32 %v10506, %v10544
  %v10669 = vmul.f32 %v10511, %v10544
  %v10670 = vmul.f32 %v10514, %v10544
  %v10671 = vmul.f32 %v10519, %v10544
  %v10672 = vmul.f32 %v10522, %v10544
  %v10673 = vmul.f32 %v10527, %v10544
  %v10674 = vmul.f32 %v10530, %v10544
  %v10675 = vmul.f32 %v10535, %v10544
  %v10676 = vmul.f32 %v10538, %v10544
  %v10677 = vadd.f32 %v10645, %v10580
  %v10678 = vadd.f32 %v10646, %v10580
  %v10679 = vadd.f32 %v10647, %v10580
  %v10680 = vadd.f32 %v10648, %v10580
  %v10681 = vadd.f32 %v10649, %v10580
  %v10682 = vadd.f32 %v10650, %v10580
  %v10683 = vadd.f32 %v10651, %v10580
  %v10684 = vadd.f32 %v10652, %v10580
  %v10685 = vadd.f32 %v10653, %v10580
  %v10686 = vadd.f32 %v10654, %v10580
  %v10687 = vadd.f32 %v10655, %v10580
  %v10688 = vadd.f32 %v10656, %v10580
  %v10689 = vadd.f32 %v10657, %v10580
  %v10690 = vadd.f32 %v10658, %v10580
  %v10691 = vadd.f32 %v10659, %v10580
  %v10692 = vadd.f32 %v10660, %v10580
  %v10693 = vadd.f32 %v10661, %v10580
  %v10694 = vadd.f32 %v10662, %v10580
  %v10695 = vadd.f32 %v10663, %v10580
  %v10696 = vadd.f32 %v10664, %v10580
  %v10697 = vadd.f32 %v10665, %v10580
  %v10698 = vadd.f32 %v10666, %v10580
  %v10699 = vadd.f32 %v10667, %v10580
  %v10700 = vadd.f32 %v10668, %v10580
  %v10701 = vadd.f32 %v10669, %v10580
  %v10702 = vadd.f32 %v10670, %v10580
  %v10703 = vadd.f32 %v10671, %v10580
  %v10704 = vadd.f32 %v10672, %v10580
  %v10705 = vadd.f32 %v10673, %v10580
  %v10706 = vadd.f32 %v10674, %v10580
  %v10707 = vadd.f32 %v10675, %v10580
  %v10708 = vadd.f32 %v10676, %v10580
  %v10709 = vmax.f32 %v10677, 0.0
  %v10710 = vmax.f32 %v10678, 0.0
  %v10711 = vmax.f32 %v10679, 0.0
  %v10712 = vmax.f32 %v10680, 0.0
  %v10713 = vmax.f32 %v10681, 0.0
  %v10714 = vmax.f32 %v10682, 0.0
  %v10715 = vmax.f32 %v10683, 0.0
  %v10716 = vmax.f32 %v10684, 0.0
  %v10717 = vmax.f32 %v10685, 0.0
  %v10718 = vmax.f32 %v10686, 0.0
  %v10719 = vmax.f32 %v10687, 0.0
  %v10720 = vmax.f32 %v10688, 0.0
  %v10721 = vmax.f32 %v10689, 0.0
  %v10722 = vmax.f32 %v10690, 0.0
  %v10723 = vmax.f32 %v10691, 0.0
  %v10724 = vmax.f32 %v10692, 0.0
  %v10725 = vmax.f32 %v10693, 0.0
  %v10726 = vmax.f32 %v10694, 0.0
  %v10727 = vmax.f32 %v10695, 0.0
  %v10728 = vmax.f32 %v10696, 0.0
  %v10729 = vmax.f32 %v10697, 0.0
  %v10730 = vmax.f32 %v10698, 0.0
  %v10731 = vmax.f32 %v10699, 0.0
  %v10732 = vmax.f32 %v10700, 0.0
  %v10733 = vmax.f32 %v10701, 0.0
  %v10734 = vmax.f32 %v10702, 0.0
  %v10735 = vmax.f32 %v10703, 0.0
  %v10736 = vmax.f32 %v10704, 0.0
  %v10737 = vmax.f32 %v10705, 0.0
  %v10738 = vmax.f32 %v10706, 0.0
  %v10739 = vmax.f32 %v10707, 0.0
  %v10740 = vmax.f32 %v10708, 0.0
  %v10741 = vmax.f32 %v10613, %v10709
  %v10742 = vmax.f32 %v10614, %v10710
  %v10743 = vmax.f32 %v10615, %v10711
  %v10744 = vmax.f32 %v10616, %v10712
  %v10745 = vmax.f32 %v10617, %v10713
  %v10746 = vmax.f32 %v10618, %v10714
  %v10747 = vmax.f32 %v10619, %v10715
  %v10748 = vmax.f32 %v10620, %v10716
  %v10749 = vmax.f32 %v10621, %v10717
  %v10750 = vmax.f32 %v10622, %v10718
  %v10751 = vmax.f32 %v10623, %v10719
  %v10752 = vmax.f32 %v10624, %v10720
  %v10753 = vmax.f32 %v10625, %v10721
  %v10754 = vmax.f32 %v10626, %v10722
  %v10755 = vmax.f32 %v10627, %v10723
  %v10756 = vmax.f32 %v10628, %v10724
  %v10757 = vmax.f32 %v10629, %v10725
  %v10758 = vmax.f32 %v10630, %v10726
  %v10759 = vmax.f32 %v10631, %v10727
  %v10760 = vmax.f32 %v10632, %v10728
  %v10761 = vmax.f32 %v10633, %v10729
  %v10762 = vmax.f32 %v10634, %v10730
  %v10763 = vmax.f32 %v10635, %v10731
  %v10764 = vmax.f32 %v10636, %v10732
  %v10765 = vmax.f32 %v10637, %v10733
  %v10766 = vmax.f32 %v10638, %v10734
  %v10767 = vmax.f32 %v10639, %v10735
  %v10768 = vmax.f32 %v10640, %v10736
  %v10769 = vmax.f32 %v10641, %v10737
  %v10770 = vmax.f32 %v10642, %v10738
  %v10771 = vmax.f32 %v10643, %v10739
  %v10772 = vmax.f32 %v10644, %v10740
  %10773 = vrot.lane.b32.xlu0 %v10741, 120
  %v10774 = vpop.permute.xlu0 %10773
  %10775 = vrot.lane.b32.xlu0 %v10742, 120
  %v10776 = vpop.permute.xlu0 %10775
  %10777 = vrot.lane.b32.xlu0 %v10743, 120
  %v10778 = vpop.permute.xlu0 %10777
  %10779 = vrot.lane.b32.xlu0 %v10744, 120
  %v10780 = vpop.permute.xlu0 %10779
  %10781 = vrot.lane.b32.xlu0 %v10745, 120
  %v10782 = vpop.permute.xlu0 %10781
  %10783 = vrot.lane.b32.xlu0 %v10746, 120
  %v10784 = vpop.permute.xlu0 %10783
  %10785 = vrot.lane.b32.xlu0 %v10747, 120
  %v10786 = vpop.permute.xlu0 %10785
  %10787 = vrot.lane.b32.xlu0 %v10748, 120
  %v10788 = vpop.permute.xlu0 %10787
  %10789 = vrot.lane.b32.xlu0 %v10749, 120
  %v10790 = vpop.permute.xlu0 %10789
  %10791 = vrot.lane.b32.xlu0 %v10750, 120
  %v10792 = vpop.permute.xlu0 %10791
  %10793 = vrot.lane.b32.xlu0 %v10751, 120
  %v10794 = vpop.permute.xlu0 %10793
  %10795 = vrot.lane.b32.xlu0 %v10752, 120
  %v10796 = vpop.permute.xlu0 %10795
  %10797 = vrot.lane.b32.xlu0 %v10753, 120
  %v10798 = vpop.permute.xlu0 %10797
  %10799 = vrot.lane.b32.xlu0 %v10754, 120
  %v10800 = vpop.permute.xlu0 %10799
  %10801 = vrot.lane.b32.xlu0 %v10755, 120
  %v10802 = vpop.permute.xlu0 %10801
  %10803 = vrot.lane.b32.xlu0 %v10756, 120
  %v10804 = vpop.permute.xlu0 %10803
  %10805 = vrot.lane.b32.xlu0 %v10757, 120
  %v10806 = vpop.permute.xlu0 %10805
  %10807 = vrot.lane.b32.xlu0 %v10758, 120
  %v10808 = vpop.permute.xlu0 %10807
  %10809 = vrot.lane.b32.xlu0 %v10759, 120
  %v10810 = vpop.permute.xlu0 %10809
  %10811 = vrot.lane.b32.xlu0 %v10760, 120
  %v10812 = vpop.permute.xlu0 %10811
  %10813 = vrot.lane.b32.xlu0 %v10761, 120
  %v10814 = vpop.permute.xlu0 %10813
  %10815 = vrot.lane.b32.xlu0 %v10762, 120
  %v10816 = vpop.permute.xlu0 %10815
  %10817 = vrot.lane.b32.xlu0 %v10763, 120
  %v10818 = vpop.permute.xlu0 %10817
  %10819 = vrot.lane.b32.xlu0 %v10764, 120
  %v10820 = vpop.permute.xlu0 %10819
  %10821 = vrot.lane.b32.xlu0 %v10765, 120
  %v10822 = vpop.permute.xlu0 %10821
  %10823 = vrot.lane.b32.xlu0 %v10766, 120
  %v10824 = vpop.permute.xlu0 %10823
  %10825 = vrot.lane.b32.xlu0 %v10767, 120
  %v10826 = vpop.permute.xlu0 %10825
  %10827 = vrot.lane.b32.xlu0 %v10768, 120
  %v10828 = vpop.permute.xlu0 %10827
  %10829 = vrot.lane.b32.xlu0 %v10769, 120
  %v10830 = vpop.permute.xlu0 %10829
  %10831 = vrot.lane.b32.xlu0 %v10770, 120
  %v10832 = vpop.permute.xlu0 %10831
  %10833 = vrot.lane.b32.xlu0 %v10771, 120
  %v10834 = vpop.permute.xlu0 %10833
  %10835 = vrot.lane.b32.xlu0 %v10772, 120
  %v10836 = vpop.permute.xlu0 %10835
  %v10837 = vmax.f32 %v10741, %v10774
  %v10838 = vmax.f32 %v10742, %v10776
  %v10839 = vmax.f32 %v10743, %v10778
  %v10840 = vmax.f32 %v10744, %v10780
  %v10841 = vmax.f32 %v10745, %v10782
  %v10842 = vmax.f32 %v10746, %v10784
  %v10843 = vmax.f32 %v10747, %v10786
  %v10844 = vmax.f32 %v10748, %v10788
  %v10845 = vmax.f32 %v10749, %v10790
  %v10846 = vmax.f32 %v10750, %v10792
  %v10847 = vmax.f32 %v10751, %v10794
  %v10848 = vmax.f32 %v10752, %v10796
  %v10849 = vmax.f32 %v10753, %v10798
  %v10850 = vmax.f32 %v10754, %v10800
  %v10851 = vmax.f32 %v10755, %v10802
  %v10852 = vmax.f32 %v10756, %v10804
  %v10853 = vmax.f32 %v10757, %v10806
  %v10854 = vmax.f32 %v10758, %v10808
  %v10855 = vmax.f32 %v10759, %v10810
  %v10856 = vmax.f32 %v10760, %v10812
  %v10857 = vmax.f32 %v10761, %v10814
  %v10858 = vmax.f32 %v10762, %v10816
  %v10859 = vmax.f32 %v10763, %v10818
  %v10860 = vmax.f32 %v10764, %v10820
  %v10861 = vmax.f32 %v10765, %v10822
  %v10862 = vmax.f32 %v10766, %v10824
  %v10863 = vmax.f32 %v10767, %v10826
  %v10864 = vmax.f32 %v10768, %v10828
  %v10865 = vmax.f32 %v10769, %v10830
  %v10866 = vmax.f32 %v10770, %v10832
  %v10867 = vmax.f32 %v10771, %v10834
  %v10868 = vmax.f32 %v10772, %v10836
  %v10869 = vpack.c.bf16 %v10838, %v10837
  %v10870 = vpack.c.bf16 %v10842, %v10841
  %v10871 = vpack.c.bf16 %v10846, %v10845
  %v10872 = vpack.c.bf16 %v10850, %v10849
  %v10873 = vpack.c.bf16 %v10854, %v10853
  %v10874 = vpack.c.bf16 %v10858, %v10857
  %v10875 = vpack.c.bf16 %v10862, %v10861
  %v10876 = vpack.c.bf16 %v10866, %v10865
  %v10877 = vpack.c.bf16 %v10840, %v10839
  %v10878 = vpack.c.bf16 %v10844, %v10843
  %v10879 = vpack.c.bf16 %v10848, %v10847
  %v10880 = vpack.c.bf16 %v10852, %v10851
  %v10881 = vpack.c.bf16 %v10856, %v10855
  %v10882 = vpack.c.bf16 %v10860, %v10859
  %v10883 = vpack.c.bf16 %v10864, %v10863
  %v10884 = vpack.c.bf16 %v10868, %v10867
  %v10885 = vld [vmem:[%s5] sm:$0xff]
  %v10886 = vld [vmem:[%s5 + $0x8] sm:$0xff]
  %v10887 = vld [vmem:[%s5 + $0x10] sm:$0xff]
  %v10888 = vld [vmem:[%s5 + $0x18] sm:$0xff]
  %v10889 = vld [vmem:[%s5 + $0x20] sm:$0xff]
  %v10890 = vld [vmem:[%s5 + $0x28] sm:$0xff]
  %v10891 = vld [vmem:[%s5 + $0x30] sm:$0xff]
  %v10892 = vld [vmem:[%s5 + $0x38] sm:$0xff]
  %v10893 = vld [vmem:[%s5 + $0x40] sm:$0xff]
  %v10894 = vld [vmem:[%s5 + $0x48] sm:$0xff]
  %v10895 = vld [vmem:[%s5 + $0x50] sm:$0xff]
  %v10896 = vld [vmem:[%s5 + $0x58] sm:$0xff]
  %v10897 = vld [vmem:[%s5 + $0x60] sm:$0xff]
  %v10898 = vld [vmem:[%s5 + $0x68] sm:$0xff]
  %v10899 = vld [vmem:[%s5 + $0x70] sm:$0xff]
  %v10900 = vld [vmem:[%s5 + $0x78] sm:$0xff]
  %v10901 = vld [vmem:[%s5 + $0x80] sm:$0xff]
  %v10902 = vld [vmem:[%s5 + $0x88] sm:$0xff]
  %v10903 = vld [vmem:[%s5 + $0x90] sm:$0xff]
  %v10904 = vld [vmem:[%s5 + $0x98] sm:$0xff]
  %v10905 = vld [vmem:[%s5 + $0xa0] sm:$0xff]
  %v10906 = vld [vmem:[%s5 + $0xa8] sm:$0xff]
  %v10907 = vld [vmem:[%s5 + $0xb0] sm:$0xff]
  %v10908 = vld [vmem:[%s5 + $0xb8] sm:$0xff]
  %v10909 = vld [vmem:[%s5 + $0xc0] sm:$0xff]
  %v10910 = vld [vmem:[%s5 + $0xc8] sm:$0xff]
  %v10911 = vld [vmem:[%s5 + $0xd0] sm:$0xff]
  %v10912 = vld [vmem:[%s5 + $0xd8] sm:$0xff]
  %v10913 = vld [vmem:[%s5 + $0xe0] sm:$0xff]
  %v10914 = vld [vmem:[%s5 + $0xe8] sm:$0xff]
  %v10915 = vld [vmem:[%s5 + $0xf0] sm:$0xff]
  %v10916 = vld [vmem:[%s5 + $0xf8] sm:$0xff]
  %v10917 = vld [vmem:[%s5 + $0x100] sm:$0xff]
  %v10918 = vld [vmem:[%s5 + $0x108] sm:$0xff]
  %v10919 = vld [vmem:[%s5 + $0x110] sm:$0xff]
  %v10920 = vld [vmem:[%s5 + $0x118] sm:$0xff]
  %v10921 = vld [vmem:[%s5 + $0x120] sm:$0xff]
  %v10922 = vld [vmem:[%s5 + $0x128] sm:$0xff]
  %v10923 = vld [vmem:[%s5 + $0x130] sm:$0xff]
  %v10924 = vld [vmem:[%s5 + $0x138] sm:$0xff]
  %v10925 = vld [vmem:[%s5 + $0x140] sm:$0xff]
  %v10926 = vld [vmem:[%s5 + $0x148] sm:$0xff]
  %v10927 = vld [vmem:[%s5 + $0x150] sm:$0xff]
  %v10928 = vld [vmem:[%s5 + $0x158] sm:$0xff]
  %v10929 = vld [vmem:[%s5 + $0x160] sm:$0xff]
  %v10930 = vld [vmem:[%s5 + $0x168] sm:$0xff]
  %v10931 = vld [vmem:[%s5 + $0x170] sm:$0xff]
  %v10932 = vld [vmem:[%s5 + $0x178] sm:$0xff]
  %v10933 = vld [vmem:[%s5 + $0x180] sm:$0xff]
  %v10934 = vld [vmem:[%s5 + $0x188] sm:$0xff]
  %v10935 = vld [vmem:[%s5 + $0x190] sm:$0xff]
  %v10936 = vld [vmem:[%s5 + $0x198] sm:$0xff]
  %v10937 = vld [vmem:[%s5 + $0x1a0] sm:$0xff]
  %v10938 = vld [vmem:[%s5 + $0x1a8] sm:$0xff]
  %v10939 = vld [vmem:[%s5 + $0x1b0] sm:$0xff]
  %v10940 = vld [vmem:[%s5 + $0x1b8] sm:$0xff]
  %v10941 = vld [vmem:[%s5 + $0x1c0] sm:$0xff]
  %v10942 = vld [vmem:[%s5 + $0x1c8] sm:$0xff]
  %v10943 = vld [vmem:[%s5 + $0x1d0] sm:$0xff]
  %v10944 = vld [vmem:[%s5 + $0x1d8] sm:$0xff]
  %v10945 = vld [vmem:[%s5 + $0x1e0] sm:$0xff]
  %v10946 = vld [vmem:[%s5 + $0x1e8] sm:$0xff]
  %v10947 = vld [vmem:[%s5 + $0x1f0] sm:$0xff]
  %v10948 = vld [vmem:[%s5 + $0x1f8] sm:$0xff]
  %v10949 = vld [vmem:[%s5 + $0x200] sm:$0xff]
  %v10950 = vld [vmem:[%s5 + $0x208] sm:$0xff]
  %v10951 = vld [vmem:[%s5 + $0x210] sm:$0xff]
  %v10952 = vld [vmem:[%s5 + $0x218] sm:$0xff]
  %v10953 = vld [vmem:[%s5 + $0x220] sm:$0xff]
  %v10954 = vld [vmem:[%s5 + $0x228] sm:$0xff]
  %v10955 = vld [vmem:[%s5 + $0x230] sm:$0xff]
  %v10956 = vld [vmem:[%s5 + $0x238] sm:$0xff]
  %v10957 = vld [vmem:[%s5 + $0x240] sm:$0xff]
  %v10958 = vld [vmem:[%s5 + $0x248] sm:$0xff]
  %v10959 = vld [vmem:[%s5 + $0x250] sm:$0xff]
  %v10960 = vld [vmem:[%s5 + $0x258] sm:$0xff]
  %v10961 = vld [vmem:[%s5 + $0x260] sm:$0xff]
  %v10962 = vld [vmem:[%s5 + $0x268] sm:$0xff]
  %v10963 = vld [vmem:[%s5 + $0x270] sm:$0xff]
  %v10964 = vld [vmem:[%s5 + $0x278] sm:$0xff]
  %v10965 = vld [vmem:[%s5 + $0x280] sm:$0xff]
  %v10966 = vld [vmem:[%s5 + $0x288] sm:$0xff]
  %v10967 = vld [vmem:[%s5 + $0x290] sm:$0xff]
  %v10968 = vld [vmem:[%s5 + $0x298] sm:$0xff]
  %v10969 = vld [vmem:[%s5 + $0x2a0] sm:$0xff]
  %v10970 = vld [vmem:[%s5 + $0x2a8] sm:$0xff]
  %v10971 = vld [vmem:[%s5 + $0x2b0] sm:$0xff]
  %v10972 = vld [vmem:[%s5 + $0x2b8] sm:$0xff]
  %v10973 = vld [vmem:[%s5 + $0x2c0] sm:$0xff]
  %v10974 = vld [vmem:[%s5 + $0x2c8] sm:$0xff]
  %v10975 = vld [vmem:[%s5 + $0x2d0] sm:$0xff]
  %v10976 = vld [vmem:[%s5 + $0x2d8] sm:$0xff]
  %v10977 = vld [vmem:[%s5 + $0x2e0] sm:$0xff]
  %v10978 = vld [vmem:[%s5 + $0x2e8] sm:$0xff]
  %v10979 = vld [vmem:[%s5 + $0x2f0] sm:$0xff]
  %v10980 = vld [vmem:[%s5 + $0x2f8] sm:$0xff]
  %v10981 = vld [vmem:[%s5 + $0x300] sm:$0xff]
  %v10982 = vld [vmem:[%s5 + $0x308] sm:$0xff]
  %v10983 = vld [vmem:[%s5 + $0x310] sm:$0xff]
  %v10984 = vld [vmem:[%s5 + $0x318] sm:$0xff]
  %v10985 = vld [vmem:[%s5 + $0x320] sm:$0xff]
  %v10986 = vld [vmem:[%s5 + $0x328] sm:$0xff]
  %v10987 = vld [vmem:[%s5 + $0x330] sm:$0xff]
  %v10988 = vld [vmem:[%s5 + $0x338] sm:$0xff]
  %v10989 = vld [vmem:[%s5 + $0x340] sm:$0xff]
  %v10990 = vld [vmem:[%s5 + $0x348] sm:$0xff]
  %v10991 = vld [vmem:[%s5 + $0x350] sm:$0xff]
  %v10992 = vld [vmem:[%s5 + $0x358] sm:$0xff]
  %v10993 = vld [vmem:[%s5 + $0x360] sm:$0xff]
  %v10994 = vld [vmem:[%s5 + $0x368] sm:$0xff]
  %v10995 = vld [vmem:[%s5 + $0x370] sm:$0xff]
  %v10996 = vld [vmem:[%s5 + $0x378] sm:$0xff]
  %v10997 = vld [vmem:[%s5 + $0x380] sm:$0xff]
  %v10998 = vld [vmem:[%s5 + $0x388] sm:$0xff]
  %v10999 = vld [vmem:[%s5 + $0x390] sm:$0xff]
  %v11000 = vld [vmem:[%s5 + $0x398] sm:$0xff]
  %v11001 = vld [vmem:[%s5 + $0x3a0] sm:$0xff]
  %v11002 = vld [vmem:[%s5 + $0x3a8] sm:$0xff]
  %v11003 = vld [vmem:[%s5 + $0x3b0] sm:$0xff]
  %v11004 = vld [vmem:[%s5 + $0x3b8] sm:$0xff]
  %v11005 = vld [vmem:[%s5 + $0x3c0] sm:$0xff]
  %v11006 = vld [vmem:[%s5 + $0x3c8] sm:$0xff]
  %v11007 = vld [vmem:[%s5 + $0x3d0] sm:$0xff]
  %v11008 = vld [vmem:[%s5 + $0x3d8] sm:$0xff]
  %v11009 = vld [vmem:[%s5 + $0x3e0] sm:$0xff]
  %v11010 = vld [vmem:[%s5 + $0x3e8] sm:$0xff]
  %v11011 = vld [vmem:[%s5 + $0x3f0] sm:$0xff]
  %v11012 = vld [vmem:[%s5 + $0x3f8] sm:$0xff]
  %v11013 = vld [vmem:[%s6] sm:$0x3]
  %v11015 = vlaneseq
  %v11016 = vshrl.u32 %v11015, 7
  %v11017 = vsub.s32 0, %v11016
  %v11018 = vrot.slane %v11013, %v11017
  %v11019 = vlaneseq
  %v11020 = vshrl.u32 %v11019, 7
  %v11021 = vsub.s32 1, %v11020
  %v11022 = vrot.slane %v11013, %v11021
  %v11153 = vunpack.c.l.b16 %v10885
  %v11154 = vunpack.c.h.b16 %v10885
  %v11155 = vunpack.c.l.b16 %v10886
  %v11156 = vunpack.c.h.b16 %v10886
  %v11157 = vunpack.c.l.b16 %v10887
  %v11158 = vunpack.c.h.b16 %v10887
  %v11159 = vunpack.c.l.b16 %v10888
  %v11160 = vunpack.c.h.b16 %v10888
  %v11161 = vunpack.c.l.b16 %v10889
  %v11162 = vunpack.c.h.b16 %v10889
  %v11163 = vunpack.c.l.b16 %v10890
  %v11164 = vunpack.c.h.b16 %v10890
  %v11165 = vunpack.c.l.b16 %v10891
  %v11166 = vunpack.c.h.b16 %v10891
  %v11167 = vunpack.c.l.b16 %v10892
  %v11168 = vunpack.c.h.b16 %v10892
  %v11169 = vunpack.c.l.b16 %v10893
  %v11170 = vunpack.c.h.b16 %v10893
  %v11171 = vunpack.c.l.b16 %v10894
  %v11172 = vunpack.c.h.b16 %v10894
  %v11173 = vunpack.c.l.b16 %v10895
  %v11174 = vunpack.c.h.b16 %v10895
  %v11175 = vunpack.c.l.b16 %v10896
  %v11176 = vunpack.c.h.b16 %v10896
  %v11177 = vunpack.c.l.b16 %v10897
  %v11178 = vunpack.c.h.b16 %v10897
  %v11179 = vunpack.c.l.b16 %v10898
  %v11180 = vunpack.c.h.b16 %v10898
  %v11181 = vunpack.c.l.b16 %v10899
  %v11182 = vunpack.c.h.b16 %v10899
  %v11183 = vunpack.c.l.b16 %v10900
  %v11184 = vunpack.c.h.b16 %v10900
  %v11185 = vunpack.c.l.b16 %v10901
  %v11186 = vunpack.c.h.b16 %v10901
  %v11187 = vunpack.c.l.b16 %v10902
  %v11188 = vunpack.c.h.b16 %v10902
  %v11189 = vunpack.c.l.b16 %v10903
  %v11190 = vunpack.c.h.b16 %v10903
  %v11191 = vunpack.c.l.b16 %v10904
  %v11192 = vunpack.c.h.b16 %v10904
  %v11193 = vunpack.c.l.b16 %v10905
  %v11194 = vunpack.c.h.b16 %v10905
  %v11195 = vunpack.c.l.b16 %v10906
  %v11196 = vunpack.c.h.b16 %v10906
  %v11197 = vunpack.c.l.b16 %v10907
  %v11198 = vunpack.c.h.b16 %v10907
  %v11199 = vunpack.c.l.b16 %v10908
  %v11200 = vunpack.c.h.b16 %v10908
  %v11201 = vunpack.c.l.b16 %v10909
  %v11202 = vunpack.c.h.b16 %v10909
  %v11203 = vunpack.c.l.b16 %v10910
  %v11204 = vunpack.c.h.b16 %v10910
  %v11205 = vunpack.c.l.b16 %v10911
  %v11206 = vunpack.c.h.b16 %v10911
  %v11207 = vunpack.c.l.b16 %v10912
  %v11208 = vunpack.c.h.b16 %v10912
  %v11209 = vunpack.c.l.b16 %v10913
  %v11210 = vunpack.c.h.b16 %v10913
  %v11211 = vunpack.c.l.b16 %v10914
  %v11212 = vunpack.c.h.b16 %v10914
  %v11213 = vunpack.c.l.b16 %v10915
  %v11214 = vunpack.c.h.b16 %v10915
  %v11215 = vunpack.c.l.b16 %v10916
  %v11216 = vunpack.c.h.b16 %v10916
  %v11217 = vunpack.c.l.b16 %v10917
  %v11218 = vunpack.c.h.b16 %v10917
  %v11219 = vunpack.c.l.b16 %v10918
  %v11220 = vunpack.c.h.b16 %v10918
  %v11221 = vunpack.c.l.b16 %v10919
  %v11222 = vunpack.c.h.b16 %v10919
  %v11223 = vunpack.c.l.b16 %v10920
  %v11224 = vunpack.c.h.b16 %v10920
  %v11225 = vunpack.c.l.b16 %v10921
  %v11226 = vunpack.c.h.b16 %v10921
  %v11227 = vunpack.c.l.b16 %v10922
  %v11228 = vunpack.c.h.b16 %v10922
  %v11229 = vunpack.c.l.b16 %v10923
  %v11230 = vunpack.c.h.b16 %v10923
  %v11231 = vunpack.c.l.b16 %v10924
  %v11232 = vunpack.c.h.b16 %v10924
  %v11233 = vunpack.c.l.b16 %v10925
  %v11234 = vunpack.c.h.b16 %v10925
  %v11235 = vunpack.c.l.b16 %v10926
  %v11236 = vunpack.c.h.b16 %v10926
  %v11237 = vunpack.c.l.b16 %v10927
  %v11238 = vunpack.c.h.b16 %v10927
  %v11239 = vunpack.c.l.b16 %v10928
  %v11240 = vunpack.c.h.b16 %v10928
  %v11241 = vunpack.c.l.b16 %v10929
  %v11242 = vunpack.c.h.b16 %v10929
  %v11243 = vunpack.c.l.b16 %v10930
  %v11244 = vunpack.c.h.b16 %v10930
  %v11245 = vunpack.c.l.b16 %v10931
  %v11246 = vunpack.c.h.b16 %v10931
  %v11247 = vunpack.c.l.b16 %v10932
  %v11248 = vunpack.c.h.b16 %v10932
  %v11249 = vunpack.c.l.b16 %v10933
  %v11250 = vunpack.c.h.b16 %v10933
  %v11251 = vunpack.c.l.b16 %v10934
  %v11252 = vunpack.c.h.b16 %v10934
  %v11253 = vunpack.c.l.b16 %v10935
  %v11254 = vunpack.c.h.b16 %v10935
  %v11255 = vunpack.c.l.b16 %v10936
  %v11256 = vunpack.c.h.b16 %v10936
  %v11257 = vunpack.c.l.b16 %v10937
  %v11258 = vunpack.c.h.b16 %v10937
  %v11259 = vunpack.c.l.b16 %v10938
  %v11260 = vunpack.c.h.b16 %v10938
  %v11261 = vunpack.c.l.b16 %v10939
  %v11262 = vunpack.c.h.b16 %v10939
  %v11263 = vunpack.c.l.b16 %v10940
  %v11264 = vunpack.c.h.b16 %v10940
  %v11265 = vunpack.c.l.b16 %v10941
  %v11266 = vunpack.c.h.b16 %v10941
  %v11267 = vunpack.c.l.b16 %v10942
  %v11268 = vunpack.c.h.b16 %v10942
  %v11269 = vunpack.c.l.b16 %v10943
  %v11270 = vunpack.c.h.b16 %v10943
  %v11271 = vunpack.c.l.b16 %v10944
  %v11272 = vunpack.c.h.b16 %v10944
  %v11273 = vunpack.c.l.b16 %v10945
  %v11274 = vunpack.c.h.b16 %v10945
  %v11275 = vunpack.c.l.b16 %v10946
  %v11276 = vunpack.c.h.b16 %v10946
  %v11277 = vunpack.c.l.b16 %v10947
  %v11278 = vunpack.c.h.b16 %v10947
  %v11279 = vunpack.c.l.b16 %v10948
  %v11280 = vunpack.c.h.b16 %v10948
  %v11281 = vunpack.c.l.b16 %v10949
  %v11282 = vunpack.c.h.b16 %v10949
  %v11283 = vunpack.c.l.b16 %v10950
  %v11284 = vunpack.c.h.b16 %v10950
  %v11285 = vunpack.c.l.b16 %v10951
  %v11286 = vunpack.c.h.b16 %v10951
  %v11287 = vunpack.c.l.b16 %v10952
  %v11288 = vunpack.c.h.b16 %v10952
  %v11289 = vunpack.c.l.b16 %v10953
  %v11290 = vunpack.c.h.b16 %v10953
  %v11291 = vunpack.c.l.b16 %v10954
  %v11292 = vunpack.c.h.b16 %v10954
  %v11293 = vunpack.c.l.b16 %v10955
  %v11294 = vunpack.c.h.b16 %v10955
  %v11295 = vunpack.c.l.b16 %v10956
  %v11296 = vunpack.c.h.b16 %v10956
  %v11297 = vunpack.c.l.b16 %v10957
  %v11298 = vunpack.c.h.b16 %v10957
  %v11299 = vunpack.c.l.b16 %v10958
  %v11300 = vunpack.c.h.b16 %v10958
  %v11301 = vunpack.c.l.b16 %v10959
  %v11302 = vunpack.c.h.b16 %v10959
  %v11303 = vunpack.c.l.b16 %v10960
  %v11304 = vunpack.c.h.b16 %v10960
  %v11305 = vunpack.c.l.b16 %v10961
  %v11306 = vunpack.c.h.b16 %v10961
  %v11307 = vunpack.c.l.b16 %v10962
  %v11308 = vunpack.c.h.b16 %v10962
  %v11309 = vunpack.c.l.b16 %v10963
  %v11310 = vunpack.c.h.b16 %v10963
  %v11311 = vunpack.c.l.b16 %v10964
  %v11312 = vunpack.c.h.b16 %v10964
  %v11313 = vunpack.c.l.b16 %v10965
  %v11314 = vunpack.c.h.b16 %v10965
  %v11315 = vunpack.c.l.b16 %v10966
  %v11316 = vunpack.c.h.b16 %v10966
  %v11317 = vunpack.c.l.b16 %v10967
  %v11318 = vunpack.c.h.b16 %v10967
  %v11319 = vunpack.c.l.b16 %v10968
  %v11320 = vunpack.c.h.b16 %v10968
  %v11321 = vunpack.c.l.b16 %v10969
  %v11322 = vunpack.c.h.b16 %v10969
  %v11323 = vunpack.c.l.b16 %v10970
  %v11324 = vunpack.c.h.b16 %v10970
  %v11325 = vunpack.c.l.b16 %v10971
  %v11326 = vunpack.c.h.b16 %v10971
  %v11327 = vunpack.c.l.b16 %v10972
  %v11328 = vunpack.c.h.b16 %v10972
  %v11329 = vunpack.c.l.b16 %v10973
  %v11330 = vunpack.c.h.b16 %v10973
  %v11331 = vunpack.c.l.b16 %v10974
  %v11332 = vunpack.c.h.b16 %v10974
  %v11333 = vunpack.c.l.b16 %v10975
  %v11334 = vunpack.c.h.b16 %v10975
  %v11335 = vunpack.c.l.b16 %v10976
  %v11336 = vunpack.c.h.b16 %v10976
  %v11337 = vunpack.c.l.b16 %v10977
  %v11338 = vunpack.c.h.b16 %v10977
  %v11339 = vunpack.c.l.b16 %v10978
  %v11340 = vunpack.c.h.b16 %v10978
  %v11341 = vunpack.c.l.b16 %v10979
  %v11342 = vunpack.c.h.b16 %v10979
  %v11343 = vunpack.c.l.b16 %v10980
  %v11344 = vunpack.c.h.b16 %v10980
  %v11345 = vunpack.c.l.b16 %v10981
  %v11346 = vunpack.c.h.b16 %v10981
  %v11347 = vunpack.c.l.b16 %v10982
  %v11348 = vunpack.c.h.b16 %v10982
  %v11349 = vunpack.c.l.b16 %v10983
  %v11350 = vunpack.c.h.b16 %v10983
  %v11351 = vunpack.c.l.b16 %v10984
  %v11352 = vunpack.c.h.b16 %v10984
  %v11353 = vunpack.c.l.b16 %v10985
  %v11354 = vunpack.c.h.b16 %v10985
  %v11355 = vunpack.c.l.b16 %v10986
  %v11356 = vunpack.c.h.b16 %v10986
  %v11357 = vunpack.c.l.b16 %v10987
  %v11358 = vunpack.c.h.b16 %v10987
  %v11359 = vunpack.c.l.b16 %v10988
  %v11360 = vunpack.c.h.b16 %v10988
  %v11361 = vunpack.c.l.b16 %v10989
  %v11362 = vunpack.c.h.b16 %v10989
  %v11363 = vunpack.c.l.b16 %v10990
  %v11364 = vunpack.c.h.b16 %v10990
  %v11365 = vunpack.c.l.b16 %v10991
  %v11366 = vunpack.c.h.b16 %v10991
  %v11367 = vunpack.c.l.b16 %v10992
  %v11368 = vunpack.c.h.b16 %v10992
  %v11369 = vunpack.c.l.b16 %v10993
  %v11370 = vunpack.c.h.b16 %v10993
  %v11371 = vunpack.c.l.b16 %v10994
  %v11372 = vunpack.c.h.b16 %v10994
  %v11373 = vunpack.c.l.b16 %v10995
  %v11374 = vunpack.c.h.b16 %v10995
  %v11375 = vunpack.c.l.b16 %v10996
  %v11376 = vunpack.c.h.b16 %v10996
  %v11377 = vunpack.c.l.b16 %v10997
  %v11378 = vunpack.c.h.b16 %v10997
  %v11379 = vunpack.c.l.b16 %v10998
  %v11380 = vunpack.c.h.b16 %v10998
  %v11381 = vunpack.c.l.b16 %v10999
  %v11382 = vunpack.c.h.b16 %v10999
  %v11383 = vunpack.c.l.b16 %v11000
  %v11384 = vunpack.c.h.b16 %v11000
  %v11385 = vunpack.c.l.b16 %v11001
  %v11386 = vunpack.c.h.b16 %v11001
  %v11387 = vunpack.c.l.b16 %v11002
  %v11388 = vunpack.c.h.b16 %v11002
  %v11389 = vunpack.c.l.b16 %v11003
  %v11390 = vunpack.c.h.b16 %v11003
  %v11391 = vunpack.c.l.b16 %v11004
  %v11392 = vunpack.c.h.b16 %v11004
  %v11393 = vunpack.c.l.b16 %v11005
  %v11394 = vunpack.c.h.b16 %v11005
  %v11395 = vunpack.c.l.b16 %v11006
  %v11396 = vunpack.c.h.b16 %v11006
  %v11397 = vunpack.c.l.b16 %v11007
  %v11398 = vunpack.c.h.b16 %v11007
  %v11399 = vunpack.c.l.b16 %v11008
  %v11400 = vunpack.c.h.b16 %v11008
  %v11401 = vunpack.c.l.b16 %v11009
  %v11402 = vunpack.c.h.b16 %v11009
  %v11403 = vunpack.c.l.b16 %v11010
  %v11404 = vunpack.c.h.b16 %v11010
  %v11405 = vunpack.c.l.b16 %v11011
  %v11406 = vunpack.c.h.b16 %v11011
  %v11407 = vunpack.c.l.b16 %v11012
  %v11408 = vunpack.c.h.b16 %v11012
  %v11409 = vpack.c.b16 %v11155, %v11153
  %v11410 = vpack.c.b16 %v11156, %v11154
  %v11411 = vpack.c.b16 %v11159, %v11157
  %v11412 = vpack.c.b16 %v11160, %v11158
  %v11413 = vpack.c.b16 %v11163, %v11161
  %v11414 = vpack.c.b16 %v11164, %v11162
  %v11415 = vpack.c.b16 %v11167, %v11165
  %v11416 = vpack.c.b16 %v11168, %v11166
  %v11417 = vpack.c.b16 %v11171, %v11169
  %v11418 = vpack.c.b16 %v11172, %v11170
  %v11419 = vpack.c.b16 %v11175, %v11173
  %v11420 = vpack.c.b16 %v11176, %v11174
  %v11421 = vpack.c.b16 %v11179, %v11177
  %v11422 = vpack.c.b16 %v11180, %v11178
  %v11423 = vpack.c.b16 %v11183, %v11181
  %v11424 = vpack.c.b16 %v11184, %v11182
  %v11425 = vpack.c.b16 %v11187, %v11185
  %v11426 = vpack.c.b16 %v11188, %v11186
  %v11427 = vpack.c.b16 %v11191, %v11189
  %v11428 = vpack.c.b16 %v11192, %v11190
  %v11429 = vpack.c.b16 %v11195, %v11193
  %v11430 = vpack.c.b16 %v11196, %v11194
  %v11431 = vpack.c.b16 %v11199, %v11197
  %v11432 = vpack.c.b16 %v11200, %v11198
  %v11433 = vpack.c.b16 %v11203, %v11201
  %v11434 = vpack.c.b16 %v11204, %v11202
  %v11435 = vpack.c.b16 %v11207, %v11205
  %v11436 = vpack.c.b16 %v11208, %v11206
  %v11437 = vpack.c.b16 %v11211, %v11209
  %v11438 = vpack.c.b16 %v11212, %v11210
  %v11439 = vpack.c.b16 %v11215, %v11213
  %v11440 = vpack.c.b16 %v11216, %v11214
  %v11441 = vpack.c.b16 %v11219, %v11217
  %v11442 = vpack.c.b16 %v11220, %v11218
  %v11443 = vpack.c.b16 %v11223, %v11221
  %v11444 = vpack.c.b16 %v11224, %v11222
  %v11445 = vpack.c.b16 %v11227, %v11225
  %v11446 = vpack.c.b16 %v11228, %v11226
  %v11447 = vpack.c.b16 %v11231, %v11229
  %v11448 = vpack.c.b16 %v11232, %v11230
  %v11449 = vpack.c.b16 %v11235, %v11233
  %v11450 = vpack.c.b16 %v11236, %v11234
  %v11451 = vpack.c.b16 %v11239, %v11237
  %v11452 = vpack.c.b16 %v11240, %v11238
  %v11453 = vpack.c.b16 %v11243, %v11241
  %v11454 = vpack.c.b16 %v11244, %v11242
  %v11455 = vpack.c.b16 %v11247, %v11245
  %v11456 = vpack.c.b16 %v11248, %v11246
  %v11457 = vpack.c.b16 %v11251, %v11249
  %v11458 = vpack.c.b16 %v11252, %v11250
  %v11459 = vpack.c.b16 %v11255, %v11253
  %v11460 = vpack.c.b16 %v11256, %v11254
  %v11461 = vpack.c.b16 %v11259, %v11257
  %v11462 = vpack.c.b16 %v11260, %v11258
  %v11463 = vpack.c.b16 %v11263, %v11261
  %v11464 = vpack.c.b16 %v11264, %v11262
  %v11465 = vpack.c.b16 %v11267, %v11265
  %v11466 = vpack.c.b16 %v11268, %v11266
  %v11467 = vpack.c.b16 %v11271, %v11269
  %v11468 = vpack.c.b16 %v11272, %v11270
  %v11469 = vpack.c.b16 %v11275, %v11273
  %v11470 = vpack.c.b16 %v11276, %v11274
  %v11471 = vpack.c.b16 %v11279, %v11277
  %v11472 = vpack.c.b16 %v11280, %v11278
  %v11473 = vpack.c.b16 %v11283, %v11281
  %v11474 = vpack.c.b16 %v11284, %v11282
  %v11475 = vpack.c.b16 %v11287, %v11285
  %v11476 = vpack.c.b16 %v11288, %v11286
  %v11477 = vpack.c.b16 %v11291, %v11289
  %v11478 = vpack.c.b16 %v11292, %v11290
  %v11479 = vpack.c.b16 %v11295, %v11293
  %v11480 = vpack.c.b16 %v11296, %v11294
  %v11481 = vpack.c.b16 %v11299, %v11297
  %v11482 = vpack.c.b16 %v11300, %v11298
  %v11483 = vpack.c.b16 %v11303, %v11301
  %v11484 = vpack.c.b16 %v11304, %v11302
  %v11485 = vpack.c.b16 %v11307, %v11305
  %v11486 = vpack.c.b16 %v11308, %v11306
  %v11487 = vpack.c.b16 %v11311, %v11309
  %v11488 = vpack.c.b16 %v11312, %v11310
  %v11489 = vpack.c.b16 %v11315, %v11313
  %v11490 = vpack.c.b16 %v11316, %v11314
  %v11491 = vpack.c.b16 %v11319, %v11317
  %v11492 = vpack.c.b16 %v11320, %v11318
  %v11493 = vpack.c.b16 %v11323, %v11321
  %v11494 = vpack.c.b16 %v11324, %v11322
  %v11495 = vpack.c.b16 %v11327, %v11325
  %v11496 = vpack.c.b16 %v11328, %v11326
  %v11497 = vpack.c.b16 %v11331, %v11329
  %v11498 = vpack.c.b16 %v11332, %v11330
  %v11499 = vpack.c.b16 %v11335, %v11333
  %v11500 = vpack.c.b16 %v11336, %v11334
  %v11501 = vpack.c.b16 %v11339, %v11337
  %v11502 = vpack.c.b16 %v11340, %v11338
  %v11503 = vpack.c.b16 %v11343, %v11341
  %v11504 = vpack.c.b16 %v11344, %v11342
  %v11505 = vpack.c.b16 %v11347, %v11345
  %v11506 = vpack.c.b16 %v11348, %v11346
  %v11507 = vpack.c.b16 %v11351, %v11349
  %v11508 = vpack.c.b16 %v11352, %v11350
  %v11509 = vpack.c.b16 %v11355, %v11353
  %v11510 = vpack.c.b16 %v11356, %v11354
  %v11511 = vpack.c.b16 %v11359, %v11357
  %v11512 = vpack.c.b16 %v11360, %v11358
  %v11513 = vpack.c.b16 %v11363, %v11361
  %v11514 = vpack.c.b16 %v11364, %v11362
  %v11515 = vpack.c.b16 %v11367, %v11365
  %v11516 = vpack.c.b16 %v11368, %v11366
  %v11517 = vpack.c.b16 %v11371, %v11369
  %v11518 = vpack.c.b16 %v11372, %v11370
  %v11519 = vpack.c.b16 %v11375, %v11373
  %v11520 = vpack.c.b16 %v11376, %v11374
  %v11521 = vpack.c.b16 %v11379, %v11377
  %v11522 = vpack.c.b16 %v11380, %v11378
  %v11523 = vpack.c.b16 %v11383, %v11381
  %v11524 = vpack.c.b16 %v11384, %v11382
  %v11525 = vpack.c.b16 %v11387, %v11385
  %v11526 = vpack.c.b16 %v11388, %v11386
  %v11527 = vpack.c.b16 %v11391, %v11389
  %v11528 = vpack.c.b16 %v11392, %v11390
  %v11529 = vpack.c.b16 %v11395, %v11393
  %v11530 = vpack.c.b16 %v11396, %v11394
  %v11531 = vpack.c.b16 %v11399, %v11397
  %v11532 = vpack.c.b16 %v11400, %v11398
  %v11533 = vpack.c.b16 %v11403, %v11401
  %v11534 = vpack.c.b16 %v11404, %v11402
  %v11535 = vpack.c.b16 %v11407, %v11405
  %v11536 = vpack.c.b16 %v11408, %v11406
  %11665 = vmatprep.subr.bf16.mxu0 %v11410
  %11666 = vmatpush1.bf16.msra.mxu0 %v11409
  %11667 = vmatprep.subr.bf16.mxu0 %v11412
  %11668 = vmatpush1.bf16.msra.mxu0 %v11411
  %11669 = vmatprep.subr.bf16.mxu0 %v11414
  %11670 = vmatpush1.bf16.msra.mxu0 %v11413
  %11671 = vmatprep.subr.bf16.mxu0 %v11416
  %11672 = vmatpush1.bf16.msra.mxu0 %v11415
  %11673 = vmatprep.subr.bf16.mxu0 %v11418
  %11674 = vmatpush1.bf16.msra.mxu0 %v11417
  %11675 = vmatprep.subr.bf16.mxu0 %v11420
  %11676 = vmatpush1.bf16.msra.mxu0 %v11419
  %11677 = vmatprep.subr.bf16.mxu0 %v11422
  %11678 = vmatpush1.bf16.msra.mxu0 %v11421
  %11679 = vmatprep.subr.bf16.mxu0 %v11424
  %11680 = vmatpush1.bf16.msra.mxu0 %v11423
  %11681 = vmatprep.subr.bf16.mxu0 %v11426
  %11682 = vmatpush1.bf16.msra.mxu0 %v11425
  %11683 = vmatprep.subr.bf16.mxu0 %v11428
  %11684 = vmatpush1.bf16.msra.mxu0 %v11427
  %11685 = vmatprep.subr.bf16.mxu0 %v11430
  %11686 = vmatpush1.bf16.msra.mxu0 %v11429
  %11687 = vmatprep.subr.bf16.mxu0 %v11432
  %11688 = vmatpush1.bf16.msra.mxu0 %v11431
  %11689 = vmatprep.subr.bf16.mxu0 %v11434
  %11690 = vmatpush1.bf16.msra.mxu0 %v11433
  %11691 = vmatprep.subr.bf16.mxu0 %v11436
  %11692 = vmatpush1.bf16.msra.mxu0 %v11435
  %11693 = vmatprep.subr.bf16.mxu0 %v11438
  %11694 = vmatpush1.bf16.msra.mxu0 %v11437
  %11695 = vmatprep.subr.bf16.mxu0 %v11440
  %11696 = vmatpush1.bf16.msra.mxu0 %v11439
  %11697 = vmatprep.mubr.bf16.mxu0 %v10870
  %11698 = vmatmul.mubr.bf16.gmra.mrb[0].mxu0 %v10869
  %v11699 = vpop.f32.mrb[0].mxu0
  %v11700 = vadd.f32 %v11018, %v11699
  %v11701 = vpop.f32.mrb[0].mxu0
  %v11702 = vadd.f32 %v11022, %v11701
  %v11703 = vpop.f32.mrb[0].mxu0
  %v11704 = vadd.f32 %v11018, %v11703
  %v11705 = vpop.f32.mrb[0].mxu0
  %v11706 = vadd.f32 %v11022, %v11705
  %11707 = vmatprep.mubr.bf16.mxu0 %v10878
  %11708 = vmatmul.mubr.bf16.gmra.mrb[0].mxu0 %v10877
  %v11709 = vpop.f32.mrb[0].mxu0
  %v11710 = vadd.f32 %v11018, %v11709
  %v11711 = vpop.f32.mrb[0].mxu0
  %v11712 = vadd.f32 %v11022, %v11711
  %v11713 = vpop.f32.mrb[0].mxu0
  %v11714 = vadd.f32 %v11018, %v11713
  %v11715 = vpop.f32.mrb[0].mxu0
  %v11716 = vadd.f32 %v11022, %v11715
  %11717 = vdwg.mxu0
  %11718 = vmatprep.subr.bf16.mxu0 %v11442
  %11719 = vmatpush1.bf16.msra.mxu0 %v11441
  %11720 = vmatprep.subr.bf16.mxu0 %v11444
  %11721 = vmatpush1.bf16.msra.mxu0 %v11443
  %11722 = vmatprep.subr.bf16.mxu0 %v11446
  %11723 = vmatpush1.bf16.msra.mxu0 %v11445
  %11724 = vmatprep.subr.bf16.mxu0 %v11448
  %11725 = vmatpush1.bf16.msra.mxu0 %v11447
  %11726 = vmatprep.subr.bf16.mxu0 %v11450
  %11727 = vmatpush1.bf16.msra.mxu0 %v11449
  %11728 = vmatprep.subr.bf16.mxu0 %v11452
  %11729 = vmatpush1.bf16.msra.mxu0 %v11451
  %11730 = vmatprep.subr.bf16.mxu0 %v11454
  %11731 = vmatpush1.bf16.msra.mxu0 %v11453
  %11732 = vmatprep.subr.bf16.mxu0 %v11456
  %11733 = vmatpush1.bf16.msra.mxu0 %v11455
  %11734 = vmatprep.subr.bf16.mxu0 %v11458
  %11735 = vmatpush1.bf16.msra.mxu0 %v11457
  %11736 = vmatprep.subr.bf16.mxu0 %v11460
  %11737 = vmatpush1.bf16.msra.mxu0 %v11459
  %11738 = vmatprep.subr.bf16.mxu0 %v11462
  %11739 = vmatpush1.bf16.msra.mxu0 %v11461
  %11740 = vmatprep.subr.bf16.mxu0 %v11464
  %11741 = vmatpush1.bf16.msra.mxu0 %v11463
  %11742 = vmatprep.subr.bf16.mxu0 %v11466
  %11743 = vmatpush1.bf16.msra.mxu0 %v11465
  %11744 = vmatprep.subr.bf16.mxu0 %v11468
  %11745 = vmatpush1.bf16.msra.mxu0 %v11467
  %11746 = vmatprep.subr.bf16.mxu0 %v11470
  %11747 = vmatpush1.bf16.msra.mxu0 %v11469
  %11748 = vmatprep.subr.bf16.mxu0 %v11472
  %11749 = vmatpush1.bf16.msra.mxu0 %v11471
  %11750 = vmatprep.mubr.bf16.mxu0 %v10872
  %11751 = vmatmul.mubr.bf16.gmra.mrb[0].mxu0 %v10871
  %v11752 = vpop.f32.mrb[0].mxu0
  %v11753 = vadd.f32 %v11700, %v11752
  %v11754 = vpop.f32.mrb[0].mxu0
  %v11755 = vadd.f32 %v11702, %v11754
  %v11756 = vpop.f32.mrb[0].mxu0
  %v11757 = vadd.f32 %v11704, %v11756
  %v11758 = vpop.f32.mrb[0].mxu0
  %v11759 = vadd.f32 %v11706, %v11758
  %11760 = vmatprep.mubr.bf16.mxu0 %v10880
  %11761 = vmatmul.mubr.bf16.gmra.mrb[0].mxu0 %v10879
  %v11762 = vpop.f32.mrb[0].mxu0
  %v11763 = vadd.f32 %v11710, %v11762
  %v11764 = vpop.f32.mrb[0].mxu0
  %v11765 = vadd.f32 %v11712, %v11764
  %v11766 = vpop.f32.mrb[0].mxu0
  %v11767 = vadd.f32 %v11714, %v11766
  %v11768 = vpop.f32.mrb[0].mxu0
  %v11769 = vadd.f32 %v11716, %v11768
  %11770 = vdwg.mxu0
  %11771 = vmatprep.subr.bf16.mxu0 %v11474
  %11772 = vmatpush1.bf16.msra.mxu0 %v11473
  %11773 = vmatprep.subr.bf16.mxu0 %v11476
  %11774 = vmatpush1.bf16.msra.mxu0 %v11475
  %11775 = vmatprep.subr.bf16.mxu0 %v11478
  %11776 = vmatpush1.bf16.msra.mxu0 %v11477
  %11777 = vmatprep.subr.bf16.mxu0 %v11480
  %11778 = vmatpush1.bf16.msra.mxu0 %v11479
  %11779 = vmatprep.subr.bf16.mxu0 %v11482
  %11780 = vmatpush1.bf16.msra.mxu0 %v11481
  %11781 = vmatprep.subr.bf16.mxu0 %v11484
  %11782 = vmatpush1.bf16.msra.mxu0 %v11483
  %11783 = vmatprep.subr.bf16.mxu0 %v11486
  %11784 = vmatpush1.bf16.msra.mxu0 %v11485
  %11785 = vmatprep.subr.bf16.mxu0 %v11488
  %11786 = vmatpush1.bf16.msra.mxu0 %v11487
  %11787 = vmatprep.subr.bf16.mxu0 %v11490
  %11788 = vmatpush1.bf16.msra.mxu0 %v11489
  %11789 = vmatprep.subr.bf16.mxu0 %v11492
  %11790 = vmatpush1.bf16.msra.mxu0 %v11491
  %11791 = vmatprep.subr.bf16.mxu0 %v11494
  %11792 = vmatpush1.bf16.msra.mxu0 %v11493
  %11793 = vmatprep.subr.bf16.mxu0 %v11496
  %11794 = vmatpush1.bf16.msra.mxu0 %v11495
  %11795 = vmatprep.subr.bf16.mxu0 %v11498
  %11796 = vmatpush1.bf16.msra.mxu0 %v11497
  %11797 = vmatprep.subr.bf16.mxu0 %v11500
  %11798 = vmatpush1.bf16.msra.mxu0 %v11499
  %11799 = vmatprep.subr.bf16.mxu0 %v11502
  %11800 = vmatpush1.bf16.msra.mxu0 %v11501
  %11801 = vmatprep.subr.bf16.mxu0 %v11504
  %11802 = vmatpush1.bf16.msra.mxu0 %v11503
  %11803 = vmatprep.mubr.bf16.mxu0 %v10874
  %11804 = vmatmul.mubr.bf16.gmra.mrb[0].mxu0 %v10873
  %v11805 = vpop.f32.mrb[0].mxu0
  %v11806 = vadd.f32 %v11753, %v11805
  %v11807 = vpop.f32.mrb[0].mxu0
  %v11808 = vadd.f32 %v11755, %v11807
  %v11809 = vpop.f32.mrb[0].mxu0
  %v11810 = vadd.f32 %v11757, %v11809
  %v11811 = vpop.f32.mrb[0].mxu0
  %v11812 = vadd.f32 %v11759, %v11811
  %11813 = vmatprep.mubr.bf16.mxu0 %v10882
  %11814 = vmatmul.mubr.bf16.gmra.mrb[0].mxu0 %v10881
  %v11815 = vpop.f32.mrb[0].mxu0
  %v11816 = vadd.f32 %v11763, %v11815
  %v11817 = vpop.f32.mrb[0].mxu0
  %v11818 = vadd.f32 %v11765, %v11817
  %v11819 = vpop.f32.mrb[0].mxu0
  %v11820 = vadd.f32 %v11767, %v11819
  %v11821 = vpop.f32.mrb[0].mxu0
  %v11822 = vadd.f32 %v11769, %v11821
  %11823 = vdwg.mxu0
  %11824 = vmatprep.subr.bf16.mxu0 %v11506
  %11825 = vmatpush1.bf16.msra.mxu0 %v11505
  %11826 = vmatprep.subr.bf16.mxu0 %v11508
  %11827 = vmatpush1.bf16.msra.mxu0 %v11507
  %11828 = vmatprep.subr.bf16.mxu0 %v11510
  %11829 = vmatpush1.bf16.msra.mxu0 %v11509
  %11830 = vmatprep.subr.bf16.mxu0 %v11512
  %11831 = vmatpush1.bf16.msra.mxu0 %v11511
  %11832 = vmatprep.subr.bf16.mxu0 %v11514
  %11833 = vmatpush1.bf16.msra.mxu0 %v11513
  %11834 = vmatprep.subr.bf16.mxu0 %v11516
  %11835 = vmatpush1.bf16.msra.mxu0 %v11515
  %11836 = vmatprep.subr.bf16.mxu0 %v11518
  %11837 = vmatpush1.bf16.msra.mxu0 %v11517
  %11838 = vmatprep.subr.bf16.mxu0 %v11520
  %11839 = vmatpush1.bf16.msra.mxu0 %v11519
  %11840 = vmatprep.subr.bf16.mxu0 %v11522
  %11841 = vmatpush1.bf16.msra.mxu0 %v11521
  %11842 = vmatprep.subr.bf16.mxu0 %v11524
  %11843 = vmatpush1.bf16.msra.mxu0 %v11523
  %11844 = vmatprep.subr.bf16.mxu0 %v11526
  %11845 = vmatpush1.bf16.msra.mxu0 %v11525
  %11846 = vmatprep.subr.bf16.mxu0 %v11528
  %11847 = vmatpush1.bf16.msra.mxu0 %v11527
  %11848 = vmatprep.subr.bf16.mxu0 %v11530
  %11849 = vmatpush1.bf16.msra.mxu0 %v11529
  %11850 = vmatprep.subr.bf16.mxu0 %v11532
  %11851 = vmatpush1.bf16.msra.mxu0 %v11531
  %11852 = vmatprep.subr.bf16.mxu0 %v11534
  %11853 = vmatpush1.bf16.msra.mxu0 %v11533
  %11854 = vmatprep.subr.bf16.mxu0 %v11536
  %11855 = vmatpush1.bf16.msra.mxu0 %v11535
  %11856 = vmatprep.mubr.bf16.mxu0 %v10876
  %11857 = vmatmul.mubr.bf16.gmra.mrb[0].mxu0 %v10875
  %v11858 = vpop.f32.mrb[0].mxu0
  %v11859 = vadd.f32 %v11806, %v11858
  %v11860 = vpop.f32.mrb[0].mxu0
  %v11861 = vadd.f32 %v11808, %v11860
  %v11862 = vpop.f32.mrb[0].mxu0
  %v11863 = vadd.f32 %v11810, %v11862
  %v11864 = vpop.f32.mrb[0].mxu0
  %v11865 = vadd.f32 %v11812, %v11864
  %11866 = vmatprep.mubr.bf16.mxu0 %v10884
  %11867 = vmatmul.mubr.bf16.gmra.mrb[0].mxu0 %v10883
  %v11868 = vpop.f32.mrb[0].mxu0
  %v11869 = vadd.f32 %v11816, %v11868
  %v11870 = vpop.f32.mrb[0].mxu0
  %v11871 = vadd.f32 %v11818, %v11870
  %v11872 = vpop.f32.mrb[0].mxu0
  %v11873 = vadd.f32 %v11820, %v11872
  %v11874 = vpop.f32.mrb[0].mxu0
  %v11875 = vadd.f32 %v11822, %v11874
  %11876 = vdwg.mxu0
  %v11877 = vmax.f32 %v11859, 0.0
  %v11878 = vmax.f32 %v11861, 0.0
  %v11879 = vmax.f32 %v11863, 0.0
  %v11880 = vmax.f32 %v11865, 0.0
  %v11881 = vmax.f32 %v11869, 0.0
  %v11882 = vmax.f32 %v11871, 0.0
  %v11883 = vmax.f32 %v11873, 0.0
  %v11884 = vmax.f32 %v11875, 0.0
  %v11885 = vpack.c.bf16 %v11879, %v11877
  %v11886 = vpack.c.bf16 %v11880, %v11878
  %v11887 = vpack.c.bf16 %v11883, %v11881
  %v11888 = vpack.c.bf16 %v11884, %v11882
  %v11889 = vld [vmem:[%s7] sm:$0xf]
  %v11890 = vld [vmem:[%s7 + $0x4] sm:$0xf]
  %v11891 = vld [vmem:[%s7 + $0x8] sm:$0xf]
  %v11892 = vld [vmem:[%s7 + $0xc] sm:$0xf]
  %v11893 = vld [vmem:[%s7 + $0x10] sm:$0xf]
  %v11894 = vld [vmem:[%s7 + $0x14] sm:$0xf]
  %v11895 = vld [vmem:[%s7 + $0x18] sm:$0xf]
  %v11896 = vld [vmem:[%s7 + $0x1c] sm:$0xf]
  %v11897 = vld [vmem:[%s7 + $0x20] sm:$0xf]
  %v11898 = vld [vmem:[%s7 + $0x24] sm:$0xf]
  %v11899 = vld [vmem:[%s7 + $0x28] sm:$0xf]
  %v11900 = vld [vmem:[%s7 + $0x2c] sm:$0xf]
  %v11901 = vld [vmem:[%s7 + $0x30] sm:$0xf]
  %v11902 = vld [vmem:[%s7 + $0x34] sm:$0xf]
  %v11903 = vld [vmem:[%s7 + $0x38] sm:$0xf]
  %v11904 = vld [vmem:[%s7 + $0x3c] sm:$0xf]
  %v11905 = vld [vmem:[%s7 + $0x40] sm:$0xf]
  %v11906 = vld [vmem:[%s7 + $0x44] sm:$0xf]
  %v11907 = vld [vmem:[%s7 + $0x48] sm:$0xf]
  %v11908 = vld [vmem:[%s7 + $0x4c] sm:$0xf]
  %v11909 = vld [vmem:[%s7 + $0x50] sm:$0xf]
  %v11910 = vld [vmem:[%s7 + $0x54] sm:$0xf]
  %v11911 = vld [vmem:[%s7 + $0x58] sm:$0xf]
  %v11912 = vld [vmem:[%s7 + $0x5c] sm:$0xf]
  %v11913 = vld [vmem:[%s7 + $0x60] sm:$0xf]
  %v11914 = vld [vmem:[%s7 + $0x64] sm:$0xf]
  %v11915 = vld [vmem:[%s7 + $0x68] sm:$0xf]
  %v11916 = vld [vmem:[%s7 + $0x6c] sm:$0xf]
  %v11917 = vld [vmem:[%s7 + $0x70] sm:$0xf]
  %v11918 = vld [vmem:[%s7 + $0x74] sm:$0xf]
  %v11919 = vld [vmem:[%s7 + $0x78] sm:$0xf]
  %v11920 = vld [vmem:[%s7 + $0x7c] sm:$0xf]
  %v11921 = vld [vmem:[%s8] sm:$0x1]
  %v11923 = vlaneseq
  %v11924 = vshrl.u32 %v11923, 7
  %v11925 = vsub.s32 0, %v11924
  %v11926 = vrot.slane %v11921, %v11925
  %v11960 = vunpack.c.l.b16 %v11889
  %v11961 = vunpack.c.l.b16 %v11890
  %v11962 = vunpack.c.l.b16 %v11891
  %v11963 = vunpack.c.l.b16 %v11892
  %v11964 = vunpack.c.l.b16 %v11893
  %v11965 = vunpack.c.l.b16 %v11894
  %v11966 = vunpack.c.l.b16 %v11895
  %v11967 = vunpack.c.l.b16 %v11896
  %v11968 = vunpack.c.l.b16 %v11897
  %v11969 = vunpack.c.l.b16 %v11898
  %v11970 = vunpack.c.l.b16 %v11899
  %v11971 = vunpack.c.l.b16 %v11900
  %v11972 = vunpack.c.l.b16 %v11901
  %v11973 = vunpack.c.l.b16 %v11902
  %v11974 = vunpack.c.l.b16 %v11903
  %v11975 = vunpack.c.l.b16 %v11904
  %v11976 = vunpack.c.l.b16 %v11905
  %v11977 = vunpack.c.l.b16 %v11906
  %v11978 = vunpack.c.l.b16 %v11907
  %v11979 = vunpack.c.l.b16 %v11908
  %v11980 = vunpack.c.l.b16 %v11909
  %v11981 = vunpack.c.l.b16 %v11910
  %v11982 = vunpack.c.l.b16 %v11911
  %v11983 = vunpack.c.l.b16 %v11912
  %v11984 = vunpack.c.l.b16 %v11913
  %v11985 = vunpack.c.l.b16 %v11914
  %v11986 = vunpack.c.l.b16 %v11915
  %v11987 = vunpack.c.l.b16 %v11916
  %v11988 = vunpack.c.l.b16 %v11917
  %v11989 = vunpack.c.l.b16 %v11918
  %v11990 = vunpack.c.l.b16 %v11919
  %v11991 = vunpack.c.l.b16 %v11920
  %v11992 = vpack.c.b16 %v11961, %v11960
  %v11993 = vpack.c.b16 %v11963, %v11962
  %v11994 = vpack.c.b16 %v11965, %v11964
  %v11995 = vpack.c.b16 %v11967, %v11966
  %v11996 = vpack.c.b16 %v11969, %v11968
  %v11997 = vpack.c.b16 %v11971, %v11970
  %v11998 = vpack.c.b16 %v11973, %v11972
  %v11999 = vpack.c.b16 %v11975, %v11974
  %v12000 = vpack.c.b16 %v11977, %v11976
  %v12001 = vpack.c.b16 %v11979, %v11978
  %v12002 = vpack.c.b16 %v11981, %v11980
  %v12003 = vpack.c.b16 %v11983, %v11982
  %v12004 = vpack.c.b16 %v11985, %v11984
  %v12005 = vpack.c.b16 %v11987, %v11986
  %v12006 = vpack.c.b16 %v11989, %v11988
  %v12007 = vpack.c.b16 %v11991, %v11990
  %12024 = vmatprep.subr.bf16.mxu0 0
  %12025 = vmatpush1.bf16.msra.mxu0 %v11992
  %12026 = vmatprep.subr.bf16.mxu0 0
  %12027 = vmatpush1.bf16.msra.mxu0 %v11993
  %12028 = vmatprep.subr.bf16.mxu0 0
  %12029 = vmatpush1.bf16.msra.mxu0 %v11994
  %12030 = vmatprep.subr.bf16.mxu0 0
  %12031 = vmatpush1.bf16.msra.mxu0 %v11995
  %12032 = vmatprep.subr.bf16.mxu0 0
  %12033 = vmatpush1.bf16.msra.mxu0 %v11996
  %12034 = vmatprep.subr.bf16.mxu0 0
  %12035 = vmatpush1.bf16.msra.mxu0 %v11997
  %12036 = vmatprep.subr.bf16.mxu0 0
  %12037 = vmatpush1.bf16.msra.mxu0 %v11998
  %12038 = vmatprep.subr.bf16.mxu0 0
  %12039 = vmatpush1.bf16.msra.mxu0 %v11999
  %12040 = vmatprep.subr.bf16.mxu0 0
  %12041 = vmatpush1.bf16.msra.mxu0 %v12000
  %12042 = vmatprep.subr.bf16.mxu0 0
  %12043 = vmatpush1.bf16.msra.mxu0 %v12001
  %12044 = vmatprep.subr.bf16.mxu0 0
  %12045 = vmatpush1.bf16.msra.mxu0 %v12002
  %12046 = vmatprep.subr.bf16.mxu0 0
  %12047 = vmatpush1.bf16.msra.mxu0 %v12003
  %12048 = vmatprep.subr.bf16.mxu0 0
  %12049 = vmatpush1.bf16.msra.mxu0 %v12004
  %12050 = vmatprep.subr.bf16.mxu0 0
  %12051 = vmatpush1.bf16.msra.mxu0 %v12005
  %12052 = vmatprep.subr.bf16.mxu0 0
  %12053 = vmatpush1.bf16.msra.mxu0 %v12006
  %12054 = vmatprep.subr.bf16.mxu0 0
  %12055 = vmatpush1.bf16.msra.mxu0 %v12007
  %12056 = vmatprep.mubr.bf16.mxu0 %v11886
  %12057 = vmatmul.mubr.bf16.gmra.mrb[0].mxu0 %v11885
  %v12058 = vpop.f32.mrb[0].mxu0
  %v12059 = vadd.f32 %v11926, %v12058
  %v12060 = vpop.f32.mrb[0].mxu0
  %v12061 = vpop.f32.mrb[0].mxu0
  %v12062 = vadd.f32 %v11926, %v12061
  %v12063 = vpop.f32.mrb[0].mxu0
  %12064 = vmatprep.mubr.bf16.mxu0 %v11888
  %12065 = vmatmul.mubr.bf16.gmra.mrb[0].mxu0 %v11887
  %v12066 = vpop.f32.mrb[0].mxu0
  %v12067 = vadd.f32 %v11926, %v12066
  %v12068 = vpop.f32.mrb[0].mxu0
  %v12069 = vpop.f32.mrb[0].mxu0
  %v12070 = vadd.f32 %v11926, %v12069
  %v12071 = vpop.f32.mrb[0].mxu0
  %12072 = vdwg.mxu0
  %vm12073 = vcmask 130048
  %12074 = vst.msk [vmem:[%s9] sm:$0xff] %vm12073, %v12059
  %12075 = vst.msk [vmem:[%s9 + $0x8] sm:$0xff] %vm12073, %v12062
  %12076 = vst.msk [vmem:[%s9 + $0x10] sm:$0xff] %vm12073, %v12067
  %12077 = vst.msk [vmem:[%s9 + $0x18] sm:$0xff] %vm12073, %v12070
  // Predicated region
  $region38: #{font_cnn_forward.1} parent=0 // pred_check
    _
  $region39: #{font_cnn_forward.1} parent=0 // pred_check_branch
    %12079 = sbr.rel (0) target = $region41
  $region40: #{font_cnn_forward.1} parent=0 // pred_region
    _
  $region41: #{font_cnn_forward.1} parent=0 // pred_fallthru
    _
  // Predicated region
  $region42: #{font_cnn_forward.1} parent=0 // pred_check
    _
  $region43: #{font_cnn_forward.1} parent=0 // pred_check_branch
    %12081 = sbr.rel (0) target = $region45
  $region44: #{font_cnn_forward.1} parent=0 // pred_region
    _
  $region45: #{font_cnn_forward.1} parent=0 // pred_fallthru
    _

</llo_original>
